<compile_context>
chip_gen: v5e
topology: v5e:2x2
jax: 0.10.0
libtpu: 0.0.40
codegen_flags: <defaults>
</compile_context>

<pallas_src>
import jax
import jax.numpy as jnp
from jax.experimental import pallas as pl
from jax.experimental.pallas import tpu as pltpu

NUM_CLASSES = 45
C_PAD = 128                      # class dim padded to lane width (45 -> 128)
FEAT_VIT = 768
FEAT = 512
N_TOTAL = FEAT_VIT + C_PAD + FEAT + C_PAD      # 1536 fused backbone columns
BN_EPS = 1e-5
_NEG = -1e30

# column offsets inside the fused backbone output
_OFF_VIT = 0
_OFF_OUT1 = FEAT_VIT                     # 768
_OFF_RES = FEAT_VIT + C_PAD              # 896
_OFF_OUT2 = FEAT_VIT + C_PAD + FEAT      # 1408

# offsets inside the fused (1, RV_TOTAL) row-vector parameter array
_RV_BB = 0                               # backbone bias        [1536]
_RV_BC1 = 1536                           # conv1 bias           [512]
_RV_WA = 2048                            # gate wa_diff         [512]
_RV_WB = 2560                            # gate wb_diff         [512]
_RV_GAMMA = 3072                         # bn gamma             [512]
_RV_BETA = 3584                          # bn beta              [512]
_RV_BSM = 4096                           # softmax bias         [128]
_RV_BD = 4224                            # gate bias broadcast  [128]
RV_TOTAL = 4352


# ---------------------------------------------------------------------------
# Fused kernel: backbone matmul (tiled over K) + full CTNet head on last step.
# ---------------------------------------------------------------------------
def _ctnet_fused_kernel(
    x_ref, w_ref,                              # x f32 / W bf16, blocked over K
    lab_ref, rv_ref,
    wc1_ref, c1_ref, c2_ref, wsm_ref,          # bf16 head weights
    out3_ref, loss_ref,
    acc_ref,                                   # f32 VMEM accumulator scratch
):
    k = pl.program_id(0)

    @pl.when(k == 0)
    def _():
        # fold the backbone bias into the accumulator init
        bb = rv_ref[:, _RV_BB:_RV_BB + N_TOTAL]              # [1, 1536]
        acc_ref[...] = jnp.broadcast_to(bb, acc_ref.shape)

    # Backbone: fused [B, tk] @ [tk, 1536] MXU pass, bf16 in / f32 acc.
    acc_ref[...] += jnp.dot(
        x_ref[...].astype(jnp.bfloat16), w_ref[...],
        preferred_element_type=jnp.float32,
    )

    @pl.when(k == pl.num_programs(0) - 1)
    def _():
        full = acc_ref[...]                                  # [B, 1536] f32
        B = full.shape[0]

        vit768 = full[:, _OFF_VIT:_OFF_VIT + FEAT_VIT]       # [B, 768]
        out1 = full[:, _OFF_OUT1:_OFF_OUT1 + C_PAD]          # [B, 128]
        resf = full[:, _OFF_RES:_OFF_RES + FEAT]             # [B, 512]
        out2 = full[:, _OFF_OUT2:_OFF_OUT2 + C_PAD]          # [B, 128]

        # in-kernel one-hot / validity mask from integer labels
        labels = lab_ref[...]                                # [B, 1] int32
        col = jax.lax.broadcasted_iota(jnp.int32, (B, C_PAD), 1)
        onehot = (col == labels).astype(jnp.float32)         # [B, 128]
        valid = col < NUM_CLASSES                            # [B, 128]

        def ce_sum(logits):
            # nn.CrossEntropyLoss(reduction='sum'); padded classes masked out.
            lm = jnp.where(valid, logits, _NEG)
            m = jnp.max(lm, axis=-1, keepdims=True)
            lse = m + jnp.log(jnp.sum(jnp.exp(lm - m), axis=-1, keepdims=True))
            picked = jnp.sum(onehot * logits, axis=-1, keepdims=True)
            return jnp.sum(lse - picked)

        crit1 = ce_sum(out1)
        crit2 = ce_sum(out2)

        # conv1: nn.Linear(768, 512) — bf16 MXU, f32 accumulate
        b_conv1 = rv_ref[:, _RV_BC1:_RV_BC1 + FEAT]
        vit_feat = (
            jnp.dot(vit768.astype(jnp.bfloat16), wc1_ref[...],
                    preferred_element_type=jnp.float32)
            + b_conv1
        )                                                    # [B, 512] f32

        # CenterLoss 1 / 2 (centers.index_select == onehot @ centers)
        oh_bf16 = onehot.astype(jnp.bfloat16)                # exact 0/1 in bf16
        cb1 = jnp.dot(oh_bf16, c1_ref[...], preferred_element_type=jnp.float32)
        loss1 = jnp.sum((vit_feat - cb1) ** 2) * 0.5
        cb2 = jnp.dot(oh_bf16, c2_ref[...], preferred_element_type=jnp.float32)
        loss2 = jnp.sum((resf - cb2) ** 2) * 0.5

        # WeightedFeatures: softmax over a 2-wide dim == sigmoid of logit diff.
        wa = rv_ref[:, _RV_WA:_RV_WA + FEAT]
        wb = rv_ref[:, _RV_WB:_RV_WB + FEAT]
        bd = rv_ref[:, _RV_BD:_RV_BD + C_PAD][:, :1]         # (1, 1) scalar
        ld = (
            jnp.sum(vit_feat * wa, axis=-1, keepdims=True)
            + jnp.sum(resf * wb, axis=-1, keepdims=True)
            + bd
        )                                                    # [B, 1]
        w0 = 1.0 / (1.0 + jnp.exp(-ld))
        feats = w0 * vit_feat + (1.0 - w0) * resf

        # BatchNorm1d(512) — fresh module in training mode => batch stats
        mean = jnp.mean(feats, axis=0, keepdims=True)
        var = jnp.mean((feats - mean) ** 2, axis=0, keepdims=True)
        gamma = rv_ref[:, _RV_GAMMA:_RV_GAMMA + FEAT]
        beta = rv_ref[:, _RV_BETA:_RV_BETA + FEAT]
        feats = (feats - mean) * jax.lax.rsqrt(var + BN_EPS)
        feats = feats * gamma + beta

        # ReLU
        feats = jnp.maximum(feats, 0.0)
        # TODO(synk): nn.Dropout(p=0.2) train-mode RNG masking omitted
        # (treated as identity, i.e. eval-mode dropout).

        # final classifier: nn.Linear(512, 45), lane-dense padded to 128
        b_sm = rv_ref[:, _RV_BSM:_RV_BSM + C_PAD]
        out3 = (
            jnp.dot(feats.astype(jnp.bfloat16), wsm_ref[...],
                    preferred_element_type=jnp.float32)
            + b_sm
        )                                                    # [B, 128]
        out3_ref[...] = out3

        crit3 = ce_sum(out3)
        total = crit1 + crit2 + crit3 + (loss1 + loss2) * 0.005
        # lane-dense loss output: scalar broadcast across the 128 lanes
        loss_ref[...] = jnp.full((1, C_PAD), total, dtype=jnp.float32)


def _pick_tk(kp):
    # Larger contiguous K tiles => fewer grid steps, bigger DMAs (HBM-bound).
    for t in (2048, 1024, 512):
        if kp % t == 0:
            return t
    return 512


@jax.jit
def ctnet_forward(x, labels, fp):
    B = x.shape[0]
    x_flat = x.reshape(B, -1).astype(jnp.float32)            # plain-JAX glue
    K = x_flat.shape[1]
    Kp = fp["w_backbone"].shape[0]
    if Kp > K:
        x_flat = jnp.pad(x_flat, ((0, 0), (0, Kp - K)))
    labels2d = labels.reshape(B, 1).astype(jnp.int32)

    tk = _pick_tk(Kp)
    nk = Kp // tk

    def const_spec(shape):
        return pl.BlockSpec(shape, lambda k: (0, 0))

    head_w_bytes = 2 * (FEAT_VIT * FEAT + 2 * C_PAD * FEAT + FEAT * C_PAD)
    cost = pl.CostEstimate(
        flops=2 * B * Kp * N_TOTAL
        + 2 * B * (FEAT_VIT * FEAT + 2 * C_PAD * FEAT + FEAT * C_PAD),
        transcendentals=B * (3 * C_PAD + 4),
        bytes_accessed=int(x_flat.size) * 4
        + int(fp["w_backbone"].size) * 2
        + head_w_bytes
        + RV_TOTAL * 4
        + B * (C_PAD + 1) * 4,
    )

    out3_p, loss = pl.pallas_call(
        _ctnet_fused_kernel,
        out_shape=(
            jax.ShapeDtypeStruct((B, C_PAD), jnp.float32),
            jax.ShapeDtypeStruct((1, C_PAD), jnp.float32),
        ),
        grid_spec=pltpu.PrefetchScalarGridSpec(
            num_scalar_prefetch=0,
            grid=(nk,),
            in_specs=[
                pl.BlockSpec((B, tk), lambda k: (0, k)),          # x (f32)
                pl.BlockSpec((tk, N_TOTAL), lambda k: (k, 0)),    # W_backbone
                const_spec((B, 1)),                               # labels
                const_spec((1, RV_TOTAL)),                        # fused row vecs
                const_spec((FEAT_VIT, FEAT)),                     # w_conv1 bf16
                const_spec((C_PAD, FEAT)),                        # centers1 bf16
                const_spec((C_PAD, FEAT)),                        # centers2 bf16
                const_spec((FEAT, C_PAD)),                        # w_sm bf16
            ],
            out_specs=(
                pl.BlockSpec((B, C_PAD), lambda k: (0, 0)),
                pl.BlockSpec((1, C_PAD), lambda k: (0, 0)),
            ),
            scratch_shapes=[pltpu.VMEM((B, N_TOTAL), jnp.float32)],
        ),
        compiler_params=pltpu.CompilerParams(
            dimension_semantics=("arbitrary",),
            vmem_limit_bytes=32 * 1024 * 1024,
        ),
        cost_estimate=cost,
    )(
        x_flat, fp["w_backbone"], labels2d, fp["rowvec"],
        fp["w_conv1"], fp["centers1"], fp["centers2"], fp["w_sm"],
    )
    return out3_p[:, :NUM_CLASSES], loss[0, 0]


# ---------------------------------------------------------------------------
# Parameter construction (deterministic, synthetic) + fused/padded layout.
# ---------------------------------------------------------------------------
def init_params(key, in_dim):
    keys = jax.random.split(key, 12)
    s = 0.02
    p = {
        # backbone stubs (ViT / ResNet replacements)
        "w_vit_feat": jax.random.normal(keys[0], (in_dim, FEAT_VIT)) * s,
        "b_vit_feat": jnp.zeros((FEAT_VIT,)),
        "w_vit_cls": jax.random.normal(keys[1], (in_dim, NUM_CLASSES)) * s,
        "b_vit_cls": jnp.zeros((NUM_CLASSES,)),
        "w_res_feat": jax.random.normal(keys[2], (in_dim, FEAT)) * s,
        "b_res_feat": jnp.zeros((FEAT,)),
        "w_res_cls": jax.random.normal(keys[3], (in_dim, NUM_CLASSES)) * s,
        "b_res_cls": jnp.zeros((NUM_CLASSES,)),
        # CTNet head parameters (PyTorch-equivalent shapes)
        "w_conv1": jax.random.normal(keys[4], (FEAT_VIT, FEAT)) * s,
        "b_conv1": jax.random.normal(keys[5], (FEAT,)) * s,
        "centers1": jax.random.normal(keys[6], (NUM_CLASSES, FEAT)),
        "centers2": jax.random.normal(keys[7], (NUM_CLASSES, FEAT)),
        "w_fw": jax.random.normal(keys[8], (2 * FEAT, 2)) * s,   # Linear(1024,2)
        "b_fw": jnp.zeros((2,)),
        "bn_gamma": jnp.ones((FEAT,)),
        "bn_beta": jnp.zeros((FEAT,)),
        "w_sm": jax.random.normal(keys[10], (FEAT, NUM_CLASSES)) * s,
        "b_sm": jax.random.normal(keys[11], (NUM_CLASSES,)) * s,
    }
    return {k: v.astype(jnp.float32) for k, v in p.items()}


def prepare_fused_params(p):
    """Concatenate + pad into the layout the fused kernel consumes."""
    def pad_cols(w):                       # [*, 45] -> [*, 128]
        return jnp.pad(w, ((0, 0), (0, C_PAD - NUM_CLASSES)))

    def pad_vec(b):                        # [45] -> [128]
        return jnp.pad(b, (0, C_PAD - NUM_CLASSES))

    in_dim = p["w_vit_feat"].shape[0]
    kp = ((in_dim + 511) // 512) * 512     # pad K so tk >= 512 always divides

    w_backbone = jnp.concatenate(
        [p["w_vit_feat"], pad_cols(p["w_vit_cls"]),
         p["w_res_feat"], pad_cols(p["w_res_cls"])], axis=1)     # [K, 1536]
    if kp > in_dim:
        w_backbone = jnp.pad(w_backbone, ((0, kp - in_dim), (0, 0)))
    b_backbone = jnp.concatenate(
        [p["b_vit_feat"], pad_vec(p["b_vit_cls"]),
         p["b_res_feat"], pad_vec(p["b_res_cls"])])              # [1536]

    # WeightedFeatures gate: softmax over 2 -> sigmoid of logit difference.
    w_fw = p["w_fw"]
    wa_diff = w_fw[:FEAT, 0] - w_fw[:FEAT, 1]                    # [512]
    wb_diff = w_fw[FEAT:, 0] - w_fw[FEAT:, 1]                    # [512]
    b_diff = p["b_fw"][0] - p["b_fw"][1]                         # scalar

    # all (1, X) row-vector params fused into one lane-aligned array
    rowvec = jnp.concatenate([
        b_backbone,                                  # offset 0,    1536
        p["b_conv1"],                                # offset 1536, 512
        wa_diff,                                     # offset 2048, 512
        wb_diff,                                     # offset 2560, 512
        p["bn_gamma"],                               # offset 3072, 512
        p["bn_beta"],                                # offset 3584, 512
        pad_vec(p["b_sm"]),                          # offset 4096, 128
        jnp.full((C_PAD,), b_diff),                  # offset 4224, 128
    ]).reshape(1, RV_TOTAL).astype(jnp.float32)

    pad_rows = C_PAD - NUM_CLASSES
    fp = {
        "w_backbone": w_backbone.astype(jnp.bfloat16),   # bf16 MXU weights
        "rowvec": rowvec,                                # f32 VPU constants
        "w_conv1": p["w_conv1"].astype(jnp.bfloat16),
        "centers1": jnp.pad(p["centers1"], ((0, pad_rows), (0, 0))).astype(jnp.bfloat16),
        "centers2": jnp.pad(p["centers2"], ((0, pad_rows), (0, 0))).astype(jnp.bfloat16),
        "w_sm": pad_cols(p["w_sm"]).astype(jnp.bfloat16),
    }
    return fp


if __name__ == "__main__":
    key = jax.random.PRNGKey(0)
    kx, kl, kp = jax.random.split(key, 3)

    B, C, H, W = 4, 4, 16, 16                 # small NCHW input, in_dim = 1024
    x = jax.random.normal(kx, (B, C, H, W), dtype=jnp.float32)
    labels = jax.random.randint(kl, (B,), 0, NUM_CLASSES, dtype=jnp.int32)

    raw_params = init_params(kp, C * H * W)
    fused_params = prepare_fused_params(raw_params)

    output_3, total_loss = ctnet_forward(x, labels, fused_params)
    jax.block_until_ready((output_3, total_loss))

    assert output_3.shape == (B, NUM_CLASSES)
    assert total_loss.shape == ()
    print("KERNEL_OK")
</pallas_src>

<mosaic_0001>
module attributes {stable_mosaic.version = 11 : i64} {
  func.func @_ctnet_fused_kernel(%arg0: i32, %arg1: memref<4x1024xf32, #tpu.memory_space<vmem>>, %arg2: memref<1024x1536xbf16, #tpu.memory_space<vmem>>, %arg3: memref<4x1xi32, #tpu.memory_space<vmem>>, %arg4: memref<1x4352xf32, #tpu.memory_space<vmem>>, %arg5: memref<768x512xbf16, #tpu.memory_space<vmem>>, %arg6: memref<128x512xbf16, #tpu.memory_space<vmem>>, %arg7: memref<128x512xbf16, #tpu.memory_space<vmem>>, %arg8: memref<512x128xbf16, #tpu.memory_space<vmem>>, %arg9: memref<4x128xf32, #tpu.memory_space<vmem>>, %arg10: memref<1x128xf32, #tpu.memory_space<vmem>>, %arg11: memref<4x1536xf32, #tpu.memory_space<vmem>>) attributes {dimension_semantics = [#tpu.dimension_semantics<arbitrary>], iteration_bounds = array<i64: 1>, scalar_prefetch = 0 : i64, scratch_operands = 1 : i64, tpu.core_type = #tpu.core_type<tc>, window_params = [{transform_indices = @transform_0, window_bounds = array<i64: 4, 1024>}, {transform_indices = @transform_1, window_bounds = array<i64: 1024, 1536>}, {pipeline_mode = #tpu.pipeline_mode<synchronous>, transform_indices = @transform_2, window_bounds = array<i64: 4, 1>}, {pipeline_mode = #tpu.pipeline_mode<synchronous>, transform_indices = @transform_3, window_bounds = array<i64: 1, 4352>}, {pipeline_mode = #tpu.pipeline_mode<synchronous>, transform_indices = @transform_4, window_bounds = array<i64: 768, 512>}, {pipeline_mode = #tpu.pipeline_mode<synchronous>, transform_indices = @transform_5, window_bounds = array<i64: 128, 512>}, {pipeline_mode = #tpu.pipeline_mode<synchronous>, transform_indices = @transform_6, window_bounds = array<i64: 128, 512>}, {pipeline_mode = #tpu.pipeline_mode<synchronous>, transform_indices = @transform_7, window_bounds = array<i64: 512, 128>}, {pipeline_mode = #tpu.pipeline_mode<synchronous>, transform_indices = @transform_8, window_bounds = array<i64: 4, 128>}, {pipeline_mode = #tpu.pipeline_mode<synchronous>, transform_indices = @transform_9, window_bounds = array<i64: 1, 128>}]} {
    %c0_i32 = arith.constant 0 : i32
    %0 = arith.cmpi eq, %arg0, %c0_i32 : i32
    %1 = arith.extui %0 : i1 to i32
    %c0_i32_0 = arith.constant 0 : i32
    %2 = arith.cmpi ne, %1, %c0_i32_0 : i32
    scf.if %2 {
      %c0_10 = arith.constant 0 : index
      %c0_11 = arith.constant 0 : index
      %13 = vector.load %arg4[%c0_10, %c0_11] : memref<1x4352xf32, #tpu.memory_space<vmem>>, vector<1x1536xf32>
      %14 = vector.shape_cast %13 : vector<1x1536xf32> to vector<1x1536xf32>
      %15 = vector.broadcast %14 : vector<1x1536xf32> to vector<4x1536xf32>
      %c0_12 = arith.constant 0 : index
      %c0_13 = arith.constant 0 : index
      %16 = vector.load %arg11[%c0_12, %c0_13] : memref<4x1536xf32, #tpu.memory_space<vmem>>, vector<4x1536xf32>
      tpu.vector_store %arg11[%c0_12, %c0_13], %15 {strides = array<i32>} : memref<4x1536xf32, #tpu.memory_space<vmem>>, vector<4x1536xf32>,
    } else {
    }
    %c0 = arith.constant 0 : index
    %c0_1 = arith.constant 0 : index
    %3 = vector.load %arg11[%c0, %c0_1] : memref<4x1536xf32, #tpu.memory_space<vmem>>, vector<4x1536xf32>
    %c0_2 = arith.constant 0 : index
    %c0_3 = arith.constant 0 : index
    %4 = vector.load %arg1[%c0_2, %c0_3] : memref<4x1024xf32, #tpu.memory_space<vmem>>, vector<4x1024xf32>
    %5 = arith.truncf %4 : vector<4x1024xf32> to vector<4x1024xbf16>
    %c0_4 = arith.constant 0 : index
    %c0_5 = arith.constant 0 : index
    %6 = vector.load %arg2[%c0_4, %c0_5] : memref<1024x1536xbf16, #tpu.memory_space<vmem>>, vector<1024x1536xbf16>
    %cst = arith.constant dense<0.000000e+00> : vector<4x1536xf32>
    %7 = tpu.matmul %5, %6, %cst {dimension_numbers = #tpu.dot_dimension_numbers<[1], [0], [0], [1], [0, 0, 1, 1], [], []>} : vector<4x1024xbf16>, vector<1024x1536xbf16>, vector<4x1536xf32> -> vector<4x1536xf32>
    %8 = arith.addf %3, %7 : vector<4x1536xf32>
    %c0_6 = arith.constant 0 : index
    %c0_7 = arith.constant 0 : index
    %9 = vector.load %arg11[%c0_6, %c0_7] : memref<4x1536xf32, #tpu.memory_space<vmem>>, vector<4x1536xf32>
    tpu.vector_store %arg11[%c0_6, %c0_7], %8 {strides = array<i32>} : memref<4x1536xf32, #tpu.memory_space<vmem>>, vector<4x1536xf32>,
    %c0_i32_8 = arith.constant 0 : i32
    %10 = arith.cmpi eq, %arg0, %c0_i32_8 : i32
    %11 = arith.extui %10 : i1 to i32
    %c0_i32_9 = arith.constant 0 : i32
    %12 = arith.cmpi ne, %11, %c0_i32_9 : i32
    scf.if %12 {
      %c0_10 = arith.constant 0 : index
      %c0_11 = arith.constant 0 : index
      %13 = vector.load %arg11[%c0_10, %c0_11] : memref<4x1536xf32, #tpu.memory_space<vmem>>, vector<4x1536xf32>
      %14 = vector.extract_strided_slice %13 {offsets = [0, 0], sizes = [4, 768], strides = [1, 1]} : vector<4x1536xf32> to vector<4x768xf32>
      %15 = vector.extract_strided_slice %13 {offsets = [0, 768], sizes = [4, 128], strides = [1, 1]} : vector<4x1536xf32> to vector<4x128xf32>
      %16 = vector.extract_strided_slice %13 {offsets = [0, 896], sizes = [4, 512], strides = [1, 1]} : vector<4x1536xf32> to vector<4x512xf32>
      %17 = vector.extract_strided_slice %13 {offsets = [0, 1408], sizes = [4, 128], strides = [1, 1]} : vector<4x1536xf32> to vector<4x128xf32>
      %c0_12 = arith.constant 0 : index
      %c0_13 = arith.constant 0 : index
      %18 = vector.load %arg3[%c0_12, %c0_13] : memref<4x1xi32, #tpu.memory_space<vmem>>, vector<4x1xi32>
      %19 = tpu.iota {dimensions = array<i32: 1>} : vector<4x128xi32>
      %20 = vector.broadcast %18 : vector<4x1xi32> to vector<4x128xi32>
      %21 = arith.cmpi eq, %19, %20 : vector<4x128xi32>
      %22 = arith.extui %21 : vector<4x128xi1> to vector<4x128xi32>
      %23 = arith.sitofp %22 : vector<4x128xi32> to vector<4x128xf32>
      %c45_i32 = arith.constant 45 : i32
      %24 = vector.broadcast %c45_i32 : i32 to vector<4x128xi32>
      %25 = arith.cmpi slt, %19, %24 : vector<4x128xi32>
      %cst_14 = arith.constant -1.000000e+30 : f32
      %26 = vector.broadcast %cst_14 : f32 to vector<4x128xf32>
      %27 = arith.select %25, %15, %26 : vector<4x128xi1>, vector<4x128xf32>
      %cst_15 = arith.constant dense<0xFF800000> : vector<4xf32>
      %28 = vector.multi_reduction <maximumf>, %27, %cst_15 [1] : vector<4x128xf32> to vector<4xf32>
      %29 = vector.shape_cast %28 : vector<4xf32> to vector<4x1xf32>
      %30 = vector.broadcast %29 : vector<4x1xf32> to vector<4x128xf32>
      %31 = arith.subf %27, %30 : vector<4x128xf32>
      %32 = math.exp %31 : vector<4x128xf32>
      %cst_16 = arith.constant dense<0.000000e+00> : vector<4xf32>
      %33 = vector.multi_reduction <add>, %32, %cst_16 [1] : vector<4x128xf32> to vector<4xf32>
      %34 = vector.shape_cast %33 : vector<4xf32> to vector<4x1xf32>
      %35 = math.log %34 : vector<4x1xf32>
      %36 = arith.addf %29, %35 : vector<4x1xf32>
      %37 = arith.mulf %23, %15 : vector<4x128xf32>
      %cst_17 = arith.constant dense<0.000000e+00> : vector<4xf32>
      %38 = vector.multi_reduction <add>, %37, %cst_17 [1] : vector<4x128xf32> to vector<4xf32>
      %39 = vector.shape_cast %38 : vector<4xf32> to vector<4x1xf32>
      %40 = arith.subf %36, %39 : vector<4x1xf32>
      %41 = vector.shape_cast %40 : vector<4x1xf32> to vector<1x4x1xf32>
      %cst_18 = arith.constant dense<0.000000e+00> : vector<1xf32>
      %42 = vector.multi_reduction <add>, %41, %cst_18 [1, 2] : vector<1x4x1xf32> to vector<1xf32>
      %43 = vector.shape_cast %42 : vector<1xf32> to vector<1x1x1xf32>
      %44 = vector.extract %43[0, 0, 0] : f32 from vector<1x1x1xf32>
      %cst_19 = arith.constant -1.000000e+30 : f32
      %45 = vector.broadcast %cst_19 : f32 to vector<4x128xf32>
      %46 = arith.select %25, %17, %45 : vector<4x128xi1>, vector<4x128xf32>
      %cst_20 = arith.constant dense<0xFF800000> : vector<4xf32>
      %47 = vector.multi_reduction <maximumf>, %46, %cst_20 [1] : vector<4x128xf32> to vector<4xf32>
      %48 = vector.shape_cast %47 : vector<4xf32> to vector<4x1xf32>
      %49 = vector.broadcast %48 : vector<4x1xf32> to vector<4x128xf32>
      %50 = arith.subf %46, %49 : vector<4x128xf32>
      %51 = math.exp %50 : vector<4x128xf32>
      %cst_21 = arith.constant dense<0.000000e+00> : vector<4xf32>
      %52 = vector.multi_reduction <add>, %51, %cst_21 [1] : vector<4x128xf32> to vector<4xf32>
      %53 = vector.shape_cast %52 : vector<4xf32> to vector<4x1xf32>
      %54 = math.log %53 : vector<4x1xf32>
      %55 = arith.addf %48, %54 : vector<4x1xf32>
      %56 = arith.mulf %23, %17 : vector<4x128xf32>
      %cst_22 = arith.constant dense<0.000000e+00> : vector<4xf32>
      %57 = vector.multi_reduction <add>, %56, %cst_22 [1] : vector<4x128xf32> to vector<4xf32>
      %58 = vector.shape_cast %57 : vector<4xf32> to vector<4x1xf32>
      %59 = arith.subf %55, %58 : vector<4x1xf32>
      %60 = vector.shape_cast %59 : vector<4x1xf32> to vector<1x4x1xf32>
      %cst_23 = arith.constant dense<0.000000e+00> : vector<1xf32>
      %61 = vector.multi_reduction <add>, %60, %cst_23 [1, 2] : vector<1x4x1xf32> to vector<1xf32>
      %62 = vector.shape_cast %61 : vector<1xf32> to vector<1x1x1xf32>
      %63 = vector.extract %62[0, 0, 0] : f32 from vector<1x1x1xf32>
      %c0_24 = arith.constant 0 : index
      %c1536 = arith.constant 1536 : index
      %64 = vector.load %arg4[%c0_24, %c1536] : memref<1x4352xf32, #tpu.memory_space<vmem>>, vector<1x512xf32>
      %65 = arith.truncf %14 : vector<4x768xf32> to vector<4x768xbf16>
      %c0_25 = arith.constant 0 : index
      %c0_26 = arith.constant 0 : index
      %66 = vector.load %arg5[%c0_25, %c0_26] : memref<768x512xbf16, #tpu.memory_space<vmem>>, vector<768x512xbf16>
      %cst_27 = arith.constant dense<0.000000e+00> : vector<4x512xf32>
      %67 = tpu.matmul %65, %66, %cst_27 {dimension_numbers = #tpu.dot_dimension_numbers<[1], [0], [0], [1], [0, 0, 1, 1], [], []>} : vector<4x768xbf16>, vector<768x512xbf16>, vector<4x512xf32> -> vector<4x512xf32>
      %68 = vector.broadcast %64 : vector<1x512xf32> to vector<4x512xf32>
      %69 = arith.addf %67, %68 : vector<4x512xf32>
      %70 = arith.truncf %23 : vector<4x128xf32> to vector<4x128xbf16>
      %c0_28 = arith.constant 0 : index
      %c0_29 = arith.constant 0 : index
      %71 = vector.load %arg6[%c0_28, %c0_29] : memref<128x512xbf16, #tpu.memory_space<vmem>>, vector<128x512xbf16>
      %cst_30 = arith.constant dense<0.000000e+00> : vector<4x512xf32>
      %72 = tpu.matmul %70, %71, %cst_30 {dimension_numbers = #tpu.dot_dimension_numbers<[1], [0], [0], [1], [0, 0, 1, 1], [], []>} : vector<4x128xbf16>, vector<128x512xbf16>, vector<4x512xf32> -> vector<4x512xf32>
      %73 = arith.subf %69, %72 : vector<4x512xf32>
      %74 = arith.mulf %73, %73 : vector<4x512xf32>
      %75 = vector.shape_cast %74 : vector<4x512xf32> to vector<1x4x512xf32>
      %cst_31 = arith.constant dense<0.000000e+00> : vector<1xf32>
      %76 = vector.multi_reduction <add>, %75, %cst_31 [1, 2] : vector<1x4x512xf32> to vector<1xf32>
      %77 = vector.shape_cast %76 : vector<1xf32> to vector<1x1x1xf32>
      %78 = vector.extract %77[0, 0, 0] : f32 from vector<1x1x1xf32>
      %cst_32 = arith.constant 5.000000e-01 : f32
      %79 = arith.mulf %78, %cst_32 : f32
      %c0_33 = arith.constant 0 : index
      %c0_34 = arith.constant 0 : index
      %80 = vector.load %arg7[%c0_33, %c0_34] : memref<128x512xbf16, #tpu.memory_space<vmem>>, vector<128x512xbf16>
      %cst_35 = arith.constant dense<0.000000e+00> : vector<4x512xf32>
      %81 = tpu.matmul %70, %80, %cst_35 {dimension_numbers = #tpu.dot_dimension_numbers<[1], [0], [0], [1], [0, 0, 1, 1], [], []>} : vector<4x128xbf16>, vector<128x512xbf16>, vector<4x512xf32> -> vector<4x512xf32>
      %82 = arith.subf %16, %81 : vector<4x512xf32>
      %83 = arith.mulf %82, %82 : vector<4x512xf32>
      %84 = vector.shape_cast %83 : vector<4x512xf32> to vector<1x4x512xf32>
      %cst_36 = arith.constant dense<0.000000e+00> : vector<1xf32>
      %85 = vector.multi_reduction <add>, %84, %cst_36 [1, 2] : vector<1x4x512xf32> to vector<1xf32>
      %86 = vector.shape_cast %85 : vector<1xf32> to vector<1x1x1xf32>
      %87 = vector.extract %86[0, 0, 0] : f32 from vector<1x1x1xf32>
      %cst_37 = arith.constant 5.000000e-01 : f32
      %88 = arith.mulf %87, %cst_37 : f32
      %c0_38 = arith.constant 0 : index
      %c2048 = arith.constant 2048 : index
      %89 = vector.load %arg4[%c0_38, %c2048] : memref<1x4352xf32, #tpu.memory_space<vmem>>, vector<1x512xf32>
      %c0_39 = arith.constant 0 : index
      %c2560 = arith.constant 2560 : index
      %90 = vector.load %arg4[%c0_39, %c2560] : memref<1x4352xf32, #tpu.memory_space<vmem>>, vector<1x512xf32>
      %c0_40 = arith.constant 0 : index
      %c4224 = arith.constant 4224 : index
      %91 = vector.load %arg4[%c0_40, %c4224] : memref<1x4352xf32, #tpu.memory_space<vmem>>, vector<1x128xf32>
      %92 = vector.extract_strided_slice %91 {offsets = [0, 0], sizes = [1, 1], strides = [1, 1]} : vector<1x128xf32> to vector<1x1xf32>
      %93 = vector.broadcast %89 : vector<1x512xf32> to vector<4x512xf32>
      %94 = arith.mulf %69, %93 : vector<4x512xf32>
      %cst_41 = arith.constant dense<0.000000e+00> : vector<4xf32>
      %95 = vector.multi_reduction <add>, %94, %cst_41 [1] : vector<4x512xf32> to vector<4xf32>
      %96 = vector.shape_cast %95 : vector<4xf32> to vector<4x1xf32>
      %97 = vector.broadcast %90 : vector<1x512xf32> to vector<4x512xf32>
      %98 = arith.mulf %16, %97 : vector<4x512xf32>
      %cst_42 = arith.constant dense<0.000000e+00> : vector<4xf32>
      %99 = vector.multi_reduction <add>, %98, %cst_42 [1] : vector<4x512xf32> to vector<4xf32>
      %100 = vector.shape_cast %99 : vector<4xf32> to vector<4x1xf32>
      %101 = arith.addf %96, %100 : vector<4x1xf32>
      %102 = vector.broadcast %92 : vector<1x1xf32> to vector<4x1xf32>
      %103 = arith.addf %101, %102 : vector<4x1xf32>
      %cst_43 = arith.constant 0.000000e+00 : f32
      %104 = vector.broadcast %cst_43 : f32 to vector<4x1xf32>
      %105 = arith.subf %104, %103 : vector<4x1xf32>
      %106 = math.exp %105 : vector<4x1xf32>
      %cst_44 = arith.constant 1.000000e+00 : f32
      %107 = vector.broadcast %cst_44 : f32 to vector<4x1xf32>
      %108 = arith.addf %107, %106 : vector<4x1xf32>
      %cst_45 = arith.constant 1.000000e+00 : f32
      %109 = vector.broadcast %cst_45 : f32 to vector<4x1xf32>
      %110 = arith.divf %109, %108 : vector<4x1xf32>
      %111 = vector.broadcast %110 : vector<4x1xf32> to vector<4x512xf32>
      %112 = arith.mulf %111, %69 : vector<4x512xf32>
      %cst_46 = arith.constant 1.000000e+00 : f32
      %113 = vector.broadcast %cst_46 : f32 to vector<4x1xf32>
      %114 = arith.subf %113, %110 : vector<4x1xf32>
      %115 = vector.broadcast %114 : vector<4x1xf32> to vector<4x512xf32>
      %116 = arith.mulf %115, %16 : vector<4x512xf32>
      %117 = arith.addf %112, %116 : vector<4x512xf32>
      %cst_47 = arith.constant dense<0.000000e+00> : vector<512xf32>
      %118 = vector.multi_reduction <add>, %117, %cst_47 [0] : vector<4x512xf32> to vector<512xf32>
      %119 = vector.shape_cast %118 : vector<512xf32> to vector<1x512xf32>
      %cst_48 = arith.constant 4.000000e+00 : f32
      %120 = vector.broadcast %cst_48 : f32 to vector<1x512xf32>
      %121 = arith.divf %119, %120 : vector<1x512xf32>
      %122 = vector.broadcast %121 : vector<1x512xf32> to vector<4x512xf32>
      %123 = arith.subf %117, %122 : vector<4x512xf32>
      %124 = arith.mulf %123, %123 : vector<4x512xf32>
      %cst_49 = arith.constant dense<0.000000e+00> : vector<512xf32>
      %125 = vector.multi_reduction <add>, %124, %cst_49 [0] : vector<4x512xf32> to vector<512xf32>
      %126 = vector.shape_cast %125 : vector<512xf32> to vector<1x512xf32>
      %cst_50 = arith.constant 4.000000e+00 : f32
      %127 = vector.broadcast %cst_50 : f32 to vector<1x512xf32>
      %128 = arith.divf %126, %127 : vector<1x512xf32>
      %c0_51 = arith.constant 0 : index
      %c3072 = arith.constant 3072 : index
      %129 = vector.load %arg4[%c0_51, %c3072] : memref<1x4352xf32, #tpu.memory_space<vmem>>, vector<1x512xf32>
      %c0_52 = arith.constant 0 : index
      %c3584 = arith.constant 3584 : index
      %130 = vector.load %arg4[%c0_52, %c3584] : memref<1x4352xf32, #tpu.memory_space<vmem>>, vector<1x512xf32>
      %131 = vector.broadcast %121 : vector<1x512xf32> to vector<4x512xf32>
      %132 = arith.subf %117, %131 : vector<4x512xf32>
      %cst_53 = arith.constant 9.99999974E-6 : f32
      %133 = vector.broadcast %cst_53 : f32 to vector<1x512xf32>
      %134 = arith.addf %128, %133 : vector<1x512xf32>
      %135 = math.rsqrt %134 : vector<1x512xf32>
      %136 = vector.broadcast %135 : vector<1x512xf32> to vector<4x512xf32>
      %137 = arith.mulf %132, %136 : vector<4x512xf32>
      %138 = vector.broadcast %129 : vector<1x512xf32> to vector<4x512xf32>
      %139 = arith.mulf %137, %138 : vector<4x512xf32>
      %140 = vector.broadcast %130 : vector<1x512xf32> to vector<4x512xf32>
      %141 = arith.addf %139, %140 : vector<4x512xf32>
      %cst_54 = arith.constant 0.000000e+00 : f32
      %142 = vector.broadcast %cst_54 : f32 to vector<4x512xf32>
      %143 = arith.maximumf %141, %142 : vector<4x512xf32>
      %c0_55 = arith.constant 0 : index
      %c4096 = arith.constant 4096 : index
      %144 = vector.load %arg4[%c0_55, %c4096] : memref<1x4352xf32, #tpu.memory_space<vmem>>, vector<1x128xf32>
      %145 = arith.truncf %143 : vector<4x512xf32> to vector<4x512xbf16>
      %c0_56 = arith.constant 0 : index
      %c0_57 = arith.constant 0 : index
      %146 = vector.load %arg8[%c0_56, %c0_57] : memref<512x128xbf16, #tpu.memory_space<vmem>>, vector<512x128xbf16>
      %cst_58 = arith.constant dense<0.000000e+00> : vector<4x128xf32>
      %147 = tpu.matmul %145, %146, %cst_58 {dimension_numbers = #tpu.dot_dimension_numbers<[1], [0], [0], [1], [0, 0, 1, 1], [], []>} : vector<4x512xbf16>, vector<512x128xbf16>, vector<4x128xf32> -> vector<4x128xf32>
      %148 = vector.broadcast %144 : vector<1x128xf32> to vector<4x128xf32>
      %149 = arith.addf %147, %148 : vector<4x128xf32>
      %c0_59 = arith.constant 0 : index
      %c0_60 = arith.constant 0 : index
      %150 = vector.load %arg9[%c0_59, %c0_60] : memref<4x128xf32, #tpu.memory_space<vmem>>, vector<4x128xf32>
      tpu.vector_store %arg9[%c0_59, %c0_60], %149 {strides = array<i32>} : memref<4x128xf32, #tpu.memory_space<vmem>>, vector<4x128xf32>,
      %cst_61 = arith.constant -1.000000e+30 : f32
      %151 = vector.broadcast %cst_61 : f32 to vector<4x128xf32>
      %152 = arith.select %25, %149, %151 : vector<4x128xi1>, vector<4x128xf32>
      %cst_62 = arith.constant dense<0xFF800000> : vector<4xf32>
      %153 = vector.multi_reduction <maximumf>, %152, %cst_62 [1] : vector<4x128xf32> to vector<4xf32>
      %154 = vector.shape_cast %153 : vector<4xf32> to vector<4x1xf32>
      %155 = vector.broadcast %154 : vector<4x1xf32> to vector<4x128xf32>
      %156 = arith.subf %152, %155 : vector<4x128xf32>
      %157 = math.exp %156 : vector<4x128xf32>
      %cst_63 = arith.constant dense<0.000000e+00> : vector<4xf32>
      %158 = vector.multi_reduction <add>, %157, %cst_63 [1] : vector<4x128xf32> to vector<4xf32>
      %159 = vector.shape_cast %158 : vector<4xf32> to vector<4x1xf32>
      %160 = math.log %159 : vector<4x1xf32>
      %161 = arith.addf %154, %160 : vector<4x1xf32>
      %162 = arith.mulf %23, %149 : vector<4x128xf32>
      %cst_64 = arith.constant dense<0.000000e+00> : vector<4xf32>
      %163 = vector.multi_reduction <add>, %162, %cst_64 [1] : vector<4x128xf32> to vector<4xf32>
      %164 = vector.shape_cast %163 : vector<4xf32> to vector<4x1xf32>
      %165 = arith.subf %161, %164 : vector<4x1xf32>
      %166 = vector.shape_cast %165 : vector<4x1xf32> to vector<1x4x1xf32>
      %cst_65 = arith.constant dense<0.000000e+00> : vector<1xf32>
      %167 = vector.multi_reduction <add>, %166, %cst_65 [1, 2] : vector<1x4x1xf32> to vector<1xf32>
      %168 = vector.shape_cast %167 : vector<1xf32> to vector<1x1x1xf32>
      %169 = vector.extract %168[0, 0, 0] : f32 from vector<1x1x1xf32>
      %170 = arith.addf %44, %63 : f32
      %171 = arith.addf %170, %169 : f32
      %172 = arith.addf %79, %88 : f32
      %cst_66 = arith.constant 5.000000e-03 : f32
      %173 = arith.mulf %172, %cst_66 : f32
      %174 = arith.addf %171, %173 : f32
      %175 = vector.broadcast %174 : f32 to vector<1x128xf32>
      %c0_67 = arith.constant 0 : index
      %c0_68 = arith.constant 0 : index
      %176 = vector.load %arg10[%c0_67, %c0_68] : memref<1x128xf32, #tpu.memory_space<vmem>>, vector<1x128xf32>
      tpu.vector_store %arg10[%c0_67, %c0_68], %175 {strides = array<i32>} : memref<1x128xf32, #tpu.memory_space<vmem>>, vector<1x128xf32>,
    } else {
    }
    return
  }
  func.func @transform_0(%arg0: i32) -> (i32, i32) {
    %c0_i32 = arith.constant 0 : i32
    %c0_i32_0 = arith.constant 0 : i32
    return %c0_i32, %arg0 : i32, i32
  }
  func.func @transform_1(%arg0: i32) -> (i32, i32) {
    %c0_i32 = arith.constant 0 : i32
    %c0_i32_0 = arith.constant 0 : i32
    return %arg0, %c0_i32 : i32, i32
  }
  func.func @transform_2(%arg0: i32) -> (i32, i32) {
    %c0_i32 = arith.constant 0 : i32
    %c0_i32_0 = arith.constant 0 : i32
    %c0_i32_1 = arith.constant 0 : i32
    return %c0_i32, %c0_i32_0 : i32, i32
  }
  func.func @transform_3(%arg0: i32) -> (i32, i32) {
    %c0_i32 = arith.constant 0 : i32
    %c0_i32_0 = arith.constant 0 : i32
    %c0_i32_1 = arith.constant 0 : i32
    return %c0_i32, %c0_i32_0 : i32, i32
  }
  func.func @transform_4(%arg0: i32) -> (i32, i32) {
    %c0_i32 = arith.constant 0 : i32
    %c0_i32_0 = arith.constant 0 : i32
    %c0_i32_1 = arith.constant 0 : i32
    return %c0_i32, %c0_i32_0 : i32, i32
  }
  func.func @transform_5(%arg0: i32) -> (i32, i32) {
    %c0_i32 = arith.constant 0 : i32
    %c0_i32_0 = arith.constant 0 : i32
    %c0_i32_1 = arith.constant 0 : i32
    return %c0_i32, %c0_i32_0 : i32, i32
  }
  func.func @transform_6(%arg0: i32) -> (i32, i32) {
    %c0_i32 = arith.constant 0 : i32
    %c0_i32_0 = arith.constant 0 : i32
    %c0_i32_1 = arith.constant 0 : i32
    return %c0_i32, %c0_i32_0 : i32, i32
  }
  func.func @transform_7(%arg0: i32) -> (i32, i32) {
    %c0_i32 = arith.constant 0 : i32
    %c0_i32_0 = arith.constant 0 : i32
    %c0_i32_1 = arith.constant 0 : i32
    return %c0_i32, %c0_i32_0 : i32, i32
  }
  func.func @transform_8(%arg0: i32) -> (i32, i32) {
    %c0_i32 = arith.constant 0 : i32
    %c0_i32_0 = arith.constant 0 : i32
    %c0_i32_1 = arith.constant 0 : i32
    return %c0_i32, %c0_i32_0 : i32, i32
  }
  func.func @transform_9(%arg0: i32) -> (i32, i32) {
    %c0_i32 = arith.constant 0 : i32
    %c0_i32_0 = arith.constant 0 : i32
    %c0_i32_1 = arith.constant 0 : i32
    return %c0_i32, %c0_i32_0 : i32, i32
  }
}

</mosaic_0001>

<llo_original>
// kernel: ctnet_forward.1
$region0: #{ctnet_forward.1}
  #allocation0 [shape = 'u32[]', space=smem, size = 0x4, offset = 0x4, fixed_abs, tag = 'smem constant byte address 0x4 - core index']
  #allocation1 [shape = 'u32[72,128]{1,0:T(1,128)}', space=vmem, size = 0x9000, scoped, tag = 'internal scratch']
  #allocation2 [shape = 'f32[4,1536]{1,0:T(4,128)}', space=vmem, size = 0x6000, scoped, tag = 'scratch operand']
  %s0 = inlined_call_operand.vmem [shape: f32[4,1024], index: 0, kind: input, shape index: {}]
  %s1 = inlined_call_operand.hbm [shape: bf16[1024,1536], index: 1, kind: input, shape index: {}]
  %s2 = inlined_call_operand.vmem [shape: s32[4,1], index: 2, kind: input, shape index: {}]
  %s3 = inlined_call_operand.hbm [shape: f32[1,4352], index: 3, kind: input, shape index: {}]
  %s4 = inlined_call_operand.hbm [shape: bf16[768,512], index: 4, kind: input, shape index: {}]
  %s5 = inlined_call_operand.hbm [shape: bf16[128,512], index: 5, kind: input, shape index: {}]
  %s6 = inlined_call_operand.hbm [shape: bf16[128,512], index: 6, kind: input, shape index: {}]
  %s7 = inlined_call_operand.hbm [shape: bf16[512,128], index: 7, kind: input, shape index: {}]
  %s8 = inlined_call_operand.hbm [shape: f32[4,128], index: 8, kind: output, shape index: {0}]
  %s9 = inlined_call_operand.hbm [shape: f32[1,128], index: 9, kind: output, shape index: {1}]
  %10 = xla_tuple %s8, %s9
  %s11 = sld [smem:[#allocation0]]
  $region82: #{ctnet_forward.1} parent=0
    _
  %s13 = ssub.s32 1, %s11
  %s14 = scalar_select 0, %s13, %s11
  $region1: #{ctnet_forward.1} parent=0
    #allocation3 [shape = 'u8[3145728]{0}', space=vmem, size = 0x300000, scoped, tag = 'input window, operand 1, single buffered']
    #allocation4 [shape = 's32[1]{0}', space=sflag, size = 0x4, scoped, tag = 'scoped memory for ctnet_forward.1']
    #allocation5 [shape = 's32[1]{0}', space=sflag, size = 0x4, scoped, tag = 'scoped memory for ctnet_forward.1']
    #allocation6 [shape = 'u8[17408]{0}', space=vmem, size = 0x4400, scoped, tag = 'input window, operand 3, single buffered']
    #allocation7 [shape = 's32[1]{0}', space=sflag, size = 0x4, scoped, tag = 'scoped memory for ctnet_forward.1']
    #allocation8 [shape = 'u8[786432]{0}', space=vmem, size = 0xc0000, scoped, tag = 'input window, operand 4, single buffered']
    #allocation9 [shape = 'u8[131072]{0}', space=vmem, size = 0x20000, scoped, tag = 'input window, operand 5, single buffered']
    #allocation10 [shape = 's32[1]{0}', space=sflag, size = 0x4, scoped, tag = 'scoped memory for ctnet_forward.1']
    #allocation11 [shape = 'u8[131072]{0}', space=vmem, size = 0x20000, scoped, tag = 'input window, operand 6, single buffered']
    #allocation12 [shape = 'u8[131072]{0}', space=vmem, size = 0x20000, scoped, tag = 'input window, operand 7, single buffered']
    #allocation13 [shape = 's32[1]{0}', space=sflag, size = 0x4, scoped, tag = 'scoped memory for ctnet_forward.1']
    #allocation14 [shape = 'u8[2048]{0}', space=vmem, size = 0x800, scoped, tag = 'output window, operand 0, single buffered']
    #allocation15 [shape = 'u8[512]{0}', space=vmem, size = 0x400, scoped, tag = 'output window, operand 1, single buffered']
    #allocation16 [shape = 's32[1]{0}', space=sflag, size = 0x4, scoped, tag = 'scoped memory for ctnet_forward.1']
    %15 = vsyncpa [#allocation4], 0
    %16 = vsyncpa [#allocation7], 0
    %17 = vsyncpa [#allocation10], 0
    %18 = vsyncpa [#allocation13], 0
    %19 = vsyncpa [#allocation5], 0
    %20 = vsyncpa [#allocation16], 0
    // Predicated region
    $region2: #{ctnet_forward.1} parent=1 // pred_check
      _
    $region3: #{ctnet_forward.1} parent=1 // pred_check_branch
      %22 = sbr.rel (0) target = $region5
    $region4: #{ctnet_forward.1} parent=1 // pred_region
      _
    $region5: #{ctnet_forward.1} parent=1 // pred_fallthru
      _
    // Predicated region
    $region6: #{ctnet_forward.1} parent=1 // pred_check
      _
    $region7: #{ctnet_forward.1} parent=1 // pred_check_branch
      %24 = sbr.rel (0) target = $region9
    $region8: #{ctnet_forward.1} parent=1 // pred_region
      %26 = vsyncadd [#allocation4], 0
      %s27 = sshll.u32 %s1, 4
      %s28 = int_to_ptr.hbm [resolvable:$true] %s27
      %s29 = sshll.u32 [#allocation3], 4
      %s30 = int_to_ptr.vmem [resolvable:$true] %s29
      %35 = dma.hbm_to_vmem [thread:$0]  %s28, 98304, %s30, [#allocation4], 768, 768, 48
    $region9: #{ctnet_forward.1} parent=1 // pred_fallthru
      _
    // Predicated region
    $region10: #{ctnet_forward.1} parent=1 // pred_check
      _
    $region11: #{ctnet_forward.1} parent=1 // pred_check_branch
      %37 = sbr.rel (0) target = $region13
    $region12: #{ctnet_forward.1} parent=1 // pred_region
      _
    $region13: #{ctnet_forward.1} parent=1 // pred_fallthru
      _
    // Predicated region
    $region14: #{ctnet_forward.1} parent=1 // pred_check
      _
    $region15: #{ctnet_forward.1} parent=1 // pred_check_branch
      %39 = sbr.rel (0) target = $region17
    $region16: #{ctnet_forward.1} parent=1 // pred_region
      %41 = vsyncadd [#allocation7], 0
      %s43 = sshll.u32 %s3, 4
      %s44 = int_to_ptr.hbm [resolvable:$true] %s43
      %s45 = sshll.u32 [#allocation6], 4
      %s46 = int_to_ptr.vmem [resolvable:$true] %s45
      %48 = dma.hbm_to_vmem [thread:$0]  %s44, 544, %s46, [#allocation7]
    $region17: #{ctnet_forward.1} parent=1 // pred_fallthru
      _
    // Predicated region
    $region18: #{ctnet_forward.1} parent=1 // pred_check
      _
    $region19: #{ctnet_forward.1} parent=1 // pred_check_branch
      %50 = sbr.rel (0) target = $region21
    $region20: #{ctnet_forward.1} parent=1 // pred_region
      %52 = vsyncadd [#allocation7], 0
      %s53 = sshll.u32 %s4, 4
      %s54 = int_to_ptr.hbm [resolvable:$true] %s53
      %s55 = sshll.u32 [#allocation8], 4
      %s56 = int_to_ptr.vmem [resolvable:$true] %s55
      %61 = dma.hbm_to_vmem [thread:$0]  %s54, 24576, %s56, [#allocation7], 256, 256, 16
    $region21: #{ctnet_forward.1} parent=1 // pred_fallthru
      _
    // Predicated region
    $region22: #{ctnet_forward.1} parent=1 // pred_check
      _
    $region23: #{ctnet_forward.1} parent=1 // pred_check_branch
      %63 = sbr.rel (0) target = $region25
    $region24: #{ctnet_forward.1} parent=1 // pred_region
      %65 = vsyncadd [#allocation10], 0
      %s66 = sshll.u32 %s5, 4
      %s67 = int_to_ptr.hbm [resolvable:$true] %s66
      %s68 = sshll.u32 [#allocation9], 4
      %s69 = int_to_ptr.vmem [resolvable:$true] %s68
      %74 = dma.hbm_to_vmem [thread:$0]  %s67, 4096, %s69, [#allocation10], 256, 256, 16
    $region25: #{ctnet_forward.1} parent=1 // pred_fallthru
      _
    // Predicated region
    $region26: #{ctnet_forward.1} parent=1 // pred_check
      _
    $region27: #{ctnet_forward.1} parent=1 // pred_check_branch
      %76 = sbr.rel (0) target = $region29
    $region28: #{ctnet_forward.1} parent=1 // pred_region
      %78 = vsyncadd [#allocation10], 0
      %s79 = sshll.u32 %s6, 4
      %s80 = int_to_ptr.hbm [resolvable:$true] %s79
      %s81 = sshll.u32 [#allocation11], 4
      %s82 = int_to_ptr.vmem [resolvable:$true] %s81
      %87 = dma.hbm_to_vmem [thread:$0]  %s80, 4096, %s82, [#allocation10], 256, 256, 16
    $region29: #{ctnet_forward.1} parent=1 // pred_fallthru
      _
    // Predicated region
    $region30: #{ctnet_forward.1} parent=1 // pred_check
      _
    $region31: #{ctnet_forward.1} parent=1 // pred_check_branch
      %89 = sbr.rel (0) target = $region33
    $region32: #{ctnet_forward.1} parent=1 // pred_region
      %91 = vsyncadd [#allocation13], 0
      %s92 = sshll.u32 %s7, 4
      %s93 = int_to_ptr.hbm [resolvable:$true] %s92
      %s94 = sshll.u32 [#allocation12], 4
      %s95 = int_to_ptr.vmem [resolvable:$true] %s94
      %100 = dma.hbm_to_vmem [thread:$0]  %s93, 4096, %s95, [#allocation13], 64, 64, 4
    $region33: #{ctnet_forward.1} parent=1 // pred_fallthru
      _
    // Predicated region
    $region34: #{ctnet_forward.1} parent=1 // pred_check
      _
    $region35: #{ctnet_forward.1} parent=1 // pred_check_branch
      %102 = sbr.rel (0) target = $region37
    $region36: #{ctnet_forward.1} parent=1 // pred_region
      %104 = dma.done [#allocation4], 98304
    $region37: #{ctnet_forward.1} parent=1 // pred_fallthru
      _
    // Predicated region
    $region38: #{ctnet_forward.1} parent=1 // pred_check
      _
    $region39: #{ctnet_forward.1} parent=1 // pred_check_branch
      %106 = sbr.rel (0) target = $region41
    $region40: #{ctnet_forward.1} parent=1 // pred_region
      %108 = dma.done [#allocation7], 544
    $region41: #{ctnet_forward.1} parent=1 // pred_fallthru
      _
    // Predicated region
    $region42: #{ctnet_forward.1} parent=1 // pred_check
      _
    $region43: #{ctnet_forward.1} parent=1 // pred_check_branch
      %110 = sbr.rel (0) target = $region45
    $region44: #{ctnet_forward.1} parent=1 // pred_region
      %112 = dma.done [#allocation7], 24576
    $region45: #{ctnet_forward.1} parent=1 // pred_fallthru
      _
    // Predicated region
    $region46: #{ctnet_forward.1} parent=1 // pred_check
      _
    $region47: #{ctnet_forward.1} parent=1 // pred_check_branch
      %114 = sbr.rel (0) target = $region49
    $region48: #{ctnet_forward.1} parent=1 // pred_region
      %116 = dma.done [#allocation10], 4096
    $region49: #{ctnet_forward.1} parent=1 // pred_fallthru
      _
    // Predicated region
    $region50: #{ctnet_forward.1} parent=1 // pred_check
      _
    $region51: #{ctnet_forward.1} parent=1 // pred_check_branch
      %118 = sbr.rel (0) target = $region53
    $region52: #{ctnet_forward.1} parent=1 // pred_region
      %120 = dma.done [#allocation10], 4096
    $region53: #{ctnet_forward.1} parent=1 // pred_fallthru
      _
    // Predicated region
    $region54: #{ctnet_forward.1} parent=1 // pred_check
      _
    $region55: #{ctnet_forward.1} parent=1 // pred_check_branch
      %122 = sbr.rel (0) target = $region57
    $region56: #{ctnet_forward.1} parent=1 // pred_region
      %124 = dma.done [#allocation13], 4096
    $region57: #{ctnet_forward.1} parent=1 // pred_fallthru
      _
    %p125 = scmp.eq.s32.totalorder 0, 0
    // Predicated region
    $region58: #{ctnet_forward.1} parent=1 // pred_check
      %p126 = pneg %p125
    $region59: #{ctnet_forward.1} parent=1 // pred_check_branch
      %128 = sbr.rel (%p126) target = $region61
    $region60: #{ctnet_forward.1} parent=1 // pred_region
      %v129 = vld [vmem:[#allocation6] sm:$0xff]
      %v130 = vld [vmem:[#allocation6 + $0x8] sm:$0xf]
      %v133 = vperm.slane %v129, 0
      %v134 = vperm.slane %v129, 1
      %v135 = vperm.slane %v129, 2
      %v136 = vperm.slane %v129, 3
      %v137 = vperm.slane %v129, 4
      %v138 = vperm.slane %v129, 5
      %v139 = vperm.slane %v129, 6
      %v140 = vperm.slane %v129, 7
      %v141 = vperm.slane %v130, 0
      %v142 = vperm.slane %v130, 1
      %v143 = vperm.slane %v130, 2
      %v144 = vperm.slane %v130, 3
      %v145 = vrot.slane %v134, 4
      %v146 = vrot.slane %v136, 4
      %v147 = vrot.slane %v138, 4
      %v148 = vrot.slane %v140, 4
      %v149 = vrot.slane %v142, 4
      %v150 = vrot.slane %v144, 4
      %vm151 = vcmask 1043456
      %v152 = vsel %vm151, %v133, %v145
      %v153 = vsel %vm151, %v135, %v146
      %v154 = vsel %vm151, %v137, %v147
      %v155 = vsel %vm151, %v139, %v148
      %v156 = vsel %vm151, %v141, %v149
      %v157 = vsel %vm151, %v143, %v150
      %164 = vst [vmem:[#allocation2] sm:$0xff] %v152
      %165 = vst [vmem:[#allocation2 + $0x8] sm:$0xff] %v153
      %166 = vst [vmem:[#allocation2 + $0x10] sm:$0xff] %v154
      %167 = vst [vmem:[#allocation2 + $0x18] sm:$0xff] %v155
      %168 = vst [vmem:[#allocation2 + $0x20] sm:$0xff] %v156
      %169 = vst [vmem:[#allocation2 + $0x28] sm:$0xff] %v157
    $region61: #{ctnet_forward.1} parent=1 // pred_fallthru
      _
    %v170 = vld [vmem:[#allocation2] sm:$0xff]
    %v171 = vld [vmem:[#allocation2 + $0x8] sm:$0xff]
    %v172 = vld [vmem:[#allocation2 + $0x10] sm:$0xff]
    %v173 = vld [vmem:[#allocation2 + $0x18] sm:$0xff]
    %v174 = vld [vmem:[#allocation2 + $0x20] sm:$0xff]
    %v175 = vld [vmem:[#allocation2 + $0x28] sm:$0xff]
    %v176 = vld [vmem:[%s0] sm:$0xff]
    %v177 = vld [vmem:[%s0 + $0x8] sm:$0xff]
    %v178 = vld [vmem:[%s0 + $0x10] sm:$0xff]
    %v179 = vld [vmem:[%s0 + $0x18] sm:$0xff]
    %184 = vst [vmem:[#allocation1] ss:$2 sm:$0xff] %v176
    %s185 = scalar_lea.vmem [#allocation1], 16
    %186 = vst [vmem:[%s185] ss:$2 sm:$0xff] %v177
    %s187 = scalar_lea.vmem [#allocation1], 32
    %188 = vst [vmem:[%s187] ss:$2 sm:$0xff] %v178
    %s189 = scalar_lea.vmem [#allocation1], 48
    %190 = vst [vmem:[%s189] ss:$2 sm:$0xff] %v179
    %v191 = vld.sshfl [vmem:[#allocation1] sm:$0xff pattern:$0x75316420]
    %v192 = vld.sshfl [vmem:[#allocation1 + $0x8] sm:$0xff pattern:$0x75316420]
    %v193 = vld.sshfl [vmem:[#allocation1 + $0x10] sm:$0xff pattern:$0x75316420]
    %v194 = vld.sshfl [vmem:[#allocation1 + $0x18] sm:$0xff pattern:$0x75316420]
    %v195 = vld.sshfl [vmem:[#allocation1 + $0x20] sm:$0xff pattern:$0x75316420]
    %v196 = vld.sshfl [vmem:[#allocation1 + $0x28] sm:$0xff pattern:$0x75316420]
    %v197 = vld.sshfl [vmem:[#allocation1 + $0x30] sm:$0xff pattern:$0x75316420]
    %v198 = vld.sshfl [vmem:[#allocation1 + $0x38] sm:$0xff pattern:$0x75316420]
    %v207 = vpack.c.bf16 %v191, %v191
    %v208 = vpack.c.bf16 %v192, %v192
    %v209 = vpack.c.bf16 %v193, %v193
    %v210 = vpack.c.bf16 %v194, %v194
    %v211 = vpack.c.bf16 %v195, %v195
    %v212 = vpack.c.bf16 %v196, %v196
    %v213 = vpack.c.bf16 %v197, %v197
    %v214 = vpack.c.bf16 %v198, %v198
    %v215 = vld [vmem:[#allocation3] sm:$0xff]
    %v216 = vld [vmem:[#allocation3 + $0x8] sm:$0xff]
    %v217 = vld [vmem:[#allocation3 + $0x10] sm:$0xff]
    %v218 = vld [vmem:[#allocation3 + $0x18] sm:$0xff]
    %v219 = vld [vmem:[#allocation3 + $0x20] sm:$0xff]
    %v220 = vld [vmem:[#allocation3 + $0x28] sm:$0xff]
    %v221 = vld [vmem:[#allocation3 + $0x30] sm:$0xff]
    %v222 = vld [vmem:[#allocation3 + $0x38] sm:$0xff]
    %v223 = vld [vmem:[#allocation3 + $0x40] sm:$0xff]
    %v224 = vld [vmem:[#allocation3 + $0x48] sm:$0xff]
    %v225 = vld [vmem:[#allocation3 + $0x50] sm:$0xff]
    %v226 = vld [vmem:[#allocation3 + $0x58] sm:$0xff]
    %v227 = vld [vmem:[#allocation3 + $0x60] sm:$0xff]
    %v228 = vld [vmem:[#allocation3 + $0x68] sm:$0xff]
    %v229 = vld [vmem:[#allocation3 + $0x70] sm:$0xff]
    %v230 = vld [vmem:[#allocation3 + $0x78] sm:$0xff]
    %v231 = vld [vmem:[#allocation3 + $0x80] sm:$0xff]
    %v232 = vld [vmem:[#allocation3 + $0x88] sm:$0xff]
    %v233 = vld [vmem:[#allocation3 + $0x90] sm:$0xff]
    %v234 = vld [vmem:[#allocation3 + $0x98] sm:$0xff]
    %v235 = vld [vmem:[#allocation3 + $0xa0] sm:$0xff]
    %v236 = vld [vmem:[#allocation3 + $0xa8] sm:$0xff]
    %v237 = vld [vmem:[#allocation3 + $0xb0] sm:$0xff]
    %v238 = vld [vmem:[#allocation3 + $0xb8] sm:$0xff]
    %v239 = vld [vmem:[#allocation3 + $0xc0] sm:$0xff]
    %v240 = vld [vmem:[#allocation3 + $0xc8] sm:$0xff]
    %v241 = vld [vmem:[#allocation3 + $0xd0] sm:$0xff]
    %v242 = vld [vmem:[#allocation3 + $0xd8] sm:$0xff]
    %v243 = vld [vmem:[#allocation3 + $0xe0] sm:$0xff]
    %v244 = vld [vmem:[#allocation3 + $0xe8] sm:$0xff]
    %v245 = vld [vmem:[#allocation3 + $0xf0] sm:$0xff]
    %v246 = vld [vmem:[#allocation3 + $0xf8] sm:$0xff]
    %v247 = vld [vmem:[#allocation3 + $0x100] sm:$0xff]
    %v248 = vld [vmem:[#allocation3 + $0x108] sm:$0xff]
    %v249 = vld [vmem:[#allocation3 + $0x110] sm:$0xff]
    %v250 = vld [vmem:[#allocation3 + $0x118] sm:$0xff]
    %v251 = vld [vmem:[#allocation3 + $0x120] sm:$0xff]
    %v252 = vld [vmem:[#allocation3 + $0x128] sm:$0xff]
    %v253 = vld [vmem:[#allocation3 + $0x130] sm:$0xff]
    %v254 = vld [vmem:[#allocation3 + $0x138] sm:$0xff]
    %v255 = vld [vmem:[#allocation3 + $0x140] sm:$0xff]
    %v256 = vld [vmem:[#allocation3 + $0x148] sm:$0xff]
    %v257 = vld [vmem:[#allocation3 + $0x150] sm:$0xff]
    %v258 = vld [vmem:[#allocation3 + $0x158] sm:$0xff]
    %v259 = vld [vmem:[#allocation3 + $0x160] sm:$0xff]
    %v260 = vld [vmem:[#allocation3 + $0x168] sm:$0xff]
    %v261 = vld [vmem:[#allocation3 + $0x170] sm:$0xff]
    %v262 = vld [vmem:[#allocation3 + $0x178] sm:$0xff]
    %v263 = vld [vmem:[#allocation3 + $0x180] sm:$0xff]
    %v264 = vld [vmem:[#allocation3 + $0x188] sm:$0xff]
    %v265 = vld [vmem:[#allocation3 + $0x190] sm:$0xff]
    %v266 = vld [vmem:[#allocation3 + $0x198] sm:$0xff]
    %v267 = vld [vmem:[#allocation3 + $0x1a0] sm:$0xff]
    %v268 = vld [vmem:[#allocation3 + $0x1a8] sm:$0xff]
    %v269 = vld [vmem:[#allocation3 + $0x1b0] sm:$0xff]
    %v270 = vld [vmem:[#allocation3 + $0x1b8] sm:$0xff]
    %v271 = vld [vmem:[#allocation3 + $0x1c0] sm:$0xff]
    %v272 = vld [vmem:[#allocation3 + $0x1c8] sm:$0xff]
    %v273 = vld [vmem:[#allocation3 + $0x1d0] sm:$0xff]
    %v274 = vld [vmem:[#allocation3 + $0x1d8] sm:$0xff]
    %v275 = vld [vmem:[#allocation3 + $0x1e0] sm:$0xff]
    %v276 = vld [vmem:[#allocation3 + $0x1e8] sm:$0xff]
    %v277 = vld [vmem:[#allocation3 + $0x1f0] sm:$0xff]
    %v278 = vld [vmem:[#allocation3 + $0x1f8] sm:$0xff]
    %v279 = vld [vmem:[#allocation3 + $0x200] sm:$0xff]
    %v280 = vld [vmem:[#allocation3 + $0x208] sm:$0xff]
    %v281 = vld [vmem:[#allocation3 + $0x210] sm:$0xff]
    %v282 = vld [vmem:[#allocation3 + $0x218] sm:$0xff]
    %v283 = vld [vmem:[#allocation3 + $0x220] sm:$0xff]
    %v284 = vld [vmem:[#allocation3 + $0x228] sm:$0xff]
    %v285 = vld [vmem:[#allocation3 + $0x230] sm:$0xff]
    %v286 = vld [vmem:[#allocation3 + $0x238] sm:$0xff]
    %v287 = vld [vmem:[#allocation3 + $0x240] sm:$0xff]
    %v288 = vld [vmem:[#allocation3 + $0x248] sm:$0xff]
    %v289 = vld [vmem:[#allocation3 + $0x250] sm:$0xff]
    %v290 = vld [vmem:[#allocation3 + $0x258] sm:$0xff]
    %v291 = vld [vmem:[#allocation3 + $0x260] sm:$0xff]
    %v292 = vld [vmem:[#allocation3 + $0x268] sm:$0xff]
    %v293 = vld [vmem:[#allocation3 + $0x270] sm:$0xff]
    %v294 = vld [vmem:[#allocation3 + $0x278] sm:$0xff]
    %v295 = vld [vmem:[#allocation3 + $0x280] sm:$0xff]
    %v296 = vld [vmem:[#allocation3 + $0x288] sm:$0xff]
    %v297 = vld [vmem:[#allocation3 + $0x290] sm:$0xff]
    %v298 = vld [vmem:[#allocation3 + $0x298] sm:$0xff]
    %v299 = vld [vmem:[#allocation3 + $0x2a0] sm:$0xff]
    %v300 = vld [vmem:[#allocation3 + $0x2a8] sm:$0xff]
    %v301 = vld [vmem:[#allocation3 + $0x2b0] sm:$0xff]
    %v302 = vld [vmem:[#allocation3 + $0x2b8] sm:$0xff]
    %v303 = vld [vmem:[#allocation3 + $0x2c0] sm:$0xff]
    %v304 = vld [vmem:[#allocation3 + $0x2c8] sm:$0xff]
    %v305 = vld [vmem:[#allocation3 + $0x2d0] sm:$0xff]
    %v306 = vld [vmem:[#allocation3 + $0x2d8] sm:$0xff]
    %v307 = vld [vmem:[#allocation3 + $0x2e0] sm:$0xff]
    %v308 = vld [vmem:[#allocation3 + $0x2e8] sm:$0xff]
    %v309 = vld [vmem:[#allocation3 + $0x2f0] sm:$0xff]
    %v310 = vld [vmem:[#allocation3 + $0x2f8] sm:$0xff]
    %v311 = vld [vmem:[#allocation3 + $0x300] sm:$0xff]
    %v312 = vld [vmem:[#allocation3 + $0x308] sm:$0xff]
    %v313 = vld [vmem:[#allocation3 + $0x310] sm:$0xff]
    %v314 = vld [vmem:[#allocation3 + $0x318] sm:$0xff]
    %v315 = vld [vmem:[#allocation3 + $0x320] sm:$0xff]
    %v316 = vld [vmem:[#allocation3 + $0x328] sm:$0xff]
    %v317 = vld [vmem:[#allocation3 + $0x330] sm:$0xff]
    %v318 = vld [vmem:[#allocation3 + $0x338] sm:$0xff]
    %v319 = vld [vmem:[#allocation3 + $0x340] sm:$0xff]
    %v320 = vld [vmem:[#allocation3 + $0x348] sm:$0xff]
    %v321 = vld [vmem:[#allocation3 + $0x350] sm:$0xff]
    %v322 = vld [vmem:[#allocation3 + $0x358] sm:$0xff]
    %v323 = vld [vmem:[#allocation3 + $0x360] sm:$0xff]
    %v324 = vld [vmem:[#allocation3 + $0x368] sm:$0xff]
    %v325 = vld [vmem:[#allocation3 + $0x370] sm:$0xff]
    %v326 = vld [vmem:[#allocation3 + $0x378] sm:$0xff]
    %v327 = vld [vmem:[#allocation3 + $0x380] sm:$0xff]
    %v328 = vld [vmem:[#allocation3 + $0x388] sm:$0xff]
    %v329 = vld [vmem:[#allocation3 + $0x390] sm:$0xff]
    %v330 = vld [vmem:[#allocation3 + $0x398] sm:$0xff]
    %v331 = vld [vmem:[#allocation3 + $0x3a0] sm:$0xff]
    %v332 = vld [vmem:[#allocation3 + $0x3a8] sm:$0xff]
    %v333 = vld [vmem:[#allocation3 + $0x3b0] sm:$0xff]
    %v334 = vld [vmem:[#allocation3 + $0x3b8] sm:$0xff]
    %v335 = vld [vmem:[#allocation3 + $0x3c0] sm:$0xff]
    %v336 = vld [vmem:[#allocation3 + $0x3c8] sm:$0xff]
    %v337 = vld [vmem:[#allocation3 + $0x3d0] sm:$0xff]
    %v338 = vld [vmem:[#allocation3 + $0x3d8] sm:$0xff]
    %v339 = vld [vmem:[#allocation3 + $0x3e0] sm:$0xff]
    %v340 = vld [vmem:[#allocation3 + $0x3e8] sm:$0xff]
    %v341 = vld [vmem:[#allocation3 + $0x3f0] sm:$0xff]
    %v342 = vld [vmem:[#allocation3 + $0x3f8] sm:$0xff]
    %v343 = vld [vmem:[#allocation3 + $0x400] sm:$0xff]
    %v344 = vld [vmem:[#allocation3 + $0x408] sm:$0xff]
    %v345 = vld [vmem:[#allocation3 + $0x410] sm:$0xff]
    %v346 = vld [vmem:[#allocation3 + $0x418] sm:$0xff]
    %v347 = vld [vmem:[#allocation3 + $0x420] sm:$0xff]
    %v348 = vld [vmem:[#allocation3 + $0x428] sm:$0xff]
    %v349 = vld [vmem:[#allocation3 + $0x430] sm:$0xff]
    %v350 = vld [vmem:[#allocation3 + $0x438] sm:$0xff]
    %v351 = vld [vmem:[#allocation3 + $0x440] sm:$0xff]
    %v352 = vld [vmem:[#allocation3 + $0x448] sm:$0xff]
    %v353 = vld [vmem:[#allocation3 + $0x450] sm:$0xff]
    %v354 = vld [vmem:[#allocation3 + $0x458] sm:$0xff]
    %v355 = vld [vmem:[#allocation3 + $0x460] sm:$0xff]
    %v356 = vld [vmem:[#allocation3 + $0x468] sm:$0xff]
    %v357 = vld [vmem:[#allocation3 + $0x470] sm:$0xff]
    %v358 = vld [vmem:[#allocation3 + $0x478] sm:$0xff]
    %v359 = vld [vmem:[#allocation3 + $0x480] sm:$0xff]
    %v360 = vld [vmem:[#allocation3 + $0x488] sm:$0xff]
    %v361 = vld [vmem:[#allocation3 + $0x490] sm:$0xff]
    %v362 = vld [vmem:[#allocation3 + $0x498] sm:$0xff]
    %v363 = vld [vmem:[#allocation3 + $0x4a0] sm:$0xff]
    %v364 = vld [vmem:[#allocation3 + $0x4a8] sm:$0xff]
    %v365 = vld [vmem:[#allocation3 + $0x4b0] sm:$0xff]
    %v366 = vld [vmem:[#allocation3 + $0x4b8] sm:$0xff]
    %v367 = vld [vmem:[#allocation3 + $0x4c0] sm:$0xff]
    %v368 = vld [vmem:[#allocation3 + $0x4c8] sm:$0xff]
    %v369 = vld [vmem:[#allocation3 + $0x4d0] sm:$0xff]
    %v370 = vld [vmem:[#allocation3 + $0x4d8] sm:$0xff]
    %v371 = vld [vmem:[#allocation3 + $0x4e0] sm:$0xff]
    %v372 = vld [vmem:[#allocation3 + $0x4e8] sm:$0xff]
    %v373 = vld [vmem:[#allocation3 + $0x4f0] sm:$0xff]
    %v374 = vld [vmem:[#allocation3 + $0x4f8] sm:$0xff]
    %v375 = vld [vmem:[#allocation3 + $0x500] sm:$0xff]
    %v376 = vld [vmem:[#allocation3 + $0x508] sm:$0xff]
    %v377 = vld [vmem:[#allocation3 + $0x510] sm:$0xff]
    %v378 = vld [vmem:[#allocation3 + $0x518] sm:$0xff]
    %v379 = vld [vmem:[#allocation3 + $0x520] sm:$0xff]
    %v380 = vld [vmem:[#allocation3 + $0x528] sm:$0xff]
    %v381 = vld [vmem:[#allocation3 + $0x530] sm:$0xff]
    %v382 = vld [vmem:[#allocation3 + $0x538] sm:$0xff]
    %v383 = vld [vmem:[#allocation3 + $0x540] sm:$0xff]
    %v384 = vld [vmem:[#allocation3 + $0x548] sm:$0xff]
    %v385 = vld [vmem:[#allocation3 + $0x550] sm:$0xff]
    %v386 = vld [vmem:[#allocation3 + $0x558] sm:$0xff]
    %v387 = vld [vmem:[#allocation3 + $0x560] sm:$0xff]
    %v388 = vld [vmem:[#allocation3 + $0x568] sm:$0xff]
    %v389 = vld [vmem:[#allocation3 + $0x570] sm:$0xff]
    %v390 = vld [vmem:[#allocation3 + $0x578] sm:$0xff]
    %v391 = vld [vmem:[#allocation3 + $0x580] sm:$0xff]
    %v392 = vld [vmem:[#allocation3 + $0x588] sm:$0xff]
    %v393 = vld [vmem:[#allocation3 + $0x590] sm:$0xff]
    %v394 = vld [vmem:[#allocation3 + $0x598] sm:$0xff]
    %v395 = vld [vmem:[#allocation3 + $0x5a0] sm:$0xff]
    %v396 = vld [vmem:[#allocation3 + $0x5a8] sm:$0xff]
    %v397 = vld [vmem:[#allocation3 + $0x5b0] sm:$0xff]
    %v398 = vld [vmem:[#allocation3 + $0x5b8] sm:$0xff]
    %v399 = vld [vmem:[#allocation3 + $0x5c0] sm:$0xff]
    %v400 = vld [vmem:[#allocation3 + $0x5c8] sm:$0xff]
    %v401 = vld [vmem:[#allocation3 + $0x5d0] sm:$0xff]
    %v402 = vld [vmem:[#allocation3 + $0x5d8] sm:$0xff]
    %v403 = vld [vmem:[#allocation3 + $0x5e0] sm:$0xff]
    %v404 = vld [vmem:[#allocation3 + $0x5e8] sm:$0xff]
    %v405 = vld [vmem:[#allocation3 + $0x5f0] sm:$0xff]
    %v406 = vld [vmem:[#allocation3 + $0x5f8] sm:$0xff]
    %v407 = vld [vmem:[#allocation3 + $0x600] sm:$0xff]
    %v408 = vld [vmem:[#allocation3 + $0x608] sm:$0xff]
    %v409 = vld [vmem:[#allocation3 + $0x610] sm:$0xff]
    %v410 = vld [vmem:[#allocation3 + $0x618] sm:$0xff]
    %v411 = vld [vmem:[#allocation3 + $0x620] sm:$0xff]
    %v412 = vld [vmem:[#allocation3 + $0x628] sm:$0xff]
    %v413 = vld [vmem:[#allocation3 + $0x630] sm:$0xff]
    %v414 = vld [vmem:[#allocation3 + $0x638] sm:$0xff]
    %v415 = vld [vmem:[#allocation3 + $0x640] sm:$0xff]
    %v416 = vld [vmem:[#allocation3 + $0x648] sm:$0xff]
    %v417 = vld [vmem:[#allocation3 + $0x650] sm:$0xff]
    %v418 = vld [vmem:[#allocation3 + $0x658] sm:$0xff]
    %v419 = vld [vmem:[#allocation3 + $0x660] sm:$0xff]
    %v420 = vld [vmem:[#allocation3 + $0x668] sm:$0xff]
    %v421 = vld [vmem:[#allocation3 + $0x670] sm:$0xff]
    %v422 = vld [vmem:[#allocation3 + $0x678] sm:$0xff]
    %v423 = vld [vmem:[#allocation3 + $0x680] sm:$0xff]
    %v424 = vld [vmem:[#allocation3 + $0x688] sm:$0xff]
    %v425 = vld [vmem:[#allocation3 + $0x690] sm:$0xff]
    %v426 = vld [vmem:[#allocation3 + $0x698] sm:$0xff]
    %v427 = vld [vmem:[#allocation3 + $0x6a0] sm:$0xff]
    %v428 = vld [vmem:[#allocation3 + $0x6a8] sm:$0xff]
    %v429 = vld [vmem:[#allocation3 + $0x6b0] sm:$0xff]
    %v430 = vld [vmem:[#allocation3 + $0x6b8] sm:$0xff]
    %v431 = vld [vmem:[#allocation3 + $0x6c0] sm:$0xff]
    %v432 = vld [vmem:[#allocation3 + $0x6c8] sm:$0xff]
    %v433 = vld [vmem:[#allocation3 + $0x6d0] sm:$0xff]
    %v434 = vld [vmem:[#allocation3 + $0x6d8] sm:$0xff]
    %v435 = vld [vmem:[#allocation3 + $0x6e0] sm:$0xff]
    %v436 = vld [vmem:[#allocation3 + $0x6e8] sm:$0xff]
    %v437 = vld [vmem:[#allocation3 + $0x6f0] sm:$0xff]
    %v438 = vld [vmem:[#allocation3 + $0x6f8] sm:$0xff]
    %v439 = vld [vmem:[#allocation3 + $0x700] sm:$0xff]
    %v440 = vld [vmem:[#allocation3 + $0x708] sm:$0xff]
    %v441 = vld [vmem:[#allocation3 + $0x710] sm:$0xff]
    %v442 = vld [vmem:[#allocation3 + $0x718] sm:$0xff]
    %v443 = vld [vmem:[#allocation3 + $0x720] sm:$0xff]
    %v444 = vld [vmem:[#allocation3 + $0x728] sm:$0xff]
    %v445 = vld [vmem:[#allocation3 + $0x730] sm:$0xff]
    %v446 = vld [vmem:[#allocation3 + $0x738] sm:$0xff]
    %v447 = vld [vmem:[#allocation3 + $0x740] sm:$0xff]
    %v448 = vld [vmem:[#allocation3 + $0x748] sm:$0xff]
    %v449 = vld [vmem:[#allocation3 + $0x750] sm:$0xff]
    %v450 = vld [vmem:[#allocation3 + $0x758] sm:$0xff]
    %v451 = vld [vmem:[#allocation3 + $0x760] sm:$0xff]
    %v452 = vld [vmem:[#allocation3 + $0x768] sm:$0xff]
    %v453 = vld [vmem:[#allocation3 + $0x770] sm:$0xff]
    %v454 = vld [vmem:[#allocation3 + $0x778] sm:$0xff]
    %v455 = vld [vmem:[#allocation3 + $0x780] sm:$0xff]
    %v456 = vld [vmem:[#allocation3 + $0x788] sm:$0xff]
    %v457 = vld [vmem:[#allocation3 + $0x790] sm:$0xff]
    %v458 = vld [vmem:[#allocation3 + $0x798] sm:$0xff]
    %v459 = vld [vmem:[#allocation3 + $0x7a0] sm:$0xff]
    %v460 = vld [vmem:[#allocation3 + $0x7a8] sm:$0xff]
    %v461 = vld [vmem:[#allocation3 + $0x7b0] sm:$0xff]
    %v462 = vld [vmem:[#allocation3 + $0x7b8] sm:$0xff]
    %v463 = vld [vmem:[#allocation3 + $0x7c0] sm:$0xff]
    %v464 = vld [vmem:[#allocation3 + $0x7c8] sm:$0xff]
    %v465 = vld [vmem:[#allocation3 + $0x7d0] sm:$0xff]
    %v466 = vld [vmem:[#allocation3 + $0x7d8] sm:$0xff]
    %v467 = vld [vmem:[#allocation3 + $0x7e0] sm:$0xff]
    %v468 = vld [vmem:[#allocation3 + $0x7e8] sm:$0xff]
    %v469 = vld [vmem:[#allocation3 + $0x7f0] sm:$0xff]
    %v470 = vld [vmem:[#allocation3 + $0x7f8] sm:$0xff]
    %v471 = vld [vmem:[#allocation3 + $0x800] sm:$0xff]
    %v472 = vld [vmem:[#allocation3 + $0x808] sm:$0xff]
    %v473 = vld [vmem:[#allocation3 + $0x810] sm:$0xff]
    %v474 = vld [vmem:[#allocation3 + $0x818] sm:$0xff]
    %v475 = vld [vmem:[#allocation3 + $0x820] sm:$0xff]
    %v476 = vld [vmem:[#allocation3 + $0x828] sm:$0xff]
    %v477 = vld [vmem:[#allocation3 + $0x830] sm:$0xff]
    %v478 = vld [vmem:[#allocation3 + $0x838] sm:$0xff]
    %v479 = vld [vmem:[#allocation3 + $0x840] sm:$0xff]
    %v480 = vld [vmem:[#allocation3 + $0x848] sm:$0xff]
    %v481 = vld [vmem:[#allocation3 + $0x850] sm:$0xff]
    %v482 = vld [vmem:[#allocation3 + $0x858] sm:$0xff]
    %v483 = vld [vmem:[#allocation3 + $0x860] sm:$0xff]
    %v484 = vld [vmem:[#allocation3 + $0x868] sm:$0xff]
    %v485 = vld [vmem:[#allocation3 + $0x870] sm:$0xff]
    %v486 = vld [vmem:[#allocation3 + $0x878] sm:$0xff]
    %v487 = vld [vmem:[#allocation3 + $0x880] sm:$0xff]
    %v488 = vld [vmem:[#allocation3 + $0x888] sm:$0xff]
    %v489 = vld [vmem:[#allocation3 + $0x890] sm:$0xff]
    %v490 = vld [vmem:[#allocation3 + $0x898] sm:$0xff]
    %v491 = vld [vmem:[#allocation3 + $0x8a0] sm:$0xff]
    %v492 = vld [vmem:[#allocation3 + $0x8a8] sm:$0xff]
    %v493 = vld [vmem:[#allocation3 + $0x8b0] sm:$0xff]
    %v494 = vld [vmem:[#allocation3 + $0x8b8] sm:$0xff]
    %v495 = vld [vmem:[#allocation3 + $0x8c0] sm:$0xff]
    %v496 = vld [vmem:[#allocation3 + $0x8c8] sm:$0xff]
    %v497 = vld [vmem:[#allocation3 + $0x8d0] sm:$0xff]
    %v498 = vld [vmem:[#allocation3 + $0x8d8] sm:$0xff]
    %v499 = vld [vmem:[#allocation3 + $0x8e0] sm:$0xff]
    %v500 = vld [vmem:[#allocation3 + $0x8e8] sm:$0xff]
    %v501 = vld [vmem:[#allocation3 + $0x8f0] sm:$0xff]
    %v502 = vld [vmem:[#allocation3 + $0x8f8] sm:$0xff]
    %v503 = vld [vmem:[#allocation3 + $0x900] sm:$0xff]
    %v504 = vld [vmem:[#allocation3 + $0x908] sm:$0xff]
    %v505 = vld [vmem:[#allocation3 + $0x910] sm:$0xff]
    %v506 = vld [vmem:[#allocation3 + $0x918] sm:$0xff]
    %v507 = vld [vmem:[#allocation3 + $0x920] sm:$0xff]
    %v508 = vld [vmem:[#allocation3 + $0x928] sm:$0xff]
    %v509 = vld [vmem:[#allocation3 + $0x930] sm:$0xff]
    %v510 = vld [vmem:[#allocation3 + $0x938] sm:$0xff]
    %v511 = vld [vmem:[#allocation3 + $0x940] sm:$0xff]
    %v512 = vld [vmem:[#allocation3 + $0x948] sm:$0xff]
    %v513 = vld [vmem:[#allocation3 + $0x950] sm:$0xff]
    %v514 = vld [vmem:[#allocation3 + $0x958] sm:$0xff]
    %v515 = vld [vmem:[#allocation3 + $0x960] sm:$0xff]
    %v516 = vld [vmem:[#allocation3 + $0x968] sm:$0xff]
    %v517 = vld [vmem:[#allocation3 + $0x970] sm:$0xff]
    %v518 = vld [vmem:[#allocation3 + $0x978] sm:$0xff]
    %v519 = vld [vmem:[#allocation3 + $0x980] sm:$0xff]
    %v520 = vld [vmem:[#allocation3 + $0x988] sm:$0xff]
    %v521 = vld [vmem:[#allocation3 + $0x990] sm:$0xff]
    %v522 = vld [vmem:[#allocation3 + $0x998] sm:$0xff]
    %v523 = vld [vmem:[#allocation3 + $0x9a0] sm:$0xff]
    %v524 = vld [vmem:[#allocation3 + $0x9a8] sm:$0xff]
    %v525 = vld [vmem:[#allocation3 + $0x9b0] sm:$0xff]
    %v526 = vld [vmem:[#allocation3 + $0x9b8] sm:$0xff]
    %v527 = vld [vmem:[#allocation3 + $0x9c0] sm:$0xff]
    %v528 = vld [vmem:[#allocation3 + $0x9c8] sm:$0xff]
    %v529 = vld [vmem:[#allocation3 + $0x9d0] sm:$0xff]
    %v530 = vld [vmem:[#allocation3 + $0x9d8] sm:$0xff]
    %v531 = vld [vmem:[#allocation3 + $0x9e0] sm:$0xff]
    %v532 = vld [vmem:[#allocation3 + $0x9e8] sm:$0xff]
    %v533 = vld [vmem:[#allocation3 + $0x9f0] sm:$0xff]
    %v534 = vld [vmem:[#allocation3 + $0x9f8] sm:$0xff]
    %v535 = vld [vmem:[#allocation3 + $0xa00] sm:$0xff]
    %v536 = vld [vmem:[#allocation3 + $0xa08] sm:$0xff]
    %v537 = vld [vmem:[#allocation3 + $0xa10] sm:$0xff]
    %v538 = vld [vmem:[#allocation3 + $0xa18] sm:$0xff]
    %v539 = vld [vmem:[#allocation3 + $0xa20] sm:$0xff]
    %v540 = vld [vmem:[#allocation3 + $0xa28] sm:$0xff]
    %v541 = vld [vmem:[#allocation3 + $0xa30] sm:$0xff]
    %v542 = vld [vmem:[#allocation3 + $0xa38] sm:$0xff]
    %v543 = vld [vmem:[#allocation3 + $0xa40] sm:$0xff]
    %v544 = vld [vmem:[#allocation3 + $0xa48] sm:$0xff]
    %v545 = vld [vmem:[#allocation3 + $0xa50] sm:$0xff]
    %v546 = vld [vmem:[#allocation3 + $0xa58] sm:$0xff]
    %v547 = vld [vmem:[#allocation3 + $0xa60] sm:$0xff]
    %v548 = vld [vmem:[#allocation3 + $0xa68] sm:$0xff]
    %v549 = vld [vmem:[#allocation3 + $0xa70] sm:$0xff]
    %v550 = vld [vmem:[#allocation3 + $0xa78] sm:$0xff]
    %v551 = vld [vmem:[#allocation3 + $0xa80] sm:$0xff]
    %v552 = vld [vmem:[#allocation3 + $0xa88] sm:$0xff]
    %v553 = vld [vmem:[#allocation3 + $0xa90] sm:$0xff]
    %v554 = vld [vmem:[#allocation3 + $0xa98] sm:$0xff]
    %v555 = vld [vmem:[#allocation3 + $0xaa0] sm:$0xff]
    %v556 = vld [vmem:[#allocation3 + $0xaa8] sm:$0xff]
    %v557 = vld [vmem:[#allocation3 + $0xab0] sm:$0xff]
    %v558 = vld [vmem:[#allocation3 + $0xab8] sm:$0xff]
    %v559 = vld [vmem:[#allocation3 + $0xac0] sm:$0xff]
    %v560 = vld [vmem:[#allocation3 + $0xac8] sm:$0xff]
    %v561 = vld [vmem:[#allocation3 + $0xad0] sm:$0xff]
    %v562 = vld [vmem:[#allocation3 + $0xad8] sm:$0xff]
    %v563 = vld [vmem:[#allocation3 + $0xae0] sm:$0xff]
    %v564 = vld [vmem:[#allocation3 + $0xae8] sm:$0xff]
    %v565 = vld [vmem:[#allocation3 + $0xaf0] sm:$0xff]
    %v566 = vld [vmem:[#allocation3 + $0xaf8] sm:$0xff]
    %v567 = vld [vmem:[#allocation3 + $0xb00] sm:$0xff]
    %v568 = vld [vmem:[#allocation3 + $0xb08] sm:$0xff]
    %v569 = vld [vmem:[#allocation3 + $0xb10] sm:$0xff]
    %v570 = vld [vmem:[#allocation3 + $0xb18] sm:$0xff]
    %v571 = vld [vmem:[#allocation3 + $0xb20] sm:$0xff]
    %v572 = vld [vmem:[#allocation3 + $0xb28] sm:$0xff]
    %v573 = vld [vmem:[#allocation3 + $0xb30] sm:$0xff]
    %v574 = vld [vmem:[#allocation3 + $0xb38] sm:$0xff]
    %v575 = vld [vmem:[#allocation3 + $0xb40] sm:$0xff]
    %v576 = vld [vmem:[#allocation3 + $0xb48] sm:$0xff]
    %v577 = vld [vmem:[#allocation3 + $0xb50] sm:$0xff]
    %v578 = vld [vmem:[#allocation3 + $0xb58] sm:$0xff]
    %v579 = vld [vmem:[#allocation3 + $0xb60] sm:$0xff]
    %v580 = vld [vmem:[#allocation3 + $0xb68] sm:$0xff]
    %v581 = vld [vmem:[#allocation3 + $0xb70] sm:$0xff]
    %v582 = vld [vmem:[#allocation3 + $0xb78] sm:$0xff]
    %v583 = vld [vmem:[#allocation3 + $0xb80] sm:$0xff]
    %v584 = vld [vmem:[#allocation3 + $0xb88] sm:$0xff]
    %v585 = vld [vmem:[#allocation3 + $0xb90] sm:$0xff]
    %v586 = vld [vmem:[#allocation3 + $0xb98] sm:$0xff]
    %v587 = vld [vmem:[#allocation3 + $0xba0] sm:$0xff]
    %v588 = vld [vmem:[#allocation3 + $0xba8] sm:$0xff]
    %v589 = vld [vmem:[#allocation3 + $0xbb0] sm:$0xff]
    %v590 = vld [vmem:[#allocation3 + $0xbb8] sm:$0xff]
    %v591 = vld [vmem:[#allocation3 + $0xbc0] sm:$0xff]
    %v592 = vld [vmem:[#allocation3 + $0xbc8] sm:$0xff]
    %v593 = vld [vmem:[#allocation3 + $0xbd0] sm:$0xff]
    %v594 = vld [vmem:[#allocation3 + $0xbd8] sm:$0xff]
    %v595 = vld [vmem:[#allocation3 + $0xbe0] sm:$0xff]
    %v596 = vld [vmem:[#allocation3 + $0xbe8] sm:$0xff]
    %v597 = vld [vmem:[#allocation3 + $0xbf0] sm:$0xff]
    %v598 = vld [vmem:[#allocation3 + $0xbf8] sm:$0xff]
    %v599 = vld [vmem:[#allocation3 + $0xc00] sm:$0xff]
    %v600 = vld [vmem:[#allocation3 + $0xc08] sm:$0xff]
    %v601 = vld [vmem:[#allocation3 + $0xc10] sm:$0xff]
    %v602 = vld [vmem:[#allocation3 + $0xc18] sm:$0xff]
    %v603 = vld [vmem:[#allocation3 + $0xc20] sm:$0xff]
    %v604 = vld [vmem:[#allocation3 + $0xc28] sm:$0xff]
    %v605 = vld [vmem:[#allocation3 + $0xc30] sm:$0xff]
    %v606 = vld [vmem:[#allocation3 + $0xc38] sm:$0xff]
    %v607 = vld [vmem:[#allocation3 + $0xc40] sm:$0xff]
    %v608 = vld [vmem:[#allocation3 + $0xc48] sm:$0xff]
    %v609 = vld [vmem:[#allocation3 + $0xc50] sm:$0xff]
    %v610 = vld [vmem:[#allocation3 + $0xc58] sm:$0xff]
    %v611 = vld [vmem:[#allocation3 + $0xc60] sm:$0xff]
    %v612 = vld [vmem:[#allocation3 + $0xc68] sm:$0xff]
    %v613 = vld [vmem:[#allocation3 + $0xc70] sm:$0xff]
    %v614 = vld [vmem:[#allocation3 + $0xc78] sm:$0xff]
    %v615 = vld [vmem:[#allocation3 + $0xc80] sm:$0xff]
    %v616 = vld [vmem:[#allocation3 + $0xc88] sm:$0xff]
    %v617 = vld [vmem:[#allocation3 + $0xc90] sm:$0xff]
    %v618 = vld [vmem:[#allocation3 + $0xc98] sm:$0xff]
    %v619 = vld [vmem:[#allocation3 + $0xca0] sm:$0xff]
    %v620 = vld [vmem:[#allocation3 + $0xca8] sm:$0xff]
    %v621 = vld [vmem:[#allocation3 + $0xcb0] sm:$0xff]
    %v622 = vld [vmem:[#allocation3 + $0xcb8] sm:$0xff]
    %v623 = vld [vmem:[#allocation3 + $0xcc0] sm:$0xff]
    %v624 = vld [vmem:[#allocation3 + $0xcc8] sm:$0xff]
    %v625 = vld [vmem:[#allocation3 + $0xcd0] sm:$0xff]
    %v626 = vld [vmem:[#allocation3 + $0xcd8] sm:$0xff]
    %v627 = vld [vmem:[#allocation3 + $0xce0] sm:$0xff]
    %v628 = vld [vmem:[#allocation3 + $0xce8] sm:$0xff]
    %v629 = vld [vmem:[#allocation3 + $0xcf0] sm:$0xff]
    %v630 = vld [vmem:[#allocation3 + $0xcf8] sm:$0xff]
    %v631 = vld [vmem:[#allocation3 + $0xd00] sm:$0xff]
    %v632 = vld [vmem:[#allocation3 + $0xd08] sm:$0xff]
    %v633 = vld [vmem:[#allocation3 + $0xd10] sm:$0xff]
    %v634 = vld [vmem:[#allocation3 + $0xd18] sm:$0xff]
    %v635 = vld [vmem:[#allocation3 + $0xd20] sm:$0xff]
    %v636 = vld [vmem:[#allocation3 + $0xd28] sm:$0xff]
    %v637 = vld [vmem:[#allocation3 + $0xd30] sm:$0xff]
    %v638 = vld [vmem:[#allocation3 + $0xd38] sm:$0xff]
    %v639 = vld [vmem:[#allocation3 + $0xd40] sm:$0xff]
    %v640 = vld [vmem:[#allocation3 + $0xd48] sm:$0xff]
    %v641 = vld [vmem:[#allocation3 + $0xd50] sm:$0xff]
    %v642 = vld [vmem:[#allocation3 + $0xd58] sm:$0xff]
    %v643 = vld [vmem:[#allocation3 + $0xd60] sm:$0xff]
    %v644 = vld [vmem:[#allocation3 + $0xd68] sm:$0xff]
    %v645 = vld [vmem:[#allocation3 + $0xd70] sm:$0xff]
    %v646 = vld [vmem:[#allocation3 + $0xd78] sm:$0xff]
    %v647 = vld [vmem:[#allocation3 + $0xd80] sm:$0xff]
    %v648 = vld [vmem:[#allocation3 + $0xd88] sm:$0xff]
    %v649 = vld [vmem:[#allocation3 + $0xd90] sm:$0xff]
    %v650 = vld [vmem:[#allocation3 + $0xd98] sm:$0xff]
    %v651 = vld [vmem:[#allocation3 + $0xda0] sm:$0xff]
    %v652 = vld [vmem:[#allocation3 + $0xda8] sm:$0xff]
    %v653 = vld [vmem:[#allocation3 + $0xdb0] sm:$0xff]
    %v654 = vld [vmem:[#allocation3 + $0xdb8] sm:$0xff]
    %v655 = vld [vmem:[#allocation3 + $0xdc0] sm:$0xff]
    %v656 = vld [vmem:[#allocation3 + $0xdc8] sm:$0xff]
    %v657 = vld [vmem:[#allocation3 + $0xdd0] sm:$0xff]
    %v658 = vld [vmem:[#allocation3 + $0xdd8] sm:$0xff]
    %v659 = vld [vmem:[#allocation3 + $0xde0] sm:$0xff]
    %v660 = vld [vmem:[#allocation3 + $0xde8] sm:$0xff]
    %v661 = vld [vmem:[#allocation3 + $0xdf0] sm:$0xff]
    %v662 = vld [vmem:[#allocation3 + $0xdf8] sm:$0xff]
    %v663 = vld [vmem:[#allocation3 + $0xe00] sm:$0xff]
    %v664 = vld [vmem:[#allocation3 + $0xe08] sm:$0xff]
    %v665 = vld [vmem:[#allocation3 + $0xe10] sm:$0xff]
    %v666 = vld [vmem:[#allocation3 + $0xe18] sm:$0xff]
    %v667 = vld [vmem:[#allocation3 + $0xe20] sm:$0xff]
    %v668 = vld [vmem:[#allocation3 + $0xe28] sm:$0xff]
    %v669 = vld [vmem:[#allocation3 + $0xe30] sm:$0xff]
    %v670 = vld [vmem:[#allocation3 + $0xe38] sm:$0xff]
    %v671 = vld [vmem:[#allocation3 + $0xe40] sm:$0xff]
    %v672 = vld [vmem:[#allocation3 + $0xe48] sm:$0xff]
    %v673 = vld [vmem:[#allocation3 + $0xe50] sm:$0xff]
    %v674 = vld [vmem:[#allocation3 + $0xe58] sm:$0xff]
    %v675 = vld [vmem:[#allocation3 + $0xe60] sm:$0xff]
    %v676 = vld [vmem:[#allocation3 + $0xe68] sm:$0xff]
    %v677 = vld [vmem:[#allocation3 + $0xe70] sm:$0xff]
    %v678 = vld [vmem:[#allocation3 + $0xe78] sm:$0xff]
    %v679 = vld [vmem:[#allocation3 + $0xe80] sm:$0xff]
    %v680 = vld [vmem:[#allocation3 + $0xe88] sm:$0xff]
    %v681 = vld [vmem:[#allocation3 + $0xe90] sm:$0xff]
    %v682 = vld [vmem:[#allocation3 + $0xe98] sm:$0xff]
    %v683 = vld [vmem:[#allocation3 + $0xea0] sm:$0xff]
    %v684 = vld [vmem:[#allocation3 + $0xea8] sm:$0xff]
    %v685 = vld [vmem:[#allocation3 + $0xeb0] sm:$0xff]
    %v686 = vld [vmem:[#allocation3 + $0xeb8] sm:$0xff]
    %v687 = vld [vmem:[#allocation3 + $0xec0] sm:$0xff]
    %v688 = vld [vmem:[#allocation3 + $0xec8] sm:$0xff]
    %v689 = vld [vmem:[#allocation3 + $0xed0] sm:$0xff]
    %v690 = vld [vmem:[#allocation3 + $0xed8] sm:$0xff]
    %v691 = vld [vmem:[#allocation3 + $0xee0] sm:$0xff]
    %v692 = vld [vmem:[#allocation3 + $0xee8] sm:$0xff]
    %v693 = vld [vmem:[#allocation3 + $0xef0] sm:$0xff]
    %v694 = vld [vmem:[#allocation3 + $0xef8] sm:$0xff]
    %v695 = vld [vmem:[#allocation3 + $0xf00] sm:$0xff]
    %v696 = vld [vmem:[#allocation3 + $0xf08] sm:$0xff]
    %v697 = vld [vmem:[#allocation3 + $0xf10] sm:$0xff]
    %v698 = vld [vmem:[#allocation3 + $0xf18] sm:$0xff]
    %v699 = vld [vmem:[#allocation3 + $0xf20] sm:$0xff]
    %v700 = vld [vmem:[#allocation3 + $0xf28] sm:$0xff]
    %v701 = vld [vmem:[#allocation3 + $0xf30] sm:$0xff]
    %v702 = vld [vmem:[#allocation3 + $0xf38] sm:$0xff]
    %v703 = vld [vmem:[#allocation3 + $0xf40] sm:$0xff]
    %v704 = vld [vmem:[#allocation3 + $0xf48] sm:$0xff]
    %v705 = vld [vmem:[#allocation3 + $0xf50] sm:$0xff]
    %v706 = vld [vmem:[#allocation3 + $0xf58] sm:$0xff]
    %v707 = vld [vmem:[#allocation3 + $0xf60] sm:$0xff]
    %v708 = vld [vmem:[#allocation3 + $0xf68] sm:$0xff]
    %v709 = vld [vmem:[#allocation3 + $0xf70] sm:$0xff]
    %v710 = vld [vmem:[#allocation3 + $0xf78] sm:$0xff]
    %v711 = vld [vmem:[#allocation3 + $0xf80] sm:$0xff]
    %v712 = vld [vmem:[#allocation3 + $0xf88] sm:$0xff]
    %v713 = vld [vmem:[#allocation3 + $0xf90] sm:$0xff]
    %v714 = vld [vmem:[#allocation3 + $0xf98] sm:$0xff]
    %v715 = vld [vmem:[#allocation3 + $0xfa0] sm:$0xff]
    %v716 = vld [vmem:[#allocation3 + $0xfa8] sm:$0xff]
    %v717 = vld [vmem:[#allocation3 + $0xfb0] sm:$0xff]
    %v718 = vld [vmem:[#allocation3 + $0xfb8] sm:$0xff]
    %v719 = vld [vmem:[#allocation3 + $0xfc0] sm:$0xff]
    %v720 = vld [vmem:[#allocation3 + $0xfc8] sm:$0xff]
    %v721 = vld [vmem:[#allocation3 + $0xfd0] sm:$0xff]
    %v722 = vld [vmem:[#allocation3 + $0xfd8] sm:$0xff]
    %v723 = vld [vmem:[#allocation3 + $0xfe0] sm:$0xff]
    %v724 = vld [vmem:[#allocation3 + $0xfe8] sm:$0xff]
    %v725 = vld [vmem:[#allocation3 + $0xff0] sm:$0xff]
    %v726 = vld [vmem:[#allocation3 + $0xff8] sm:$0xff]
    %v727 = vld [vmem:[#allocation3 + $0x1000] sm:$0xff]
    %v728 = vld [vmem:[#allocation3 + $0x1008] sm:$0xff]
    %v729 = vld [vmem:[#allocation3 + $0x1010] sm:$0xff]
    %v730 = vld [vmem:[#allocation3 + $0x1018] sm:$0xff]
    %v731 = vld [vmem:[#allocation3 + $0x1020] sm:$0xff]
    %v732 = vld [vmem:[#allocation3 + $0x1028] sm:$0xff]
    %v733 = vld [vmem:[#allocation3 + $0x1030] sm:$0xff]
    %v734 = vld [vmem:[#allocation3 + $0x1038] sm:$0xff]
    %v735 = vld [vmem:[#allocation3 + $0x1040] sm:$0xff]
    %v736 = vld [vmem:[#allocation3 + $0x1048] sm:$0xff]
    %v737 = vld [vmem:[#allocation3 + $0x1050] sm:$0xff]
    %v738 = vld [vmem:[#allocation3 + $0x1058] sm:$0xff]
    %v739 = vld [vmem:[#allocation3 + $0x1060] sm:$0xff]
    %v740 = vld [vmem:[#allocation3 + $0x1068] sm:$0xff]
    %v741 = vld [vmem:[#allocation3 + $0x1070] sm:$0xff]
    %v742 = vld [vmem:[#allocation3 + $0x1078] sm:$0xff]
    %v743 = vld [vmem:[#allocation3 + $0x1080] sm:$0xff]
    %v744 = vld [vmem:[#allocation3 + $0x1088] sm:$0xff]
    %v745 = vld [vmem:[#allocation3 + $0x1090] sm:$0xff]
    %v746 = vld [vmem:[#allocation3 + $0x1098] sm:$0xff]
    %v747 = vld [vmem:[#allocation3 + $0x10a0] sm:$0xff]
    %v748 = vld [vmem:[#allocation3 + $0x10a8] sm:$0xff]
    %v749 = vld [vmem:[#allocation3 + $0x10b0] sm:$0xff]
    %v750 = vld [vmem:[#allocation3 + $0x10b8] sm:$0xff]
    %v751 = vld [vmem:[#allocation3 + $0x10c0] sm:$0xff]
    %v752 = vld [vmem:[#allocation3 + $0x10c8] sm:$0xff]
    %v753 = vld [vmem:[#allocation3 + $0x10d0] sm:$0xff]
    %v754 = vld [vmem:[#allocation3 + $0x10d8] sm:$0xff]
    %v755 = vld [vmem:[#allocation3 + $0x10e0] sm:$0xff]
    %v756 = vld [vmem:[#allocation3 + $0x10e8] sm:$0xff]
    %v757 = vld [vmem:[#allocation3 + $0x10f0] sm:$0xff]
    %v758 = vld [vmem:[#allocation3 + $0x10f8] sm:$0xff]
    %v759 = vld [vmem:[#allocation3 + $0x1100] sm:$0xff]
    %v760 = vld [vmem:[#allocation3 + $0x1108] sm:$0xff]
    %v761 = vld [vmem:[#allocation3 + $0x1110] sm:$0xff]
    %v762 = vld [vmem:[#allocation3 + $0x1118] sm:$0xff]
    %v763 = vld [vmem:[#allocation3 + $0x1120] sm:$0xff]
    %v764 = vld [vmem:[#allocation3 + $0x1128] sm:$0xff]
    %v765 = vld [vmem:[#allocation3 + $0x1130] sm:$0xff]
    %v766 = vld [vmem:[#allocation3 + $0x1138] sm:$0xff]
    %v767 = vld [vmem:[#allocation3 + $0x1140] sm:$0xff]
    %v768 = vld [vmem:[#allocation3 + $0x1148] sm:$0xff]
    %v769 = vld [vmem:[#allocation3 + $0x1150] sm:$0xff]
    %v770 = vld [vmem:[#allocation3 + $0x1158] sm:$0xff]
    %v771 = vld [vmem:[#allocation3 + $0x1160] sm:$0xff]
    %v772 = vld [vmem:[#allocation3 + $0x1168] sm:$0xff]
    %v773 = vld [vmem:[#allocation3 + $0x1170] sm:$0xff]
    %v774 = vld [vmem:[#allocation3 + $0x1178] sm:$0xff]
    %v775 = vld [vmem:[#allocation3 + $0x1180] sm:$0xff]
    %v776 = vld [vmem:[#allocation3 + $0x1188] sm:$0xff]
    %v777 = vld [vmem:[#allocation3 + $0x1190] sm:$0xff]
    %v778 = vld [vmem:[#allocation3 + $0x1198] sm:$0xff]
    %v779 = vld [vmem:[#allocation3 + $0x11a0] sm:$0xff]
    %v780 = vld [vmem:[#allocation3 + $0x11a8] sm:$0xff]
    %v781 = vld [vmem:[#allocation3 + $0x11b0] sm:$0xff]
    %v782 = vld [vmem:[#allocation3 + $0x11b8] sm:$0xff]
    %v783 = vld [vmem:[#allocation3 + $0x11c0] sm:$0xff]
    %v784 = vld [vmem:[#allocation3 + $0x11c8] sm:$0xff]
    %v785 = vld [vmem:[#allocation3 + $0x11d0] sm:$0xff]
    %v786 = vld [vmem:[#allocation3 + $0x11d8] sm:$0xff]
    %v787 = vld [vmem:[#allocation3 + $0x11e0] sm:$0xff]
    %v788 = vld [vmem:[#allocation3 + $0x11e8] sm:$0xff]
    %v789 = vld [vmem:[#allocation3 + $0x11f0] sm:$0xff]
    %v790 = vld [vmem:[#allocation3 + $0x11f8] sm:$0xff]
    %v791 = vld [vmem:[#allocation3 + $0x1200] sm:$0xff]
    %v792 = vld [vmem:[#allocation3 + $0x1208] sm:$0xff]
    %v793 = vld [vmem:[#allocation3 + $0x1210] sm:$0xff]
    %v794 = vld [vmem:[#allocation3 + $0x1218] sm:$0xff]
    %v795 = vld [vmem:[#allocation3 + $0x1220] sm:$0xff]
    %v796 = vld [vmem:[#allocation3 + $0x1228] sm:$0xff]
    %v797 = vld [vmem:[#allocation3 + $0x1230] sm:$0xff]
    %v798 = vld [vmem:[#allocation3 + $0x1238] sm:$0xff]
    %v799 = vld [vmem:[#allocation3 + $0x1240] sm:$0xff]
    %v800 = vld [vmem:[#allocation3 + $0x1248] sm:$0xff]
    %v801 = vld [vmem:[#allocation3 + $0x1250] sm:$0xff]
    %v802 = vld [vmem:[#allocation3 + $0x1258] sm:$0xff]
    %v803 = vld [vmem:[#allocation3 + $0x1260] sm:$0xff]
    %v804 = vld [vmem:[#allocation3 + $0x1268] sm:$0xff]
    %v805 = vld [vmem:[#allocation3 + $0x1270] sm:$0xff]
    %v806 = vld [vmem:[#allocation3 + $0x1278] sm:$0xff]
    %v807 = vld [vmem:[#allocation3 + $0x1280] sm:$0xff]
    %v808 = vld [vmem:[#allocation3 + $0x1288] sm:$0xff]
    %v809 = vld [vmem:[#allocation3 + $0x1290] sm:$0xff]
    %v810 = vld [vmem:[#allocation3 + $0x1298] sm:$0xff]
    %v811 = vld [vmem:[#allocation3 + $0x12a0] sm:$0xff]
    %v812 = vld [vmem:[#allocation3 + $0x12a8] sm:$0xff]
    %v813 = vld [vmem:[#allocation3 + $0x12b0] sm:$0xff]
    %v814 = vld [vmem:[#allocation3 + $0x12b8] sm:$0xff]
    %v815 = vld [vmem:[#allocation3 + $0x12c0] sm:$0xff]
    %v816 = vld [vmem:[#allocation3 + $0x12c8] sm:$0xff]
    %v817 = vld [vmem:[#allocation3 + $0x12d0] sm:$0xff]
    %v818 = vld [vmem:[#allocation3 + $0x12d8] sm:$0xff]
    %v819 = vld [vmem:[#allocation3 + $0x12e0] sm:$0xff]
    %v820 = vld [vmem:[#allocation3 + $0x12e8] sm:$0xff]
    %v821 = vld [vmem:[#allocation3 + $0x12f0] sm:$0xff]
    %v822 = vld [vmem:[#allocation3 + $0x12f8] sm:$0xff]
    %v823 = vld [vmem:[#allocation3 + $0x1300] sm:$0xff]
    %v824 = vld [vmem:[#allocation3 + $0x1308] sm:$0xff]
    %v825 = vld [vmem:[#allocation3 + $0x1310] sm:$0xff]
    %v826 = vld [vmem:[#allocation3 + $0x1318] sm:$0xff]
    %v827 = vld [vmem:[#allocation3 + $0x1320] sm:$0xff]
    %v828 = vld [vmem:[#allocation3 + $0x1328] sm:$0xff]
    %v829 = vld [vmem:[#allocation3 + $0x1330] sm:$0xff]
    %v830 = vld [vmem:[#allocation3 + $0x1338] sm:$0xff]
    %v831 = vld [vmem:[#allocation3 + $0x1340] sm:$0xff]
    %v832 = vld [vmem:[#allocation3 + $0x1348] sm:$0xff]
    %v833 = vld [vmem:[#allocation3 + $0x1350] sm:$0xff]
    %v834 = vld [vmem:[#allocation3 + $0x1358] sm:$0xff]
    %v835 = vld [vmem:[#allocation3 + $0x1360] sm:$0xff]
    %v836 = vld [vmem:[#allocation3 + $0x1368] sm:$0xff]
    %v837 = vld [vmem:[#allocation3 + $0x1370] sm:$0xff]
    %v838 = vld [vmem:[#allocation3 + $0x1378] sm:$0xff]
    %v839 = vld [vmem:[#allocation3 + $0x1380] sm:$0xff]
    %v840 = vld [vmem:[#allocation3 + $0x1388] sm:$0xff]
    %v841 = vld [vmem:[#allocation3 + $0x1390] sm:$0xff]
    %v842 = vld [vmem:[#allocation3 + $0x1398] sm:$0xff]
    %v843 = vld [vmem:[#allocation3 + $0x13a0] sm:$0xff]
    %v844 = vld [vmem:[#allocation3 + $0x13a8] sm:$0xff]
    %v845 = vld [vmem:[#allocation3 + $0x13b0] sm:$0xff]
    %v846 = vld [vmem:[#allocation3 + $0x13b8] sm:$0xff]
    %v847 = vld [vmem:[#allocation3 + $0x13c0] sm:$0xff]
    %v848 = vld [vmem:[#allocation3 + $0x13c8] sm:$0xff]
    %v849 = vld [vmem:[#allocation3 + $0x13d0] sm:$0xff]
    %v850 = vld [vmem:[#allocation3 + $0x13d8] sm:$0xff]
    %v851 = vld [vmem:[#allocation3 + $0x13e0] sm:$0xff]
    %v852 = vld [vmem:[#allocation3 + $0x13e8] sm:$0xff]
    %v853 = vld [vmem:[#allocation3 + $0x13f0] sm:$0xff]
    %v854 = vld [vmem:[#allocation3 + $0x13f8] sm:$0xff]
    %v855 = vld [vmem:[#allocation3 + $0x1400] sm:$0xff]
    %v856 = vld [vmem:[#allocation3 + $0x1408] sm:$0xff]
    %v857 = vld [vmem:[#allocation3 + $0x1410] sm:$0xff]
    %v858 = vld [vmem:[#allocation3 + $0x1418] sm:$0xff]
    %v859 = vld [vmem:[#allocation3 + $0x1420] sm:$0xff]
    %v860 = vld [vmem:[#allocation3 + $0x1428] sm:$0xff]
    %v861 = vld [vmem:[#allocation3 + $0x1430] sm:$0xff]
    %v862 = vld [vmem:[#allocation3 + $0x1438] sm:$0xff]
    %v863 = vld [vmem:[#allocation3 + $0x1440] sm:$0xff]
    %v864 = vld [vmem:[#allocation3 + $0x1448] sm:$0xff]
    %v865 = vld [vmem:[#allocation3 + $0x1450] sm:$0xff]
    %v866 = vld [vmem:[#allocation3 + $0x1458] sm:$0xff]
    %v867 = vld [vmem:[#allocation3 + $0x1460] sm:$0xff]
    %v868 = vld [vmem:[#allocation3 + $0x1468] sm:$0xff]
    %v869 = vld [vmem:[#allocation3 + $0x1470] sm:$0xff]
    %v870 = vld [vmem:[#allocation3 + $0x1478] sm:$0xff]
    %v871 = vld [vmem:[#allocation3 + $0x1480] sm:$0xff]
    %v872 = vld [vmem:[#allocation3 + $0x1488] sm:$0xff]
    %v873 = vld [vmem:[#allocation3 + $0x1490] sm:$0xff]
    %v874 = vld [vmem:[#allocation3 + $0x1498] sm:$0xff]
    %v875 = vld [vmem:[#allocation3 + $0x14a0] sm:$0xff]
    %v876 = vld [vmem:[#allocation3 + $0x14a8] sm:$0xff]
    %v877 = vld [vmem:[#allocation3 + $0x14b0] sm:$0xff]
    %v878 = vld [vmem:[#allocation3 + $0x14b8] sm:$0xff]
    %v879 = vld [vmem:[#allocation3 + $0x14c0] sm:$0xff]
    %v880 = vld [vmem:[#allocation3 + $0x14c8] sm:$0xff]
    %v881 = vld [vmem:[#allocation3 + $0x14d0] sm:$0xff]
    %v882 = vld [vmem:[#allocation3 + $0x14d8] sm:$0xff]
    %v883 = vld [vmem:[#allocation3 + $0x14e0] sm:$0xff]
    %v884 = vld [vmem:[#allocation3 + $0x14e8] sm:$0xff]
    %v885 = vld [vmem:[#allocation3 + $0x14f0] sm:$0xff]
    %v886 = vld [vmem:[#allocation3 + $0x14f8] sm:$0xff]
    %v887 = vld [vmem:[#allocation3 + $0x1500] sm:$0xff]
    %v888 = vld [vmem:[#allocation3 + $0x1508] sm:$0xff]
    %v889 = vld [vmem:[#allocation3 + $0x1510] sm:$0xff]
    %v890 = vld [vmem:[#allocation3 + $0x1518] sm:$0xff]
    %v891 = vld [vmem:[#allocation3 + $0x1520] sm:$0xff]
    %v892 = vld [vmem:[#allocation3 + $0x1528] sm:$0xff]
    %v893 = vld [vmem:[#allocation3 + $0x1530] sm:$0xff]
    %v894 = vld [vmem:[#allocation3 + $0x1538] sm:$0xff]
    %v895 = vld [vmem:[#allocation3 + $0x1540] sm:$0xff]
    %v896 = vld [vmem:[#allocation3 + $0x1548] sm:$0xff]
    %v897 = vld [vmem:[#allocation3 + $0x1550] sm:$0xff]
    %v898 = vld [vmem:[#allocation3 + $0x1558] sm:$0xff]
    %v899 = vld [vmem:[#allocation3 + $0x1560] sm:$0xff]
    %v900 = vld [vmem:[#allocation3 + $0x1568] sm:$0xff]
    %v901 = vld [vmem:[#allocation3 + $0x1570] sm:$0xff]
    %v902 = vld [vmem:[#allocation3 + $0x1578] sm:$0xff]
    %v903 = vld [vmem:[#allocation3 + $0x1580] sm:$0xff]
    %v904 = vld [vmem:[#allocation3 + $0x1588] sm:$0xff]
    %v905 = vld [vmem:[#allocation3 + $0x1590] sm:$0xff]
    %v906 = vld [vmem:[#allocation3 + $0x1598] sm:$0xff]
    %v907 = vld [vmem:[#allocation3 + $0x15a0] sm:$0xff]
    %v908 = vld [vmem:[#allocation3 + $0x15a8] sm:$0xff]
    %v909 = vld [vmem:[#allocation3 + $0x15b0] sm:$0xff]
    %v910 = vld [vmem:[#allocation3 + $0x15b8] sm:$0xff]
    %v911 = vld [vmem:[#allocation3 + $0x15c0] sm:$0xff]
    %v912 = vld [vmem:[#allocation3 + $0x15c8] sm:$0xff]
    %v913 = vld [vmem:[#allocation3 + $0x15d0] sm:$0xff]
    %v914 = vld [vmem:[#allocation3 + $0x15d8] sm:$0xff]
    %v915 = vld [vmem:[#allocation3 + $0x15e0] sm:$0xff]
    %v916 = vld [vmem:[#allocation3 + $0x15e8] sm:$0xff]
    %v917 = vld [vmem:[#allocation3 + $0x15f0] sm:$0xff]
    %v918 = vld [vmem:[#allocation3 + $0x15f8] sm:$0xff]
    %v919 = vld [vmem:[#allocation3 + $0x1600] sm:$0xff]
    %v920 = vld [vmem:[#allocation3 + $0x1608] sm:$0xff]
    %v921 = vld [vmem:[#allocation3 + $0x1610] sm:$0xff]
    %v922 = vld [vmem:[#allocation3 + $0x1618] sm:$0xff]
    %v923 = vld [vmem:[#allocation3 + $0x1620] sm:$0xff]
    %v924 = vld [vmem:[#allocation3 + $0x1628] sm:$0xff]
    %v925 = vld [vmem:[#allocation3 + $0x1630] sm:$0xff]
    %v926 = vld [vmem:[#allocation3 + $0x1638] sm:$0xff]
    %v927 = vld [vmem:[#allocation3 + $0x1640] sm:$0xff]
    %v928 = vld [vmem:[#allocation3 + $0x1648] sm:$0xff]
    %v929 = vld [vmem:[#allocation3 + $0x1650] sm:$0xff]
    %v930 = vld [vmem:[#allocation3 + $0x1658] sm:$0xff]
    %v931 = vld [vmem:[#allocation3 + $0x1660] sm:$0xff]
    %v932 = vld [vmem:[#allocation3 + $0x1668] sm:$0xff]
    %v933 = vld [vmem:[#allocation3 + $0x1670] sm:$0xff]
    %v934 = vld [vmem:[#allocation3 + $0x1678] sm:$0xff]
    %v935 = vld [vmem:[#allocation3 + $0x1680] sm:$0xff]
    %v936 = vld [vmem:[#allocation3 + $0x1688] sm:$0xff]
    %v937 = vld [vmem:[#allocation3 + $0x1690] sm:$0xff]
    %v938 = vld [vmem:[#allocation3 + $0x1698] sm:$0xff]
    %v939 = vld [vmem:[#allocation3 + $0x16a0] sm:$0xff]
    %v940 = vld [vmem:[#allocation3 + $0x16a8] sm:$0xff]
    %v941 = vld [vmem:[#allocation3 + $0x16b0] sm:$0xff]
    %v942 = vld [vmem:[#allocation3 + $0x16b8] sm:$0xff]
    %v943 = vld [vmem:[#allocation3 + $0x16c0] sm:$0xff]
    %v944 = vld [vmem:[#allocation3 + $0x16c8] sm:$0xff]
    %v945 = vld [vmem:[#allocation3 + $0x16d0] sm:$0xff]
    %v946 = vld [vmem:[#allocation3 + $0x16d8] sm:$0xff]
    %v947 = vld [vmem:[#allocation3 + $0x16e0] sm:$0xff]
    %v948 = vld [vmem:[#allocation3 + $0x16e8] sm:$0xff]
    %v949 = vld [vmem:[#allocation3 + $0x16f0] sm:$0xff]
    %v950 = vld [vmem:[#allocation3 + $0x16f8] sm:$0xff]
    %v951 = vld [vmem:[#allocation3 + $0x1700] sm:$0xff]
    %v952 = vld [vmem:[#allocation3 + $0x1708] sm:$0xff]
    %v953 = vld [vmem:[#allocation3 + $0x1710] sm:$0xff]
    %v954 = vld [vmem:[#allocation3 + $0x1718] sm:$0xff]
    %v955 = vld [vmem:[#allocation3 + $0x1720] sm:$0xff]
    %v956 = vld [vmem:[#allocation3 + $0x1728] sm:$0xff]
    %v957 = vld [vmem:[#allocation3 + $0x1730] sm:$0xff]
    %v958 = vld [vmem:[#allocation3 + $0x1738] sm:$0xff]
    %v959 = vld [vmem:[#allocation3 + $0x1740] sm:$0xff]
    %v960 = vld [vmem:[#allocation3 + $0x1748] sm:$0xff]
    %v961 = vld [vmem:[#allocation3 + $0x1750] sm:$0xff]
    %v962 = vld [vmem:[#allocation3 + $0x1758] sm:$0xff]
    %v963 = vld [vmem:[#allocation3 + $0x1760] sm:$0xff]
    %v964 = vld [vmem:[#allocation3 + $0x1768] sm:$0xff]
    %v965 = vld [vmem:[#allocation3 + $0x1770] sm:$0xff]
    %v966 = vld [vmem:[#allocation3 + $0x1778] sm:$0xff]
    %v967 = vld [vmem:[#allocation3 + $0x1780] sm:$0xff]
    %v968 = vld [vmem:[#allocation3 + $0x1788] sm:$0xff]
    %v969 = vld [vmem:[#allocation3 + $0x1790] sm:$0xff]
    %v970 = vld [vmem:[#allocation3 + $0x1798] sm:$0xff]
    %v971 = vld [vmem:[#allocation3 + $0x17a0] sm:$0xff]
    %v972 = vld [vmem:[#allocation3 + $0x17a8] sm:$0xff]
    %v973 = vld [vmem:[#allocation3 + $0x17b0] sm:$0xff]
    %v974 = vld [vmem:[#allocation3 + $0x17b8] sm:$0xff]
    %v975 = vld [vmem:[#allocation3 + $0x17c0] sm:$0xff]
    %v976 = vld [vmem:[#allocation3 + $0x17c8] sm:$0xff]
    %v977 = vld [vmem:[#allocation3 + $0x17d0] sm:$0xff]
    %v978 = vld [vmem:[#allocation3 + $0x17d8] sm:$0xff]
    %v979 = vld [vmem:[#allocation3 + $0x17e0] sm:$0xff]
    %v980 = vld [vmem:[#allocation3 + $0x17e8] sm:$0xff]
    %v981 = vld [vmem:[#allocation3 + $0x17f0] sm:$0xff]
    %v982 = vld [vmem:[#allocation3 + $0x17f8] sm:$0xff]
    %v1751 = vunpack.c.l.b16 %v215
    %v1752 = vunpack.c.h.b16 %v215
    %v1753 = vunpack.c.l.b16 %v216
    %v1754 = vunpack.c.h.b16 %v216
    %v1755 = vunpack.c.l.b16 %v217
    %v1756 = vunpack.c.h.b16 %v217
    %v1757 = vunpack.c.l.b16 %v218
    %v1758 = vunpack.c.h.b16 %v218
    %v1759 = vunpack.c.l.b16 %v219
    %v1760 = vunpack.c.h.b16 %v219
    %v1761 = vunpack.c.l.b16 %v220
    %v1762 = vunpack.c.h.b16 %v220
    %v1763 = vunpack.c.l.b16 %v221
    %v1764 = vunpack.c.h.b16 %v221
    %v1765 = vunpack.c.l.b16 %v222
    %v1766 = vunpack.c.h.b16 %v222
    %v1767 = vunpack.c.l.b16 %v223
    %v1768 = vunpack.c.h.b16 %v223
    %v1769 = vunpack.c.l.b16 %v224
    %v1770 = vunpack.c.h.b16 %v224
    %v1771 = vunpack.c.l.b16 %v225
    %v1772 = vunpack.c.h.b16 %v225
    %v1773 = vunpack.c.l.b16 %v226
    %v1774 = vunpack.c.h.b16 %v226
    %v1775 = vunpack.c.l.b16 %v227
    %v1776 = vunpack.c.h.b16 %v227
    %v1777 = vunpack.c.l.b16 %v228
    %v1778 = vunpack.c.h.b16 %v228
    %v1779 = vunpack.c.l.b16 %v229
    %v1780 = vunpack.c.h.b16 %v229
    %v1781 = vunpack.c.l.b16 %v230
    %v1782 = vunpack.c.h.b16 %v230
    %v1783 = vunpack.c.l.b16 %v231
    %v1784 = vunpack.c.h.b16 %v231
    %v1785 = vunpack.c.l.b16 %v232
    %v1786 = vunpack.c.h.b16 %v232
    %v1787 = vunpack.c.l.b16 %v233
    %v1788 = vunpack.c.h.b16 %v233
    %v1789 = vunpack.c.l.b16 %v234
    %v1790 = vunpack.c.h.b16 %v234
    %v1791 = vunpack.c.l.b16 %v235
    %v1792 = vunpack.c.h.b16 %v235
    %v1793 = vunpack.c.l.b16 %v236
    %v1794 = vunpack.c.h.b16 %v236
    %v1795 = vunpack.c.l.b16 %v237
    %v1796 = vunpack.c.h.b16 %v237
    %v1797 = vunpack.c.l.b16 %v238
    %v1798 = vunpack.c.h.b16 %v238
    %v1799 = vunpack.c.l.b16 %v239
    %v1800 = vunpack.c.h.b16 %v239
    %v1801 = vunpack.c.l.b16 %v240
    %v1802 = vunpack.c.h.b16 %v240
    %v1803 = vunpack.c.l.b16 %v241
    %v1804 = vunpack.c.h.b16 %v241
    %v1805 = vunpack.c.l.b16 %v242
    %v1806 = vunpack.c.h.b16 %v242
    %v1807 = vunpack.c.l.b16 %v243
    %v1808 = vunpack.c.h.b16 %v243
    %v1809 = vunpack.c.l.b16 %v244
    %v1810 = vunpack.c.h.b16 %v244
    %v1811 = vunpack.c.l.b16 %v245
    %v1812 = vunpack.c.h.b16 %v245
    %v1813 = vunpack.c.l.b16 %v246
    %v1814 = vunpack.c.h.b16 %v246
    %v1815 = vunpack.c.l.b16 %v247
    %v1816 = vunpack.c.h.b16 %v247
    %v1817 = vunpack.c.l.b16 %v248
    %v1818 = vunpack.c.h.b16 %v248
    %v1819 = vunpack.c.l.b16 %v249
    %v1820 = vunpack.c.h.b16 %v249
    %v1821 = vunpack.c.l.b16 %v250
    %v1822 = vunpack.c.h.b16 %v250
    %v1823 = vunpack.c.l.b16 %v251
    %v1824 = vunpack.c.h.b16 %v251
    %v1825 = vunpack.c.l.b16 %v252
    %v1826 = vunpack.c.h.b16 %v252
    %v1827 = vunpack.c.l.b16 %v253
    %v1828 = vunpack.c.h.b16 %v253
    %v1829 = vunpack.c.l.b16 %v254
    %v1830 = vunpack.c.h.b16 %v254
    %v1831 = vunpack.c.l.b16 %v255
    %v1832 = vunpack.c.h.b16 %v255
    %v1833 = vunpack.c.l.b16 %v256
    %v1834 = vunpack.c.h.b16 %v256
    %v1835 = vunpack.c.l.b16 %v257
    %v1836 = vunpack.c.h.b16 %v257
    %v1837 = vunpack.c.l.b16 %v258
    %v1838 = vunpack.c.h.b16 %v258
    %v1839 = vunpack.c.l.b16 %v259
    %v1840 = vunpack.c.h.b16 %v259
    %v1841 = vunpack.c.l.b16 %v260
    %v1842 = vunpack.c.h.b16 %v260
    %v1843 = vunpack.c.l.b16 %v261
    %v1844 = vunpack.c.h.b16 %v261
    %v1845 = vunpack.c.l.b16 %v262
    %v1846 = vunpack.c.h.b16 %v262
    %v1847 = vunpack.c.l.b16 %v263
    %v1848 = vunpack.c.h.b16 %v263
    %v1849 = vunpack.c.l.b16 %v264
    %v1850 = vunpack.c.h.b16 %v264
    %v1851 = vunpack.c.l.b16 %v265
    %v1852 = vunpack.c.h.b16 %v265
    %v1853 = vunpack.c.l.b16 %v266
    %v1854 = vunpack.c.h.b16 %v266
    %v1855 = vunpack.c.l.b16 %v267
    %v1856 = vunpack.c.h.b16 %v267
    %v1857 = vunpack.c.l.b16 %v268
    %v1858 = vunpack.c.h.b16 %v268
    %v1859 = vunpack.c.l.b16 %v269
    %v1860 = vunpack.c.h.b16 %v269
    %v1861 = vunpack.c.l.b16 %v270
    %v1862 = vunpack.c.h.b16 %v270
    %v1863 = vunpack.c.l.b16 %v271
    %v1864 = vunpack.c.h.b16 %v271
    %v1865 = vunpack.c.l.b16 %v272
    %v1866 = vunpack.c.h.b16 %v272
    %v1867 = vunpack.c.l.b16 %v273
    %v1868 = vunpack.c.h.b16 %v273
    %v1869 = vunpack.c.l.b16 %v274
    %v1870 = vunpack.c.h.b16 %v274
    %v1871 = vunpack.c.l.b16 %v275
    %v1872 = vunpack.c.h.b16 %v275
    %v1873 = vunpack.c.l.b16 %v276
    %v1874 = vunpack.c.h.b16 %v276
    %v1875 = vunpack.c.l.b16 %v277
    %v1876 = vunpack.c.h.b16 %v277
    %v1877 = vunpack.c.l.b16 %v278
    %v1878 = vunpack.c.h.b16 %v278
    %v1879 = vunpack.c.l.b16 %v279
    %v1880 = vunpack.c.h.b16 %v279
    %v1881 = vunpack.c.l.b16 %v280
    %v1882 = vunpack.c.h.b16 %v280
    %v1883 = vunpack.c.l.b16 %v281
    %v1884 = vunpack.c.h.b16 %v281
    %v1885 = vunpack.c.l.b16 %v282
    %v1886 = vunpack.c.h.b16 %v282
    %v1887 = vunpack.c.l.b16 %v283
    %v1888 = vunpack.c.h.b16 %v283
    %v1889 = vunpack.c.l.b16 %v284
    %v1890 = vunpack.c.h.b16 %v284
    %v1891 = vunpack.c.l.b16 %v285
    %v1892 = vunpack.c.h.b16 %v285
    %v1893 = vunpack.c.l.b16 %v286
    %v1894 = vunpack.c.h.b16 %v286
    %v1895 = vunpack.c.l.b16 %v287
    %v1896 = vunpack.c.h.b16 %v287
    %v1897 = vunpack.c.l.b16 %v288
    %v1898 = vunpack.c.h.b16 %v288
    %v1899 = vunpack.c.l.b16 %v289
    %v1900 = vunpack.c.h.b16 %v289
    %v1901 = vunpack.c.l.b16 %v290
    %v1902 = vunpack.c.h.b16 %v290
    %v1903 = vunpack.c.l.b16 %v291
    %v1904 = vunpack.c.h.b16 %v291
    %v1905 = vunpack.c.l.b16 %v292
    %v1906 = vunpack.c.h.b16 %v292
    %v1907 = vunpack.c.l.b16 %v293
    %v1908 = vunpack.c.h.b16 %v293
    %v1909 = vunpack.c.l.b16 %v294
    %v1910 = vunpack.c.h.b16 %v294
    %v1911 = vunpack.c.l.b16 %v295
    %v1912 = vunpack.c.h.b16 %v295
    %v1913 = vunpack.c.l.b16 %v296
    %v1914 = vunpack.c.h.b16 %v296
    %v1915 = vunpack.c.l.b16 %v297
    %v1916 = vunpack.c.h.b16 %v297
    %v1917 = vunpack.c.l.b16 %v298
    %v1918 = vunpack.c.h.b16 %v298
    %v1919 = vunpack.c.l.b16 %v299
    %v1920 = vunpack.c.h.b16 %v299
    %v1921 = vunpack.c.l.b16 %v300
    %v1922 = vunpack.c.h.b16 %v300
    %v1923 = vunpack.c.l.b16 %v301
    %v1924 = vunpack.c.h.b16 %v301
    %v1925 = vunpack.c.l.b16 %v302
    %v1926 = vunpack.c.h.b16 %v302
    %v1927 = vunpack.c.l.b16 %v303
    %v1928 = vunpack.c.h.b16 %v303
    %v1929 = vunpack.c.l.b16 %v304
    %v1930 = vunpack.c.h.b16 %v304
    %v1931 = vunpack.c.l.b16 %v305
    %v1932 = vunpack.c.h.b16 %v305
    %v1933 = vunpack.c.l.b16 %v306
    %v1934 = vunpack.c.h.b16 %v306
    %v1935 = vunpack.c.l.b16 %v307
    %v1936 = vunpack.c.h.b16 %v307
    %v1937 = vunpack.c.l.b16 %v308
    %v1938 = vunpack.c.h.b16 %v308
    %v1939 = vunpack.c.l.b16 %v309
    %v1940 = vunpack.c.h.b16 %v309
    %v1941 = vunpack.c.l.b16 %v310
    %v1942 = vunpack.c.h.b16 %v310
    %v1943 = vunpack.c.l.b16 %v311
    %v1944 = vunpack.c.h.b16 %v311
    %v1945 = vunpack.c.l.b16 %v312
    %v1946 = vunpack.c.h.b16 %v312
    %v1947 = vunpack.c.l.b16 %v313
    %v1948 = vunpack.c.h.b16 %v313
    %v1949 = vunpack.c.l.b16 %v314
    %v1950 = vunpack.c.h.b16 %v314
    %v1951 = vunpack.c.l.b16 %v315
    %v1952 = vunpack.c.h.b16 %v315
    %v1953 = vunpack.c.l.b16 %v316
    %v1954 = vunpack.c.h.b16 %v316
    %v1955 = vunpack.c.l.b16 %v317
    %v1956 = vunpack.c.h.b16 %v317
    %v1957 = vunpack.c.l.b16 %v318
    %v1958 = vunpack.c.h.b16 %v318
    %v1959 = vunpack.c.l.b16 %v319
    %v1960 = vunpack.c.h.b16 %v319
    %v1961 = vunpack.c.l.b16 %v320
    %v1962 = vunpack.c.h.b16 %v320
    %v1963 = vunpack.c.l.b16 %v321
    %v1964 = vunpack.c.h.b16 %v321
    %v1965 = vunpack.c.l.b16 %v322
    %v1966 = vunpack.c.h.b16 %v322
    %v1967 = vunpack.c.l.b16 %v323
    %v1968 = vunpack.c.h.b16 %v323
    %v1969 = vunpack.c.l.b16 %v324
    %v1970 = vunpack.c.h.b16 %v324
    %v1971 = vunpack.c.l.b16 %v325
    %v1972 = vunpack.c.h.b16 %v325
    %v1973 = vunpack.c.l.b16 %v326
    %v1974 = vunpack.c.h.b16 %v326
    %v1975 = vunpack.c.l.b16 %v327
    %v1976 = vunpack.c.h.b16 %v327
    %v1977 = vunpack.c.l.b16 %v328
    %v1978 = vunpack.c.h.b16 %v328
    %v1979 = vunpack.c.l.b16 %v329
    %v1980 = vunpack.c.h.b16 %v329
    %v1981 = vunpack.c.l.b16 %v330
    %v1982 = vunpack.c.h.b16 %v330
    %v1983 = vunpack.c.l.b16 %v331
    %v1984 = vunpack.c.h.b16 %v331
    %v1985 = vunpack.c.l.b16 %v332
    %v1986 = vunpack.c.h.b16 %v332
    %v1987 = vunpack.c.l.b16 %v333
    %v1988 = vunpack.c.h.b16 %v333
    %v1989 = vunpack.c.l.b16 %v334
    %v1990 = vunpack.c.h.b16 %v334
    %v1991 = vunpack.c.l.b16 %v335
    %v1992 = vunpack.c.h.b16 %v335
    %v1993 = vunpack.c.l.b16 %v336
    %v1994 = vunpack.c.h.b16 %v336
    %v1995 = vunpack.c.l.b16 %v337
    %v1996 = vunpack.c.h.b16 %v337
    %v1997 = vunpack.c.l.b16 %v338
    %v1998 = vunpack.c.h.b16 %v338
    %v1999 = vunpack.c.l.b16 %v339
    %v2000 = vunpack.c.h.b16 %v339
    %v2001 = vunpack.c.l.b16 %v340
    %v2002 = vunpack.c.h.b16 %v340
    %v2003 = vunpack.c.l.b16 %v341
    %v2004 = vunpack.c.h.b16 %v341
    %v2005 = vunpack.c.l.b16 %v342
    %v2006 = vunpack.c.h.b16 %v342
    %v2007 = vunpack.c.l.b16 %v343
    %v2008 = vunpack.c.h.b16 %v343
    %v2009 = vunpack.c.l.b16 %v344
    %v2010 = vunpack.c.h.b16 %v344
    %v2011 = vunpack.c.l.b16 %v345
    %v2012 = vunpack.c.h.b16 %v345
    %v2013 = vunpack.c.l.b16 %v346
    %v2014 = vunpack.c.h.b16 %v346
    %v2015 = vunpack.c.l.b16 %v347
    %v2016 = vunpack.c.h.b16 %v347
    %v2017 = vunpack.c.l.b16 %v348
    %v2018 = vunpack.c.h.b16 %v348
    %v2019 = vunpack.c.l.b16 %v349
    %v2020 = vunpack.c.h.b16 %v349
    %v2021 = vunpack.c.l.b16 %v350
    %v2022 = vunpack.c.h.b16 %v350
    %v2023 = vunpack.c.l.b16 %v351
    %v2024 = vunpack.c.h.b16 %v351
    %v2025 = vunpack.c.l.b16 %v352
    %v2026 = vunpack.c.h.b16 %v352
    %v2027 = vunpack.c.l.b16 %v353
    %v2028 = vunpack.c.h.b16 %v353
    %v2029 = vunpack.c.l.b16 %v354
    %v2030 = vunpack.c.h.b16 %v354
    %v2031 = vunpack.c.l.b16 %v355
    %v2032 = vunpack.c.h.b16 %v355
    %v2033 = vunpack.c.l.b16 %v356
    %v2034 = vunpack.c.h.b16 %v356
    %v2035 = vunpack.c.l.b16 %v357
    %v2036 = vunpack.c.h.b16 %v357
    %v2037 = vunpack.c.l.b16 %v358
    %v2038 = vunpack.c.h.b16 %v358
    %v2039 = vunpack.c.l.b16 %v359
    %v2040 = vunpack.c.h.b16 %v359
    %v2041 = vunpack.c.l.b16 %v360
    %v2042 = vunpack.c.h.b16 %v360
    %v2043 = vunpack.c.l.b16 %v361
    %v2044 = vunpack.c.h.b16 %v361
    %v2045 = vunpack.c.l.b16 %v362
    %v2046 = vunpack.c.h.b16 %v362
    %v2047 = vunpack.c.l.b16 %v363
    %v2048 = vunpack.c.h.b16 %v363
    %v2049 = vunpack.c.l.b16 %v364
    %v2050 = vunpack.c.h.b16 %v364
    %v2051 = vunpack.c.l.b16 %v365
    %v2052 = vunpack.c.h.b16 %v365
    %v2053 = vunpack.c.l.b16 %v366
    %v2054 = vunpack.c.h.b16 %v366
    %v2055 = vunpack.c.l.b16 %v367
    %v2056 = vunpack.c.h.b16 %v367
    %v2057 = vunpack.c.l.b16 %v368
    %v2058 = vunpack.c.h.b16 %v368
    %v2059 = vunpack.c.l.b16 %v369
    %v2060 = vunpack.c.h.b16 %v369
    %v2061 = vunpack.c.l.b16 %v370
    %v2062 = vunpack.c.h.b16 %v370
    %v2063 = vunpack.c.l.b16 %v371
    %v2064 = vunpack.c.h.b16 %v371
    %v2065 = vunpack.c.l.b16 %v372
    %v2066 = vunpack.c.h.b16 %v372
    %v2067 = vunpack.c.l.b16 %v373
    %v2068 = vunpack.c.h.b16 %v373
    %v2069 = vunpack.c.l.b16 %v374
    %v2070 = vunpack.c.h.b16 %v374
    %v2071 = vunpack.c.l.b16 %v375
    %v2072 = vunpack.c.h.b16 %v375
    %v2073 = vunpack.c.l.b16 %v376
    %v2074 = vunpack.c.h.b16 %v376
    %v2075 = vunpack.c.l.b16 %v377
    %v2076 = vunpack.c.h.b16 %v377
    %v2077 = vunpack.c.l.b16 %v378
    %v2078 = vunpack.c.h.b16 %v378
    %v2079 = vunpack.c.l.b16 %v379
    %v2080 = vunpack.c.h.b16 %v379
    %v2081 = vunpack.c.l.b16 %v380
    %v2082 = vunpack.c.h.b16 %v380
    %v2083 = vunpack.c.l.b16 %v381
    %v2084 = vunpack.c.h.b16 %v381
    %v2085 = vunpack.c.l.b16 %v382
    %v2086 = vunpack.c.h.b16 %v382
    %v2087 = vunpack.c.l.b16 %v383
    %v2088 = vunpack.c.h.b16 %v383
    %v2089 = vunpack.c.l.b16 %v384
    %v2090 = vunpack.c.h.b16 %v384
    %v2091 = vunpack.c.l.b16 %v385
    %v2092 = vunpack.c.h.b16 %v385
    %v2093 = vunpack.c.l.b16 %v386
    %v2094 = vunpack.c.h.b16 %v386
    %v2095 = vunpack.c.l.b16 %v387
    %v2096 = vunpack.c.h.b16 %v387
    %v2097 = vunpack.c.l.b16 %v388
    %v2098 = vunpack.c.h.b16 %v388
    %v2099 = vunpack.c.l.b16 %v389
    %v2100 = vunpack.c.h.b16 %v389
    %v2101 = vunpack.c.l.b16 %v390
    %v2102 = vunpack.c.h.b16 %v390
    %v2103 = vunpack.c.l.b16 %v391
    %v2104 = vunpack.c.h.b16 %v391
    %v2105 = vunpack.c.l.b16 %v392
    %v2106 = vunpack.c.h.b16 %v392
    %v2107 = vunpack.c.l.b16 %v393
    %v2108 = vunpack.c.h.b16 %v393
    %v2109 = vunpack.c.l.b16 %v394
    %v2110 = vunpack.c.h.b16 %v394
    %v2111 = vunpack.c.l.b16 %v395
    %v2112 = vunpack.c.h.b16 %v395
    %v2113 = vunpack.c.l.b16 %v396
    %v2114 = vunpack.c.h.b16 %v396
    %v2115 = vunpack.c.l.b16 %v397
    %v2116 = vunpack.c.h.b16 %v397
    %v2117 = vunpack.c.l.b16 %v398
    %v2118 = vunpack.c.h.b16 %v398
    %v2119 = vunpack.c.l.b16 %v399
    %v2120 = vunpack.c.h.b16 %v399
    %v2121 = vunpack.c.l.b16 %v400
    %v2122 = vunpack.c.h.b16 %v400
    %v2123 = vunpack.c.l.b16 %v401
    %v2124 = vunpack.c.h.b16 %v401
    %v2125 = vunpack.c.l.b16 %v402
    %v2126 = vunpack.c.h.b16 %v402
    %v2127 = vunpack.c.l.b16 %v403
    %v2128 = vunpack.c.h.b16 %v403
    %v2129 = vunpack.c.l.b16 %v404
    %v2130 = vunpack.c.h.b16 %v404
    %v2131 = vunpack.c.l.b16 %v405
    %v2132 = vunpack.c.h.b16 %v405
    %v2133 = vunpack.c.l.b16 %v406
    %v2134 = vunpack.c.h.b16 %v406
    %v2135 = vunpack.c.l.b16 %v407
    %v2136 = vunpack.c.h.b16 %v407
    %v2137 = vunpack.c.l.b16 %v408
    %v2138 = vunpack.c.h.b16 %v408
    %v2139 = vunpack.c.l.b16 %v409
    %v2140 = vunpack.c.h.b16 %v409
    %v2141 = vunpack.c.l.b16 %v410
    %v2142 = vunpack.c.h.b16 %v410
    %v2143 = vunpack.c.l.b16 %v411
    %v2144 = vunpack.c.h.b16 %v411
    %v2145 = vunpack.c.l.b16 %v412
    %v2146 = vunpack.c.h.b16 %v412
    %v2147 = vunpack.c.l.b16 %v413
    %v2148 = vunpack.c.h.b16 %v413
    %v2149 = vunpack.c.l.b16 %v414
    %v2150 = vunpack.c.h.b16 %v414
    %v2151 = vunpack.c.l.b16 %v415
    %v2152 = vunpack.c.h.b16 %v415
    %v2153 = vunpack.c.l.b16 %v416
    %v2154 = vunpack.c.h.b16 %v416
    %v2155 = vunpack.c.l.b16 %v417
    %v2156 = vunpack.c.h.b16 %v417
    %v2157 = vunpack.c.l.b16 %v418
    %v2158 = vunpack.c.h.b16 %v418
    %v2159 = vunpack.c.l.b16 %v419
    %v2160 = vunpack.c.h.b16 %v419
    %v2161 = vunpack.c.l.b16 %v420
    %v2162 = vunpack.c.h.b16 %v420
    %v2163 = vunpack.c.l.b16 %v421
    %v2164 = vunpack.c.h.b16 %v421
    %v2165 = vunpack.c.l.b16 %v422
    %v2166 = vunpack.c.h.b16 %v422
    %v2167 = vunpack.c.l.b16 %v423
    %v2168 = vunpack.c.h.b16 %v423
    %v2169 = vunpack.c.l.b16 %v424
    %v2170 = vunpack.c.h.b16 %v424
    %v2171 = vunpack.c.l.b16 %v425
    %v2172 = vunpack.c.h.b16 %v425
    %v2173 = vunpack.c.l.b16 %v426
    %v2174 = vunpack.c.h.b16 %v426
    %v2175 = vunpack.c.l.b16 %v427
    %v2176 = vunpack.c.h.b16 %v427
    %v2177 = vunpack.c.l.b16 %v428
    %v2178 = vunpack.c.h.b16 %v428
    %v2179 = vunpack.c.l.b16 %v429
    %v2180 = vunpack.c.h.b16 %v429
    %v2181 = vunpack.c.l.b16 %v430
    %v2182 = vunpack.c.h.b16 %v430
    %v2183 = vunpack.c.l.b16 %v431
    %v2184 = vunpack.c.h.b16 %v431
    %v2185 = vunpack.c.l.b16 %v432
    %v2186 = vunpack.c.h.b16 %v432
    %v2187 = vunpack.c.l.b16 %v433
    %v2188 = vunpack.c.h.b16 %v433
    %v2189 = vunpack.c.l.b16 %v434
    %v2190 = vunpack.c.h.b16 %v434
    %v2191 = vunpack.c.l.b16 %v435
    %v2192 = vunpack.c.h.b16 %v435
    %v2193 = vunpack.c.l.b16 %v436
    %v2194 = vunpack.c.h.b16 %v436
    %v2195 = vunpack.c.l.b16 %v437
    %v2196 = vunpack.c.h.b16 %v437
    %v2197 = vunpack.c.l.b16 %v438
    %v2198 = vunpack.c.h.b16 %v438
    %v2199 = vunpack.c.l.b16 %v439
    %v2200 = vunpack.c.h.b16 %v439
    %v2201 = vunpack.c.l.b16 %v440
    %v2202 = vunpack.c.h.b16 %v440
    %v2203 = vunpack.c.l.b16 %v441
    %v2204 = vunpack.c.h.b16 %v441
    %v2205 = vunpack.c.l.b16 %v442
    %v2206 = vunpack.c.h.b16 %v442
    %v2207 = vunpack.c.l.b16 %v443
    %v2208 = vunpack.c.h.b16 %v443
    %v2209 = vunpack.c.l.b16 %v444
    %v2210 = vunpack.c.h.b16 %v444
    %v2211 = vunpack.c.l.b16 %v445
    %v2212 = vunpack.c.h.b16 %v445
    %v2213 = vunpack.c.l.b16 %v446
    %v2214 = vunpack.c.h.b16 %v446
    %v2215 = vunpack.c.l.b16 %v447
    %v2216 = vunpack.c.h.b16 %v447
    %v2217 = vunpack.c.l.b16 %v448
    %v2218 = vunpack.c.h.b16 %v448
    %v2219 = vunpack.c.l.b16 %v449
    %v2220 = vunpack.c.h.b16 %v449
    %v2221 = vunpack.c.l.b16 %v450
    %v2222 = vunpack.c.h.b16 %v450
    %v2223 = vunpack.c.l.b16 %v451
    %v2224 = vunpack.c.h.b16 %v451
    %v2225 = vunpack.c.l.b16 %v452
    %v2226 = vunpack.c.h.b16 %v452
    %v2227 = vunpack.c.l.b16 %v453
    %v2228 = vunpack.c.h.b16 %v453
    %v2229 = vunpack.c.l.b16 %v454
    %v2230 = vunpack.c.h.b16 %v454
    %v2231 = vunpack.c.l.b16 %v455
    %v2232 = vunpack.c.h.b16 %v455
    %v2233 = vunpack.c.l.b16 %v456
    %v2234 = vunpack.c.h.b16 %v456
    %v2235 = vunpack.c.l.b16 %v457
    %v2236 = vunpack.c.h.b16 %v457
    %v2237 = vunpack.c.l.b16 %v458
    %v2238 = vunpack.c.h.b16 %v458
    %v2239 = vunpack.c.l.b16 %v459
    %v2240 = vunpack.c.h.b16 %v459
    %v2241 = vunpack.c.l.b16 %v460
    %v2242 = vunpack.c.h.b16 %v460
    %v2243 = vunpack.c.l.b16 %v461
    %v2244 = vunpack.c.h.b16 %v461
    %v2245 = vunpack.c.l.b16 %v462
    %v2246 = vunpack.c.h.b16 %v462
    %v2247 = vunpack.c.l.b16 %v463
    %v2248 = vunpack.c.h.b16 %v463
    %v2249 = vunpack.c.l.b16 %v464
    %v2250 = vunpack.c.h.b16 %v464
    %v2251 = vunpack.c.l.b16 %v465
    %v2252 = vunpack.c.h.b16 %v465
    %v2253 = vunpack.c.l.b16 %v466
    %v2254 = vunpack.c.h.b16 %v466
    %v2255 = vunpack.c.l.b16 %v467
    %v2256 = vunpack.c.h.b16 %v467
    %v2257 = vunpack.c.l.b16 %v468
    %v2258 = vunpack.c.h.b16 %v468
    %v2259 = vunpack.c.l.b16 %v469
    %v2260 = vunpack.c.h.b16 %v469
    %v2261 = vunpack.c.l.b16 %v470
    %v2262 = vunpack.c.h.b16 %v470
    %v2263 = vunpack.c.l.b16 %v471
    %v2264 = vunpack.c.h.b16 %v471
    %v2265 = vunpack.c.l.b16 %v472
    %v2266 = vunpack.c.h.b16 %v472
    %v2267 = vunpack.c.l.b16 %v473
    %v2268 = vunpack.c.h.b16 %v473
    %v2269 = vunpack.c.l.b16 %v474
    %v2270 = vunpack.c.h.b16 %v474
    %v2271 = vunpack.c.l.b16 %v475
    %v2272 = vunpack.c.h.b16 %v475
    %v2273 = vunpack.c.l.b16 %v476
    %v2274 = vunpack.c.h.b16 %v476
    %v2275 = vunpack.c.l.b16 %v477
    %v2276 = vunpack.c.h.b16 %v477
    %v2277 = vunpack.c.l.b16 %v478
    %v2278 = vunpack.c.h.b16 %v478
    %v2279 = vunpack.c.l.b16 %v479
    %v2280 = vunpack.c.h.b16 %v479
    %v2281 = vunpack.c.l.b16 %v480
    %v2282 = vunpack.c.h.b16 %v480
    %v2283 = vunpack.c.l.b16 %v481
    %v2284 = vunpack.c.h.b16 %v481
    %v2285 = vunpack.c.l.b16 %v482
    %v2286 = vunpack.c.h.b16 %v482
    %v2287 = vunpack.c.l.b16 %v483
    %v2288 = vunpack.c.h.b16 %v483
    %v2289 = vunpack.c.l.b16 %v484
    %v2290 = vunpack.c.h.b16 %v484
    %v2291 = vunpack.c.l.b16 %v485
    %v2292 = vunpack.c.h.b16 %v485
    %v2293 = vunpack.c.l.b16 %v486
    %v2294 = vunpack.c.h.b16 %v486
    %v2295 = vunpack.c.l.b16 %v487
    %v2296 = vunpack.c.h.b16 %v487
    %v2297 = vunpack.c.l.b16 %v488
    %v2298 = vunpack.c.h.b16 %v488
    %v2299 = vunpack.c.l.b16 %v489
    %v2300 = vunpack.c.h.b16 %v489
    %v2301 = vunpack.c.l.b16 %v490
    %v2302 = vunpack.c.h.b16 %v490
    %v2303 = vunpack.c.l.b16 %v491
    %v2304 = vunpack.c.h.b16 %v491
    %v2305 = vunpack.c.l.b16 %v492
    %v2306 = vunpack.c.h.b16 %v492
    %v2307 = vunpack.c.l.b16 %v493
    %v2308 = vunpack.c.h.b16 %v493
    %v2309 = vunpack.c.l.b16 %v494
    %v2310 = vunpack.c.h.b16 %v494
    %v2311 = vunpack.c.l.b16 %v495
    %v2312 = vunpack.c.h.b16 %v495
    %v2313 = vunpack.c.l.b16 %v496
    %v2314 = vunpack.c.h.b16 %v496
    %v2315 = vunpack.c.l.b16 %v497
    %v2316 = vunpack.c.h.b16 %v497
    %v2317 = vunpack.c.l.b16 %v498
    %v2318 = vunpack.c.h.b16 %v498
    %v2319 = vunpack.c.l.b16 %v499
    %v2320 = vunpack.c.h.b16 %v499
    %v2321 = vunpack.c.l.b16 %v500
    %v2322 = vunpack.c.h.b16 %v500
    %v2323 = vunpack.c.l.b16 %v501
    %v2324 = vunpack.c.h.b16 %v501
    %v2325 = vunpack.c.l.b16 %v502
    %v2326 = vunpack.c.h.b16 %v502
    %v2327 = vunpack.c.l.b16 %v503
    %v2328 = vunpack.c.h.b16 %v503
    %v2329 = vunpack.c.l.b16 %v504
    %v2330 = vunpack.c.h.b16 %v504
    %v2331 = vunpack.c.l.b16 %v505
    %v2332 = vunpack.c.h.b16 %v505
    %v2333 = vunpack.c.l.b16 %v506
    %v2334 = vunpack.c.h.b16 %v506
    %v2335 = vunpack.c.l.b16 %v507
    %v2336 = vunpack.c.h.b16 %v507
    %v2337 = vunpack.c.l.b16 %v508
    %v2338 = vunpack.c.h.b16 %v508
    %v2339 = vunpack.c.l.b16 %v509
    %v2340 = vunpack.c.h.b16 %v509
    %v2341 = vunpack.c.l.b16 %v510
    %v2342 = vunpack.c.h.b16 %v510
    %v2343 = vunpack.c.l.b16 %v511
    %v2344 = vunpack.c.h.b16 %v511
    %v2345 = vunpack.c.l.b16 %v512
    %v2346 = vunpack.c.h.b16 %v512
    %v2347 = vunpack.c.l.b16 %v513
    %v2348 = vunpack.c.h.b16 %v513
    %v2349 = vunpack.c.l.b16 %v514
    %v2350 = vunpack.c.h.b16 %v514
    %v2351 = vunpack.c.l.b16 %v515
    %v2352 = vunpack.c.h.b16 %v515
    %v2353 = vunpack.c.l.b16 %v516
    %v2354 = vunpack.c.h.b16 %v516
    %v2355 = vunpack.c.l.b16 %v517
    %v2356 = vunpack.c.h.b16 %v517
    %v2357 = vunpack.c.l.b16 %v518
    %v2358 = vunpack.c.h.b16 %v518
    %v2359 = vunpack.c.l.b16 %v519
    %v2360 = vunpack.c.h.b16 %v519
    %v2361 = vunpack.c.l.b16 %v520
    %v2362 = vunpack.c.h.b16 %v520
    %v2363 = vunpack.c.l.b16 %v521
    %v2364 = vunpack.c.h.b16 %v521
    %v2365 = vunpack.c.l.b16 %v522
    %v2366 = vunpack.c.h.b16 %v522
    %v2367 = vunpack.c.l.b16 %v523
    %v2368 = vunpack.c.h.b16 %v523
    %v2369 = vunpack.c.l.b16 %v524
    %v2370 = vunpack.c.h.b16 %v524
    %v2371 = vunpack.c.l.b16 %v525
    %v2372 = vunpack.c.h.b16 %v525
    %v2373 = vunpack.c.l.b16 %v526
    %v2374 = vunpack.c.h.b16 %v526
    %v2375 = vunpack.c.l.b16 %v527
    %v2376 = vunpack.c.h.b16 %v527
    %v2377 = vunpack.c.l.b16 %v528
    %v2378 = vunpack.c.h.b16 %v528
    %v2379 = vunpack.c.l.b16 %v529
    %v2380 = vunpack.c.h.b16 %v529
    %v2381 = vunpack.c.l.b16 %v530
    %v2382 = vunpack.c.h.b16 %v530
    %v2383 = vunpack.c.l.b16 %v531
    %v2384 = vunpack.c.h.b16 %v531
    %v2385 = vunpack.c.l.b16 %v532
    %v2386 = vunpack.c.h.b16 %v532
    %v2387 = vunpack.c.l.b16 %v533
    %v2388 = vunpack.c.h.b16 %v533
    %v2389 = vunpack.c.l.b16 %v534
    %v2390 = vunpack.c.h.b16 %v534
    %v2391 = vunpack.c.l.b16 %v535
    %v2392 = vunpack.c.h.b16 %v535
    %v2393 = vunpack.c.l.b16 %v536
    %v2394 = vunpack.c.h.b16 %v536
    %v2395 = vunpack.c.l.b16 %v537
    %v2396 = vunpack.c.h.b16 %v537
    %v2397 = vunpack.c.l.b16 %v538
    %v2398 = vunpack.c.h.b16 %v538
    %v2399 = vunpack.c.l.b16 %v539
    %v2400 = vunpack.c.h.b16 %v539
    %v2401 = vunpack.c.l.b16 %v540
    %v2402 = vunpack.c.h.b16 %v540
    %v2403 = vunpack.c.l.b16 %v541
    %v2404 = vunpack.c.h.b16 %v541
    %v2405 = vunpack.c.l.b16 %v542
    %v2406 = vunpack.c.h.b16 %v542
    %v2407 = vunpack.c.l.b16 %v543
    %v2408 = vunpack.c.h.b16 %v543
    %v2409 = vunpack.c.l.b16 %v544
    %v2410 = vunpack.c.h.b16 %v544
    %v2411 = vunpack.c.l.b16 %v545
    %v2412 = vunpack.c.h.b16 %v545
    %v2413 = vunpack.c.l.b16 %v546
    %v2414 = vunpack.c.h.b16 %v546
    %v2415 = vunpack.c.l.b16 %v547
    %v2416 = vunpack.c.h.b16 %v547
    %v2417 = vunpack.c.l.b16 %v548
    %v2418 = vunpack.c.h.b16 %v548
    %v2419 = vunpack.c.l.b16 %v549
    %v2420 = vunpack.c.h.b16 %v549
    %v2421 = vunpack.c.l.b16 %v550
    %v2422 = vunpack.c.h.b16 %v550
    %v2423 = vunpack.c.l.b16 %v551
    %v2424 = vunpack.c.h.b16 %v551
    %v2425 = vunpack.c.l.b16 %v552
    %v2426 = vunpack.c.h.b16 %v552
    %v2427 = vunpack.c.l.b16 %v553
    %v2428 = vunpack.c.h.b16 %v553
    %v2429 = vunpack.c.l.b16 %v554
    %v2430 = vunpack.c.h.b16 %v554
    %v2431 = vunpack.c.l.b16 %v555
    %v2432 = vunpack.c.h.b16 %v555
    %v2433 = vunpack.c.l.b16 %v556
    %v2434 = vunpack.c.h.b16 %v556
    %v2435 = vunpack.c.l.b16 %v557
    %v2436 = vunpack.c.h.b16 %v557
    %v2437 = vunpack.c.l.b16 %v558
    %v2438 = vunpack.c.h.b16 %v558
    %v2439 = vunpack.c.l.b16 %v559
    %v2440 = vunpack.c.h.b16 %v559
    %v2441 = vunpack.c.l.b16 %v560
    %v2442 = vunpack.c.h.b16 %v560
    %v2443 = vunpack.c.l.b16 %v561
    %v2444 = vunpack.c.h.b16 %v561
    %v2445 = vunpack.c.l.b16 %v562
    %v2446 = vunpack.c.h.b16 %v562
    %v2447 = vunpack.c.l.b16 %v563
    %v2448 = vunpack.c.h.b16 %v563
    %v2449 = vunpack.c.l.b16 %v564
    %v2450 = vunpack.c.h.b16 %v564
    %v2451 = vunpack.c.l.b16 %v565
    %v2452 = vunpack.c.h.b16 %v565
    %v2453 = vunpack.c.l.b16 %v566
    %v2454 = vunpack.c.h.b16 %v566
    %v2455 = vunpack.c.l.b16 %v567
    %v2456 = vunpack.c.h.b16 %v567
    %v2457 = vunpack.c.l.b16 %v568
    %v2458 = vunpack.c.h.b16 %v568
    %v2459 = vunpack.c.l.b16 %v569
    %v2460 = vunpack.c.h.b16 %v569
    %v2461 = vunpack.c.l.b16 %v570
    %v2462 = vunpack.c.h.b16 %v570
    %v2463 = vunpack.c.l.b16 %v571
    %v2464 = vunpack.c.h.b16 %v571
    %v2465 = vunpack.c.l.b16 %v572
    %v2466 = vunpack.c.h.b16 %v572
    %v2467 = vunpack.c.l.b16 %v573
    %v2468 = vunpack.c.h.b16 %v573
    %v2469 = vunpack.c.l.b16 %v574
    %v2470 = vunpack.c.h.b16 %v574
    %v2471 = vunpack.c.l.b16 %v575
    %v2472 = vunpack.c.h.b16 %v575
    %v2473 = vunpack.c.l.b16 %v576
    %v2474 = vunpack.c.h.b16 %v576
    %v2475 = vunpack.c.l.b16 %v577
    %v2476 = vunpack.c.h.b16 %v577
    %v2477 = vunpack.c.l.b16 %v578
    %v2478 = vunpack.c.h.b16 %v578
    %v2479 = vunpack.c.l.b16 %v579
    %v2480 = vunpack.c.h.b16 %v579
    %v2481 = vunpack.c.l.b16 %v580
    %v2482 = vunpack.c.h.b16 %v580
    %v2483 = vunpack.c.l.b16 %v581
    %v2484 = vunpack.c.h.b16 %v581
    %v2485 = vunpack.c.l.b16 %v582
    %v2486 = vunpack.c.h.b16 %v582
    %v2487 = vunpack.c.l.b16 %v583
    %v2488 = vunpack.c.h.b16 %v583
    %v2489 = vunpack.c.l.b16 %v584
    %v2490 = vunpack.c.h.b16 %v584
    %v2491 = vunpack.c.l.b16 %v585
    %v2492 = vunpack.c.h.b16 %v585
    %v2493 = vunpack.c.l.b16 %v586
    %v2494 = vunpack.c.h.b16 %v586
    %v2495 = vunpack.c.l.b16 %v587
    %v2496 = vunpack.c.h.b16 %v587
    %v2497 = vunpack.c.l.b16 %v588
    %v2498 = vunpack.c.h.b16 %v588
    %v2499 = vunpack.c.l.b16 %v589
    %v2500 = vunpack.c.h.b16 %v589
    %v2501 = vunpack.c.l.b16 %v590
    %v2502 = vunpack.c.h.b16 %v590
    %v2503 = vunpack.c.l.b16 %v591
    %v2504 = vunpack.c.h.b16 %v591
    %v2505 = vunpack.c.l.b16 %v592
    %v2506 = vunpack.c.h.b16 %v592
    %v2507 = vunpack.c.l.b16 %v593
    %v2508 = vunpack.c.h.b16 %v593
    %v2509 = vunpack.c.l.b16 %v594
    %v2510 = vunpack.c.h.b16 %v594
    %v2511 = vunpack.c.l.b16 %v595
    %v2512 = vunpack.c.h.b16 %v595
    %v2513 = vunpack.c.l.b16 %v596
    %v2514 = vunpack.c.h.b16 %v596
    %v2515 = vunpack.c.l.b16 %v597
    %v2516 = vunpack.c.h.b16 %v597
    %v2517 = vunpack.c.l.b16 %v598
    %v2518 = vunpack.c.h.b16 %v598
    %v2519 = vunpack.c.l.b16 %v599
    %v2520 = vunpack.c.h.b16 %v599
    %v2521 = vunpack.c.l.b16 %v600
    %v2522 = vunpack.c.h.b16 %v600
    %v2523 = vunpack.c.l.b16 %v601
    %v2524 = vunpack.c.h.b16 %v601
    %v2525 = vunpack.c.l.b16 %v602
    %v2526 = vunpack.c.h.b16 %v602
    %v2527 = vunpack.c.l.b16 %v603
    %v2528 = vunpack.c.h.b16 %v603
    %v2529 = vunpack.c.l.b16 %v604
    %v2530 = vunpack.c.h.b16 %v604
    %v2531 = vunpack.c.l.b16 %v605
    %v2532 = vunpack.c.h.b16 %v605
    %v2533 = vunpack.c.l.b16 %v606
    %v2534 = vunpack.c.h.b16 %v606
    %v2535 = vunpack.c.l.b16 %v607
    %v2536 = vunpack.c.h.b16 %v607
    %v2537 = vunpack.c.l.b16 %v608
    %v2538 = vunpack.c.h.b16 %v608
    %v2539 = vunpack.c.l.b16 %v609
    %v2540 = vunpack.c.h.b16 %v609
    %v2541 = vunpack.c.l.b16 %v610
    %v2542 = vunpack.c.h.b16 %v610
    %v2543 = vunpack.c.l.b16 %v611
    %v2544 = vunpack.c.h.b16 %v611
    %v2545 = vunpack.c.l.b16 %v612
    %v2546 = vunpack.c.h.b16 %v612
    %v2547 = vunpack.c.l.b16 %v613
    %v2548 = vunpack.c.h.b16 %v613
    %v2549 = vunpack.c.l.b16 %v614
    %v2550 = vunpack.c.h.b16 %v614
    %v2551 = vunpack.c.l.b16 %v615
    %v2552 = vunpack.c.h.b16 %v615
    %v2553 = vunpack.c.l.b16 %v616
    %v2554 = vunpack.c.h.b16 %v616
    %v2555 = vunpack.c.l.b16 %v617
    %v2556 = vunpack.c.h.b16 %v617
    %v2557 = vunpack.c.l.b16 %v618
    %v2558 = vunpack.c.h.b16 %v618
    %v2559 = vunpack.c.l.b16 %v619
    %v2560 = vunpack.c.h.b16 %v619
    %v2561 = vunpack.c.l.b16 %v620
    %v2562 = vunpack.c.h.b16 %v620
    %v2563 = vunpack.c.l.b16 %v621
    %v2564 = vunpack.c.h.b16 %v621
    %v2565 = vunpack.c.l.b16 %v622
    %v2566 = vunpack.c.h.b16 %v622
    %v2567 = vunpack.c.l.b16 %v623
    %v2568 = vunpack.c.h.b16 %v623
    %v2569 = vunpack.c.l.b16 %v624
    %v2570 = vunpack.c.h.b16 %v624
    %v2571 = vunpack.c.l.b16 %v625
    %v2572 = vunpack.c.h.b16 %v625
    %v2573 = vunpack.c.l.b16 %v626
    %v2574 = vunpack.c.h.b16 %v626
    %v2575 = vunpack.c.l.b16 %v627
    %v2576 = vunpack.c.h.b16 %v627
    %v2577 = vunpack.c.l.b16 %v628
    %v2578 = vunpack.c.h.b16 %v628
    %v2579 = vunpack.c.l.b16 %v629
    %v2580 = vunpack.c.h.b16 %v629
    %v2581 = vunpack.c.l.b16 %v630
    %v2582 = vunpack.c.h.b16 %v630
    %v2583 = vunpack.c.l.b16 %v631
    %v2584 = vunpack.c.h.b16 %v631
    %v2585 = vunpack.c.l.b16 %v632
    %v2586 = vunpack.c.h.b16 %v632
    %v2587 = vunpack.c.l.b16 %v633
    %v2588 = vunpack.c.h.b16 %v633
    %v2589 = vunpack.c.l.b16 %v634
    %v2590 = vunpack.c.h.b16 %v634
    %v2591 = vunpack.c.l.b16 %v635
    %v2592 = vunpack.c.h.b16 %v635
    %v2593 = vunpack.c.l.b16 %v636
    %v2594 = vunpack.c.h.b16 %v636
    %v2595 = vunpack.c.l.b16 %v637
    %v2596 = vunpack.c.h.b16 %v637
    %v2597 = vunpack.c.l.b16 %v638
    %v2598 = vunpack.c.h.b16 %v638
    %v2599 = vunpack.c.l.b16 %v639
    %v2600 = vunpack.c.h.b16 %v639
    %v2601 = vunpack.c.l.b16 %v640
    %v2602 = vunpack.c.h.b16 %v640
    %v2603 = vunpack.c.l.b16 %v641
    %v2604 = vunpack.c.h.b16 %v641
    %v2605 = vunpack.c.l.b16 %v642
    %v2606 = vunpack.c.h.b16 %v642
    %v2607 = vunpack.c.l.b16 %v643
    %v2608 = vunpack.c.h.b16 %v643
    %v2609 = vunpack.c.l.b16 %v644
    %v2610 = vunpack.c.h.b16 %v644
    %v2611 = vunpack.c.l.b16 %v645
    %v2612 = vunpack.c.h.b16 %v645
    %v2613 = vunpack.c.l.b16 %v646
    %v2614 = vunpack.c.h.b16 %v646
    %v2615 = vunpack.c.l.b16 %v647
    %v2616 = vunpack.c.h.b16 %v647
    %v2617 = vunpack.c.l.b16 %v648
    %v2618 = vunpack.c.h.b16 %v648
    %v2619 = vunpack.c.l.b16 %v649
    %v2620 = vunpack.c.h.b16 %v649
    %v2621 = vunpack.c.l.b16 %v650
    %v2622 = vunpack.c.h.b16 %v650
    %v2623 = vunpack.c.l.b16 %v651
    %v2624 = vunpack.c.h.b16 %v651
    %v2625 = vunpack.c.l.b16 %v652
    %v2626 = vunpack.c.h.b16 %v652
    %v2627 = vunpack.c.l.b16 %v653
    %v2628 = vunpack.c.h.b16 %v653
    %v2629 = vunpack.c.l.b16 %v654
    %v2630 = vunpack.c.h.b16 %v654
    %v2631 = vunpack.c.l.b16 %v655
    %v2632 = vunpack.c.h.b16 %v655
    %v2633 = vunpack.c.l.b16 %v656
    %v2634 = vunpack.c.h.b16 %v656
    %v2635 = vunpack.c.l.b16 %v657
    %v2636 = vunpack.c.h.b16 %v657
    %v2637 = vunpack.c.l.b16 %v658
    %v2638 = vunpack.c.h.b16 %v658
    %v2639 = vunpack.c.l.b16 %v659
    %v2640 = vunpack.c.h.b16 %v659
    %v2641 = vunpack.c.l.b16 %v660
    %v2642 = vunpack.c.h.b16 %v660
    %v2643 = vunpack.c.l.b16 %v661
    %v2644 = vunpack.c.h.b16 %v661
    %v2645 = vunpack.c.l.b16 %v662
    %v2646 = vunpack.c.h.b16 %v662
    %v2647 = vunpack.c.l.b16 %v663
    %v2648 = vunpack.c.h.b16 %v663
    %v2649 = vunpack.c.l.b16 %v664
    %v2650 = vunpack.c.h.b16 %v664
    %v2651 = vunpack.c.l.b16 %v665
    %v2652 = vunpack.c.h.b16 %v665
    %v2653 = vunpack.c.l.b16 %v666
    %v2654 = vunpack.c.h.b16 %v666
    %v2655 = vunpack.c.l.b16 %v667
    %v2656 = vunpack.c.h.b16 %v667
    %v2657 = vunpack.c.l.b16 %v668
    %v2658 = vunpack.c.h.b16 %v668
    %v2659 = vunpack.c.l.b16 %v669
    %v2660 = vunpack.c.h.b16 %v669
    %v2661 = vunpack.c.l.b16 %v670
    %v2662 = vunpack.c.h.b16 %v670
    %v2663 = vunpack.c.l.b16 %v671
    %v2664 = vunpack.c.h.b16 %v671
    %v2665 = vunpack.c.l.b16 %v672
    %v2666 = vunpack.c.h.b16 %v672
    %v2667 = vunpack.c.l.b16 %v673
    %v2668 = vunpack.c.h.b16 %v673
    %v2669 = vunpack.c.l.b16 %v674
    %v2670 = vunpack.c.h.b16 %v674
    %v2671 = vunpack.c.l.b16 %v675
    %v2672 = vunpack.c.h.b16 %v675
    %v2673 = vunpack.c.l.b16 %v676
    %v2674 = vunpack.c.h.b16 %v676
    %v2675 = vunpack.c.l.b16 %v677
    %v2676 = vunpack.c.h.b16 %v677
    %v2677 = vunpack.c.l.b16 %v678
    %v2678 = vunpack.c.h.b16 %v678
    %v2679 = vunpack.c.l.b16 %v679
    %v2680 = vunpack.c.h.b16 %v679
    %v2681 = vunpack.c.l.b16 %v680
    %v2682 = vunpack.c.h.b16 %v680
    %v2683 = vunpack.c.l.b16 %v681
    %v2684 = vunpack.c.h.b16 %v681
    %v2685 = vunpack.c.l.b16 %v682
    %v2686 = vunpack.c.h.b16 %v682
    %v2687 = vunpack.c.l.b16 %v683
    %v2688 = vunpack.c.h.b16 %v683
    %v2689 = vunpack.c.l.b16 %v684
    %v2690 = vunpack.c.h.b16 %v684
    %v2691 = vunpack.c.l.b16 %v685
    %v2692 = vunpack.c.h.b16 %v685
    %v2693 = vunpack.c.l.b16 %v686
    %v2694 = vunpack.c.h.b16 %v686
    %v2695 = vunpack.c.l.b16 %v687
    %v2696 = vunpack.c.h.b16 %v687
    %v2697 = vunpack.c.l.b16 %v688
    %v2698 = vunpack.c.h.b16 %v688
    %v2699 = vunpack.c.l.b16 %v689
    %v2700 = vunpack.c.h.b16 %v689
    %v2701 = vunpack.c.l.b16 %v690
    %v2702 = vunpack.c.h.b16 %v690
    %v2703 = vunpack.c.l.b16 %v691
    %v2704 = vunpack.c.h.b16 %v691
    %v2705 = vunpack.c.l.b16 %v692
    %v2706 = vunpack.c.h.b16 %v692
    %v2707 = vunpack.c.l.b16 %v693
    %v2708 = vunpack.c.h.b16 %v693
    %v2709 = vunpack.c.l.b16 %v694
    %v2710 = vunpack.c.h.b16 %v694
    %v2711 = vunpack.c.l.b16 %v695
    %v2712 = vunpack.c.h.b16 %v695
    %v2713 = vunpack.c.l.b16 %v696
    %v2714 = vunpack.c.h.b16 %v696
    %v2715 = vunpack.c.l.b16 %v697
    %v2716 = vunpack.c.h.b16 %v697
    %v2717 = vunpack.c.l.b16 %v698
    %v2718 = vunpack.c.h.b16 %v698
    %v2719 = vunpack.c.l.b16 %v699
    %v2720 = vunpack.c.h.b16 %v699
    %v2721 = vunpack.c.l.b16 %v700
    %v2722 = vunpack.c.h.b16 %v700
    %v2723 = vunpack.c.l.b16 %v701
    %v2724 = vunpack.c.h.b16 %v701
    %v2725 = vunpack.c.l.b16 %v702
    %v2726 = vunpack.c.h.b16 %v702
    %v2727 = vunpack.c.l.b16 %v703
    %v2728 = vunpack.c.h.b16 %v703
    %v2729 = vunpack.c.l.b16 %v704
    %v2730 = vunpack.c.h.b16 %v704
    %v2731 = vunpack.c.l.b16 %v705
    %v2732 = vunpack.c.h.b16 %v705
    %v2733 = vunpack.c.l.b16 %v706
    %v2734 = vunpack.c.h.b16 %v706
    %v2735 = vunpack.c.l.b16 %v707
    %v2736 = vunpack.c.h.b16 %v707
    %v2737 = vunpack.c.l.b16 %v708
    %v2738 = vunpack.c.h.b16 %v708
    %v2739 = vunpack.c.l.b16 %v709
    %v2740 = vunpack.c.h.b16 %v709
    %v2741 = vunpack.c.l.b16 %v710
    %v2742 = vunpack.c.h.b16 %v710
    %v2743 = vunpack.c.l.b16 %v711
    %v2744 = vunpack.c.h.b16 %v711
    %v2745 = vunpack.c.l.b16 %v712
    %v2746 = vunpack.c.h.b16 %v712
    %v2747 = vunpack.c.l.b16 %v713
    %v2748 = vunpack.c.h.b16 %v713
    %v2749 = vunpack.c.l.b16 %v714
    %v2750 = vunpack.c.h.b16 %v714
    %v2751 = vunpack.c.l.b16 %v715
    %v2752 = vunpack.c.h.b16 %v715
    %v2753 = vunpack.c.l.b16 %v716
    %v2754 = vunpack.c.h.b16 %v716
    %v2755 = vunpack.c.l.b16 %v717
    %v2756 = vunpack.c.h.b16 %v717
    %v2757 = vunpack.c.l.b16 %v718
    %v2758 = vunpack.c.h.b16 %v718
    %v2759 = vunpack.c.l.b16 %v719
    %v2760 = vunpack.c.h.b16 %v719
    %v2761 = vunpack.c.l.b16 %v720
    %v2762 = vunpack.c.h.b16 %v720
    %v2763 = vunpack.c.l.b16 %v721
    %v2764 = vunpack.c.h.b16 %v721
    %v2765 = vunpack.c.l.b16 %v722
    %v2766 = vunpack.c.h.b16 %v722
    %v2767 = vunpack.c.l.b16 %v723
    %v2768 = vunpack.c.h.b16 %v723
    %v2769 = vunpack.c.l.b16 %v724
    %v2770 = vunpack.c.h.b16 %v724
    %v2771 = vunpack.c.l.b16 %v725
    %v2772 = vunpack.c.h.b16 %v725
    %v2773 = vunpack.c.l.b16 %v726
    %v2774 = vunpack.c.h.b16 %v726
    %v2775 = vunpack.c.l.b16 %v727
    %v2776 = vunpack.c.h.b16 %v727
    %v2777 = vunpack.c.l.b16 %v728
    %v2778 = vunpack.c.h.b16 %v728
    %v2779 = vunpack.c.l.b16 %v729
    %v2780 = vunpack.c.h.b16 %v729
    %v2781 = vunpack.c.l.b16 %v730
    %v2782 = vunpack.c.h.b16 %v730
    %v2783 = vunpack.c.l.b16 %v731
    %v2784 = vunpack.c.h.b16 %v731
    %v2785 = vunpack.c.l.b16 %v732
    %v2786 = vunpack.c.h.b16 %v732
    %v2787 = vunpack.c.l.b16 %v733
    %v2788 = vunpack.c.h.b16 %v733
    %v2789 = vunpack.c.l.b16 %v734
    %v2790 = vunpack.c.h.b16 %v734
    %v2791 = vunpack.c.l.b16 %v735
    %v2792 = vunpack.c.h.b16 %v735
    %v2793 = vunpack.c.l.b16 %v736
    %v2794 = vunpack.c.h.b16 %v736
    %v2795 = vunpack.c.l.b16 %v737
    %v2796 = vunpack.c.h.b16 %v737
    %v2797 = vunpack.c.l.b16 %v738
    %v2798 = vunpack.c.h.b16 %v738
    %v2799 = vunpack.c.l.b16 %v739
    %v2800 = vunpack.c.h.b16 %v739
    %v2801 = vunpack.c.l.b16 %v740
    %v2802 = vunpack.c.h.b16 %v740
    %v2803 = vunpack.c.l.b16 %v741
    %v2804 = vunpack.c.h.b16 %v741
    %v2805 = vunpack.c.l.b16 %v742
    %v2806 = vunpack.c.h.b16 %v742
    %v2807 = vunpack.c.l.b16 %v743
    %v2808 = vunpack.c.h.b16 %v743
    %v2809 = vunpack.c.l.b16 %v744
    %v2810 = vunpack.c.h.b16 %v744
    %v2811 = vunpack.c.l.b16 %v745
    %v2812 = vunpack.c.h.b16 %v745
    %v2813 = vunpack.c.l.b16 %v746
    %v2814 = vunpack.c.h.b16 %v746
    %v2815 = vunpack.c.l.b16 %v747
    %v2816 = vunpack.c.h.b16 %v747
    %v2817 = vunpack.c.l.b16 %v748
    %v2818 = vunpack.c.h.b16 %v748
    %v2819 = vunpack.c.l.b16 %v749
    %v2820 = vunpack.c.h.b16 %v749
    %v2821 = vunpack.c.l.b16 %v750
    %v2822 = vunpack.c.h.b16 %v750
    %v2823 = vunpack.c.l.b16 %v751
    %v2824 = vunpack.c.h.b16 %v751
    %v2825 = vunpack.c.l.b16 %v752
    %v2826 = vunpack.c.h.b16 %v752
    %v2827 = vunpack.c.l.b16 %v753
    %v2828 = vunpack.c.h.b16 %v753
    %v2829 = vunpack.c.l.b16 %v754
    %v2830 = vunpack.c.h.b16 %v754
    %v2831 = vunpack.c.l.b16 %v755
    %v2832 = vunpack.c.h.b16 %v755
    %v2833 = vunpack.c.l.b16 %v756
    %v2834 = vunpack.c.h.b16 %v756
    %v2835 = vunpack.c.l.b16 %v757
    %v2836 = vunpack.c.h.b16 %v757
    %v2837 = vunpack.c.l.b16 %v758
    %v2838 = vunpack.c.h.b16 %v758
    %v2839 = vunpack.c.l.b16 %v759
    %v2840 = vunpack.c.h.b16 %v759
    %v2841 = vunpack.c.l.b16 %v760
    %v2842 = vunpack.c.h.b16 %v760
    %v2843 = vunpack.c.l.b16 %v761
    %v2844 = vunpack.c.h.b16 %v761
    %v2845 = vunpack.c.l.b16 %v762
    %v2846 = vunpack.c.h.b16 %v762
    %v2847 = vunpack.c.l.b16 %v763
    %v2848 = vunpack.c.h.b16 %v763
    %v2849 = vunpack.c.l.b16 %v764
    %v2850 = vunpack.c.h.b16 %v764
    %v2851 = vunpack.c.l.b16 %v765
    %v2852 = vunpack.c.h.b16 %v765
    %v2853 = vunpack.c.l.b16 %v766
    %v2854 = vunpack.c.h.b16 %v766
    %v2855 = vunpack.c.l.b16 %v767
    %v2856 = vunpack.c.h.b16 %v767
    %v2857 = vunpack.c.l.b16 %v768
    %v2858 = vunpack.c.h.b16 %v768
    %v2859 = vunpack.c.l.b16 %v769
    %v2860 = vunpack.c.h.b16 %v769
    %v2861 = vunpack.c.l.b16 %v770
    %v2862 = vunpack.c.h.b16 %v770
    %v2863 = vunpack.c.l.b16 %v771
    %v2864 = vunpack.c.h.b16 %v771
    %v2865 = vunpack.c.l.b16 %v772
    %v2866 = vunpack.c.h.b16 %v772
    %v2867 = vunpack.c.l.b16 %v773
    %v2868 = vunpack.c.h.b16 %v773
    %v2869 = vunpack.c.l.b16 %v774
    %v2870 = vunpack.c.h.b16 %v774
    %v2871 = vunpack.c.l.b16 %v775
    %v2872 = vunpack.c.h.b16 %v775
    %v2873 = vunpack.c.l.b16 %v776
    %v2874 = vunpack.c.h.b16 %v776
    %v2875 = vunpack.c.l.b16 %v777
    %v2876 = vunpack.c.h.b16 %v777
    %v2877 = vunpack.c.l.b16 %v778
    %v2878 = vunpack.c.h.b16 %v778
    %v2879 = vunpack.c.l.b16 %v779
    %v2880 = vunpack.c.h.b16 %v779
    %v2881 = vunpack.c.l.b16 %v780
    %v2882 = vunpack.c.h.b16 %v780
    %v2883 = vunpack.c.l.b16 %v781
    %v2884 = vunpack.c.h.b16 %v781
    %v2885 = vunpack.c.l.b16 %v782
    %v2886 = vunpack.c.h.b16 %v782
    %v2887 = vunpack.c.l.b16 %v783
    %v2888 = vunpack.c.h.b16 %v783
    %v2889 = vunpack.c.l.b16 %v784
    %v2890 = vunpack.c.h.b16 %v784
    %v2891 = vunpack.c.l.b16 %v785
    %v2892 = vunpack.c.h.b16 %v785
    %v2893 = vunpack.c.l.b16 %v786
    %v2894 = vunpack.c.h.b16 %v786
    %v2895 = vunpack.c.l.b16 %v787
    %v2896 = vunpack.c.h.b16 %v787
    %v2897 = vunpack.c.l.b16 %v788
    %v2898 = vunpack.c.h.b16 %v788
    %v2899 = vunpack.c.l.b16 %v789
    %v2900 = vunpack.c.h.b16 %v789
    %v2901 = vunpack.c.l.b16 %v790
    %v2902 = vunpack.c.h.b16 %v790
    %v2903 = vunpack.c.l.b16 %v791
    %v2904 = vunpack.c.h.b16 %v791
    %v2905 = vunpack.c.l.b16 %v792
    %v2906 = vunpack.c.h.b16 %v792
    %v2907 = vunpack.c.l.b16 %v793
    %v2908 = vunpack.c.h.b16 %v793
    %v2909 = vunpack.c.l.b16 %v794
    %v2910 = vunpack.c.h.b16 %v794
    %v2911 = vunpack.c.l.b16 %v795
    %v2912 = vunpack.c.h.b16 %v795
    %v2913 = vunpack.c.l.b16 %v796
    %v2914 = vunpack.c.h.b16 %v796
    %v2915 = vunpack.c.l.b16 %v797
    %v2916 = vunpack.c.h.b16 %v797
    %v2917 = vunpack.c.l.b16 %v798
    %v2918 = vunpack.c.h.b16 %v798
    %v2919 = vunpack.c.l.b16 %v799
    %v2920 = vunpack.c.h.b16 %v799
    %v2921 = vunpack.c.l.b16 %v800
    %v2922 = vunpack.c.h.b16 %v800
    %v2923 = vunpack.c.l.b16 %v801
    %v2924 = vunpack.c.h.b16 %v801
    %v2925 = vunpack.c.l.b16 %v802
    %v2926 = vunpack.c.h.b16 %v802
    %v2927 = vunpack.c.l.b16 %v803
    %v2928 = vunpack.c.h.b16 %v803
    %v2929 = vunpack.c.l.b16 %v804
    %v2930 = vunpack.c.h.b16 %v804
    %v2931 = vunpack.c.l.b16 %v805
    %v2932 = vunpack.c.h.b16 %v805
    %v2933 = vunpack.c.l.b16 %v806
    %v2934 = vunpack.c.h.b16 %v806
    %v2935 = vunpack.c.l.b16 %v807
    %v2936 = vunpack.c.h.b16 %v807
    %v2937 = vunpack.c.l.b16 %v808
    %v2938 = vunpack.c.h.b16 %v808
    %v2939 = vunpack.c.l.b16 %v809
    %v2940 = vunpack.c.h.b16 %v809
    %v2941 = vunpack.c.l.b16 %v810
    %v2942 = vunpack.c.h.b16 %v810
    %v2943 = vunpack.c.l.b16 %v811
    %v2944 = vunpack.c.h.b16 %v811
    %v2945 = vunpack.c.l.b16 %v812
    %v2946 = vunpack.c.h.b16 %v812
    %v2947 = vunpack.c.l.b16 %v813
    %v2948 = vunpack.c.h.b16 %v813
    %v2949 = vunpack.c.l.b16 %v814
    %v2950 = vunpack.c.h.b16 %v814
    %v2951 = vunpack.c.l.b16 %v815
    %v2952 = vunpack.c.h.b16 %v815
    %v2953 = vunpack.c.l.b16 %v816
    %v2954 = vunpack.c.h.b16 %v816
    %v2955 = vunpack.c.l.b16 %v817
    %v2956 = vunpack.c.h.b16 %v817
    %v2957 = vunpack.c.l.b16 %v818
    %v2958 = vunpack.c.h.b16 %v818
    %v2959 = vunpack.c.l.b16 %v819
    %v2960 = vunpack.c.h.b16 %v819
    %v2961 = vunpack.c.l.b16 %v820
    %v2962 = vunpack.c.h.b16 %v820
    %v2963 = vunpack.c.l.b16 %v821
    %v2964 = vunpack.c.h.b16 %v821
    %v2965 = vunpack.c.l.b16 %v822
    %v2966 = vunpack.c.h.b16 %v822
    %v2967 = vunpack.c.l.b16 %v823
    %v2968 = vunpack.c.h.b16 %v823
    %v2969 = vunpack.c.l.b16 %v824
    %v2970 = vunpack.c.h.b16 %v824
    %v2971 = vunpack.c.l.b16 %v825
    %v2972 = vunpack.c.h.b16 %v825
    %v2973 = vunpack.c.l.b16 %v826
    %v2974 = vunpack.c.h.b16 %v826
    %v2975 = vunpack.c.l.b16 %v827
    %v2976 = vunpack.c.h.b16 %v827
    %v2977 = vunpack.c.l.b16 %v828
    %v2978 = vunpack.c.h.b16 %v828
    %v2979 = vunpack.c.l.b16 %v829
    %v2980 = vunpack.c.h.b16 %v829
    %v2981 = vunpack.c.l.b16 %v830
    %v2982 = vunpack.c.h.b16 %v830
    %v2983 = vunpack.c.l.b16 %v831
    %v2984 = vunpack.c.h.b16 %v831
    %v2985 = vunpack.c.l.b16 %v832
    %v2986 = vunpack.c.h.b16 %v832
    %v2987 = vunpack.c.l.b16 %v833
    %v2988 = vunpack.c.h.b16 %v833
    %v2989 = vunpack.c.l.b16 %v834
    %v2990 = vunpack.c.h.b16 %v834
    %v2991 = vunpack.c.l.b16 %v835
    %v2992 = vunpack.c.h.b16 %v835
    %v2993 = vunpack.c.l.b16 %v836
    %v2994 = vunpack.c.h.b16 %v836
    %v2995 = vunpack.c.l.b16 %v837
    %v2996 = vunpack.c.h.b16 %v837
    %v2997 = vunpack.c.l.b16 %v838
    %v2998 = vunpack.c.h.b16 %v838
    %v2999 = vunpack.c.l.b16 %v839
    %v3000 = vunpack.c.h.b16 %v839
    %v3001 = vunpack.c.l.b16 %v840
    %v3002 = vunpack.c.h.b16 %v840
    %v3003 = vunpack.c.l.b16 %v841
    %v3004 = vunpack.c.h.b16 %v841
    %v3005 = vunpack.c.l.b16 %v842
    %v3006 = vunpack.c.h.b16 %v842
    %v3007 = vunpack.c.l.b16 %v843
    %v3008 = vunpack.c.h.b16 %v843
    %v3009 = vunpack.c.l.b16 %v844
    %v3010 = vunpack.c.h.b16 %v844
    %v3011 = vunpack.c.l.b16 %v845
    %v3012 = vunpack.c.h.b16 %v845
    %v3013 = vunpack.c.l.b16 %v846
    %v3014 = vunpack.c.h.b16 %v846
    %v3015 = vunpack.c.l.b16 %v847
    %v3016 = vunpack.c.h.b16 %v847
    %v3017 = vunpack.c.l.b16 %v848
    %v3018 = vunpack.c.h.b16 %v848
    %v3019 = vunpack.c.l.b16 %v849
    %v3020 = vunpack.c.h.b16 %v849
    %v3021 = vunpack.c.l.b16 %v850
    %v3022 = vunpack.c.h.b16 %v850
    %v3023 = vunpack.c.l.b16 %v851
    %v3024 = vunpack.c.h.b16 %v851
    %v3025 = vunpack.c.l.b16 %v852
    %v3026 = vunpack.c.h.b16 %v852
    %v3027 = vunpack.c.l.b16 %v853
    %v3028 = vunpack.c.h.b16 %v853
    %v3029 = vunpack.c.l.b16 %v854
    %v3030 = vunpack.c.h.b16 %v854
    %v3031 = vunpack.c.l.b16 %v855
    %v3032 = vunpack.c.h.b16 %v855
    %v3033 = vunpack.c.l.b16 %v856
    %v3034 = vunpack.c.h.b16 %v856
    %v3035 = vunpack.c.l.b16 %v857
    %v3036 = vunpack.c.h.b16 %v857
    %v3037 = vunpack.c.l.b16 %v858
    %v3038 = vunpack.c.h.b16 %v858
    %v3039 = vunpack.c.l.b16 %v859
    %v3040 = vunpack.c.h.b16 %v859
    %v3041 = vunpack.c.l.b16 %v860
    %v3042 = vunpack.c.h.b16 %v860
    %v3043 = vunpack.c.l.b16 %v861
    %v3044 = vunpack.c.h.b16 %v861
    %v3045 = vunpack.c.l.b16 %v862
    %v3046 = vunpack.c.h.b16 %v862
    %v3047 = vunpack.c.l.b16 %v863
    %v3048 = vunpack.c.h.b16 %v863
    %v3049 = vunpack.c.l.b16 %v864
    %v3050 = vunpack.c.h.b16 %v864
    %v3051 = vunpack.c.l.b16 %v865
    %v3052 = vunpack.c.h.b16 %v865
    %v3053 = vunpack.c.l.b16 %v866
    %v3054 = vunpack.c.h.b16 %v866
    %v3055 = vunpack.c.l.b16 %v867
    %v3056 = vunpack.c.h.b16 %v867
    %v3057 = vunpack.c.l.b16 %v868
    %v3058 = vunpack.c.h.b16 %v868
    %v3059 = vunpack.c.l.b16 %v869
    %v3060 = vunpack.c.h.b16 %v869
    %v3061 = vunpack.c.l.b16 %v870
    %v3062 = vunpack.c.h.b16 %v870
    %v3063 = vunpack.c.l.b16 %v871
    %v3064 = vunpack.c.h.b16 %v871
    %v3065 = vunpack.c.l.b16 %v872
    %v3066 = vunpack.c.h.b16 %v872
    %v3067 = vunpack.c.l.b16 %v873
    %v3068 = vunpack.c.h.b16 %v873
    %v3069 = vunpack.c.l.b16 %v874
    %v3070 = vunpack.c.h.b16 %v874
    %v3071 = vunpack.c.l.b16 %v875
    %v3072 = vunpack.c.h.b16 %v875
    %v3073 = vunpack.c.l.b16 %v876
    %v3074 = vunpack.c.h.b16 %v876
    %v3075 = vunpack.c.l.b16 %v877
    %v3076 = vunpack.c.h.b16 %v877
    %v3077 = vunpack.c.l.b16 %v878
    %v3078 = vunpack.c.h.b16 %v878
    %v3079 = vunpack.c.l.b16 %v879
    %v3080 = vunpack.c.h.b16 %v879
    %v3081 = vunpack.c.l.b16 %v880
    %v3082 = vunpack.c.h.b16 %v880
    %v3083 = vunpack.c.l.b16 %v881
    %v3084 = vunpack.c.h.b16 %v881
    %v3085 = vunpack.c.l.b16 %v882
    %v3086 = vunpack.c.h.b16 %v882
    %v3087 = vunpack.c.l.b16 %v883
    %v3088 = vunpack.c.h.b16 %v883
    %v3089 = vunpack.c.l.b16 %v884
    %v3090 = vunpack.c.h.b16 %v884
    %v3091 = vunpack.c.l.b16 %v885
    %v3092 = vunpack.c.h.b16 %v885
    %v3093 = vunpack.c.l.b16 %v886
    %v3094 = vunpack.c.h.b16 %v886
    %v3095 = vunpack.c.l.b16 %v887
    %v3096 = vunpack.c.h.b16 %v887
    %v3097 = vunpack.c.l.b16 %v888
    %v3098 = vunpack.c.h.b16 %v888
    %v3099 = vunpack.c.l.b16 %v889
    %v3100 = vunpack.c.h.b16 %v889
    %v3101 = vunpack.c.l.b16 %v890
    %v3102 = vunpack.c.h.b16 %v890
    %v3103 = vunpack.c.l.b16 %v891
    %v3104 = vunpack.c.h.b16 %v891
    %v3105 = vunpack.c.l.b16 %v892
    %v3106 = vunpack.c.h.b16 %v892
    %v3107 = vunpack.c.l.b16 %v893
    %v3108 = vunpack.c.h.b16 %v893
    %v3109 = vunpack.c.l.b16 %v894
    %v3110 = vunpack.c.h.b16 %v894
    %v3111 = vunpack.c.l.b16 %v895
    %v3112 = vunpack.c.h.b16 %v895
    %v3113 = vunpack.c.l.b16 %v896
    %v3114 = vunpack.c.h.b16 %v896
    %v3115 = vunpack.c.l.b16 %v897
    %v3116 = vunpack.c.h.b16 %v897
    %v3117 = vunpack.c.l.b16 %v898
    %v3118 = vunpack.c.h.b16 %v898
    %v3119 = vunpack.c.l.b16 %v899
    %v3120 = vunpack.c.h.b16 %v899
    %v3121 = vunpack.c.l.b16 %v900
    %v3122 = vunpack.c.h.b16 %v900
    %v3123 = vunpack.c.l.b16 %v901
    %v3124 = vunpack.c.h.b16 %v901
    %v3125 = vunpack.c.l.b16 %v902
    %v3126 = vunpack.c.h.b16 %v902
    %v3127 = vunpack.c.l.b16 %v903
    %v3128 = vunpack.c.h.b16 %v903
    %v3129 = vunpack.c.l.b16 %v904
    %v3130 = vunpack.c.h.b16 %v904
    %v3131 = vunpack.c.l.b16 %v905
    %v3132 = vunpack.c.h.b16 %v905
    %v3133 = vunpack.c.l.b16 %v906
    %v3134 = vunpack.c.h.b16 %v906
    %v3135 = vunpack.c.l.b16 %v907
    %v3136 = vunpack.c.h.b16 %v907
    %v3137 = vunpack.c.l.b16 %v908
    %v3138 = vunpack.c.h.b16 %v908
    %v3139 = vunpack.c.l.b16 %v909
    %v3140 = vunpack.c.h.b16 %v909
    %v3141 = vunpack.c.l.b16 %v910
    %v3142 = vunpack.c.h.b16 %v910
    %v3143 = vunpack.c.l.b16 %v911
    %v3144 = vunpack.c.h.b16 %v911
    %v3145 = vunpack.c.l.b16 %v912
    %v3146 = vunpack.c.h.b16 %v912
    %v3147 = vunpack.c.l.b16 %v913
    %v3148 = vunpack.c.h.b16 %v913
    %v3149 = vunpack.c.l.b16 %v914
    %v3150 = vunpack.c.h.b16 %v914
    %v3151 = vunpack.c.l.b16 %v915
    %v3152 = vunpack.c.h.b16 %v915
    %v3153 = vunpack.c.l.b16 %v916
    %v3154 = vunpack.c.h.b16 %v916
    %v3155 = vunpack.c.l.b16 %v917
    %v3156 = vunpack.c.h.b16 %v917
    %v3157 = vunpack.c.l.b16 %v918
    %v3158 = vunpack.c.h.b16 %v918
    %v3159 = vunpack.c.l.b16 %v919
    %v3160 = vunpack.c.h.b16 %v919
    %v3161 = vunpack.c.l.b16 %v920
    %v3162 = vunpack.c.h.b16 %v920
    %v3163 = vunpack.c.l.b16 %v921
    %v3164 = vunpack.c.h.b16 %v921
    %v3165 = vunpack.c.l.b16 %v922
    %v3166 = vunpack.c.h.b16 %v922
    %v3167 = vunpack.c.l.b16 %v923
    %v3168 = vunpack.c.h.b16 %v923
    %v3169 = vunpack.c.l.b16 %v924
    %v3170 = vunpack.c.h.b16 %v924
    %v3171 = vunpack.c.l.b16 %v925
    %v3172 = vunpack.c.h.b16 %v925
    %v3173 = vunpack.c.l.b16 %v926
    %v3174 = vunpack.c.h.b16 %v926
    %v3175 = vunpack.c.l.b16 %v927
    %v3176 = vunpack.c.h.b16 %v927
    %v3177 = vunpack.c.l.b16 %v928
    %v3178 = vunpack.c.h.b16 %v928
    %v3179 = vunpack.c.l.b16 %v929
    %v3180 = vunpack.c.h.b16 %v929
    %v3181 = vunpack.c.l.b16 %v930
    %v3182 = vunpack.c.h.b16 %v930
    %v3183 = vunpack.c.l.b16 %v931
    %v3184 = vunpack.c.h.b16 %v931
    %v3185 = vunpack.c.l.b16 %v932
    %v3186 = vunpack.c.h.b16 %v932
    %v3187 = vunpack.c.l.b16 %v933
    %v3188 = vunpack.c.h.b16 %v933
    %v3189 = vunpack.c.l.b16 %v934
    %v3190 = vunpack.c.h.b16 %v934
    %v3191 = vunpack.c.l.b16 %v935
    %v3192 = vunpack.c.h.b16 %v935
    %v3193 = vunpack.c.l.b16 %v936
    %v3194 = vunpack.c.h.b16 %v936
    %v3195 = vunpack.c.l.b16 %v937
    %v3196 = vunpack.c.h.b16 %v937
    %v3197 = vunpack.c.l.b16 %v938
    %v3198 = vunpack.c.h.b16 %v938
    %v3199 = vunpack.c.l.b16 %v939
    %v3200 = vunpack.c.h.b16 %v939
    %v3201 = vunpack.c.l.b16 %v940
    %v3202 = vunpack.c.h.b16 %v940
    %v3203 = vunpack.c.l.b16 %v941
    %v3204 = vunpack.c.h.b16 %v941
    %v3205 = vunpack.c.l.b16 %v942
    %v3206 = vunpack.c.h.b16 %v942
    %v3207 = vunpack.c.l.b16 %v943
    %v3208 = vunpack.c.h.b16 %v943
    %v3209 = vunpack.c.l.b16 %v944
    %v3210 = vunpack.c.h.b16 %v944
    %v3211 = vunpack.c.l.b16 %v945
    %v3212 = vunpack.c.h.b16 %v945
    %v3213 = vunpack.c.l.b16 %v946
    %v3214 = vunpack.c.h.b16 %v946
    %v3215 = vunpack.c.l.b16 %v947
    %v3216 = vunpack.c.h.b16 %v947
    %v3217 = vunpack.c.l.b16 %v948
    %v3218 = vunpack.c.h.b16 %v948
    %v3219 = vunpack.c.l.b16 %v949
    %v3220 = vunpack.c.h.b16 %v949
    %v3221 = vunpack.c.l.b16 %v950
    %v3222 = vunpack.c.h.b16 %v950
    %v3223 = vunpack.c.l.b16 %v951
    %v3224 = vunpack.c.h.b16 %v951
    %v3225 = vunpack.c.l.b16 %v952
    %v3226 = vunpack.c.h.b16 %v952
    %v3227 = vunpack.c.l.b16 %v953
    %v3228 = vunpack.c.h.b16 %v953
    %v3229 = vunpack.c.l.b16 %v954
    %v3230 = vunpack.c.h.b16 %v954
    %v3231 = vunpack.c.l.b16 %v955
    %v3232 = vunpack.c.h.b16 %v955
    %v3233 = vunpack.c.l.b16 %v956
    %v3234 = vunpack.c.h.b16 %v956
    %v3235 = vunpack.c.l.b16 %v957
    %v3236 = vunpack.c.h.b16 %v957
    %v3237 = vunpack.c.l.b16 %v958
    %v3238 = vunpack.c.h.b16 %v958
    %v3239 = vunpack.c.l.b16 %v959
    %v3240 = vunpack.c.h.b16 %v959
    %v3241 = vunpack.c.l.b16 %v960
    %v3242 = vunpack.c.h.b16 %v960
    %v3243 = vunpack.c.l.b16 %v961
    %v3244 = vunpack.c.h.b16 %v961
    %v3245 = vunpack.c.l.b16 %v962
    %v3246 = vunpack.c.h.b16 %v962
    %v3247 = vunpack.c.l.b16 %v963
    %v3248 = vunpack.c.h.b16 %v963
    %v3249 = vunpack.c.l.b16 %v964
    %v3250 = vunpack.c.h.b16 %v964
    %v3251 = vunpack.c.l.b16 %v965
    %v3252 = vunpack.c.h.b16 %v965
    %v3253 = vunpack.c.l.b16 %v966
    %v3254 = vunpack.c.h.b16 %v966
    %v3255 = vunpack.c.l.b16 %v967
    %v3256 = vunpack.c.h.b16 %v967
    %v3257 = vunpack.c.l.b16 %v968
    %v3258 = vunpack.c.h.b16 %v968
    %v3259 = vunpack.c.l.b16 %v969
    %v3260 = vunpack.c.h.b16 %v969
    %v3261 = vunpack.c.l.b16 %v970
    %v3262 = vunpack.c.h.b16 %v970
    %v3263 = vunpack.c.l.b16 %v971
    %v3264 = vunpack.c.h.b16 %v971
    %v3265 = vunpack.c.l.b16 %v972
    %v3266 = vunpack.c.h.b16 %v972
    %v3267 = vunpack.c.l.b16 %v973
    %v3268 = vunpack.c.h.b16 %v973
    %v3269 = vunpack.c.l.b16 %v974
    %v3270 = vunpack.c.h.b16 %v974
    %v3271 = vunpack.c.l.b16 %v975
    %v3272 = vunpack.c.h.b16 %v975
    %v3273 = vunpack.c.l.b16 %v976
    %v3274 = vunpack.c.h.b16 %v976
    %v3275 = vunpack.c.l.b16 %v977
    %v3276 = vunpack.c.h.b16 %v977
    %v3277 = vunpack.c.l.b16 %v978
    %v3278 = vunpack.c.h.b16 %v978
    %v3279 = vunpack.c.l.b16 %v979
    %v3280 = vunpack.c.h.b16 %v979
    %v3281 = vunpack.c.l.b16 %v980
    %v3282 = vunpack.c.h.b16 %v980
    %v3283 = vunpack.c.l.b16 %v981
    %v3284 = vunpack.c.h.b16 %v981
    %v3285 = vunpack.c.l.b16 %v982
    %v3286 = vunpack.c.h.b16 %v982
    %v3287 = vpack.c.b16 %v1763, %v1751
    %v3288 = vpack.c.b16 %v1764, %v1752
    %v3289 = vpack.c.b16 %v1765, %v1753
    %v3290 = vpack.c.b16 %v1766, %v1754
    %v3291 = vpack.c.b16 %v1767, %v1755
    %v3292 = vpack.c.b16 %v1768, %v1756
    %v3293 = vpack.c.b16 %v1769, %v1757
    %v3294 = vpack.c.b16 %v1770, %v1758
    %v3295 = vpack.c.b16 %v1771, %v1759
    %v3296 = vpack.c.b16 %v1772, %v1760
    %v3297 = vpack.c.b16 %v1773, %v1761
    %v3298 = vpack.c.b16 %v1774, %v1762
    %v3299 = vpack.c.b16 %v1787, %v1775
    %v3300 = vpack.c.b16 %v1788, %v1776
    %v3301 = vpack.c.b16 %v1789, %v1777
    %v3302 = vpack.c.b16 %v1790, %v1778
    %v3303 = vpack.c.b16 %v1791, %v1779
    %v3304 = vpack.c.b16 %v1792, %v1780
    %v3305 = vpack.c.b16 %v1793, %v1781
    %v3306 = vpack.c.b16 %v1794, %v1782
    %v3307 = vpack.c.b16 %v1795, %v1783
    %v3308 = vpack.c.b16 %v1796, %v1784
    %v3309 = vpack.c.b16 %v1797, %v1785
    %v3310 = vpack.c.b16 %v1798, %v1786
    %v3311 = vpack.c.b16 %v1811, %v1799
    %v3312 = vpack.c.b16 %v1812, %v1800
    %v3313 = vpack.c.b16 %v1813, %v1801
    %v3314 = vpack.c.b16 %v1814, %v1802
    %v3315 = vpack.c.b16 %v1815, %v1803
    %v3316 = vpack.c.b16 %v1816, %v1804
    %v3317 = vpack.c.b16 %v1817, %v1805
    %v3318 = vpack.c.b16 %v1818, %v1806
    %v3319 = vpack.c.b16 %v1819, %v1807
    %v3320 = vpack.c.b16 %v1820, %v1808
    %v3321 = vpack.c.b16 %v1821, %v1809
    %v3322 = vpack.c.b16 %v1822, %v1810
    %v3323 = vpack.c.b16 %v1835, %v1823
    %v3324 = vpack.c.b16 %v1836, %v1824
    %v3325 = vpack.c.b16 %v1837, %v1825
    %v3326 = vpack.c.b16 %v1838, %v1826
    %v3327 = vpack.c.b16 %v1839, %v1827
    %v3328 = vpack.c.b16 %v1840, %v1828
    %v3329 = vpack.c.b16 %v1841, %v1829
    %v3330 = vpack.c.b16 %v1842, %v1830
    %v3331 = vpack.c.b16 %v1843, %v1831
    %v3332 = vpack.c.b16 %v1844, %v1832
    %v3333 = vpack.c.b16 %v1845, %v1833
    %v3334 = vpack.c.b16 %v1846, %v1834
    %v3335 = vpack.c.b16 %v1859, %v1847
    %v3336 = vpack.c.b16 %v1860, %v1848
    %v3337 = vpack.c.b16 %v1861, %v1849
    %v3338 = vpack.c.b16 %v1862, %v1850
    %v3339 = vpack.c.b16 %v1863, %v1851
    %v3340 = vpack.c.b16 %v1864, %v1852
    %v3341 = vpack.c.b16 %v1865, %v1853
    %v3342 = vpack.c.b16 %v1866, %v1854
    %v3343 = vpack.c.b16 %v1867, %v1855
    %v3344 = vpack.c.b16 %v1868, %v1856
    %v3345 = vpack.c.b16 %v1869, %v1857
    %v3346 = vpack.c.b16 %v1870, %v1858
    %v3347 = vpack.c.b16 %v1883, %v1871
    %v3348 = vpack.c.b16 %v1884, %v1872
    %v3349 = vpack.c.b16 %v1885, %v1873
    %v3350 = vpack.c.b16 %v1886, %v1874
    %v3351 = vpack.c.b16 %v1887, %v1875
    %v3352 = vpack.c.b16 %v1888, %v1876
    %v3353 = vpack.c.b16 %v1889, %v1877
    %v3354 = vpack.c.b16 %v1890, %v1878
    %v3355 = vpack.c.b16 %v1891, %v1879
    %v3356 = vpack.c.b16 %v1892, %v1880
    %v3357 = vpack.c.b16 %v1893, %v1881
    %v3358 = vpack.c.b16 %v1894, %v1882
    %v3359 = vpack.c.b16 %v1907, %v1895
    %v3360 = vpack.c.b16 %v1908, %v1896
    %v3361 = vpack.c.b16 %v1909, %v1897
    %v3362 = vpack.c.b16 %v1910, %v1898
    %v3363 = vpack.c.b16 %v1911, %v1899
    %v3364 = vpack.c.b16 %v1912, %v1900
    %v3365 = vpack.c.b16 %v1913, %v1901
    %v3366 = vpack.c.b16 %v1914, %v1902
    %v3367 = vpack.c.b16 %v1915, %v1903
    %v3368 = vpack.c.b16 %v1916, %v1904
    %v3369 = vpack.c.b16 %v1917, %v1905
    %v3370 = vpack.c.b16 %v1918, %v1906
    %v3371 = vpack.c.b16 %v1931, %v1919
    %v3372 = vpack.c.b16 %v1932, %v1920
    %v3373 = vpack.c.b16 %v1933, %v1921
    %v3374 = vpack.c.b16 %v1934, %v1922
    %v3375 = vpack.c.b16 %v1935, %v1923
    %v3376 = vpack.c.b16 %v1936, %v1924
    %v3377 = vpack.c.b16 %v1937, %v1925
    %v3378 = vpack.c.b16 %v1938, %v1926
    %v3379 = vpack.c.b16 %v1939, %v1927
    %v3380 = vpack.c.b16 %v1940, %v1928
    %v3381 = vpack.c.b16 %v1941, %v1929
    %v3382 = vpack.c.b16 %v1942, %v1930
    %v3383 = vpack.c.b16 %v1955, %v1943
    %v3384 = vpack.c.b16 %v1956, %v1944
    %v3385 = vpack.c.b16 %v1957, %v1945
    %v3386 = vpack.c.b16 %v1958, %v1946
    %v3387 = vpack.c.b16 %v1959, %v1947
    %v3388 = vpack.c.b16 %v1960, %v1948
    %v3389 = vpack.c.b16 %v1961, %v1949
    %v3390 = vpack.c.b16 %v1962, %v1950
    %v3391 = vpack.c.b16 %v1963, %v1951
    %v3392 = vpack.c.b16 %v1964, %v1952
    %v3393 = vpack.c.b16 %v1965, %v1953
    %v3394 = vpack.c.b16 %v1966, %v1954
    %v3395 = vpack.c.b16 %v1979, %v1967
    %v3396 = vpack.c.b16 %v1980, %v1968
    %v3397 = vpack.c.b16 %v1981, %v1969
    %v3398 = vpack.c.b16 %v1982, %v1970
    %v3399 = vpack.c.b16 %v1983, %v1971
    %v3400 = vpack.c.b16 %v1984, %v1972
    %v3401 = vpack.c.b16 %v1985, %v1973
    %v3402 = vpack.c.b16 %v1986, %v1974
    %v3403 = vpack.c.b16 %v1987, %v1975
    %v3404 = vpack.c.b16 %v1988, %v1976
    %v3405 = vpack.c.b16 %v1989, %v1977
    %v3406 = vpack.c.b16 %v1990, %v1978
    %v3407 = vpack.c.b16 %v2003, %v1991
    %v3408 = vpack.c.b16 %v2004, %v1992
    %v3409 = vpack.c.b16 %v2005, %v1993
    %v3410 = vpack.c.b16 %v2006, %v1994
    %v3411 = vpack.c.b16 %v2007, %v1995
    %v3412 = vpack.c.b16 %v2008, %v1996
    %v3413 = vpack.c.b16 %v2009, %v1997
    %v3414 = vpack.c.b16 %v2010, %v1998
    %v3415 = vpack.c.b16 %v2011, %v1999
    %v3416 = vpack.c.b16 %v2012, %v2000
    %v3417 = vpack.c.b16 %v2013, %v2001
    %v3418 = vpack.c.b16 %v2014, %v2002
    %v3419 = vpack.c.b16 %v2027, %v2015
    %v3420 = vpack.c.b16 %v2028, %v2016
    %v3421 = vpack.c.b16 %v2029, %v2017
    %v3422 = vpack.c.b16 %v2030, %v2018
    %v3423 = vpack.c.b16 %v2031, %v2019
    %v3424 = vpack.c.b16 %v2032, %v2020
    %v3425 = vpack.c.b16 %v2033, %v2021
    %v3426 = vpack.c.b16 %v2034, %v2022
    %v3427 = vpack.c.b16 %v2035, %v2023
    %v3428 = vpack.c.b16 %v2036, %v2024
    %v3429 = vpack.c.b16 %v2037, %v2025
    %v3430 = vpack.c.b16 %v2038, %v2026
    %v3431 = vpack.c.b16 %v2051, %v2039
    %v3432 = vpack.c.b16 %v2052, %v2040
    %v3433 = vpack.c.b16 %v2053, %v2041
    %v3434 = vpack.c.b16 %v2054, %v2042
    %v3435 = vpack.c.b16 %v2055, %v2043
    %v3436 = vpack.c.b16 %v2056, %v2044
    %v3437 = vpack.c.b16 %v2057, %v2045
    %v3438 = vpack.c.b16 %v2058, %v2046
    %v3439 = vpack.c.b16 %v2059, %v2047
    %v3440 = vpack.c.b16 %v2060, %v2048
    %v3441 = vpack.c.b16 %v2061, %v2049
    %v3442 = vpack.c.b16 %v2062, %v2050
    %v3443 = vpack.c.b16 %v2075, %v2063
    %v3444 = vpack.c.b16 %v2076, %v2064
    %v3445 = vpack.c.b16 %v2077, %v2065
    %v3446 = vpack.c.b16 %v2078, %v2066
    %v3447 = vpack.c.b16 %v2079, %v2067
    %v3448 = vpack.c.b16 %v2080, %v2068
    %v3449 = vpack.c.b16 %v2081, %v2069
    %v3450 = vpack.c.b16 %v2082, %v2070
    %v3451 = vpack.c.b16 %v2083, %v2071
    %v3452 = vpack.c.b16 %v2084, %v2072
    %v3453 = vpack.c.b16 %v2085, %v2073
    %v3454 = vpack.c.b16 %v2086, %v2074
    %v3455 = vpack.c.b16 %v2099, %v2087
    %v3456 = vpack.c.b16 %v2100, %v2088
    %v3457 = vpack.c.b16 %v2101, %v2089
    %v3458 = vpack.c.b16 %v2102, %v2090
    %v3459 = vpack.c.b16 %v2103, %v2091
    %v3460 = vpack.c.b16 %v2104, %v2092
    %v3461 = vpack.c.b16 %v2105, %v2093
    %v3462 = vpack.c.b16 %v2106, %v2094
    %v3463 = vpack.c.b16 %v2107, %v2095
    %v3464 = vpack.c.b16 %v2108, %v2096
    %v3465 = vpack.c.b16 %v2109, %v2097
    %v3466 = vpack.c.b16 %v2110, %v2098
    %v3467 = vpack.c.b16 %v2123, %v2111
    %v3468 = vpack.c.b16 %v2124, %v2112
    %v3469 = vpack.c.b16 %v2125, %v2113
    %v3470 = vpack.c.b16 %v2126, %v2114
    %v3471 = vpack.c.b16 %v2127, %v2115
    %v3472 = vpack.c.b16 %v2128, %v2116
    %v3473 = vpack.c.b16 %v2129, %v2117
    %v3474 = vpack.c.b16 %v2130, %v2118
    %v3475 = vpack.c.b16 %v2131, %v2119
    %v3476 = vpack.c.b16 %v2132, %v2120
    %v3477 = vpack.c.b16 %v2133, %v2121
    %v3478 = vpack.c.b16 %v2134, %v2122
    %v3479 = vpack.c.b16 %v2147, %v2135
    %v3480 = vpack.c.b16 %v2148, %v2136
    %v3481 = vpack.c.b16 %v2149, %v2137
    %v3482 = vpack.c.b16 %v2150, %v2138
    %v3483 = vpack.c.b16 %v2151, %v2139
    %v3484 = vpack.c.b16 %v2152, %v2140
    %v3485 = vpack.c.b16 %v2153, %v2141
    %v3486 = vpack.c.b16 %v2154, %v2142
    %v3487 = vpack.c.b16 %v2155, %v2143
    %v3488 = vpack.c.b16 %v2156, %v2144
    %v3489 = vpack.c.b16 %v2157, %v2145
    %v3490 = vpack.c.b16 %v2158, %v2146
    %v3491 = vpack.c.b16 %v2171, %v2159
    %v3492 = vpack.c.b16 %v2172, %v2160
    %v3493 = vpack.c.b16 %v2173, %v2161
    %v3494 = vpack.c.b16 %v2174, %v2162
    %v3495 = vpack.c.b16 %v2175, %v2163
    %v3496 = vpack.c.b16 %v2176, %v2164
    %v3497 = vpack.c.b16 %v2177, %v2165
    %v3498 = vpack.c.b16 %v2178, %v2166
    %v3499 = vpack.c.b16 %v2179, %v2167
    %v3500 = vpack.c.b16 %v2180, %v2168
    %v3501 = vpack.c.b16 %v2181, %v2169
    %v3502 = vpack.c.b16 %v2182, %v2170
    %v3503 = vpack.c.b16 %v2195, %v2183
    %v3504 = vpack.c.b16 %v2196, %v2184
    %v3505 = vpack.c.b16 %v2197, %v2185
    %v3506 = vpack.c.b16 %v2198, %v2186
    %v3507 = vpack.c.b16 %v2199, %v2187
    %v3508 = vpack.c.b16 %v2200, %v2188
    %v3509 = vpack.c.b16 %v2201, %v2189
    %v3510 = vpack.c.b16 %v2202, %v2190
    %v3511 = vpack.c.b16 %v2203, %v2191
    %v3512 = vpack.c.b16 %v2204, %v2192
    %v3513 = vpack.c.b16 %v2205, %v2193
    %v3514 = vpack.c.b16 %v2206, %v2194
    %v3515 = vpack.c.b16 %v2219, %v2207
    %v3516 = vpack.c.b16 %v2220, %v2208
    %v3517 = vpack.c.b16 %v2221, %v2209
    %v3518 = vpack.c.b16 %v2222, %v2210
    %v3519 = vpack.c.b16 %v2223, %v2211
    %v3520 = vpack.c.b16 %v2224, %v2212
    %v3521 = vpack.c.b16 %v2225, %v2213
    %v3522 = vpack.c.b16 %v2226, %v2214
    %v3523 = vpack.c.b16 %v2227, %v2215
    %v3524 = vpack.c.b16 %v2228, %v2216
    %v3525 = vpack.c.b16 %v2229, %v2217
    %v3526 = vpack.c.b16 %v2230, %v2218
    %v3527 = vpack.c.b16 %v2243, %v2231
    %v3528 = vpack.c.b16 %v2244, %v2232
    %v3529 = vpack.c.b16 %v2245, %v2233
    %v3530 = vpack.c.b16 %v2246, %v2234
    %v3531 = vpack.c.b16 %v2247, %v2235
    %v3532 = vpack.c.b16 %v2248, %v2236
    %v3533 = vpack.c.b16 %v2249, %v2237
    %v3534 = vpack.c.b16 %v2250, %v2238
    %v3535 = vpack.c.b16 %v2251, %v2239
    %v3536 = vpack.c.b16 %v2252, %v2240
    %v3537 = vpack.c.b16 %v2253, %v2241
    %v3538 = vpack.c.b16 %v2254, %v2242
    %v3539 = vpack.c.b16 %v2267, %v2255
    %v3540 = vpack.c.b16 %v2268, %v2256
    %v3541 = vpack.c.b16 %v2269, %v2257
    %v3542 = vpack.c.b16 %v2270, %v2258
    %v3543 = vpack.c.b16 %v2271, %v2259
    %v3544 = vpack.c.b16 %v2272, %v2260
    %v3545 = vpack.c.b16 %v2273, %v2261
    %v3546 = vpack.c.b16 %v2274, %v2262
    %v3547 = vpack.c.b16 %v2275, %v2263
    %v3548 = vpack.c.b16 %v2276, %v2264
    %v3549 = vpack.c.b16 %v2277, %v2265
    %v3550 = vpack.c.b16 %v2278, %v2266
    %v3551 = vpack.c.b16 %v2291, %v2279
    %v3552 = vpack.c.b16 %v2292, %v2280
    %v3553 = vpack.c.b16 %v2293, %v2281
    %v3554 = vpack.c.b16 %v2294, %v2282
    %v3555 = vpack.c.b16 %v2295, %v2283
    %v3556 = vpack.c.b16 %v2296, %v2284
    %v3557 = vpack.c.b16 %v2297, %v2285
    %v3558 = vpack.c.b16 %v2298, %v2286
    %v3559 = vpack.c.b16 %v2299, %v2287
    %v3560 = vpack.c.b16 %v2300, %v2288
    %v3561 = vpack.c.b16 %v2301, %v2289
    %v3562 = vpack.c.b16 %v2302, %v2290
    %v3563 = vpack.c.b16 %v2315, %v2303
    %v3564 = vpack.c.b16 %v2316, %v2304
    %v3565 = vpack.c.b16 %v2317, %v2305
    %v3566 = vpack.c.b16 %v2318, %v2306
    %v3567 = vpack.c.b16 %v2319, %v2307
    %v3568 = vpack.c.b16 %v2320, %v2308
    %v3569 = vpack.c.b16 %v2321, %v2309
    %v3570 = vpack.c.b16 %v2322, %v2310
    %v3571 = vpack.c.b16 %v2323, %v2311
    %v3572 = vpack.c.b16 %v2324, %v2312
    %v3573 = vpack.c.b16 %v2325, %v2313
    %v3574 = vpack.c.b16 %v2326, %v2314
    %v3575 = vpack.c.b16 %v2339, %v2327
    %v3576 = vpack.c.b16 %v2340, %v2328
    %v3577 = vpack.c.b16 %v2341, %v2329
    %v3578 = vpack.c.b16 %v2342, %v2330
    %v3579 = vpack.c.b16 %v2343, %v2331
    %v3580 = vpack.c.b16 %v2344, %v2332
    %v3581 = vpack.c.b16 %v2345, %v2333
    %v3582 = vpack.c.b16 %v2346, %v2334
    %v3583 = vpack.c.b16 %v2347, %v2335
    %v3584 = vpack.c.b16 %v2348, %v2336
    %v3585 = vpack.c.b16 %v2349, %v2337
    %v3586 = vpack.c.b16 %v2350, %v2338
    %v3587 = vpack.c.b16 %v2363, %v2351
    %v3588 = vpack.c.b16 %v2364, %v2352
    %v3589 = vpack.c.b16 %v2365, %v2353
    %v3590 = vpack.c.b16 %v2366, %v2354
    %v3591 = vpack.c.b16 %v2367, %v2355
    %v3592 = vpack.c.b16 %v2368, %v2356
    %v3593 = vpack.c.b16 %v2369, %v2357
    %v3594 = vpack.c.b16 %v2370, %v2358
    %v3595 = vpack.c.b16 %v2371, %v2359
    %v3596 = vpack.c.b16 %v2372, %v2360
    %v3597 = vpack.c.b16 %v2373, %v2361
    %v3598 = vpack.c.b16 %v2374, %v2362
    %v3599 = vpack.c.b16 %v2387, %v2375
    %v3600 = vpack.c.b16 %v2388, %v2376
    %v3601 = vpack.c.b16 %v2389, %v2377
    %v3602 = vpack.c.b16 %v2390, %v2378
    %v3603 = vpack.c.b16 %v2391, %v2379
    %v3604 = vpack.c.b16 %v2392, %v2380
    %v3605 = vpack.c.b16 %v2393, %v2381
    %v3606 = vpack.c.b16 %v2394, %v2382
    %v3607 = vpack.c.b16 %v2395, %v2383
    %v3608 = vpack.c.b16 %v2396, %v2384
    %v3609 = vpack.c.b16 %v2397, %v2385
    %v3610 = vpack.c.b16 %v2398, %v2386
    %v3611 = vpack.c.b16 %v2411, %v2399
    %v3612 = vpack.c.b16 %v2412, %v2400
    %v3613 = vpack.c.b16 %v2413, %v2401
    %v3614 = vpack.c.b16 %v2414, %v2402
    %v3615 = vpack.c.b16 %v2415, %v2403
    %v3616 = vpack.c.b16 %v2416, %v2404
    %v3617 = vpack.c.b16 %v2417, %v2405
    %v3618 = vpack.c.b16 %v2418, %v2406
    %v3619 = vpack.c.b16 %v2419, %v2407
    %v3620 = vpack.c.b16 %v2420, %v2408
    %v3621 = vpack.c.b16 %v2421, %v2409
    %v3622 = vpack.c.b16 %v2422, %v2410
    %v3623 = vpack.c.b16 %v2435, %v2423
    %v3624 = vpack.c.b16 %v2436, %v2424
    %v3625 = vpack.c.b16 %v2437, %v2425
    %v3626 = vpack.c.b16 %v2438, %v2426
    %v3627 = vpack.c.b16 %v2439, %v2427
    %v3628 = vpack.c.b16 %v2440, %v2428
    %v3629 = vpack.c.b16 %v2441, %v2429
    %v3630 = vpack.c.b16 %v2442, %v2430
    %v3631 = vpack.c.b16 %v2443, %v2431
    %v3632 = vpack.c.b16 %v2444, %v2432
    %v3633 = vpack.c.b16 %v2445, %v2433
    %v3634 = vpack.c.b16 %v2446, %v2434
    %v3635 = vpack.c.b16 %v2459, %v2447
    %v3636 = vpack.c.b16 %v2460, %v2448
    %v3637 = vpack.c.b16 %v2461, %v2449
    %v3638 = vpack.c.b16 %v2462, %v2450
    %v3639 = vpack.c.b16 %v2463, %v2451
    %v3640 = vpack.c.b16 %v2464, %v2452
    %v3641 = vpack.c.b16 %v2465, %v2453
    %v3642 = vpack.c.b16 %v2466, %v2454
    %v3643 = vpack.c.b16 %v2467, %v2455
    %v3644 = vpack.c.b16 %v2468, %v2456
    %v3645 = vpack.c.b16 %v2469, %v2457
    %v3646 = vpack.c.b16 %v2470, %v2458
    %v3647 = vpack.c.b16 %v2483, %v2471
    %v3648 = vpack.c.b16 %v2484, %v2472
    %v3649 = vpack.c.b16 %v2485, %v2473
    %v3650 = vpack.c.b16 %v2486, %v2474
    %v3651 = vpack.c.b16 %v2487, %v2475
    %v3652 = vpack.c.b16 %v2488, %v2476
    %v3653 = vpack.c.b16 %v2489, %v2477
    %v3654 = vpack.c.b16 %v2490, %v2478
    %v3655 = vpack.c.b16 %v2491, %v2479
    %v3656 = vpack.c.b16 %v2492, %v2480
    %v3657 = vpack.c.b16 %v2493, %v2481
    %v3658 = vpack.c.b16 %v2494, %v2482
    %v3659 = vpack.c.b16 %v2507, %v2495
    %v3660 = vpack.c.b16 %v2508, %v2496
    %v3661 = vpack.c.b16 %v2509, %v2497
    %v3662 = vpack.c.b16 %v2510, %v2498
    %v3663 = vpack.c.b16 %v2511, %v2499
    %v3664 = vpack.c.b16 %v2512, %v2500
    %v3665 = vpack.c.b16 %v2513, %v2501
    %v3666 = vpack.c.b16 %v2514, %v2502
    %v3667 = vpack.c.b16 %v2515, %v2503
    %v3668 = vpack.c.b16 %v2516, %v2504
    %v3669 = vpack.c.b16 %v2517, %v2505
    %v3670 = vpack.c.b16 %v2518, %v2506
    %v3671 = vpack.c.b16 %v2531, %v2519
    %v3672 = vpack.c.b16 %v2532, %v2520
    %v3673 = vpack.c.b16 %v2533, %v2521
    %v3674 = vpack.c.b16 %v2534, %v2522
    %v3675 = vpack.c.b16 %v2535, %v2523
    %v3676 = vpack.c.b16 %v2536, %v2524
    %v3677 = vpack.c.b16 %v2537, %v2525
    %v3678 = vpack.c.b16 %v2538, %v2526
    %v3679 = vpack.c.b16 %v2539, %v2527
    %v3680 = vpack.c.b16 %v2540, %v2528
    %v3681 = vpack.c.b16 %v2541, %v2529
    %v3682 = vpack.c.b16 %v2542, %v2530
    %v3683 = vpack.c.b16 %v2555, %v2543
    %v3684 = vpack.c.b16 %v2556, %v2544
    %v3685 = vpack.c.b16 %v2557, %v2545
    %v3686 = vpack.c.b16 %v2558, %v2546
    %v3687 = vpack.c.b16 %v2559, %v2547
    %v3688 = vpack.c.b16 %v2560, %v2548
    %v3689 = vpack.c.b16 %v2561, %v2549
    %v3690 = vpack.c.b16 %v2562, %v2550
    %v3691 = vpack.c.b16 %v2563, %v2551
    %v3692 = vpack.c.b16 %v2564, %v2552
    %v3693 = vpack.c.b16 %v2565, %v2553
    %v3694 = vpack.c.b16 %v2566, %v2554
    %v3695 = vpack.c.b16 %v2579, %v2567
    %v3696 = vpack.c.b16 %v2580, %v2568
    %v3697 = vpack.c.b16 %v2581, %v2569
    %v3698 = vpack.c.b16 %v2582, %v2570
    %v3699 = vpack.c.b16 %v2583, %v2571
    %v3700 = vpack.c.b16 %v2584, %v2572
    %v3701 = vpack.c.b16 %v2585, %v2573
    %v3702 = vpack.c.b16 %v2586, %v2574
    %v3703 = vpack.c.b16 %v2587, %v2575
    %v3704 = vpack.c.b16 %v2588, %v2576
    %v3705 = vpack.c.b16 %v2589, %v2577
    %v3706 = vpack.c.b16 %v2590, %v2578
    %v3707 = vpack.c.b16 %v2603, %v2591
    %v3708 = vpack.c.b16 %v2604, %v2592
    %v3709 = vpack.c.b16 %v2605, %v2593
    %v3710 = vpack.c.b16 %v2606, %v2594
    %v3711 = vpack.c.b16 %v2607, %v2595
    %v3712 = vpack.c.b16 %v2608, %v2596
    %v3713 = vpack.c.b16 %v2609, %v2597
    %v3714 = vpack.c.b16 %v2610, %v2598
    %v3715 = vpack.c.b16 %v2611, %v2599
    %v3716 = vpack.c.b16 %v2612, %v2600
    %v3717 = vpack.c.b16 %v2613, %v2601
    %v3718 = vpack.c.b16 %v2614, %v2602
    %v3719 = vpack.c.b16 %v2627, %v2615
    %v3720 = vpack.c.b16 %v2628, %v2616
    %v3721 = vpack.c.b16 %v2629, %v2617
    %v3722 = vpack.c.b16 %v2630, %v2618
    %v3723 = vpack.c.b16 %v2631, %v2619
    %v3724 = vpack.c.b16 %v2632, %v2620
    %v3725 = vpack.c.b16 %v2633, %v2621
    %v3726 = vpack.c.b16 %v2634, %v2622
    %v3727 = vpack.c.b16 %v2635, %v2623
    %v3728 = vpack.c.b16 %v2636, %v2624
    %v3729 = vpack.c.b16 %v2637, %v2625
    %v3730 = vpack.c.b16 %v2638, %v2626
    %v3731 = vpack.c.b16 %v2651, %v2639
    %v3732 = vpack.c.b16 %v2652, %v2640
    %v3733 = vpack.c.b16 %v2653, %v2641
    %v3734 = vpack.c.b16 %v2654, %v2642
    %v3735 = vpack.c.b16 %v2655, %v2643
    %v3736 = vpack.c.b16 %v2656, %v2644
    %v3737 = vpack.c.b16 %v2657, %v2645
    %v3738 = vpack.c.b16 %v2658, %v2646
    %v3739 = vpack.c.b16 %v2659, %v2647
    %v3740 = vpack.c.b16 %v2660, %v2648
    %v3741 = vpack.c.b16 %v2661, %v2649
    %v3742 = vpack.c.b16 %v2662, %v2650
    %v3743 = vpack.c.b16 %v2675, %v2663
    %v3744 = vpack.c.b16 %v2676, %v2664
    %v3745 = vpack.c.b16 %v2677, %v2665
    %v3746 = vpack.c.b16 %v2678, %v2666
    %v3747 = vpack.c.b16 %v2679, %v2667
    %v3748 = vpack.c.b16 %v2680, %v2668
    %v3749 = vpack.c.b16 %v2681, %v2669
    %v3750 = vpack.c.b16 %v2682, %v2670
    %v3751 = vpack.c.b16 %v2683, %v2671
    %v3752 = vpack.c.b16 %v2684, %v2672
    %v3753 = vpack.c.b16 %v2685, %v2673
    %v3754 = vpack.c.b16 %v2686, %v2674
    %v3755 = vpack.c.b16 %v2699, %v2687
    %v3756 = vpack.c.b16 %v2700, %v2688
    %v3757 = vpack.c.b16 %v2701, %v2689
    %v3758 = vpack.c.b16 %v2702, %v2690
    %v3759 = vpack.c.b16 %v2703, %v2691
    %v3760 = vpack.c.b16 %v2704, %v2692
    %v3761 = vpack.c.b16 %v2705, %v2693
    %v3762 = vpack.c.b16 %v2706, %v2694
    %v3763 = vpack.c.b16 %v2707, %v2695
    %v3764 = vpack.c.b16 %v2708, %v2696
    %v3765 = vpack.c.b16 %v2709, %v2697
    %v3766 = vpack.c.b16 %v2710, %v2698
    %v3767 = vpack.c.b16 %v2723, %v2711
    %v3768 = vpack.c.b16 %v2724, %v2712
    %v3769 = vpack.c.b16 %v2725, %v2713
    %v3770 = vpack.c.b16 %v2726, %v2714
    %v3771 = vpack.c.b16 %v2727, %v2715
    %v3772 = vpack.c.b16 %v2728, %v2716
    %v3773 = vpack.c.b16 %v2729, %v2717
    %v3774 = vpack.c.b16 %v2730, %v2718
    %v3775 = vpack.c.b16 %v2731, %v2719
    %v3776 = vpack.c.b16 %v2732, %v2720
    %v3777 = vpack.c.b16 %v2733, %v2721
    %v3778 = vpack.c.b16 %v2734, %v2722
    %v3779 = vpack.c.b16 %v2747, %v2735
    %v3780 = vpack.c.b16 %v2748, %v2736
    %v3781 = vpack.c.b16 %v2749, %v2737
    %v3782 = vpack.c.b16 %v2750, %v2738
    %v3783 = vpack.c.b16 %v2751, %v2739
    %v3784 = vpack.c.b16 %v2752, %v2740
    %v3785 = vpack.c.b16 %v2753, %v2741
    %v3786 = vpack.c.b16 %v2754, %v2742
    %v3787 = vpack.c.b16 %v2755, %v2743
    %v3788 = vpack.c.b16 %v2756, %v2744
    %v3789 = vpack.c.b16 %v2757, %v2745
    %v3790 = vpack.c.b16 %v2758, %v2746
    %v3791 = vpack.c.b16 %v2771, %v2759
    %v3792 = vpack.c.b16 %v2772, %v2760
    %v3793 = vpack.c.b16 %v2773, %v2761
    %v3794 = vpack.c.b16 %v2774, %v2762
    %v3795 = vpack.c.b16 %v2775, %v2763
    %v3796 = vpack.c.b16 %v2776, %v2764
    %v3797 = vpack.c.b16 %v2777, %v2765
    %v3798 = vpack.c.b16 %v2778, %v2766
    %v3799 = vpack.c.b16 %v2779, %v2767
    %v3800 = vpack.c.b16 %v2780, %v2768
    %v3801 = vpack.c.b16 %v2781, %v2769
    %v3802 = vpack.c.b16 %v2782, %v2770
    %v3803 = vpack.c.b16 %v2795, %v2783
    %v3804 = vpack.c.b16 %v2796, %v2784
    %v3805 = vpack.c.b16 %v2797, %v2785
    %v3806 = vpack.c.b16 %v2798, %v2786
    %v3807 = vpack.c.b16 %v2799, %v2787
    %v3808 = vpack.c.b16 %v2800, %v2788
    %v3809 = vpack.c.b16 %v2801, %v2789
    %v3810 = vpack.c.b16 %v2802, %v2790
    %v3811 = vpack.c.b16 %v2803, %v2791
    %v3812 = vpack.c.b16 %v2804, %v2792
    %v3813 = vpack.c.b16 %v2805, %v2793
    %v3814 = vpack.c.b16 %v2806, %v2794
    %v3815 = vpack.c.b16 %v2819, %v2807
    %v3816 = vpack.c.b16 %v2820, %v2808
    %v3817 = vpack.c.b16 %v2821, %v2809
    %v3818 = vpack.c.b16 %v2822, %v2810
    %v3819 = vpack.c.b16 %v2823, %v2811
    %v3820 = vpack.c.b16 %v2824, %v2812
    %v3821 = vpack.c.b16 %v2825, %v2813
    %v3822 = vpack.c.b16 %v2826, %v2814
    %v3823 = vpack.c.b16 %v2827, %v2815
    %v3824 = vpack.c.b16 %v2828, %v2816
    %v3825 = vpack.c.b16 %v2829, %v2817
    %v3826 = vpack.c.b16 %v2830, %v2818
    %v3827 = vpack.c.b16 %v2843, %v2831
    %v3828 = vpack.c.b16 %v2844, %v2832
    %v3829 = vpack.c.b16 %v2845, %v2833
    %v3830 = vpack.c.b16 %v2846, %v2834
    %v3831 = vpack.c.b16 %v2847, %v2835
    %v3832 = vpack.c.b16 %v2848, %v2836
    %v3833 = vpack.c.b16 %v2849, %v2837
    %v3834 = vpack.c.b16 %v2850, %v2838
    %v3835 = vpack.c.b16 %v2851, %v2839
    %v3836 = vpack.c.b16 %v2852, %v2840
    %v3837 = vpack.c.b16 %v2853, %v2841
    %v3838 = vpack.c.b16 %v2854, %v2842
    %v3839 = vpack.c.b16 %v2867, %v2855
    %v3840 = vpack.c.b16 %v2868, %v2856
    %v3841 = vpack.c.b16 %v2869, %v2857
    %v3842 = vpack.c.b16 %v2870, %v2858
    %v3843 = vpack.c.b16 %v2871, %v2859
    %v3844 = vpack.c.b16 %v2872, %v2860
    %v3845 = vpack.c.b16 %v2873, %v2861
    %v3846 = vpack.c.b16 %v2874, %v2862
    %v3847 = vpack.c.b16 %v2875, %v2863
    %v3848 = vpack.c.b16 %v2876, %v2864
    %v3849 = vpack.c.b16 %v2877, %v2865
    %v3850 = vpack.c.b16 %v2878, %v2866
    %v3851 = vpack.c.b16 %v2891, %v2879
    %v3852 = vpack.c.b16 %v2892, %v2880
    %v3853 = vpack.c.b16 %v2893, %v2881
    %v3854 = vpack.c.b16 %v2894, %v2882
    %v3855 = vpack.c.b16 %v2895, %v2883
    %v3856 = vpack.c.b16 %v2896, %v2884
    %v3857 = vpack.c.b16 %v2897, %v2885
    %v3858 = vpack.c.b16 %v2898, %v2886
    %v3859 = vpack.c.b16 %v2899, %v2887
    %v3860 = vpack.c.b16 %v2900, %v2888
    %v3861 = vpack.c.b16 %v2901, %v2889
    %v3862 = vpack.c.b16 %v2902, %v2890
    %v3863 = vpack.c.b16 %v2915, %v2903
    %v3864 = vpack.c.b16 %v2916, %v2904
    %v3865 = vpack.c.b16 %v2917, %v2905
    %v3866 = vpack.c.b16 %v2918, %v2906
    %v3867 = vpack.c.b16 %v2919, %v2907
    %v3868 = vpack.c.b16 %v2920, %v2908
    %v3869 = vpack.c.b16 %v2921, %v2909
    %v3870 = vpack.c.b16 %v2922, %v2910
    %v3871 = vpack.c.b16 %v2923, %v2911
    %v3872 = vpack.c.b16 %v2924, %v2912
    %v3873 = vpack.c.b16 %v2925, %v2913
    %v3874 = vpack.c.b16 %v2926, %v2914
    %v3875 = vpack.c.b16 %v2939, %v2927
    %v3876 = vpack.c.b16 %v2940, %v2928
    %v3877 = vpack.c.b16 %v2941, %v2929
    %v3878 = vpack.c.b16 %v2942, %v2930
    %v3879 = vpack.c.b16 %v2943, %v2931
    %v3880 = vpack.c.b16 %v2944, %v2932
    %v3881 = vpack.c.b16 %v2945, %v2933
    %v3882 = vpack.c.b16 %v2946, %v2934
    %v3883 = vpack.c.b16 %v2947, %v2935
    %v3884 = vpack.c.b16 %v2948, %v2936
    %v3885 = vpack.c.b16 %v2949, %v2937
    %v3886 = vpack.c.b16 %v2950, %v2938
    %v3887 = vpack.c.b16 %v2963, %v2951
    %v3888 = vpack.c.b16 %v2964, %v2952
    %v3889 = vpack.c.b16 %v2965, %v2953
    %v3890 = vpack.c.b16 %v2966, %v2954
    %v3891 = vpack.c.b16 %v2967, %v2955
    %v3892 = vpack.c.b16 %v2968, %v2956
    %v3893 = vpack.c.b16 %v2969, %v2957
    %v3894 = vpack.c.b16 %v2970, %v2958
    %v3895 = vpack.c.b16 %v2971, %v2959
    %v3896 = vpack.c.b16 %v2972, %v2960
    %v3897 = vpack.c.b16 %v2973, %v2961
    %v3898 = vpack.c.b16 %v2974, %v2962
    %v3899 = vpack.c.b16 %v2987, %v2975
    %v3900 = vpack.c.b16 %v2988, %v2976
    %v3901 = vpack.c.b16 %v2989, %v2977
    %v3902 = vpack.c.b16 %v2990, %v2978
    %v3903 = vpack.c.b16 %v2991, %v2979
    %v3904 = vpack.c.b16 %v2992, %v2980
    %v3905 = vpack.c.b16 %v2993, %v2981
    %v3906 = vpack.c.b16 %v2994, %v2982
    %v3907 = vpack.c.b16 %v2995, %v2983
    %v3908 = vpack.c.b16 %v2996, %v2984
    %v3909 = vpack.c.b16 %v2997, %v2985
    %v3910 = vpack.c.b16 %v2998, %v2986
    %v3911 = vpack.c.b16 %v3011, %v2999
    %v3912 = vpack.c.b16 %v3012, %v3000
    %v3913 = vpack.c.b16 %v3013, %v3001
    %v3914 = vpack.c.b16 %v3014, %v3002
    %v3915 = vpack.c.b16 %v3015, %v3003
    %v3916 = vpack.c.b16 %v3016, %v3004
    %v3917 = vpack.c.b16 %v3017, %v3005
    %v3918 = vpack.c.b16 %v3018, %v3006
    %v3919 = vpack.c.b16 %v3019, %v3007
    %v3920 = vpack.c.b16 %v3020, %v3008
    %v3921 = vpack.c.b16 %v3021, %v3009
    %v3922 = vpack.c.b16 %v3022, %v3010
    %v3923 = vpack.c.b16 %v3035, %v3023
    %v3924 = vpack.c.b16 %v3036, %v3024
    %v3925 = vpack.c.b16 %v3037, %v3025
    %v3926 = vpack.c.b16 %v3038, %v3026
    %v3927 = vpack.c.b16 %v3039, %v3027
    %v3928 = vpack.c.b16 %v3040, %v3028
    %v3929 = vpack.c.b16 %v3041, %v3029
    %v3930 = vpack.c.b16 %v3042, %v3030
    %v3931 = vpack.c.b16 %v3043, %v3031
    %v3932 = vpack.c.b16 %v3044, %v3032
    %v3933 = vpack.c.b16 %v3045, %v3033
    %v3934 = vpack.c.b16 %v3046, %v3034
    %v3935 = vpack.c.b16 %v3059, %v3047
    %v3936 = vpack.c.b16 %v3060, %v3048
    %v3937 = vpack.c.b16 %v3061, %v3049
    %v3938 = vpack.c.b16 %v3062, %v3050
    %v3939 = vpack.c.b16 %v3063, %v3051
    %v3940 = vpack.c.b16 %v3064, %v3052
    %v3941 = vpack.c.b16 %v3065, %v3053
    %v3942 = vpack.c.b16 %v3066, %v3054
    %v3943 = vpack.c.b16 %v3067, %v3055
    %v3944 = vpack.c.b16 %v3068, %v3056
    %v3945 = vpack.c.b16 %v3069, %v3057
    %v3946 = vpack.c.b16 %v3070, %v3058
    %v3947 = vpack.c.b16 %v3083, %v3071
    %v3948 = vpack.c.b16 %v3084, %v3072
    %v3949 = vpack.c.b16 %v3085, %v3073
    %v3950 = vpack.c.b16 %v3086, %v3074
    %v3951 = vpack.c.b16 %v3087, %v3075
    %v3952 = vpack.c.b16 %v3088, %v3076
    %v3953 = vpack.c.b16 %v3089, %v3077
    %v3954 = vpack.c.b16 %v3090, %v3078
    %v3955 = vpack.c.b16 %v3091, %v3079
    %v3956 = vpack.c.b16 %v3092, %v3080
    %v3957 = vpack.c.b16 %v3093, %v3081
    %v3958 = vpack.c.b16 %v3094, %v3082
    %v3959 = vpack.c.b16 %v3107, %v3095
    %v3960 = vpack.c.b16 %v3108, %v3096
    %v3961 = vpack.c.b16 %v3109, %v3097
    %v3962 = vpack.c.b16 %v3110, %v3098
    %v3963 = vpack.c.b16 %v3111, %v3099
    %v3964 = vpack.c.b16 %v3112, %v3100
    %v3965 = vpack.c.b16 %v3113, %v3101
    %v3966 = vpack.c.b16 %v3114, %v3102
    %v3967 = vpack.c.b16 %v3115, %v3103
    %v3968 = vpack.c.b16 %v3116, %v3104
    %v3969 = vpack.c.b16 %v3117, %v3105
    %v3970 = vpack.c.b16 %v3118, %v3106
    %v3971 = vpack.c.b16 %v3131, %v3119
    %v3972 = vpack.c.b16 %v3132, %v3120
    %v3973 = vpack.c.b16 %v3133, %v3121
    %v3974 = vpack.c.b16 %v3134, %v3122
    %v3975 = vpack.c.b16 %v3135, %v3123
    %v3976 = vpack.c.b16 %v3136, %v3124
    %v3977 = vpack.c.b16 %v3137, %v3125
    %v3978 = vpack.c.b16 %v3138, %v3126
    %v3979 = vpack.c.b16 %v3139, %v3127
    %v3980 = vpack.c.b16 %v3140, %v3128
    %v3981 = vpack.c.b16 %v3141, %v3129
    %v3982 = vpack.c.b16 %v3142, %v3130
    %v3983 = vpack.c.b16 %v3155, %v3143
    %v3984 = vpack.c.b16 %v3156, %v3144
    %v3985 = vpack.c.b16 %v3157, %v3145
    %v3986 = vpack.c.b16 %v3158, %v3146
    %v3987 = vpack.c.b16 %v3159, %v3147
    %v3988 = vpack.c.b16 %v3160, %v3148
    %v3989 = vpack.c.b16 %v3161, %v3149
    %v3990 = vpack.c.b16 %v3162, %v3150
    %v3991 = vpack.c.b16 %v3163, %v3151
    %v3992 = vpack.c.b16 %v3164, %v3152
    %v3993 = vpack.c.b16 %v3165, %v3153
    %v3994 = vpack.c.b16 %v3166, %v3154
    %v3995 = vpack.c.b16 %v3179, %v3167
    %v3996 = vpack.c.b16 %v3180, %v3168
    %v3997 = vpack.c.b16 %v3181, %v3169
    %v3998 = vpack.c.b16 %v3182, %v3170
    %v3999 = vpack.c.b16 %v3183, %v3171
    %v4000 = vpack.c.b16 %v3184, %v3172
    %v4001 = vpack.c.b16 %v3185, %v3173
    %v4002 = vpack.c.b16 %v3186, %v3174
    %v4003 = vpack.c.b16 %v3187, %v3175
    %v4004 = vpack.c.b16 %v3188, %v3176
    %v4005 = vpack.c.b16 %v3189, %v3177
    %v4006 = vpack.c.b16 %v3190, %v3178
    %v4007 = vpack.c.b16 %v3203, %v3191
    %v4008 = vpack.c.b16 %v3204, %v3192
    %v4009 = vpack.c.b16 %v3205, %v3193
    %v4010 = vpack.c.b16 %v3206, %v3194
    %v4011 = vpack.c.b16 %v3207, %v3195
    %v4012 = vpack.c.b16 %v3208, %v3196
    %v4013 = vpack.c.b16 %v3209, %v3197
    %v4014 = vpack.c.b16 %v3210, %v3198
    %v4015 = vpack.c.b16 %v3211, %v3199
    %v4016 = vpack.c.b16 %v3212, %v3200
    %v4017 = vpack.c.b16 %v3213, %v3201
    %v4018 = vpack.c.b16 %v3214, %v3202
    %v4019 = vpack.c.b16 %v3227, %v3215
    %v4020 = vpack.c.b16 %v3228, %v3216
    %v4021 = vpack.c.b16 %v3229, %v3217
    %v4022 = vpack.c.b16 %v3230, %v3218
    %v4023 = vpack.c.b16 %v3231, %v3219
    %v4024 = vpack.c.b16 %v3232, %v3220
    %v4025 = vpack.c.b16 %v3233, %v3221
    %v4026 = vpack.c.b16 %v3234, %v3222
    %v4027 = vpack.c.b16 %v3235, %v3223
    %v4028 = vpack.c.b16 %v3236, %v3224
    %v4029 = vpack.c.b16 %v3237, %v3225
    %v4030 = vpack.c.b16 %v3238, %v3226
    %v4031 = vpack.c.b16 %v3251, %v3239
    %v4032 = vpack.c.b16 %v3252, %v3240
    %v4033 = vpack.c.b16 %v3253, %v3241
    %v4034 = vpack.c.b16 %v3254, %v3242
    %v4035 = vpack.c.b16 %v3255, %v3243
    %v4036 = vpack.c.b16 %v3256, %v3244
    %v4037 = vpack.c.b16 %v3257, %v3245
    %v4038 = vpack.c.b16 %v3258, %v3246
    %v4039 = vpack.c.b16 %v3259, %v3247
    %v4040 = vpack.c.b16 %v3260, %v3248
    %v4041 = vpack.c.b16 %v3261, %v3249
    %v4042 = vpack.c.b16 %v3262, %v3250
    %v4043 = vpack.c.b16 %v3275, %v3263
    %v4044 = vpack.c.b16 %v3276, %v3264
    %v4045 = vpack.c.b16 %v3277, %v3265
    %v4046 = vpack.c.b16 %v3278, %v3266
    %v4047 = vpack.c.b16 %v3279, %v3267
    %v4048 = vpack.c.b16 %v3280, %v3268
    %v4049 = vpack.c.b16 %v3281, %v3269
    %v4050 = vpack.c.b16 %v3282, %v3270
    %v4051 = vpack.c.b16 %v3283, %v3271
    %v4052 = vpack.c.b16 %v3284, %v3272
    %v4053 = vpack.c.b16 %v3285, %v3273
    %v4054 = vpack.c.b16 %v3286, %v3274
    %4823 = vmatpush.bf16.msra.mxu0 %v3371
    %4824 = vmatpush.bf16.msra.mxu0 %v3359
    %4825 = vmatpush.bf16.msra.mxu0 %v3347
    %4826 = vmatpush.bf16.msra.mxu0 %v3335
    %4827 = vmatpush.bf16.msra.mxu0 %v3323
    %4828 = vmatpush.bf16.msra.mxu0 %v3311
    %4829 = vmatpush.bf16.msra.mxu0 %v3299
    %4830 = vmatpush.bf16.msra.mxu0 %v3287
    %4831 = vmatmul.bf16.gmra.mxu0 %v207
    %v4832 = vpop.f32.mrf.mxu0
    %v4833 = vadd.f32 0.0, %v4832
    %v4834 = vpop.f32.mrf.mxu0
    %4835 = vdwg.mxu0
    %4836 = vmatpush.bf16.msra.mxu0 %v3467
    %4837 = vmatpush.bf16.msra.mxu0 %v3455
    %4838 = vmatpush.bf16.msra.mxu0 %v3443
    %4839 = vmatpush.bf16.msra.mxu0 %v3431
    %4840 = vmatpush.bf16.msra.mxu0 %v3419
    %4841 = vmatpush.bf16.msra.mxu0 %v3407
    %4842 = vmatpush.bf16.msra.mxu0 %v3395
    %4843 = vmatpush.bf16.msra.mxu0 %v3383
    %4844 = vmatmul.bf16.gmra.mxu0 %v208
    %v4845 = vpop.f32.mrf.mxu0
    %v4846 = vadd.f32 %v4833, %v4845
    %v4847 = vpop.f32.mrf.mxu0
    %4848 = vdwg.mxu0
    %4849 = vmatpush.bf16.msra.mxu0 %v3563
    %4850 = vmatpush.bf16.msra.mxu0 %v3551
    %4851 = vmatpush.bf16.msra.mxu0 %v3539
    %4852 = vmatpush.bf16.msra.mxu0 %v3527
    %4853 = vmatpush.bf16.msra.mxu0 %v3515
    %4854 = vmatpush.bf16.msra.mxu0 %v3503
    %4855 = vmatpush.bf16.msra.mxu0 %v3491
    %4856 = vmatpush.bf16.msra.mxu0 %v3479
    %4857 = vmatmul.bf16.gmra.mxu0 %v209
    %v4858 = vpop.f32.mrf.mxu0
    %v4859 = vadd.f32 %v4846, %v4858
    %v4860 = vpop.f32.mrf.mxu0
    %4861 = vdwg.mxu0
    %4862 = vmatpush.bf16.msra.mxu0 %v3659
    %4863 = vmatpush.bf16.msra.mxu0 %v3647
    %4864 = vmatpush.bf16.msra.mxu0 %v3635
    %4865 = vmatpush.bf16.msra.mxu0 %v3623
    %4866 = vmatpush.bf16.msra.mxu0 %v3611
    %4867 = vmatpush.bf16.msra.mxu0 %v3599
    %4868 = vmatpush.bf16.msra.mxu0 %v3587
    %4869 = vmatpush.bf16.msra.mxu0 %v3575
    %4870 = vmatmul.bf16.gmra.mxu0 %v210
    %v4871 = vpop.f32.mrf.mxu0
    %v4872 = vadd.f32 %v4859, %v4871
    %v4873 = vpop.f32.mrf.mxu0
    %4874 = vdwg.mxu0
    %4875 = vmatpush.bf16.msra.mxu0 %v3755
    %4876 = vmatpush.bf16.msra.mxu0 %v3743
    %4877 = vmatpush.bf16.msra.mxu0 %v3731
    %4878 = vmatpush.bf16.msra.mxu0 %v3719
    %4879 = vmatpush.bf16.msra.mxu0 %v3707
    %4880 = vmatpush.bf16.msra.mxu0 %v3695
    %4881 = vmatpush.bf16.msra.mxu0 %v3683
    %4882 = vmatpush.bf16.msra.mxu0 %v3671
    %4883 = vmatmul.bf16.gmra.mxu0 %v211
    %v4884 = vpop.f32.mrf.mxu0
    %v4885 = vadd.f32 %v4872, %v4884
    %v4886 = vpop.f32.mrf.mxu0
    %4887 = vdwg.mxu0
    %4888 = vmatpush.bf16.msra.mxu0 %v3851
    %4889 = vmatpush.bf16.msra.mxu0 %v3839
    %4890 = vmatpush.bf16.msra.mxu0 %v3827
    %4891 = vmatpush.bf16.msra.mxu0 %v3815
    %4892 = vmatpush.bf16.msra.mxu0 %v3803
    %4893 = vmatpush.bf16.msra.mxu0 %v3791
    %4894 = vmatpush.bf16.msra.mxu0 %v3779
    %4895 = vmatpush.bf16.msra.mxu0 %v3767
    %4896 = vmatmul.bf16.gmra.mxu0 %v212
    %v4897 = vpop.f32.mrf.mxu0
    %v4898 = vadd.f32 %v4885, %v4897
    %v4899 = vpop.f32.mrf.mxu0
    %4900 = vdwg.mxu0
    %4901 = vmatpush.bf16.msra.mxu0 %v3947
    %4902 = vmatpush.bf16.msra.mxu0 %v3935
    %4903 = vmatpush.bf16.msra.mxu0 %v3923
    %4904 = vmatpush.bf16.msra.mxu0 %v3911
    %4905 = vmatpush.bf16.msra.mxu0 %v3899
    %4906 = vmatpush.bf16.msra.mxu0 %v3887
    %4907 = vmatpush.bf16.msra.mxu0 %v3875
    %4908 = vmatpush.bf16.msra.mxu0 %v3863
    %4909 = vmatmul.bf16.gmra.mxu0 %v213
    %v4910 = vpop.f32.mrf.mxu0
    %v4911 = vadd.f32 %v4898, %v4910
    %v4912 = vpop.f32.mrf.mxu0
    %4913 = vdwg.mxu0
    %4914 = vmatpush.bf16.msra.mxu0 %v4043
    %4915 = vmatpush.bf16.msra.mxu0 %v4031
    %4916 = vmatpush.bf16.msra.mxu0 %v4019
    %4917 = vmatpush.bf16.msra.mxu0 %v4007
    %4918 = vmatpush.bf16.msra.mxu0 %v3995
    %4919 = vmatpush.bf16.msra.mxu0 %v3983
    %4920 = vmatpush.bf16.msra.mxu0 %v3971
    %4921 = vmatpush.bf16.msra.mxu0 %v3959
    %4922 = vmatmul.bf16.gmra.mxu0 %v214
    %v4923 = vpop.f32.mrf.mxu0
    %v4924 = vadd.f32 %v4911, %v4923
    %v4925 = vpop.f32.mrf.mxu0
    %4926 = vdwg.mxu0
    %4927 = vmatpush.bf16.msra.mxu0 %v3372
    %4928 = vmatpush.bf16.msra.mxu0 %v3360
    %4929 = vmatpush.bf16.msra.mxu0 %v3348
    %4930 = vmatpush.bf16.msra.mxu0 %v3336
    %4931 = vmatpush.bf16.msra.mxu0 %v3324
    %4932 = vmatpush.bf16.msra.mxu0 %v3312
    %4933 = vmatpush.bf16.msra.mxu0 %v3300
    %4934 = vmatpush.bf16.msra.mxu0 %v3288
    %4935 = vmatmul.bf16.gmra.mxu0 %v207
    %v4936 = vpop.f32.mrf.mxu0
    %v4937 = vadd.f32 0.0, %v4936
    %v4938 = vpop.f32.mrf.mxu0
    %4939 = vdwg.mxu0
    %4940 = vmatpush.bf16.msra.mxu0 %v3468
    %4941 = vmatpush.bf16.msra.mxu0 %v3456
    %4942 = vmatpush.bf16.msra.mxu0 %v3444
    %4943 = vmatpush.bf16.msra.mxu0 %v3432
    %4944 = vmatpush.bf16.msra.mxu0 %v3420
    %4945 = vmatpush.bf16.msra.mxu0 %v3408
    %4946 = vmatpush.bf16.msra.mxu0 %v3396
    %4947 = vmatpush.bf16.msra.mxu0 %v3384
    %4948 = vmatmul.bf16.gmra.mxu0 %v208
    %v4949 = vpop.f32.mrf.mxu0
    %v4950 = vadd.f32 %v4937, %v4949
    %v4951 = vpop.f32.mrf.mxu0
    %4952 = vdwg.mxu0
    %4953 = vmatpush.bf16.msra.mxu0 %v3564
    %4954 = vmatpush.bf16.msra.mxu0 %v3552
    %4955 = vmatpush.bf16.msra.mxu0 %v3540
    %4956 = vmatpush.bf16.msra.mxu0 %v3528
    %4957 = vmatpush.bf16.msra.mxu0 %v3516
    %4958 = vmatpush.bf16.msra.mxu0 %v3504
    %4959 = vmatpush.bf16.msra.mxu0 %v3492
    %4960 = vmatpush.bf16.msra.mxu0 %v3480
    %4961 = vmatmul.bf16.gmra.mxu0 %v209
    %v4962 = vpop.f32.mrf.mxu0
    %v4963 = vadd.f32 %v4950, %v4962
    %v4964 = vpop.f32.mrf.mxu0
    %4965 = vdwg.mxu0
    %4966 = vmatpush.bf16.msra.mxu0 %v3660
    %4967 = vmatpush.bf16.msra.mxu0 %v3648
    %4968 = vmatpush.bf16.msra.mxu0 %v3636
    %4969 = vmatpush.bf16.msra.mxu0 %v3624
    %4970 = vmatpush.bf16.msra.mxu0 %v3612
    %4971 = vmatpush.bf16.msra.mxu0 %v3600
    %4972 = vmatpush.bf16.msra.mxu0 %v3588
    %4973 = vmatpush.bf16.msra.mxu0 %v3576
    %4974 = vmatmul.bf16.gmra.mxu0 %v210
    %v4975 = vpop.f32.mrf.mxu0
    %v4976 = vadd.f32 %v4963, %v4975
    %v4977 = vpop.f32.mrf.mxu0
    %4978 = vdwg.mxu0
    %4979 = vmatpush.bf16.msra.mxu0 %v3756
    %4980 = vmatpush.bf16.msra.mxu0 %v3744
    %4981 = vmatpush.bf16.msra.mxu0 %v3732
    %4982 = vmatpush.bf16.msra.mxu0 %v3720
    %4983 = vmatpush.bf16.msra.mxu0 %v3708
    %4984 = vmatpush.bf16.msra.mxu0 %v3696
    %4985 = vmatpush.bf16.msra.mxu0 %v3684
    %4986 = vmatpush.bf16.msra.mxu0 %v3672
    %4987 = vmatmul.bf16.gmra.mxu0 %v211
    %v4988 = vpop.f32.mrf.mxu0
    %v4989 = vadd.f32 %v4976, %v4988
    %v4990 = vpop.f32.mrf.mxu0
    %4991 = vdwg.mxu0
    %4992 = vmatpush.bf16.msra.mxu0 %v3852
    %4993 = vmatpush.bf16.msra.mxu0 %v3840
    %4994 = vmatpush.bf16.msra.mxu0 %v3828
    %4995 = vmatpush.bf16.msra.mxu0 %v3816
    %4996 = vmatpush.bf16.msra.mxu0 %v3804
    %4997 = vmatpush.bf16.msra.mxu0 %v3792
    %4998 = vmatpush.bf16.msra.mxu0 %v3780
    %4999 = vmatpush.bf16.msra.mxu0 %v3768
    %5000 = vmatmul.bf16.gmra.mxu0 %v212
    %v5001 = vpop.f32.mrf.mxu0
    %v5002 = vadd.f32 %v4989, %v5001
    %v5003 = vpop.f32.mrf.mxu0
    %5004 = vdwg.mxu0
    %5005 = vmatpush.bf16.msra.mxu0 %v3948
    %5006 = vmatpush.bf16.msra.mxu0 %v3936
    %5007 = vmatpush.bf16.msra.mxu0 %v3924
    %5008 = vmatpush.bf16.msra.mxu0 %v3912
    %5009 = vmatpush.bf16.msra.mxu0 %v3900
    %5010 = vmatpush.bf16.msra.mxu0 %v3888
    %5011 = vmatpush.bf16.msra.mxu0 %v3876
    %5012 = vmatpush.bf16.msra.mxu0 %v3864
    %5013 = vmatmul.bf16.gmra.mxu0 %v213
    %v5014 = vpop.f32.mrf.mxu0
    %v5015 = vadd.f32 %v5002, %v5014
    %v5016 = vpop.f32.mrf.mxu0
    %5017 = vdwg.mxu0
    %5018 = vmatpush.bf16.msra.mxu0 %v4044
    %5019 = vmatpush.bf16.msra.mxu0 %v4032
    %5020 = vmatpush.bf16.msra.mxu0 %v4020
    %5021 = vmatpush.bf16.msra.mxu0 %v4008
    %5022 = vmatpush.bf16.msra.mxu0 %v3996
    %5023 = vmatpush.bf16.msra.mxu0 %v3984
    %5024 = vmatpush.bf16.msra.mxu0 %v3972
    %5025 = vmatpush.bf16.msra.mxu0 %v3960
    %5026 = vmatmul.bf16.gmra.mxu0 %v214
    %v5027 = vpop.f32.mrf.mxu0
    %v5028 = vadd.f32 %v5015, %v5027
    %v5029 = vpop.f32.mrf.mxu0
    %5030 = vdwg.mxu0
    %5031 = vmatpush.bf16.msra.mxu0 %v3373
    %5032 = vmatpush.bf16.msra.mxu0 %v3361
    %5033 = vmatpush.bf16.msra.mxu0 %v3349
    %5034 = vmatpush.bf16.msra.mxu0 %v3337
    %5035 = vmatpush.bf16.msra.mxu0 %v3325
    %5036 = vmatpush.bf16.msra.mxu0 %v3313
    %5037 = vmatpush.bf16.msra.mxu0 %v3301
    %5038 = vmatpush.bf16.msra.mxu0 %v3289
    %5039 = vmatmul.bf16.gmra.mxu0 %v207
    %v5040 = vpop.f32.mrf.mxu0
    %v5041 = vadd.f32 0.0, %v5040
    %v5042 = vpop.f32.mrf.mxu0
    %5043 = vdwg.mxu0
    %5044 = vmatpush.bf16.msra.mxu0 %v3469
    %5045 = vmatpush.bf16.msra.mxu0 %v3457
    %5046 = vmatpush.bf16.msra.mxu0 %v3445
    %5047 = vmatpush.bf16.msra.mxu0 %v3433
    %5048 = vmatpush.bf16.msra.mxu0 %v3421
    %5049 = vmatpush.bf16.msra.mxu0 %v3409
    %5050 = vmatpush.bf16.msra.mxu0 %v3397
    %5051 = vmatpush.bf16.msra.mxu0 %v3385
    %5052 = vmatmul.bf16.gmra.mxu0 %v208
    %v5053 = vpop.f32.mrf.mxu0
    %v5054 = vadd.f32 %v5041, %v5053
    %v5055 = vpop.f32.mrf.mxu0
    %5056 = vdwg.mxu0
    %5057 = vmatpush.bf16.msra.mxu0 %v3565
    %5058 = vmatpush.bf16.msra.mxu0 %v3553
    %5059 = vmatpush.bf16.msra.mxu0 %v3541
    %5060 = vmatpush.bf16.msra.mxu0 %v3529
    %5061 = vmatpush.bf16.msra.mxu0 %v3517
    %5062 = vmatpush.bf16.msra.mxu0 %v3505
    %5063 = vmatpush.bf16.msra.mxu0 %v3493
    %5064 = vmatpush.bf16.msra.mxu0 %v3481
    %5065 = vmatmul.bf16.gmra.mxu0 %v209
    %v5066 = vpop.f32.mrf.mxu0
    %v5067 = vadd.f32 %v5054, %v5066
    %v5068 = vpop.f32.mrf.mxu0
    %5069 = vdwg.mxu0
    %5070 = vmatpush.bf16.msra.mxu0 %v3661
    %5071 = vmatpush.bf16.msra.mxu0 %v3649
    %5072 = vmatpush.bf16.msra.mxu0 %v3637
    %5073 = vmatpush.bf16.msra.mxu0 %v3625
    %5074 = vmatpush.bf16.msra.mxu0 %v3613
    %5075 = vmatpush.bf16.msra.mxu0 %v3601
    %5076 = vmatpush.bf16.msra.mxu0 %v3589
    %5077 = vmatpush.bf16.msra.mxu0 %v3577
    %5078 = vmatmul.bf16.gmra.mxu0 %v210
    %v5079 = vpop.f32.mrf.mxu0
    %v5080 = vadd.f32 %v5067, %v5079
    %v5081 = vpop.f32.mrf.mxu0
    %5082 = vdwg.mxu0
    %5083 = vmatpush.bf16.msra.mxu0 %v3757
    %5084 = vmatpush.bf16.msra.mxu0 %v3745
    %5085 = vmatpush.bf16.msra.mxu0 %v3733
    %5086 = vmatpush.bf16.msra.mxu0 %v3721
    %5087 = vmatpush.bf16.msra.mxu0 %v3709
    %5088 = vmatpush.bf16.msra.mxu0 %v3697
    %5089 = vmatpush.bf16.msra.mxu0 %v3685
    %5090 = vmatpush.bf16.msra.mxu0 %v3673
    %5091 = vmatmul.bf16.gmra.mxu0 %v211
    %v5092 = vpop.f32.mrf.mxu0
    %v5093 = vadd.f32 %v5080, %v5092
    %v5094 = vpop.f32.mrf.mxu0
    %5095 = vdwg.mxu0
    %5096 = vmatpush.bf16.msra.mxu0 %v3853
    %5097 = vmatpush.bf16.msra.mxu0 %v3841
    %5098 = vmatpush.bf16.msra.mxu0 %v3829
    %5099 = vmatpush.bf16.msra.mxu0 %v3817
    %5100 = vmatpush.bf16.msra.mxu0 %v3805
    %5101 = vmatpush.bf16.msra.mxu0 %v3793
    %5102 = vmatpush.bf16.msra.mxu0 %v3781
    %5103 = vmatpush.bf16.msra.mxu0 %v3769
    %5104 = vmatmul.bf16.gmra.mxu0 %v212
    %v5105 = vpop.f32.mrf.mxu0
    %v5106 = vadd.f32 %v5093, %v5105
    %v5107 = vpop.f32.mrf.mxu0
    %5108 = vdwg.mxu0
    %5109 = vmatpush.bf16.msra.mxu0 %v3949
    %5110 = vmatpush.bf16.msra.mxu0 %v3937
    %5111 = vmatpush.bf16.msra.mxu0 %v3925
    %5112 = vmatpush.bf16.msra.mxu0 %v3913
    %5113 = vmatpush.bf16.msra.mxu0 %v3901
    %5114 = vmatpush.bf16.msra.mxu0 %v3889
    %5115 = vmatpush.bf16.msra.mxu0 %v3877
    %5116 = vmatpush.bf16.msra.mxu0 %v3865
    %5117 = vmatmul.bf16.gmra.mxu0 %v213
    %v5118 = vpop.f32.mrf.mxu0
    %v5119 = vadd.f32 %v5106, %v5118
    %v5120 = vpop.f32.mrf.mxu0
    %5121 = vdwg.mxu0
    %5122 = vmatpush.bf16.msra.mxu0 %v4045
    %5123 = vmatpush.bf16.msra.mxu0 %v4033
    %5124 = vmatpush.bf16.msra.mxu0 %v4021
    %5125 = vmatpush.bf16.msra.mxu0 %v4009
    %5126 = vmatpush.bf16.msra.mxu0 %v3997
    %5127 = vmatpush.bf16.msra.mxu0 %v3985
    %5128 = vmatpush.bf16.msra.mxu0 %v3973
    %5129 = vmatpush.bf16.msra.mxu0 %v3961
    %5130 = vmatmul.bf16.gmra.mxu0 %v214
    %v5131 = vpop.f32.mrf.mxu0
    %v5132 = vadd.f32 %v5119, %v5131
    %v5133 = vpop.f32.mrf.mxu0
    %5134 = vdwg.mxu0
    %5135 = vmatpush.bf16.msra.mxu0 %v3374
    %5136 = vmatpush.bf16.msra.mxu0 %v3362
    %5137 = vmatpush.bf16.msra.mxu0 %v3350
    %5138 = vmatpush.bf16.msra.mxu0 %v3338
    %5139 = vmatpush.bf16.msra.mxu0 %v3326
    %5140 = vmatpush.bf16.msra.mxu0 %v3314
    %5141 = vmatpush.bf16.msra.mxu0 %v3302
    %5142 = vmatpush.bf16.msra.mxu0 %v3290
    %5143 = vmatmul.bf16.gmra.mxu0 %v207
    %v5144 = vpop.f32.mrf.mxu0
    %v5145 = vadd.f32 0.0, %v5144
    %v5146 = vpop.f32.mrf.mxu0
    %5147 = vdwg.mxu0
    %5148 = vmatpush.bf16.msra.mxu0 %v3470
    %5149 = vmatpush.bf16.msra.mxu0 %v3458
    %5150 = vmatpush.bf16.msra.mxu0 %v3446
    %5151 = vmatpush.bf16.msra.mxu0 %v3434
    %5152 = vmatpush.bf16.msra.mxu0 %v3422
    %5153 = vmatpush.bf16.msra.mxu0 %v3410
    %5154 = vmatpush.bf16.msra.mxu0 %v3398
    %5155 = vmatpush.bf16.msra.mxu0 %v3386
    %5156 = vmatmul.bf16.gmra.mxu0 %v208
    %v5157 = vpop.f32.mrf.mxu0
    %v5158 = vadd.f32 %v5145, %v5157
    %v5159 = vpop.f32.mrf.mxu0
    %5160 = vdwg.mxu0
    %5161 = vmatpush.bf16.msra.mxu0 %v3566
    %5162 = vmatpush.bf16.msra.mxu0 %v3554
    %5163 = vmatpush.bf16.msra.mxu0 %v3542
    %5164 = vmatpush.bf16.msra.mxu0 %v3530
    %5165 = vmatpush.bf16.msra.mxu0 %v3518
    %5166 = vmatpush.bf16.msra.mxu0 %v3506
    %5167 = vmatpush.bf16.msra.mxu0 %v3494
    %5168 = vmatpush.bf16.msra.mxu0 %v3482
    %5169 = vmatmul.bf16.gmra.mxu0 %v209
    %v5170 = vpop.f32.mrf.mxu0
    %v5171 = vadd.f32 %v5158, %v5170
    %v5172 = vpop.f32.mrf.mxu0
    %5173 = vdwg.mxu0
    %5174 = vmatpush.bf16.msra.mxu0 %v3662
    %5175 = vmatpush.bf16.msra.mxu0 %v3650
    %5176 = vmatpush.bf16.msra.mxu0 %v3638
    %5177 = vmatpush.bf16.msra.mxu0 %v3626
    %5178 = vmatpush.bf16.msra.mxu0 %v3614
    %5179 = vmatpush.bf16.msra.mxu0 %v3602
    %5180 = vmatpush.bf16.msra.mxu0 %v3590
    %5181 = vmatpush.bf16.msra.mxu0 %v3578
    %5182 = vmatmul.bf16.gmra.mxu0 %v210
    %v5183 = vpop.f32.mrf.mxu0
    %v5184 = vadd.f32 %v5171, %v5183
    %v5185 = vpop.f32.mrf.mxu0
    %5186 = vdwg.mxu0
    %5187 = vmatpush.bf16.msra.mxu0 %v3758
    %5188 = vmatpush.bf16.msra.mxu0 %v3746
    %5189 = vmatpush.bf16.msra.mxu0 %v3734
    %5190 = vmatpush.bf16.msra.mxu0 %v3722
    %5191 = vmatpush.bf16.msra.mxu0 %v3710
    %5192 = vmatpush.bf16.msra.mxu0 %v3698
    %5193 = vmatpush.bf16.msra.mxu0 %v3686
    %5194 = vmatpush.bf16.msra.mxu0 %v3674
    %5195 = vmatmul.bf16.gmra.mxu0 %v211
    %v5196 = vpop.f32.mrf.mxu0
    %v5197 = vadd.f32 %v5184, %v5196
    %v5198 = vpop.f32.mrf.mxu0
    %5199 = vdwg.mxu0
    %5200 = vmatpush.bf16.msra.mxu0 %v3854
    %5201 = vmatpush.bf16.msra.mxu0 %v3842
    %5202 = vmatpush.bf16.msra.mxu0 %v3830
    %5203 = vmatpush.bf16.msra.mxu0 %v3818
    %5204 = vmatpush.bf16.msra.mxu0 %v3806
    %5205 = vmatpush.bf16.msra.mxu0 %v3794
    %5206 = vmatpush.bf16.msra.mxu0 %v3782
    %5207 = vmatpush.bf16.msra.mxu0 %v3770
    %5208 = vmatmul.bf16.gmra.mxu0 %v212
    %v5209 = vpop.f32.mrf.mxu0
    %v5210 = vadd.f32 %v5197, %v5209
    %v5211 = vpop.f32.mrf.mxu0
    %5212 = vdwg.mxu0
    %5213 = vmatpush.bf16.msra.mxu0 %v3950
    %5214 = vmatpush.bf16.msra.mxu0 %v3938
    %5215 = vmatpush.bf16.msra.mxu0 %v3926
    %5216 = vmatpush.bf16.msra.mxu0 %v3914
    %5217 = vmatpush.bf16.msra.mxu0 %v3902
    %5218 = vmatpush.bf16.msra.mxu0 %v3890
    %5219 = vmatpush.bf16.msra.mxu0 %v3878
    %5220 = vmatpush.bf16.msra.mxu0 %v3866
    %5221 = vmatmul.bf16.gmra.mxu0 %v213
    %v5222 = vpop.f32.mrf.mxu0
    %v5223 = vadd.f32 %v5210, %v5222
    %v5224 = vpop.f32.mrf.mxu0
    %5225 = vdwg.mxu0
    %5226 = vmatpush.bf16.msra.mxu0 %v4046
    %5227 = vmatpush.bf16.msra.mxu0 %v4034
    %5228 = vmatpush.bf16.msra.mxu0 %v4022
    %5229 = vmatpush.bf16.msra.mxu0 %v4010
    %5230 = vmatpush.bf16.msra.mxu0 %v3998
    %5231 = vmatpush.bf16.msra.mxu0 %v3986
    %5232 = vmatpush.bf16.msra.mxu0 %v3974
    %5233 = vmatpush.bf16.msra.mxu0 %v3962
    %5234 = vmatmul.bf16.gmra.mxu0 %v214
    %v5235 = vpop.f32.mrf.mxu0
    %v5236 = vadd.f32 %v5223, %v5235
    %v5237 = vpop.f32.mrf.mxu0
    %5238 = vdwg.mxu0
    %5239 = vmatpush.bf16.msra.mxu0 %v3375
    %5240 = vmatpush.bf16.msra.mxu0 %v3363
    %5241 = vmatpush.bf16.msra.mxu0 %v3351
    %5242 = vmatpush.bf16.msra.mxu0 %v3339
    %5243 = vmatpush.bf16.msra.mxu0 %v3327
    %5244 = vmatpush.bf16.msra.mxu0 %v3315
    %5245 = vmatpush.bf16.msra.mxu0 %v3303
    %5246 = vmatpush.bf16.msra.mxu0 %v3291
    %5247 = vmatmul.bf16.gmra.mxu0 %v207
    %v5248 = vpop.f32.mrf.mxu0
    %v5249 = vadd.f32 0.0, %v5248
    %v5250 = vpop.f32.mrf.mxu0
    %5251 = vdwg.mxu0
    %5252 = vmatpush.bf16.msra.mxu0 %v3471
    %5253 = vmatpush.bf16.msra.mxu0 %v3459
    %5254 = vmatpush.bf16.msra.mxu0 %v3447
    %5255 = vmatpush.bf16.msra.mxu0 %v3435
    %5256 = vmatpush.bf16.msra.mxu0 %v3423
    %5257 = vmatpush.bf16.msra.mxu0 %v3411
    %5258 = vmatpush.bf16.msra.mxu0 %v3399
    %5259 = vmatpush.bf16.msra.mxu0 %v3387
    %5260 = vmatmul.bf16.gmra.mxu0 %v208
    %v5261 = vpop.f32.mrf.mxu0
    %v5262 = vadd.f32 %v5249, %v5261
    %v5263 = vpop.f32.mrf.mxu0
    %5264 = vdwg.mxu0
    %5265 = vmatpush.bf16.msra.mxu0 %v3567
    %5266 = vmatpush.bf16.msra.mxu0 %v3555
    %5267 = vmatpush.bf16.msra.mxu0 %v3543
    %5268 = vmatpush.bf16.msra.mxu0 %v3531
    %5269 = vmatpush.bf16.msra.mxu0 %v3519
    %5270 = vmatpush.bf16.msra.mxu0 %v3507
    %5271 = vmatpush.bf16.msra.mxu0 %v3495
    %5272 = vmatpush.bf16.msra.mxu0 %v3483
    %5273 = vmatmul.bf16.gmra.mxu0 %v209
    %v5274 = vpop.f32.mrf.mxu0
    %v5275 = vadd.f32 %v5262, %v5274
    %v5276 = vpop.f32.mrf.mxu0
    %5277 = vdwg.mxu0
    %5278 = vmatpush.bf16.msra.mxu0 %v3663
    %5279 = vmatpush.bf16.msra.mxu0 %v3651
    %5280 = vmatpush.bf16.msra.mxu0 %v3639
    %5281 = vmatpush.bf16.msra.mxu0 %v3627
    %5282 = vmatpush.bf16.msra.mxu0 %v3615
    %5283 = vmatpush.bf16.msra.mxu0 %v3603
    %5284 = vmatpush.bf16.msra.mxu0 %v3591
    %5285 = vmatpush.bf16.msra.mxu0 %v3579
    %5286 = vmatmul.bf16.gmra.mxu0 %v210
    %v5287 = vpop.f32.mrf.mxu0
    %v5288 = vadd.f32 %v5275, %v5287
    %v5289 = vpop.f32.mrf.mxu0
    %5290 = vdwg.mxu0
    %5291 = vmatpush.bf16.msra.mxu0 %v3759
    %5292 = vmatpush.bf16.msra.mxu0 %v3747
    %5293 = vmatpush.bf16.msra.mxu0 %v3735
    %5294 = vmatpush.bf16.msra.mxu0 %v3723
    %5295 = vmatpush.bf16.msra.mxu0 %v3711
    %5296 = vmatpush.bf16.msra.mxu0 %v3699
    %5297 = vmatpush.bf16.msra.mxu0 %v3687
    %5298 = vmatpush.bf16.msra.mxu0 %v3675
    %5299 = vmatmul.bf16.gmra.mxu0 %v211
    %v5300 = vpop.f32.mrf.mxu0
    %v5301 = vadd.f32 %v5288, %v5300
    %v5302 = vpop.f32.mrf.mxu0
    %5303 = vdwg.mxu0
    %5304 = vmatpush.bf16.msra.mxu0 %v3855
    %5305 = vmatpush.bf16.msra.mxu0 %v3843
    %5306 = vmatpush.bf16.msra.mxu0 %v3831
    %5307 = vmatpush.bf16.msra.mxu0 %v3819
    %5308 = vmatpush.bf16.msra.mxu0 %v3807
    %5309 = vmatpush.bf16.msra.mxu0 %v3795
    %5310 = vmatpush.bf16.msra.mxu0 %v3783
    %5311 = vmatpush.bf16.msra.mxu0 %v3771
    %5312 = vmatmul.bf16.gmra.mxu0 %v212
    %v5313 = vpop.f32.mrf.mxu0
    %v5314 = vadd.f32 %v5301, %v5313
    %v5315 = vpop.f32.mrf.mxu0
    %5316 = vdwg.mxu0
    %5317 = vmatpush.bf16.msra.mxu0 %v3951
    %5318 = vmatpush.bf16.msra.mxu0 %v3939
    %5319 = vmatpush.bf16.msra.mxu0 %v3927
    %5320 = vmatpush.bf16.msra.mxu0 %v3915
    %5321 = vmatpush.bf16.msra.mxu0 %v3903
    %5322 = vmatpush.bf16.msra.mxu0 %v3891
    %5323 = vmatpush.bf16.msra.mxu0 %v3879
    %5324 = vmatpush.bf16.msra.mxu0 %v3867
    %5325 = vmatmul.bf16.gmra.mxu0 %v213
    %v5326 = vpop.f32.mrf.mxu0
    %v5327 = vadd.f32 %v5314, %v5326
    %v5328 = vpop.f32.mrf.mxu0
    %5329 = vdwg.mxu0
    %5330 = vmatpush.bf16.msra.mxu0 %v4047
    %5331 = vmatpush.bf16.msra.mxu0 %v4035
    %5332 = vmatpush.bf16.msra.mxu0 %v4023
    %5333 = vmatpush.bf16.msra.mxu0 %v4011
    %5334 = vmatpush.bf16.msra.mxu0 %v3999
    %5335 = vmatpush.bf16.msra.mxu0 %v3987
    %5336 = vmatpush.bf16.msra.mxu0 %v3975
    %5337 = vmatpush.bf16.msra.mxu0 %v3963
    %5338 = vmatmul.bf16.gmra.mxu0 %v214
    %v5339 = vpop.f32.mrf.mxu0
    %v5340 = vadd.f32 %v5327, %v5339
    %v5341 = vpop.f32.mrf.mxu0
    %5342 = vdwg.mxu0
    %5343 = vmatpush.bf16.msra.mxu0 %v3376
    %5344 = vmatpush.bf16.msra.mxu0 %v3364
    %5345 = vmatpush.bf16.msra.mxu0 %v3352
    %5346 = vmatpush.bf16.msra.mxu0 %v3340
    %5347 = vmatpush.bf16.msra.mxu0 %v3328
    %5348 = vmatpush.bf16.msra.mxu0 %v3316
    %5349 = vmatpush.bf16.msra.mxu0 %v3304
    %5350 = vmatpush.bf16.msra.mxu0 %v3292
    %5351 = vmatmul.bf16.gmra.mxu0 %v207
    %v5352 = vpop.f32.mrf.mxu0
    %v5353 = vadd.f32 0.0, %v5352
    %v5354 = vpop.f32.mrf.mxu0
    %5355 = vdwg.mxu0
    %5356 = vmatpush.bf16.msra.mxu0 %v3472
    %5357 = vmatpush.bf16.msra.mxu0 %v3460
    %5358 = vmatpush.bf16.msra.mxu0 %v3448
    %5359 = vmatpush.bf16.msra.mxu0 %v3436
    %5360 = vmatpush.bf16.msra.mxu0 %v3424
    %5361 = vmatpush.bf16.msra.mxu0 %v3412
    %5362 = vmatpush.bf16.msra.mxu0 %v3400
    %5363 = vmatpush.bf16.msra.mxu0 %v3388
    %5364 = vmatmul.bf16.gmra.mxu0 %v208
    %v5365 = vpop.f32.mrf.mxu0
    %v5366 = vadd.f32 %v5353, %v5365
    %v5367 = vpop.f32.mrf.mxu0
    %5368 = vdwg.mxu0
    %5369 = vmatpush.bf16.msra.mxu0 %v3568
    %5370 = vmatpush.bf16.msra.mxu0 %v3556
    %5371 = vmatpush.bf16.msra.mxu0 %v3544
    %5372 = vmatpush.bf16.msra.mxu0 %v3532
    %5373 = vmatpush.bf16.msra.mxu0 %v3520
    %5374 = vmatpush.bf16.msra.mxu0 %v3508
    %5375 = vmatpush.bf16.msra.mxu0 %v3496
    %5376 = vmatpush.bf16.msra.mxu0 %v3484
    %5377 = vmatmul.bf16.gmra.mxu0 %v209
    %v5378 = vpop.f32.mrf.mxu0
    %v5379 = vadd.f32 %v5366, %v5378
    %v5380 = vpop.f32.mrf.mxu0
    %5381 = vdwg.mxu0
    %5382 = vmatpush.bf16.msra.mxu0 %v3664
    %5383 = vmatpush.bf16.msra.mxu0 %v3652
    %5384 = vmatpush.bf16.msra.mxu0 %v3640
    %5385 = vmatpush.bf16.msra.mxu0 %v3628
    %5386 = vmatpush.bf16.msra.mxu0 %v3616
    %5387 = vmatpush.bf16.msra.mxu0 %v3604
    %5388 = vmatpush.bf16.msra.mxu0 %v3592
    %5389 = vmatpush.bf16.msra.mxu0 %v3580
    %5390 = vmatmul.bf16.gmra.mxu0 %v210
    %v5391 = vpop.f32.mrf.mxu0
    %v5392 = vadd.f32 %v5379, %v5391
    %v5393 = vpop.f32.mrf.mxu0
    %5394 = vdwg.mxu0
    %5395 = vmatpush.bf16.msra.mxu0 %v3760
    %5396 = vmatpush.bf16.msra.mxu0 %v3748
    %5397 = vmatpush.bf16.msra.mxu0 %v3736
    %5398 = vmatpush.bf16.msra.mxu0 %v3724
    %5399 = vmatpush.bf16.msra.mxu0 %v3712
    %5400 = vmatpush.bf16.msra.mxu0 %v3700
    %5401 = vmatpush.bf16.msra.mxu0 %v3688
    %5402 = vmatpush.bf16.msra.mxu0 %v3676
    %5403 = vmatmul.bf16.gmra.mxu0 %v211
    %v5404 = vpop.f32.mrf.mxu0
    %v5405 = vadd.f32 %v5392, %v5404
    %v5406 = vpop.f32.mrf.mxu0
    %5407 = vdwg.mxu0
    %5408 = vmatpush.bf16.msra.mxu0 %v3856
    %5409 = vmatpush.bf16.msra.mxu0 %v3844
    %5410 = vmatpush.bf16.msra.mxu0 %v3832
    %5411 = vmatpush.bf16.msra.mxu0 %v3820
    %5412 = vmatpush.bf16.msra.mxu0 %v3808
    %5413 = vmatpush.bf16.msra.mxu0 %v3796
    %5414 = vmatpush.bf16.msra.mxu0 %v3784
    %5415 = vmatpush.bf16.msra.mxu0 %v3772
    %5416 = vmatmul.bf16.gmra.mxu0 %v212
    %v5417 = vpop.f32.mrf.mxu0
    %v5418 = vadd.f32 %v5405, %v5417
    %v5419 = vpop.f32.mrf.mxu0
    %5420 = vdwg.mxu0
    %5421 = vmatpush.bf16.msra.mxu0 %v3952
    %5422 = vmatpush.bf16.msra.mxu0 %v3940
    %5423 = vmatpush.bf16.msra.mxu0 %v3928
    %5424 = vmatpush.bf16.msra.mxu0 %v3916
    %5425 = vmatpush.bf16.msra.mxu0 %v3904
    %5426 = vmatpush.bf16.msra.mxu0 %v3892
    %5427 = vmatpush.bf16.msra.mxu0 %v3880
    %5428 = vmatpush.bf16.msra.mxu0 %v3868
    %5429 = vmatmul.bf16.gmra.mxu0 %v213
    %v5430 = vpop.f32.mrf.mxu0
    %v5431 = vadd.f32 %v5418, %v5430
    %v5432 = vpop.f32.mrf.mxu0
    %5433 = vdwg.mxu0
    %5434 = vmatpush.bf16.msra.mxu0 %v4048
    %5435 = vmatpush.bf16.msra.mxu0 %v4036
    %5436 = vmatpush.bf16.msra.mxu0 %v4024
    %5437 = vmatpush.bf16.msra.mxu0 %v4012
    %5438 = vmatpush.bf16.msra.mxu0 %v4000
    %5439 = vmatpush.bf16.msra.mxu0 %v3988
    %5440 = vmatpush.bf16.msra.mxu0 %v3976
    %5441 = vmatpush.bf16.msra.mxu0 %v3964
    %5442 = vmatmul.bf16.gmra.mxu0 %v214
    %v5443 = vpop.f32.mrf.mxu0
    %v5444 = vadd.f32 %v5431, %v5443
    %v5445 = vpop.f32.mrf.mxu0
    %5446 = vdwg.mxu0
    %5447 = vmatpush.bf16.msra.mxu0 %v3377
    %5448 = vmatpush.bf16.msra.mxu0 %v3365
    %5449 = vmatpush.bf16.msra.mxu0 %v3353
    %5450 = vmatpush.bf16.msra.mxu0 %v3341
    %5451 = vmatpush.bf16.msra.mxu0 %v3329
    %5452 = vmatpush.bf16.msra.mxu0 %v3317
    %5453 = vmatpush.bf16.msra.mxu0 %v3305
    %5454 = vmatpush.bf16.msra.mxu0 %v3293
    %5455 = vmatmul.bf16.gmra.mxu0 %v207
    %v5456 = vpop.f32.mrf.mxu0
    %v5457 = vadd.f32 0.0, %v5456
    %v5458 = vpop.f32.mrf.mxu0
    %5459 = vdwg.mxu0
    %5460 = vmatpush.bf16.msra.mxu0 %v3473
    %5461 = vmatpush.bf16.msra.mxu0 %v3461
    %5462 = vmatpush.bf16.msra.mxu0 %v3449
    %5463 = vmatpush.bf16.msra.mxu0 %v3437
    %5464 = vmatpush.bf16.msra.mxu0 %v3425
    %5465 = vmatpush.bf16.msra.mxu0 %v3413
    %5466 = vmatpush.bf16.msra.mxu0 %v3401
    %5467 = vmatpush.bf16.msra.mxu0 %v3389
    %5468 = vmatmul.bf16.gmra.mxu0 %v208
    %v5469 = vpop.f32.mrf.mxu0
    %v5470 = vadd.f32 %v5457, %v5469
    %v5471 = vpop.f32.mrf.mxu0
    %5472 = vdwg.mxu0
    %5473 = vmatpush.bf16.msra.mxu0 %v3569
    %5474 = vmatpush.bf16.msra.mxu0 %v3557
    %5475 = vmatpush.bf16.msra.mxu0 %v3545
    %5476 = vmatpush.bf16.msra.mxu0 %v3533
    %5477 = vmatpush.bf16.msra.mxu0 %v3521
    %5478 = vmatpush.bf16.msra.mxu0 %v3509
    %5479 = vmatpush.bf16.msra.mxu0 %v3497
    %5480 = vmatpush.bf16.msra.mxu0 %v3485
    %5481 = vmatmul.bf16.gmra.mxu0 %v209
    %v5482 = vpop.f32.mrf.mxu0
    %v5483 = vadd.f32 %v5470, %v5482
    %v5484 = vpop.f32.mrf.mxu0
    %5485 = vdwg.mxu0
    %5486 = vmatpush.bf16.msra.mxu0 %v3665
    %5487 = vmatpush.bf16.msra.mxu0 %v3653
    %5488 = vmatpush.bf16.msra.mxu0 %v3641
    %5489 = vmatpush.bf16.msra.mxu0 %v3629
    %5490 = vmatpush.bf16.msra.mxu0 %v3617
    %5491 = vmatpush.bf16.msra.mxu0 %v3605
    %5492 = vmatpush.bf16.msra.mxu0 %v3593
    %5493 = vmatpush.bf16.msra.mxu0 %v3581
    %5494 = vmatmul.bf16.gmra.mxu0 %v210
    %v5495 = vpop.f32.mrf.mxu0
    %v5496 = vadd.f32 %v5483, %v5495
    %v5497 = vpop.f32.mrf.mxu0
    %5498 = vdwg.mxu0
    %5499 = vmatpush.bf16.msra.mxu0 %v3761
    %5500 = vmatpush.bf16.msra.mxu0 %v3749
    %5501 = vmatpush.bf16.msra.mxu0 %v3737
    %5502 = vmatpush.bf16.msra.mxu0 %v3725
    %5503 = vmatpush.bf16.msra.mxu0 %v3713
    %5504 = vmatpush.bf16.msra.mxu0 %v3701
    %5505 = vmatpush.bf16.msra.mxu0 %v3689
    %5506 = vmatpush.bf16.msra.mxu0 %v3677
    %5507 = vmatmul.bf16.gmra.mxu0 %v211
    %v5508 = vpop.f32.mrf.mxu0
    %v5509 = vadd.f32 %v5496, %v5508
    %v5510 = vpop.f32.mrf.mxu0
    %5511 = vdwg.mxu0
    %5512 = vmatpush.bf16.msra.mxu0 %v3857
    %5513 = vmatpush.bf16.msra.mxu0 %v3845
    %5514 = vmatpush.bf16.msra.mxu0 %v3833
    %5515 = vmatpush.bf16.msra.mxu0 %v3821
    %5516 = vmatpush.bf16.msra.mxu0 %v3809
    %5517 = vmatpush.bf16.msra.mxu0 %v3797
    %5518 = vmatpush.bf16.msra.mxu0 %v3785
    %5519 = vmatpush.bf16.msra.mxu0 %v3773
    %5520 = vmatmul.bf16.gmra.mxu0 %v212
    %v5521 = vpop.f32.mrf.mxu0
    %v5522 = vadd.f32 %v5509, %v5521
    %v5523 = vpop.f32.mrf.mxu0
    %5524 = vdwg.mxu0
    %5525 = vmatpush.bf16.msra.mxu0 %v3953
    %5526 = vmatpush.bf16.msra.mxu0 %v3941
    %5527 = vmatpush.bf16.msra.mxu0 %v3929
    %5528 = vmatpush.bf16.msra.mxu0 %v3917
    %5529 = vmatpush.bf16.msra.mxu0 %v3905
    %5530 = vmatpush.bf16.msra.mxu0 %v3893
    %5531 = vmatpush.bf16.msra.mxu0 %v3881
    %5532 = vmatpush.bf16.msra.mxu0 %v3869
    %5533 = vmatmul.bf16.gmra.mxu0 %v213
    %v5534 = vpop.f32.mrf.mxu0
    %v5535 = vadd.f32 %v5522, %v5534
    %v5536 = vpop.f32.mrf.mxu0
    %5537 = vdwg.mxu0
    %5538 = vmatpush.bf16.msra.mxu0 %v4049
    %5539 = vmatpush.bf16.msra.mxu0 %v4037
    %5540 = vmatpush.bf16.msra.mxu0 %v4025
    %5541 = vmatpush.bf16.msra.mxu0 %v4013
    %5542 = vmatpush.bf16.msra.mxu0 %v4001
    %5543 = vmatpush.bf16.msra.mxu0 %v3989
    %5544 = vmatpush.bf16.msra.mxu0 %v3977
    %5545 = vmatpush.bf16.msra.mxu0 %v3965
    %5546 = vmatmul.bf16.gmra.mxu0 %v214
    %v5547 = vpop.f32.mrf.mxu0
    %v5548 = vadd.f32 %v5535, %v5547
    %v5549 = vpop.f32.mrf.mxu0
    %5550 = vdwg.mxu0
    %5551 = vmatpush.bf16.msra.mxu0 %v3378
    %5552 = vmatpush.bf16.msra.mxu0 %v3366
    %5553 = vmatpush.bf16.msra.mxu0 %v3354
    %5554 = vmatpush.bf16.msra.mxu0 %v3342
    %5555 = vmatpush.bf16.msra.mxu0 %v3330
    %5556 = vmatpush.bf16.msra.mxu0 %v3318
    %5557 = vmatpush.bf16.msra.mxu0 %v3306
    %5558 = vmatpush.bf16.msra.mxu0 %v3294
    %5559 = vmatmul.bf16.gmra.mxu0 %v207
    %v5560 = vpop.f32.mrf.mxu0
    %v5561 = vadd.f32 0.0, %v5560
    %v5562 = vpop.f32.mrf.mxu0
    %5563 = vdwg.mxu0
    %5564 = vmatpush.bf16.msra.mxu0 %v3474
    %5565 = vmatpush.bf16.msra.mxu0 %v3462
    %5566 = vmatpush.bf16.msra.mxu0 %v3450
    %5567 = vmatpush.bf16.msra.mxu0 %v3438
    %5568 = vmatpush.bf16.msra.mxu0 %v3426
    %5569 = vmatpush.bf16.msra.mxu0 %v3414
    %5570 = vmatpush.bf16.msra.mxu0 %v3402
    %5571 = vmatpush.bf16.msra.mxu0 %v3390
    %5572 = vmatmul.bf16.gmra.mxu0 %v208
    %v5573 = vpop.f32.mrf.mxu0
    %v5574 = vadd.f32 %v5561, %v5573
    %v5575 = vpop.f32.mrf.mxu0
    %5576 = vdwg.mxu0
    %5577 = vmatpush.bf16.msra.mxu0 %v3570
    %5578 = vmatpush.bf16.msra.mxu0 %v3558
    %5579 = vmatpush.bf16.msra.mxu0 %v3546
    %5580 = vmatpush.bf16.msra.mxu0 %v3534
    %5581 = vmatpush.bf16.msra.mxu0 %v3522
    %5582 = vmatpush.bf16.msra.mxu0 %v3510
    %5583 = vmatpush.bf16.msra.mxu0 %v3498
    %5584 = vmatpush.bf16.msra.mxu0 %v3486
    %5585 = vmatmul.bf16.gmra.mxu0 %v209
    %v5586 = vpop.f32.mrf.mxu0
    %v5587 = vadd.f32 %v5574, %v5586
    %v5588 = vpop.f32.mrf.mxu0
    %5589 = vdwg.mxu0
    %5590 = vmatpush.bf16.msra.mxu0 %v3666
    %5591 = vmatpush.bf16.msra.mxu0 %v3654
    %5592 = vmatpush.bf16.msra.mxu0 %v3642
    %5593 = vmatpush.bf16.msra.mxu0 %v3630
    %5594 = vmatpush.bf16.msra.mxu0 %v3618
    %5595 = vmatpush.bf16.msra.mxu0 %v3606
    %5596 = vmatpush.bf16.msra.mxu0 %v3594
    %5597 = vmatpush.bf16.msra.mxu0 %v3582
    %5598 = vmatmul.bf16.gmra.mxu0 %v210
    %v5599 = vpop.f32.mrf.mxu0
    %v5600 = vadd.f32 %v5587, %v5599
    %v5601 = vpop.f32.mrf.mxu0
    %5602 = vdwg.mxu0
    %5603 = vmatpush.bf16.msra.mxu0 %v3762
    %5604 = vmatpush.bf16.msra.mxu0 %v3750
    %5605 = vmatpush.bf16.msra.mxu0 %v3738
    %5606 = vmatpush.bf16.msra.mxu0 %v3726
    %5607 = vmatpush.bf16.msra.mxu0 %v3714
    %5608 = vmatpush.bf16.msra.mxu0 %v3702
    %5609 = vmatpush.bf16.msra.mxu0 %v3690
    %5610 = vmatpush.bf16.msra.mxu0 %v3678
    %5611 = vmatmul.bf16.gmra.mxu0 %v211
    %v5612 = vpop.f32.mrf.mxu0
    %v5613 = vadd.f32 %v5600, %v5612
    %v5614 = vpop.f32.mrf.mxu0
    %5615 = vdwg.mxu0
    %5616 = vmatpush.bf16.msra.mxu0 %v3858
    %5617 = vmatpush.bf16.msra.mxu0 %v3846
    %5618 = vmatpush.bf16.msra.mxu0 %v3834
    %5619 = vmatpush.bf16.msra.mxu0 %v3822
    %5620 = vmatpush.bf16.msra.mxu0 %v3810
    %5621 = vmatpush.bf16.msra.mxu0 %v3798
    %5622 = vmatpush.bf16.msra.mxu0 %v3786
    %5623 = vmatpush.bf16.msra.mxu0 %v3774
    %5624 = vmatmul.bf16.gmra.mxu0 %v212
    %v5625 = vpop.f32.mrf.mxu0
    %v5626 = vadd.f32 %v5613, %v5625
    %v5627 = vpop.f32.mrf.mxu0
    %5628 = vdwg.mxu0
    %5629 = vmatpush.bf16.msra.mxu0 %v3954
    %5630 = vmatpush.bf16.msra.mxu0 %v3942
    %5631 = vmatpush.bf16.msra.mxu0 %v3930
    %5632 = vmatpush.bf16.msra.mxu0 %v3918
    %5633 = vmatpush.bf16.msra.mxu0 %v3906
    %5634 = vmatpush.bf16.msra.mxu0 %v3894
    %5635 = vmatpush.bf16.msra.mxu0 %v3882
    %5636 = vmatpush.bf16.msra.mxu0 %v3870
    %5637 = vmatmul.bf16.gmra.mxu0 %v213
    %v5638 = vpop.f32.mrf.mxu0
    %v5639 = vadd.f32 %v5626, %v5638
    %v5640 = vpop.f32.mrf.mxu0
    %5641 = vdwg.mxu0
    %5642 = vmatpush.bf16.msra.mxu0 %v4050
    %5643 = vmatpush.bf16.msra.mxu0 %v4038
    %5644 = vmatpush.bf16.msra.mxu0 %v4026
    %5645 = vmatpush.bf16.msra.mxu0 %v4014
    %5646 = vmatpush.bf16.msra.mxu0 %v4002
    %5647 = vmatpush.bf16.msra.mxu0 %v3990
    %5648 = vmatpush.bf16.msra.mxu0 %v3978
    %5649 = vmatpush.bf16.msra.mxu0 %v3966
    %5650 = vmatmul.bf16.gmra.mxu0 %v214
    %v5651 = vpop.f32.mrf.mxu0
    %v5652 = vadd.f32 %v5639, %v5651
    %v5653 = vpop.f32.mrf.mxu0
    %5654 = vdwg.mxu0
    %5655 = vmatpush.bf16.msra.mxu0 %v3379
    %5656 = vmatpush.bf16.msra.mxu0 %v3367
    %5657 = vmatpush.bf16.msra.mxu0 %v3355
    %5658 = vmatpush.bf16.msra.mxu0 %v3343
    %5659 = vmatpush.bf16.msra.mxu0 %v3331
    %5660 = vmatpush.bf16.msra.mxu0 %v3319
    %5661 = vmatpush.bf16.msra.mxu0 %v3307
    %5662 = vmatpush.bf16.msra.mxu0 %v3295
    %5663 = vmatmul.bf16.gmra.mxu0 %v207
    %v5664 = vpop.f32.mrf.mxu0
    %v5665 = vadd.f32 0.0, %v5664
    %v5666 = vpop.f32.mrf.mxu0
    %5667 = vdwg.mxu0
    %5668 = vmatpush.bf16.msra.mxu0 %v3475
    %5669 = vmatpush.bf16.msra.mxu0 %v3463
    %5670 = vmatpush.bf16.msra.mxu0 %v3451
    %5671 = vmatpush.bf16.msra.mxu0 %v3439
    %5672 = vmatpush.bf16.msra.mxu0 %v3427
    %5673 = vmatpush.bf16.msra.mxu0 %v3415
    %5674 = vmatpush.bf16.msra.mxu0 %v3403
    %5675 = vmatpush.bf16.msra.mxu0 %v3391
    %5676 = vmatmul.bf16.gmra.mxu0 %v208
    %v5677 = vpop.f32.mrf.mxu0
    %v5678 = vadd.f32 %v5665, %v5677
    %v5679 = vpop.f32.mrf.mxu0
    %5680 = vdwg.mxu0
    %5681 = vmatpush.bf16.msra.mxu0 %v3571
    %5682 = vmatpush.bf16.msra.mxu0 %v3559
    %5683 = vmatpush.bf16.msra.mxu0 %v3547
    %5684 = vmatpush.bf16.msra.mxu0 %v3535
    %5685 = vmatpush.bf16.msra.mxu0 %v3523
    %5686 = vmatpush.bf16.msra.mxu0 %v3511
    %5687 = vmatpush.bf16.msra.mxu0 %v3499
    %5688 = vmatpush.bf16.msra.mxu0 %v3487
    %5689 = vmatmul.bf16.gmra.mxu0 %v209
    %v5690 = vpop.f32.mrf.mxu0
    %v5691 = vadd.f32 %v5678, %v5690
    %v5692 = vpop.f32.mrf.mxu0
    %5693 = vdwg.mxu0
    %5694 = vmatpush.bf16.msra.mxu0 %v3667
    %5695 = vmatpush.bf16.msra.mxu0 %v3655
    %5696 = vmatpush.bf16.msra.mxu0 %v3643
    %5697 = vmatpush.bf16.msra.mxu0 %v3631
    %5698 = vmatpush.bf16.msra.mxu0 %v3619
    %5699 = vmatpush.bf16.msra.mxu0 %v3607
    %5700 = vmatpush.bf16.msra.mxu0 %v3595
    %5701 = vmatpush.bf16.msra.mxu0 %v3583
    %5702 = vmatmul.bf16.gmra.mxu0 %v210
    %v5703 = vpop.f32.mrf.mxu0
    %v5704 = vadd.f32 %v5691, %v5703
    %v5705 = vpop.f32.mrf.mxu0
    %5706 = vdwg.mxu0
    %5707 = vmatpush.bf16.msra.mxu0 %v3763
    %5708 = vmatpush.bf16.msra.mxu0 %v3751
    %5709 = vmatpush.bf16.msra.mxu0 %v3739
    %5710 = vmatpush.bf16.msra.mxu0 %v3727
    %5711 = vmatpush.bf16.msra.mxu0 %v3715
    %5712 = vmatpush.bf16.msra.mxu0 %v3703
    %5713 = vmatpush.bf16.msra.mxu0 %v3691
    %5714 = vmatpush.bf16.msra.mxu0 %v3679
    %5715 = vmatmul.bf16.gmra.mxu0 %v211
    %v5716 = vpop.f32.mrf.mxu0
    %v5717 = vadd.f32 %v5704, %v5716
    %v5718 = vpop.f32.mrf.mxu0
    %5719 = vdwg.mxu0
    %5720 = vmatpush.bf16.msra.mxu0 %v3859
    %5721 = vmatpush.bf16.msra.mxu0 %v3847
    %5722 = vmatpush.bf16.msra.mxu0 %v3835
    %5723 = vmatpush.bf16.msra.mxu0 %v3823
    %5724 = vmatpush.bf16.msra.mxu0 %v3811
    %5725 = vmatpush.bf16.msra.mxu0 %v3799
    %5726 = vmatpush.bf16.msra.mxu0 %v3787
    %5727 = vmatpush.bf16.msra.mxu0 %v3775
    %5728 = vmatmul.bf16.gmra.mxu0 %v212
    %v5729 = vpop.f32.mrf.mxu0
    %v5730 = vadd.f32 %v5717, %v5729
    %v5731 = vpop.f32.mrf.mxu0
    %5732 = vdwg.mxu0
    %5733 = vmatpush.bf16.msra.mxu0 %v3955
    %5734 = vmatpush.bf16.msra.mxu0 %v3943
    %5735 = vmatpush.bf16.msra.mxu0 %v3931
    %5736 = vmatpush.bf16.msra.mxu0 %v3919
    %5737 = vmatpush.bf16.msra.mxu0 %v3907
    %5738 = vmatpush.bf16.msra.mxu0 %v3895
    %5739 = vmatpush.bf16.msra.mxu0 %v3883
    %5740 = vmatpush.bf16.msra.mxu0 %v3871
    %5741 = vmatmul.bf16.gmra.mxu0 %v213
    %v5742 = vpop.f32.mrf.mxu0
    %v5743 = vadd.f32 %v5730, %v5742
    %v5744 = vpop.f32.mrf.mxu0
    %5745 = vdwg.mxu0
    %5746 = vmatpush.bf16.msra.mxu0 %v4051
    %5747 = vmatpush.bf16.msra.mxu0 %v4039
    %5748 = vmatpush.bf16.msra.mxu0 %v4027
    %5749 = vmatpush.bf16.msra.mxu0 %v4015
    %5750 = vmatpush.bf16.msra.mxu0 %v4003
    %5751 = vmatpush.bf16.msra.mxu0 %v3991
    %5752 = vmatpush.bf16.msra.mxu0 %v3979
    %5753 = vmatpush.bf16.msra.mxu0 %v3967
    %5754 = vmatmul.bf16.gmra.mxu0 %v214
    %v5755 = vpop.f32.mrf.mxu0
    %v5756 = vadd.f32 %v5743, %v5755
    %v5757 = vpop.f32.mrf.mxu0
    %5758 = vdwg.mxu0
    %5759 = vmatpush.bf16.msra.mxu0 %v3380
    %5760 = vmatpush.bf16.msra.mxu0 %v3368
    %5761 = vmatpush.bf16.msra.mxu0 %v3356
    %5762 = vmatpush.bf16.msra.mxu0 %v3344
    %5763 = vmatpush.bf16.msra.mxu0 %v3332
    %5764 = vmatpush.bf16.msra.mxu0 %v3320
    %5765 = vmatpush.bf16.msra.mxu0 %v3308
    %5766 = vmatpush.bf16.msra.mxu0 %v3296
    %5767 = vmatmul.bf16.gmra.mxu0 %v207
    %v5768 = vpop.f32.mrf.mxu0
    %v5769 = vadd.f32 0.0, %v5768
    %v5770 = vpop.f32.mrf.mxu0
    %5771 = vdwg.mxu0
    %5772 = vmatpush.bf16.msra.mxu0 %v3476
    %5773 = vmatpush.bf16.msra.mxu0 %v3464
    %5774 = vmatpush.bf16.msra.mxu0 %v3452
    %5775 = vmatpush.bf16.msra.mxu0 %v3440
    %5776 = vmatpush.bf16.msra.mxu0 %v3428
    %5777 = vmatpush.bf16.msra.mxu0 %v3416
    %5778 = vmatpush.bf16.msra.mxu0 %v3404
    %5779 = vmatpush.bf16.msra.mxu0 %v3392
    %5780 = vmatmul.bf16.gmra.mxu0 %v208
    %v5781 = vpop.f32.mrf.mxu0
    %v5782 = vadd.f32 %v5769, %v5781
    %v5783 = vpop.f32.mrf.mxu0
    %5784 = vdwg.mxu0
    %5785 = vmatpush.bf16.msra.mxu0 %v3572
    %5786 = vmatpush.bf16.msra.mxu0 %v3560
    %5787 = vmatpush.bf16.msra.mxu0 %v3548
    %5788 = vmatpush.bf16.msra.mxu0 %v3536
    %5789 = vmatpush.bf16.msra.mxu0 %v3524
    %5790 = vmatpush.bf16.msra.mxu0 %v3512
    %5791 = vmatpush.bf16.msra.mxu0 %v3500
    %5792 = vmatpush.bf16.msra.mxu0 %v3488
    %5793 = vmatmul.bf16.gmra.mxu0 %v209
    %v5794 = vpop.f32.mrf.mxu0
    %v5795 = vadd.f32 %v5782, %v5794
    %v5796 = vpop.f32.mrf.mxu0
    %5797 = vdwg.mxu0
    %5798 = vmatpush.bf16.msra.mxu0 %v3668
    %5799 = vmatpush.bf16.msra.mxu0 %v3656
    %5800 = vmatpush.bf16.msra.mxu0 %v3644
    %5801 = vmatpush.bf16.msra.mxu0 %v3632
    %5802 = vmatpush.bf16.msra.mxu0 %v3620
    %5803 = vmatpush.bf16.msra.mxu0 %v3608
    %5804 = vmatpush.bf16.msra.mxu0 %v3596
    %5805 = vmatpush.bf16.msra.mxu0 %v3584
    %5806 = vmatmul.bf16.gmra.mxu0 %v210
    %v5807 = vpop.f32.mrf.mxu0
    %v5808 = vadd.f32 %v5795, %v5807
    %v5809 = vpop.f32.mrf.mxu0
    %5810 = vdwg.mxu0
    %5811 = vmatpush.bf16.msra.mxu0 %v3764
    %5812 = vmatpush.bf16.msra.mxu0 %v3752
    %5813 = vmatpush.bf16.msra.mxu0 %v3740
    %5814 = vmatpush.bf16.msra.mxu0 %v3728
    %5815 = vmatpush.bf16.msra.mxu0 %v3716
    %5816 = vmatpush.bf16.msra.mxu0 %v3704
    %5817 = vmatpush.bf16.msra.mxu0 %v3692
    %5818 = vmatpush.bf16.msra.mxu0 %v3680
    %5819 = vmatmul.bf16.gmra.mxu0 %v211
    %v5820 = vpop.f32.mrf.mxu0
    %v5821 = vadd.f32 %v5808, %v5820
    %v5822 = vpop.f32.mrf.mxu0
    %5823 = vdwg.mxu0
    %5824 = vmatpush.bf16.msra.mxu0 %v3860
    %5825 = vmatpush.bf16.msra.mxu0 %v3848
    %5826 = vmatpush.bf16.msra.mxu0 %v3836
    %5827 = vmatpush.bf16.msra.mxu0 %v3824
    %5828 = vmatpush.bf16.msra.mxu0 %v3812
    %5829 = vmatpush.bf16.msra.mxu0 %v3800
    %5830 = vmatpush.bf16.msra.mxu0 %v3788
    %5831 = vmatpush.bf16.msra.mxu0 %v3776
    %5832 = vmatmul.bf16.gmra.mxu0 %v212
    %v5833 = vpop.f32.mrf.mxu0
    %v5834 = vadd.f32 %v5821, %v5833
    %v5835 = vpop.f32.mrf.mxu0
    %5836 = vdwg.mxu0
    %5837 = vmatpush.bf16.msra.mxu0 %v3956
    %5838 = vmatpush.bf16.msra.mxu0 %v3944
    %5839 = vmatpush.bf16.msra.mxu0 %v3932
    %5840 = vmatpush.bf16.msra.mxu0 %v3920
    %5841 = vmatpush.bf16.msra.mxu0 %v3908
    %5842 = vmatpush.bf16.msra.mxu0 %v3896
    %5843 = vmatpush.bf16.msra.mxu0 %v3884
    %5844 = vmatpush.bf16.msra.mxu0 %v3872
    %5845 = vmatmul.bf16.gmra.mxu0 %v213
    %v5846 = vpop.f32.mrf.mxu0
    %v5847 = vadd.f32 %v5834, %v5846
    %v5848 = vpop.f32.mrf.mxu0
    %5849 = vdwg.mxu0
    %5850 = vmatpush.bf16.msra.mxu0 %v4052
    %5851 = vmatpush.bf16.msra.mxu0 %v4040
    %5852 = vmatpush.bf16.msra.mxu0 %v4028
    %5853 = vmatpush.bf16.msra.mxu0 %v4016
    %5854 = vmatpush.bf16.msra.mxu0 %v4004
    %5855 = vmatpush.bf16.msra.mxu0 %v3992
    %5856 = vmatpush.bf16.msra.mxu0 %v3980
    %5857 = vmatpush.bf16.msra.mxu0 %v3968
    %5858 = vmatmul.bf16.gmra.mxu0 %v214
    %v5859 = vpop.f32.mrf.mxu0
    %v5860 = vadd.f32 %v5847, %v5859
    %v5861 = vpop.f32.mrf.mxu0
    %5862 = vdwg.mxu0
    %5863 = vmatpush.bf16.msra.mxu0 %v3381
    %5864 = vmatpush.bf16.msra.mxu0 %v3369
    %5865 = vmatpush.bf16.msra.mxu0 %v3357
    %5866 = vmatpush.bf16.msra.mxu0 %v3345
    %5867 = vmatpush.bf16.msra.mxu0 %v3333
    %5868 = vmatpush.bf16.msra.mxu0 %v3321
    %5869 = vmatpush.bf16.msra.mxu0 %v3309
    %5870 = vmatpush.bf16.msra.mxu0 %v3297
    %5871 = vmatmul.bf16.gmra.mxu0 %v207
    %v5872 = vpop.f32.mrf.mxu0
    %v5873 = vadd.f32 0.0, %v5872
    %v5874 = vpop.f32.mrf.mxu0
    %5875 = vdwg.mxu0
    %5876 = vmatpush.bf16.msra.mxu0 %v3477
    %5877 = vmatpush.bf16.msra.mxu0 %v3465
    %5878 = vmatpush.bf16.msra.mxu0 %v3453
    %5879 = vmatpush.bf16.msra.mxu0 %v3441
    %5880 = vmatpush.bf16.msra.mxu0 %v3429
    %5881 = vmatpush.bf16.msra.mxu0 %v3417
    %5882 = vmatpush.bf16.msra.mxu0 %v3405
    %5883 = vmatpush.bf16.msra.mxu0 %v3393
    %5884 = vmatmul.bf16.gmra.mxu0 %v208
    %v5885 = vpop.f32.mrf.mxu0
    %v5886 = vadd.f32 %v5873, %v5885
    %v5887 = vpop.f32.mrf.mxu0
    %5888 = vdwg.mxu0
    %5889 = vmatpush.bf16.msra.mxu0 %v3573
    %5890 = vmatpush.bf16.msra.mxu0 %v3561
    %5891 = vmatpush.bf16.msra.mxu0 %v3549
    %5892 = vmatpush.bf16.msra.mxu0 %v3537
    %5893 = vmatpush.bf16.msra.mxu0 %v3525
    %5894 = vmatpush.bf16.msra.mxu0 %v3513
    %5895 = vmatpush.bf16.msra.mxu0 %v3501
    %5896 = vmatpush.bf16.msra.mxu0 %v3489
    %5897 = vmatmul.bf16.gmra.mxu0 %v209
    %v5898 = vpop.f32.mrf.mxu0
    %v5899 = vadd.f32 %v5886, %v5898
    %v5900 = vpop.f32.mrf.mxu0
    %5901 = vdwg.mxu0
    %5902 = vmatpush.bf16.msra.mxu0 %v3669
    %5903 = vmatpush.bf16.msra.mxu0 %v3657
    %5904 = vmatpush.bf16.msra.mxu0 %v3645
    %5905 = vmatpush.bf16.msra.mxu0 %v3633
    %5906 = vmatpush.bf16.msra.mxu0 %v3621
    %5907 = vmatpush.bf16.msra.mxu0 %v3609
    %5908 = vmatpush.bf16.msra.mxu0 %v3597
    %5909 = vmatpush.bf16.msra.mxu0 %v3585
    %5910 = vmatmul.bf16.gmra.mxu0 %v210
    %v5911 = vpop.f32.mrf.mxu0
    %v5912 = vadd.f32 %v5899, %v5911
    %v5913 = vpop.f32.mrf.mxu0
    %5914 = vdwg.mxu0
    %5915 = vmatpush.bf16.msra.mxu0 %v3765
    %5916 = vmatpush.bf16.msra.mxu0 %v3753
    %5917 = vmatpush.bf16.msra.mxu0 %v3741
    %5918 = vmatpush.bf16.msra.mxu0 %v3729
    %5919 = vmatpush.bf16.msra.mxu0 %v3717
    %5920 = vmatpush.bf16.msra.mxu0 %v3705
    %5921 = vmatpush.bf16.msra.mxu0 %v3693
    %5922 = vmatpush.bf16.msra.mxu0 %v3681
    %5923 = vmatmul.bf16.gmra.mxu0 %v211
    %v5924 = vpop.f32.mrf.mxu0
    %v5925 = vadd.f32 %v5912, %v5924
    %v5926 = vpop.f32.mrf.mxu0
    %5927 = vdwg.mxu0
    %5928 = vmatpush.bf16.msra.mxu0 %v3861
    %5929 = vmatpush.bf16.msra.mxu0 %v3849
    %5930 = vmatpush.bf16.msra.mxu0 %v3837
    %5931 = vmatpush.bf16.msra.mxu0 %v3825
    %5932 = vmatpush.bf16.msra.mxu0 %v3813
    %5933 = vmatpush.bf16.msra.mxu0 %v3801
    %5934 = vmatpush.bf16.msra.mxu0 %v3789
    %5935 = vmatpush.bf16.msra.mxu0 %v3777
    %5936 = vmatmul.bf16.gmra.mxu0 %v212
    %v5937 = vpop.f32.mrf.mxu0
    %v5938 = vadd.f32 %v5925, %v5937
    %v5939 = vpop.f32.mrf.mxu0
    %5940 = vdwg.mxu0
    %5941 = vmatpush.bf16.msra.mxu0 %v3957
    %5942 = vmatpush.bf16.msra.mxu0 %v3945
    %5943 = vmatpush.bf16.msra.mxu0 %v3933
    %5944 = vmatpush.bf16.msra.mxu0 %v3921
    %5945 = vmatpush.bf16.msra.mxu0 %v3909
    %5946 = vmatpush.bf16.msra.mxu0 %v3897
    %5947 = vmatpush.bf16.msra.mxu0 %v3885
    %5948 = vmatpush.bf16.msra.mxu0 %v3873
    %5949 = vmatmul.bf16.gmra.mxu0 %v213
    %v5950 = vpop.f32.mrf.mxu0
    %v5951 = vadd.f32 %v5938, %v5950
    %v5952 = vpop.f32.mrf.mxu0
    %5953 = vdwg.mxu0
    %5954 = vmatpush.bf16.msra.mxu0 %v4053
    %5955 = vmatpush.bf16.msra.mxu0 %v4041
    %5956 = vmatpush.bf16.msra.mxu0 %v4029
    %5957 = vmatpush.bf16.msra.mxu0 %v4017
    %5958 = vmatpush.bf16.msra.mxu0 %v4005
    %5959 = vmatpush.bf16.msra.mxu0 %v3993
    %5960 = vmatpush.bf16.msra.mxu0 %v3981
    %5961 = vmatpush.bf16.msra.mxu0 %v3969
    %5962 = vmatmul.bf16.gmra.mxu0 %v214
    %v5963 = vpop.f32.mrf.mxu0
    %v5964 = vadd.f32 %v5951, %v5963
    %v5965 = vpop.f32.mrf.mxu0
    %5966 = vdwg.mxu0
    %5967 = vmatpush.bf16.msra.mxu0 %v3382
    %5968 = vmatpush.bf16.msra.mxu0 %v3370
    %5969 = vmatpush.bf16.msra.mxu0 %v3358
    %5970 = vmatpush.bf16.msra.mxu0 %v3346
    %5971 = vmatpush.bf16.msra.mxu0 %v3334
    %5972 = vmatpush.bf16.msra.mxu0 %v3322
    %5973 = vmatpush.bf16.msra.mxu0 %v3310
    %5974 = vmatpush.bf16.msra.mxu0 %v3298
    %5975 = vmatmul.bf16.gmra.mxu0 %v207
    %v5976 = vpop.f32.mrf.mxu0
    %v5977 = vadd.f32 0.0, %v5976
    %v5978 = vpop.f32.mrf.mxu0
    %5979 = vdwg.mxu0
    %5980 = vmatpush.bf16.msra.mxu0 %v3478
    %5981 = vmatpush.bf16.msra.mxu0 %v3466
    %5982 = vmatpush.bf16.msra.mxu0 %v3454
    %5983 = vmatpush.bf16.msra.mxu0 %v3442
    %5984 = vmatpush.bf16.msra.mxu0 %v3430
    %5985 = vmatpush.bf16.msra.mxu0 %v3418
    %5986 = vmatpush.bf16.msra.mxu0 %v3406
    %5987 = vmatpush.bf16.msra.mxu0 %v3394
    %5988 = vmatmul.bf16.gmra.mxu0 %v208
    %v5989 = vpop.f32.mrf.mxu0
    %v5990 = vadd.f32 %v5977, %v5989
    %v5991 = vpop.f32.mrf.mxu0
    %5992 = vdwg.mxu0
    %5993 = vmatpush.bf16.msra.mxu0 %v3574
    %5994 = vmatpush.bf16.msra.mxu0 %v3562
    %5995 = vmatpush.bf16.msra.mxu0 %v3550
    %5996 = vmatpush.bf16.msra.mxu0 %v3538
    %5997 = vmatpush.bf16.msra.mxu0 %v3526
    %5998 = vmatpush.bf16.msra.mxu0 %v3514
    %5999 = vmatpush.bf16.msra.mxu0 %v3502
    %6000 = vmatpush.bf16.msra.mxu0 %v3490
    %6001 = vmatmul.bf16.gmra.mxu0 %v209
    %v6002 = vpop.f32.mrf.mxu0
    %v6003 = vadd.f32 %v5990, %v6002
    %v6004 = vpop.f32.mrf.mxu0
    %6005 = vdwg.mxu0
    %6006 = vmatpush.bf16.msra.mxu0 %v3670
    %6007 = vmatpush.bf16.msra.mxu0 %v3658
    %6008 = vmatpush.bf16.msra.mxu0 %v3646
    %6009 = vmatpush.bf16.msra.mxu0 %v3634
    %6010 = vmatpush.bf16.msra.mxu0 %v3622
    %6011 = vmatpush.bf16.msra.mxu0 %v3610
    %6012 = vmatpush.bf16.msra.mxu0 %v3598
    %6013 = vmatpush.bf16.msra.mxu0 %v3586
    %6014 = vmatmul.bf16.gmra.mxu0 %v210
    %v6015 = vpop.f32.mrf.mxu0
    %v6016 = vadd.f32 %v6003, %v6015
    %v6017 = vpop.f32.mrf.mxu0
    %6018 = vdwg.mxu0
    %6019 = vmatpush.bf16.msra.mxu0 %v3766
    %6020 = vmatpush.bf16.msra.mxu0 %v3754
    %6021 = vmatpush.bf16.msra.mxu0 %v3742
    %6022 = vmatpush.bf16.msra.mxu0 %v3730
    %6023 = vmatpush.bf16.msra.mxu0 %v3718
    %6024 = vmatpush.bf16.msra.mxu0 %v3706
    %6025 = vmatpush.bf16.msra.mxu0 %v3694
    %6026 = vmatpush.bf16.msra.mxu0 %v3682
    %6027 = vmatmul.bf16.gmra.mxu0 %v211
    %v6028 = vpop.f32.mrf.mxu0
    %v6029 = vadd.f32 %v6016, %v6028
    %v6030 = vpop.f32.mrf.mxu0
    %6031 = vdwg.mxu0
    %6032 = vmatpush.bf16.msra.mxu0 %v3862
    %6033 = vmatpush.bf16.msra.mxu0 %v3850
    %6034 = vmatpush.bf16.msra.mxu0 %v3838
    %6035 = vmatpush.bf16.msra.mxu0 %v3826
    %6036 = vmatpush.bf16.msra.mxu0 %v3814
    %6037 = vmatpush.bf16.msra.mxu0 %v3802
    %6038 = vmatpush.bf16.msra.mxu0 %v3790
    %6039 = vmatpush.bf16.msra.mxu0 %v3778
    %6040 = vmatmul.bf16.gmra.mxu0 %v212
    %v6041 = vpop.f32.mrf.mxu0
    %v6042 = vadd.f32 %v6029, %v6041
    %v6043 = vpop.f32.mrf.mxu0
    %6044 = vdwg.mxu0
    %6045 = vmatpush.bf16.msra.mxu0 %v3958
    %6046 = vmatpush.bf16.msra.mxu0 %v3946
    %6047 = vmatpush.bf16.msra.mxu0 %v3934
    %6048 = vmatpush.bf16.msra.mxu0 %v3922
    %6049 = vmatpush.bf16.msra.mxu0 %v3910
    %6050 = vmatpush.bf16.msra.mxu0 %v3898
    %6051 = vmatpush.bf16.msra.mxu0 %v3886
    %6052 = vmatpush.bf16.msra.mxu0 %v3874
    %6053 = vmatmul.bf16.gmra.mxu0 %v213
    %v6054 = vpop.f32.mrf.mxu0
    %v6055 = vadd.f32 %v6042, %v6054
    %v6056 = vpop.f32.mrf.mxu0
    %6057 = vdwg.mxu0
    %6058 = vmatpush.bf16.msra.mxu0 %v4054
    %6059 = vmatpush.bf16.msra.mxu0 %v4042
    %6060 = vmatpush.bf16.msra.mxu0 %v4030
    %6061 = vmatpush.bf16.msra.mxu0 %v4018
    %6062 = vmatpush.bf16.msra.mxu0 %v4006
    %6063 = vmatpush.bf16.msra.mxu0 %v3994
    %6064 = vmatpush.bf16.msra.mxu0 %v3982
    %6065 = vmatpush.bf16.msra.mxu0 %v3970
    %6066 = vmatmul.bf16.gmra.mxu0 %v214
    %v6067 = vpop.f32.mrf.mxu0
    %v6068 = vadd.f32 %v6055, %v6067
    %v6069 = vpop.f32.mrf.mxu0
    %6070 = vdwg.mxu0
    %v6083 = vrot.slane %v5028, 4
    %v6084 = vrot.slane %v5236, 4
    %v6085 = vrot.slane %v5444, 4
    %v6086 = vrot.slane %v5652, 4
    %v6087 = vrot.slane %v5860, 4
    %v6088 = vrot.slane %v6068, 4
    %vm6089 = vcmask 1043456
    %v6090 = vsel %vm6089, %v4924, %v6083
    %v6091 = vsel %vm6089, %v5132, %v6084
    %v6092 = vsel %vm6089, %v5340, %v6085
    %v6093 = vsel %vm6089, %v5548, %v6086
    %v6094 = vsel %vm6089, %v5756, %v6087
    %v6095 = vsel %vm6089, %v5964, %v6088
    %v6102 = vadd.f32 %v170, %v6090
    %v6103 = vadd.f32 %v171, %v6091
    %v6104 = vadd.f32 %v172, %v6092
    %v6105 = vadd.f32 %v173, %v6093
    %v6106 = vadd.f32 %v174, %v6094
    %v6107 = vadd.f32 %v175, %v6095
    %6108 = vst [vmem:[#allocation2] sm:$0xff] %v6102
    %6109 = vst [vmem:[#allocation2 + $0x8] sm:$0xff] %v6103
    %6110 = vst [vmem:[#allocation2 + $0x10] sm:$0xff] %v6104
    %6111 = vst [vmem:[#allocation2 + $0x18] sm:$0xff] %v6105
    %6112 = vst [vmem:[#allocation2 + $0x20] sm:$0xff] %v6106
    %6113 = vst [vmem:[#allocation2 + $0x28] sm:$0xff] %v6107
    // Predicated region
    $region62: #{ctnet_forward.1} parent=1 // pred_check
      %p6114 = pneg %p125
    $region63: #{ctnet_forward.1} parent=1 // pred_check_branch
      %6116 = sbr.rel (%p6114) target = $region65
    $region64: #{ctnet_forward.1} parent=1 // pred_region
      %v6117 = vld [vmem:[#allocation2] sm:$0xff]
      %v6118 = vld [vmem:[#allocation2 + $0x8] sm:$0xff]
      %v6119 = vld [vmem:[#allocation2 + $0x10] sm:$0xff]
      %v6120 = vld [vmem:[#allocation2 + $0x18] sm:$0xff]
      %v6121 = vld [vmem:[#allocation2 + $0x20] sm:$0xff]
      %v6122 = vld [vmem:[#allocation2 + $0x28] sm:$0xff]
      %v6123 = vld [vmem:[%s2] sm:$0xf]
      %v6124 = vlaneseq
      %v6125 = vand.u32 %v6124, 127
      %6126 = vset.pattern.permute.xlu0 0
      %6127 = vperm.xlu0 %6126, %v6123
      %v6128 = vpop.permute.xlu0 %6127
      %vm6129 = vcmp.eq.s32.totalorder %v6125, %v6128
      %v6130 = vsel %vm6129, 1, 0
      %v6131 = vcvt.s32.f32 %v6130
      %vm6132 = vcmp.lt.s32.totalorder %v6125, 45
      %v6133 = vsel %vm6132, %v6120, -1e+30
      %v6134 = vsel %vm6089, %v6133, -inf
      %6135 = vmax.xlane.f32.xlu0 %v6134
      %v6136 = vpop.xlane.xlu0 %6135
      %v6137 = vsub.f32 %v6133, %v6136
      %v6138 = vmul.f32 %v6137, 1.442695
      %v6139 = vpow.pop %v6138
      %v6140 = vsel %vm6089, %v6139, 0.0
      %6141 = vadd.xlane.f32.xlu0 %v6140
      %v6142 = vpop.xlane.xlu0 %6141
      %v6143 = vlog2.pop %v6142
      %v6144 = vmul.f32 %v6143, 0.6931472
      %v6145 = vadd.f32 %v6136, %v6144
      %v6146 = vmul.f32 %v6131, %v6120
      %v6147 = vsel %vm6089, %v6146, 0.0
      %6148 = vadd.xlane.f32.xlu0 %v6147
      %v6149 = vpop.xlane.xlu0 %6148
      %v6150 = vsub.f32 %v6145, %v6149
      %vm6151 = vcmask 3072
      %v6152 = vsel %vm6151, %v6150, 0.0
      %6153 = vadd.xlane.f32.xlu0 %v6152
      %v6154 = vpop.xlane.xlu0 %6153
      %v6155 = vrot.slane %v6154, 4
      %v6156 = vadd.f32 %v6154, %v6155
      %v6157 = vrot.slane %v6156, 2
      %v6158 = vadd.f32 %v6156, %v6157
      %v6159 = vrot.slane %v6158, 1
      %v6160 = vadd.f32 %v6158, %v6159
      %s6161 = vtos %v6160
      %6163 = vst [vmem:[#allocation1] ss:$2 sm:$0xff] %v6122
      %v6164 = vld.sshfl [vmem:[#allocation1 + $0x8] sm:$0xff pattern:$0x75316420]
      %v6166 = vsel %vm6132, %v6164, -1e+30
      %v6167 = vsel %vm6089, %v6166, -inf
      %6168 = vmax.xlane.f32.xlu0 %v6167
      %v6169 = vpop.xlane.xlu0 %6168
      %v6170 = vsub.f32 %v6166, %v6169
      %v6171 = vmul.f32 %v6170, 1.442695
      %v6172 = vpow.pop %v6171
      %v6173 = vsel %vm6089, %v6172, 0.0
      %6174 = vadd.xlane.f32.xlu0 %v6173
      %v6175 = vpop.xlane.xlu0 %6174
      %v6176 = vlog2.pop %v6175
      %v6177 = vmul.f32 %v6176, 0.6931472
      %v6178 = vadd.f32 %v6169, %v6177
      %6179 = vst [vmem:[#allocation1] ss:$2 sm:$0xff] %v6122
      %v6180 = vld.sshfl [vmem:[#allocation1 + $0x8] sm:$0xff pattern:$0x75316420]
      %v6182 = vmul.f32 %v6131, %v6180
      %v6183 = vsel %vm6089, %v6182, 0.0
      %6184 = vadd.xlane.f32.xlu0 %v6183
      %v6185 = vpop.xlane.xlu0 %6184
      %v6186 = vsub.f32 %v6178, %v6185
      %v6187 = vsel %vm6151, %v6186, 0.0
      %6188 = vadd.xlane.f32.xlu0 %v6187
      %v6189 = vpop.xlane.xlu0 %6188
      %v6190 = vrot.slane %v6189, 4
      %v6191 = vadd.f32 %v6189, %v6190
      %v6192 = vrot.slane %v6191, 2
      %v6193 = vadd.f32 %v6191, %v6192
      %v6194 = vrot.slane %v6193, 1
      %v6195 = vadd.f32 %v6193, %v6194
      %s6196 = vtos %v6195
      %v6197 = vld [vmem:[#allocation6 + $0xc] sm:$0xf]
      %6201 = vst [vmem:[#allocation1] ss:$2 sm:$0xff] %v6117
      %s6202 = scalar_lea.vmem [#allocation1], 16
      %6203 = vst [vmem:[%s6202] ss:$2 sm:$0xff] %v6118
      %s6204 = scalar_lea.vmem [#allocation1], 32
      %6205 = vst [vmem:[%s6204] ss:$2 sm:$0xff] %v6119
      %v6206 = vld.sshfl [vmem:[#allocation1] sm:$0xff pattern:$0x75316420]
      %v6207 = vld.sshfl [vmem:[#allocation1 + $0x8] sm:$0xff pattern:$0x75316420]
      %v6208 = vld.sshfl [vmem:[#allocation1 + $0x10] sm:$0xff pattern:$0x75316420]
      %v6209 = vld.sshfl [vmem:[#allocation1 + $0x18] sm:$0xff pattern:$0x75316420]
      %v6210 = vld.sshfl [vmem:[#allocation1 + $0x20] sm:$0xff pattern:$0x75316420]
      %v6211 = vld.sshfl [vmem:[#allocation1 + $0x28] sm:$0xff pattern:$0x75316420]
      %v6218 = vpack.c.bf16 %v6206, %v6206
      %v6219 = vpack.c.bf16 %v6207, %v6207
      %v6220 = vpack.c.bf16 %v6208, %v6208
      %v6221 = vpack.c.bf16 %v6209, %v6209
      %v6222 = vpack.c.bf16 %v6210, %v6210
      %v6223 = vpack.c.bf16 %v6211, %v6211
      %v6224 = vld [vmem:[#allocation8] sm:$0xff]
      %v6225 = vld [vmem:[#allocation8 + $0x8] sm:$0xff]
      %v6226 = vld [vmem:[#allocation8 + $0x10] sm:$0xff]
      %v6227 = vld [vmem:[#allocation8 + $0x18] sm:$0xff]
      %v6228 = vld [vmem:[#allocation8 + $0x20] sm:$0xff]
      %v6229 = vld [vmem:[#allocation8 + $0x28] sm:$0xff]
      %v6230 = vld [vmem:[#allocation8 + $0x30] sm:$0xff]
      %v6231 = vld [vmem:[#allocation8 + $0x38] sm:$0xff]
      %v6232 = vld [vmem:[#allocation8 + $0x40] sm:$0xff]
      %v6233 = vld [vmem:[#allocation8 + $0x48] sm:$0xff]
      %v6234 = vld [vmem:[#allocation8 + $0x50] sm:$0xff]
      %v6235 = vld [vmem:[#allocation8 + $0x58] sm:$0xff]
      %v6236 = vld [vmem:[#allocation8 + $0x60] sm:$0xff]
      %v6237 = vld [vmem:[#allocation8 + $0x68] sm:$0xff]
      %v6238 = vld [vmem:[#allocation8 + $0x70] sm:$0xff]
      %v6239 = vld [vmem:[#allocation8 + $0x78] sm:$0xff]
      %v6240 = vld [vmem:[#allocation8 + $0x80] sm:$0xff]
      %v6241 = vld [vmem:[#allocation8 + $0x88] sm:$0xff]
      %v6242 = vld [vmem:[#allocation8 + $0x90] sm:$0xff]
      %v6243 = vld [vmem:[#allocation8 + $0x98] sm:$0xff]
      %v6244 = vld [vmem:[#allocation8 + $0xa0] sm:$0xff]
      %v6245 = vld [vmem:[#allocation8 + $0xa8] sm:$0xff]
      %v6246 = vld [vmem:[#allocation8 + $0xb0] sm:$0xff]
      %v6247 = vld [vmem:[#allocation8 + $0xb8] sm:$0xff]
      %v6248 = vld [vmem:[#allocation8 + $0xc0] sm:$0xff]
      %v6249 = vld [vmem:[#allocation8 + $0xc8] sm:$0xff]
      %v6250 = vld [vmem:[#allocation8 + $0xd0] sm:$0xff]
      %v6251 = vld [vmem:[#allocation8 + $0xd8] sm:$0xff]
      %v6252 = vld [vmem:[#allocation8 + $0xe0] sm:$0xff]
      %v6253 = vld [vmem:[#allocation8 + $0xe8] sm:$0xff]
      %v6254 = vld [vmem:[#allocation8 + $0xf0] sm:$0xff]
      %v6255 = vld [vmem:[#allocation8 + $0xf8] sm:$0xff]
      %v6256 = vld [vmem:[#allocation8 + $0x100] sm:$0xff]
      %v6257 = vld [vmem:[#allocation8 + $0x108] sm:$0xff]
      %v6258 = vld [vmem:[#allocation8 + $0x110] sm:$0xff]
      %v6259 = vld [vmem:[#allocation8 + $0x118] sm:$0xff]
      %v6260 = vld [vmem:[#allocation8 + $0x120] sm:$0xff]
      %v6261 = vld [vmem:[#allocation8 + $0x128] sm:$0xff]
      %v6262 = vld [vmem:[#allocation8 + $0x130] sm:$0xff]
      %v6263 = vld [vmem:[#allocation8 + $0x138] sm:$0xff]
      %v6264 = vld [vmem:[#allocation8 + $0x140] sm:$0xff]
      %v6265 = vld [vmem:[#allocation8 + $0x148] sm:$0xff]
      %v6266 = vld [vmem:[#allocation8 + $0x150] sm:$0xff]
      %v6267 = vld [vmem:[#allocation8 + $0x158] sm:$0xff]
      %v6268 = vld [vmem:[#allocation8 + $0x160] sm:$0xff]
      %v6269 = vld [vmem:[#allocation8 + $0x168] sm:$0xff]
      %v6270 = vld [vmem:[#allocation8 + $0x170] sm:$0xff]
      %v6271 = vld [vmem:[#allocation8 + $0x178] sm:$0xff]
      %v6272 = vld [vmem:[#allocation8 + $0x180] sm:$0xff]
      %v6273 = vld [vmem:[#allocation8 + $0x188] sm:$0xff]
      %v6274 = vld [vmem:[#allocation8 + $0x190] sm:$0xff]
      %v6275 = vld [vmem:[#allocation8 + $0x198] sm:$0xff]
      %v6276 = vld [vmem:[#allocation8 + $0x1a0] sm:$0xff]
      %v6277 = vld [vmem:[#allocation8 + $0x1a8] sm:$0xff]
      %v6278 = vld [vmem:[#allocation8 + $0x1b0] sm:$0xff]
      %v6279 = vld [vmem:[#allocation8 + $0x1b8] sm:$0xff]
      %v6280 = vld [vmem:[#allocation8 + $0x1c0] sm:$0xff]
      %v6281 = vld [vmem:[#allocation8 + $0x1c8] sm:$0xff]
      %v6282 = vld [vmem:[#allocation8 + $0x1d0] sm:$0xff]
      %v6283 = vld [vmem:[#allocation8 + $0x1d8] sm:$0xff]
      %v6284 = vld [vmem:[#allocation8 + $0x1e0] sm:$0xff]
      %v6285 = vld [vmem:[#allocation8 + $0x1e8] sm:$0xff]
      %v6286 = vld [vmem:[#allocation8 + $0x1f0] sm:$0xff]
      %v6287 = vld [vmem:[#allocation8 + $0x1f8] sm:$0xff]
      %v6288 = vld [vmem:[#allocation8 + $0x200] sm:$0xff]
      %v6289 = vld [vmem:[#allocation8 + $0x208] sm:$0xff]
      %v6290 = vld [vmem:[#allocation8 + $0x210] sm:$0xff]
      %v6291 = vld [vmem:[#allocation8 + $0x218] sm:$0xff]
      %v6292 = vld [vmem:[#allocation8 + $0x220] sm:$0xff]
      %v6293 = vld [vmem:[#allocation8 + $0x228] sm:$0xff]
      %v6294 = vld [vmem:[#allocation8 + $0x230] sm:$0xff]
      %v6295 = vld [vmem:[#allocation8 + $0x238] sm:$0xff]
      %v6296 = vld [vmem:[#allocation8 + $0x240] sm:$0xff]
      %v6297 = vld [vmem:[#allocation8 + $0x248] sm:$0xff]
      %v6298 = vld [vmem:[#allocation8 + $0x250] sm:$0xff]
      %v6299 = vld [vmem:[#allocation8 + $0x258] sm:$0xff]
      %v6300 = vld [vmem:[#allocation8 + $0x260] sm:$0xff]
      %v6301 = vld [vmem:[#allocation8 + $0x268] sm:$0xff]
      %v6302 = vld [vmem:[#allocation8 + $0x270] sm:$0xff]
      %v6303 = vld [vmem:[#allocation8 + $0x278] sm:$0xff]
      %v6304 = vld [vmem:[#allocation8 + $0x280] sm:$0xff]
      %v6305 = vld [vmem:[#allocation8 + $0x288] sm:$0xff]
      %v6306 = vld [vmem:[#allocation8 + $0x290] sm:$0xff]
      %v6307 = vld [vmem:[#allocation8 + $0x298] sm:$0xff]
      %v6308 = vld [vmem:[#allocation8 + $0x2a0] sm:$0xff]
      %v6309 = vld [vmem:[#allocation8 + $0x2a8] sm:$0xff]
      %v6310 = vld [vmem:[#allocation8 + $0x2b0] sm:$0xff]
      %v6311 = vld [vmem:[#allocation8 + $0x2b8] sm:$0xff]
      %v6312 = vld [vmem:[#allocation8 + $0x2c0] sm:$0xff]
      %v6313 = vld [vmem:[#allocation8 + $0x2c8] sm:$0xff]
      %v6314 = vld [vmem:[#allocation8 + $0x2d0] sm:$0xff]
      %v6315 = vld [vmem:[#allocation8 + $0x2d8] sm:$0xff]
      %v6316 = vld [vmem:[#allocation8 + $0x2e0] sm:$0xff]
      %v6317 = vld [vmem:[#allocation8 + $0x2e8] sm:$0xff]
      %v6318 = vld [vmem:[#allocation8 + $0x2f0] sm:$0xff]
      %v6319 = vld [vmem:[#allocation8 + $0x2f8] sm:$0xff]
      %v6320 = vld [vmem:[#allocation8 + $0x300] sm:$0xff]
      %v6321 = vld [vmem:[#allocation8 + $0x308] sm:$0xff]
      %v6322 = vld [vmem:[#allocation8 + $0x310] sm:$0xff]
      %v6323 = vld [vmem:[#allocation8 + $0x318] sm:$0xff]
      %v6324 = vld [vmem:[#allocation8 + $0x320] sm:$0xff]
      %v6325 = vld [vmem:[#allocation8 + $0x328] sm:$0xff]
      %v6326 = vld [vmem:[#allocation8 + $0x330] sm:$0xff]
      %v6327 = vld [vmem:[#allocation8 + $0x338] sm:$0xff]
      %v6328 = vld [vmem:[#allocation8 + $0x340] sm:$0xff]
      %v6329 = vld [vmem:[#allocation8 + $0x348] sm:$0xff]
      %v6330 = vld [vmem:[#allocation8 + $0x350] sm:$0xff]
      %v6331 = vld [vmem:[#allocation8 + $0x358] sm:$0xff]
      %v6332 = vld [vmem:[#allocation8 + $0x360] sm:$0xff]
      %v6333 = vld [vmem:[#allocation8 + $0x368] sm:$0xff]
      %v6334 = vld [vmem:[#allocation8 + $0x370] sm:$0xff]
      %v6335 = vld [vmem:[#allocation8 + $0x378] sm:$0xff]
      %v6336 = vld [vmem:[#allocation8 + $0x380] sm:$0xff]
      %v6337 = vld [vmem:[#allocation8 + $0x388] sm:$0xff]
      %v6338 = vld [vmem:[#allocation8 + $0x390] sm:$0xff]
      %v6339 = vld [vmem:[#allocation8 + $0x398] sm:$0xff]
      %v6340 = vld [vmem:[#allocation8 + $0x3a0] sm:$0xff]
      %v6341 = vld [vmem:[#allocation8 + $0x3a8] sm:$0xff]
      %v6342 = vld [vmem:[#allocation8 + $0x3b0] sm:$0xff]
      %v6343 = vld [vmem:[#allocation8 + $0x3b8] sm:$0xff]
      %v6344 = vld [vmem:[#allocation8 + $0x3c0] sm:$0xff]
      %v6345 = vld [vmem:[#allocation8 + $0x3c8] sm:$0xff]
      %v6346 = vld [vmem:[#allocation8 + $0x3d0] sm:$0xff]
      %v6347 = vld [vmem:[#allocation8 + $0x3d8] sm:$0xff]
      %v6348 = vld [vmem:[#allocation8 + $0x3e0] sm:$0xff]
      %v6349 = vld [vmem:[#allocation8 + $0x3e8] sm:$0xff]
      %v6350 = vld [vmem:[#allocation8 + $0x3f0] sm:$0xff]
      %v6351 = vld [vmem:[#allocation8 + $0x3f8] sm:$0xff]
      %v6352 = vld [vmem:[#allocation8 + $0x400] sm:$0xff]
      %v6353 = vld [vmem:[#allocation8 + $0x408] sm:$0xff]
      %v6354 = vld [vmem:[#allocation8 + $0x410] sm:$0xff]
      %v6355 = vld [vmem:[#allocation8 + $0x418] sm:$0xff]
      %v6356 = vld [vmem:[#allocation8 + $0x420] sm:$0xff]
      %v6357 = vld [vmem:[#allocation8 + $0x428] sm:$0xff]
      %v6358 = vld [vmem:[#allocation8 + $0x430] sm:$0xff]
      %v6359 = vld [vmem:[#allocation8 + $0x438] sm:$0xff]
      %v6360 = vld [vmem:[#allocation8 + $0x440] sm:$0xff]
      %v6361 = vld [vmem:[#allocation8 + $0x448] sm:$0xff]
      %v6362 = vld [vmem:[#allocation8 + $0x450] sm:$0xff]
      %v6363 = vld [vmem:[#allocation8 + $0x458] sm:$0xff]
      %v6364 = vld [vmem:[#allocation8 + $0x460] sm:$0xff]
      %v6365 = vld [vmem:[#allocation8 + $0x468] sm:$0xff]
      %v6366 = vld [vmem:[#allocation8 + $0x470] sm:$0xff]
      %v6367 = vld [vmem:[#allocation8 + $0x478] sm:$0xff]
      %v6368 = vld [vmem:[#allocation8 + $0x480] sm:$0xff]
      %v6369 = vld [vmem:[#allocation8 + $0x488] sm:$0xff]
      %v6370 = vld [vmem:[#allocation8 + $0x490] sm:$0xff]
      %v6371 = vld [vmem:[#allocation8 + $0x498] sm:$0xff]
      %v6372 = vld [vmem:[#allocation8 + $0x4a0] sm:$0xff]
      %v6373 = vld [vmem:[#allocation8 + $0x4a8] sm:$0xff]
      %v6374 = vld [vmem:[#allocation8 + $0x4b0] sm:$0xff]
      %v6375 = vld [vmem:[#allocation8 + $0x4b8] sm:$0xff]
      %v6376 = vld [vmem:[#allocation8 + $0x4c0] sm:$0xff]
      %v6377 = vld [vmem:[#allocation8 + $0x4c8] sm:$0xff]
      %v6378 = vld [vmem:[#allocation8 + $0x4d0] sm:$0xff]
      %v6379 = vld [vmem:[#allocation8 + $0x4d8] sm:$0xff]
      %v6380 = vld [vmem:[#allocation8 + $0x4e0] sm:$0xff]
      %v6381 = vld [vmem:[#allocation8 + $0x4e8] sm:$0xff]
      %v6382 = vld [vmem:[#allocation8 + $0x4f0] sm:$0xff]
      %v6383 = vld [vmem:[#allocation8 + $0x4f8] sm:$0xff]
      %v6384 = vld [vmem:[#allocation8 + $0x500] sm:$0xff]
      %v6385 = vld [vmem:[#allocation8 + $0x508] sm:$0xff]
      %v6386 = vld [vmem:[#allocation8 + $0x510] sm:$0xff]
      %v6387 = vld [vmem:[#allocation8 + $0x518] sm:$0xff]
      %v6388 = vld [vmem:[#allocation8 + $0x520] sm:$0xff]
      %v6389 = vld [vmem:[#allocation8 + $0x528] sm:$0xff]
      %v6390 = vld [vmem:[#allocation8 + $0x530] sm:$0xff]
      %v6391 = vld [vmem:[#allocation8 + $0x538] sm:$0xff]
      %v6392 = vld [vmem:[#allocation8 + $0x540] sm:$0xff]
      %v6393 = vld [vmem:[#allocation8 + $0x548] sm:$0xff]
      %v6394 = vld [vmem:[#allocation8 + $0x550] sm:$0xff]
      %v6395 = vld [vmem:[#allocation8 + $0x558] sm:$0xff]
      %v6396 = vld [vmem:[#allocation8 + $0x560] sm:$0xff]
      %v6397 = vld [vmem:[#allocation8 + $0x568] sm:$0xff]
      %v6398 = vld [vmem:[#allocation8 + $0x570] sm:$0xff]
      %v6399 = vld [vmem:[#allocation8 + $0x578] sm:$0xff]
      %v6400 = vld [vmem:[#allocation8 + $0x580] sm:$0xff]
      %v6401 = vld [vmem:[#allocation8 + $0x588] sm:$0xff]
      %v6402 = vld [vmem:[#allocation8 + $0x590] sm:$0xff]
      %v6403 = vld [vmem:[#allocation8 + $0x598] sm:$0xff]
      %v6404 = vld [vmem:[#allocation8 + $0x5a0] sm:$0xff]
      %v6405 = vld [vmem:[#allocation8 + $0x5a8] sm:$0xff]
      %v6406 = vld [vmem:[#allocation8 + $0x5b0] sm:$0xff]
      %v6407 = vld [vmem:[#allocation8 + $0x5b8] sm:$0xff]
      %v6408 = vld [vmem:[#allocation8 + $0x5c0] sm:$0xff]
      %v6409 = vld [vmem:[#allocation8 + $0x5c8] sm:$0xff]
      %v6410 = vld [vmem:[#allocation8 + $0x5d0] sm:$0xff]
      %v6411 = vld [vmem:[#allocation8 + $0x5d8] sm:$0xff]
      %v6412 = vld [vmem:[#allocation8 + $0x5e0] sm:$0xff]
      %v6413 = vld [vmem:[#allocation8 + $0x5e8] sm:$0xff]
      %v6414 = vld [vmem:[#allocation8 + $0x5f0] sm:$0xff]
      %v6415 = vld [vmem:[#allocation8 + $0x5f8] sm:$0xff]
      %v6417 = vperm.slane %v6197, 0
      %v6418 = vperm.slane %v6197, 1
      %v6419 = vperm.slane %v6197, 2
      %v6420 = vperm.slane %v6197, 3
      %v6617 = vunpack.c.l.b16 %v6224
      %v6618 = vunpack.c.h.b16 %v6224
      %v6619 = vunpack.c.l.b16 %v6225
      %v6620 = vunpack.c.h.b16 %v6225
      %v6621 = vunpack.c.l.b16 %v6226
      %v6622 = vunpack.c.h.b16 %v6226
      %v6623 = vunpack.c.l.b16 %v6227
      %v6624 = vunpack.c.h.b16 %v6227
      %v6625 = vunpack.c.l.b16 %v6228
      %v6626 = vunpack.c.h.b16 %v6228
      %v6627 = vunpack.c.l.b16 %v6229
      %v6628 = vunpack.c.h.b16 %v6229
      %v6629 = vunpack.c.l.b16 %v6230
      %v6630 = vunpack.c.h.b16 %v6230
      %v6631 = vunpack.c.l.b16 %v6231
      %v6632 = vunpack.c.h.b16 %v6231
      %v6633 = vunpack.c.l.b16 %v6232
      %v6634 = vunpack.c.h.b16 %v6232
      %v6635 = vunpack.c.l.b16 %v6233
      %v6636 = vunpack.c.h.b16 %v6233
      %v6637 = vunpack.c.l.b16 %v6234
      %v6638 = vunpack.c.h.b16 %v6234
      %v6639 = vunpack.c.l.b16 %v6235
      %v6640 = vunpack.c.h.b16 %v6235
      %v6641 = vunpack.c.l.b16 %v6236
      %v6642 = vunpack.c.h.b16 %v6236
      %v6643 = vunpack.c.l.b16 %v6237
      %v6644 = vunpack.c.h.b16 %v6237
      %v6645 = vunpack.c.l.b16 %v6238
      %v6646 = vunpack.c.h.b16 %v6238
      %v6647 = vunpack.c.l.b16 %v6239
      %v6648 = vunpack.c.h.b16 %v6239
      %v6649 = vunpack.c.l.b16 %v6240
      %v6650 = vunpack.c.h.b16 %v6240
      %v6651 = vunpack.c.l.b16 %v6241
      %v6652 = vunpack.c.h.b16 %v6241
      %v6653 = vunpack.c.l.b16 %v6242
      %v6654 = vunpack.c.h.b16 %v6242
      %v6655 = vunpack.c.l.b16 %v6243
      %v6656 = vunpack.c.h.b16 %v6243
      %v6657 = vunpack.c.l.b16 %v6244
      %v6658 = vunpack.c.h.b16 %v6244
      %v6659 = vunpack.c.l.b16 %v6245
      %v6660 = vunpack.c.h.b16 %v6245
      %v6661 = vunpack.c.l.b16 %v6246
      %v6662 = vunpack.c.h.b16 %v6246
      %v6663 = vunpack.c.l.b16 %v6247
      %v6664 = vunpack.c.h.b16 %v6247
      %v6665 = vunpack.c.l.b16 %v6248
      %v6666 = vunpack.c.h.b16 %v6248
      %v6667 = vunpack.c.l.b16 %v6249
      %v6668 = vunpack.c.h.b16 %v6249
      %v6669 = vunpack.c.l.b16 %v6250
      %v6670 = vunpack.c.h.b16 %v6250
      %v6671 = vunpack.c.l.b16 %v6251
      %v6672 = vunpack.c.h.b16 %v6251
      %v6673 = vunpack.c.l.b16 %v6252
      %v6674 = vunpack.c.h.b16 %v6252
      %v6675 = vunpack.c.l.b16 %v6253
      %v6676 = vunpack.c.h.b16 %v6253
      %v6677 = vunpack.c.l.b16 %v6254
      %v6678 = vunpack.c.h.b16 %v6254
      %v6679 = vunpack.c.l.b16 %v6255
      %v6680 = vunpack.c.h.b16 %v6255
      %v6681 = vunpack.c.l.b16 %v6256
      %v6682 = vunpack.c.h.b16 %v6256
      %v6683 = vunpack.c.l.b16 %v6257
      %v6684 = vunpack.c.h.b16 %v6257
      %v6685 = vunpack.c.l.b16 %v6258
      %v6686 = vunpack.c.h.b16 %v6258
      %v6687 = vunpack.c.l.b16 %v6259
      %v6688 = vunpack.c.h.b16 %v6259
      %v6689 = vunpack.c.l.b16 %v6260
      %v6690 = vunpack.c.h.b16 %v6260
      %v6691 = vunpack.c.l.b16 %v6261
      %v6692 = vunpack.c.h.b16 %v6261
      %v6693 = vunpack.c.l.b16 %v6262
      %v6694 = vunpack.c.h.b16 %v6262
      %v6695 = vunpack.c.l.b16 %v6263
      %v6696 = vunpack.c.h.b16 %v6263
      %v6697 = vunpack.c.l.b16 %v6264
      %v6698 = vunpack.c.h.b16 %v6264
      %v6699 = vunpack.c.l.b16 %v6265
      %v6700 = vunpack.c.h.b16 %v6265
      %v6701 = vunpack.c.l.b16 %v6266
      %v6702 = vunpack.c.h.b16 %v6266
      %v6703 = vunpack.c.l.b16 %v6267
      %v6704 = vunpack.c.h.b16 %v6267
      %v6705 = vunpack.c.l.b16 %v6268
      %v6706 = vunpack.c.h.b16 %v6268
      %v6707 = vunpack.c.l.b16 %v6269
      %v6708 = vunpack.c.h.b16 %v6269
      %v6709 = vunpack.c.l.b16 %v6270
      %v6710 = vunpack.c.h.b16 %v6270
      %v6711 = vunpack.c.l.b16 %v6271
      %v6712 = vunpack.c.h.b16 %v6271
      %v6713 = vunpack.c.l.b16 %v6272
      %v6714 = vunpack.c.h.b16 %v6272
      %v6715 = vunpack.c.l.b16 %v6273
      %v6716 = vunpack.c.h.b16 %v6273
      %v6717 = vunpack.c.l.b16 %v6274
      %v6718 = vunpack.c.h.b16 %v6274
      %v6719 = vunpack.c.l.b16 %v6275
      %v6720 = vunpack.c.h.b16 %v6275
      %v6721 = vunpack.c.l.b16 %v6276
      %v6722 = vunpack.c.h.b16 %v6276
      %v6723 = vunpack.c.l.b16 %v6277
      %v6724 = vunpack.c.h.b16 %v6277
      %v6725 = vunpack.c.l.b16 %v6278
      %v6726 = vunpack.c.h.b16 %v6278
      %v6727 = vunpack.c.l.b16 %v6279
      %v6728 = vunpack.c.h.b16 %v6279
      %v6729 = vunpack.c.l.b16 %v6280
      %v6730 = vunpack.c.h.b16 %v6280
      %v6731 = vunpack.c.l.b16 %v6281
      %v6732 = vunpack.c.h.b16 %v6281
      %v6733 = vunpack.c.l.b16 %v6282
      %v6734 = vunpack.c.h.b16 %v6282
      %v6735 = vunpack.c.l.b16 %v6283
      %v6736 = vunpack.c.h.b16 %v6283
      %v6737 = vunpack.c.l.b16 %v6284
      %v6738 = vunpack.c.h.b16 %v6284
      %v6739 = vunpack.c.l.b16 %v6285
      %v6740 = vunpack.c.h.b16 %v6285
      %v6741 = vunpack.c.l.b16 %v6286
      %v6742 = vunpack.c.h.b16 %v6286
      %v6743 = vunpack.c.l.b16 %v6287
      %v6744 = vunpack.c.h.b16 %v6287
      %v6745 = vunpack.c.l.b16 %v6288
      %v6746 = vunpack.c.h.b16 %v6288
      %v6747 = vunpack.c.l.b16 %v6289
      %v6748 = vunpack.c.h.b16 %v6289
      %v6749 = vunpack.c.l.b16 %v6290
      %v6750 = vunpack.c.h.b16 %v6290
      %v6751 = vunpack.c.l.b16 %v6291
      %v6752 = vunpack.c.h.b16 %v6291
      %v6753 = vunpack.c.l.b16 %v6292
      %v6754 = vunpack.c.h.b16 %v6292
      %v6755 = vunpack.c.l.b16 %v6293
      %v6756 = vunpack.c.h.b16 %v6293
      %v6757 = vunpack.c.l.b16 %v6294
      %v6758 = vunpack.c.h.b16 %v6294
      %v6759 = vunpack.c.l.b16 %v6295
      %v6760 = vunpack.c.h.b16 %v6295
      %v6761 = vunpack.c.l.b16 %v6296
      %v6762 = vunpack.c.h.b16 %v6296
      %v6763 = vunpack.c.l.b16 %v6297
      %v6764 = vunpack.c.h.b16 %v6297
      %v6765 = vunpack.c.l.b16 %v6298
      %v6766 = vunpack.c.h.b16 %v6298
      %v6767 = vunpack.c.l.b16 %v6299
      %v6768 = vunpack.c.h.b16 %v6299
      %v6769 = vunpack.c.l.b16 %v6300
      %v6770 = vunpack.c.h.b16 %v6300
      %v6771 = vunpack.c.l.b16 %v6301
      %v6772 = vunpack.c.h.b16 %v6301
      %v6773 = vunpack.c.l.b16 %v6302
      %v6774 = vunpack.c.h.b16 %v6302
      %v6775 = vunpack.c.l.b16 %v6303
      %v6776 = vunpack.c.h.b16 %v6303
      %v6777 = vunpack.c.l.b16 %v6304
      %v6778 = vunpack.c.h.b16 %v6304
      %v6779 = vunpack.c.l.b16 %v6305
      %v6780 = vunpack.c.h.b16 %v6305
      %v6781 = vunpack.c.l.b16 %v6306
      %v6782 = vunpack.c.h.b16 %v6306
      %v6783 = vunpack.c.l.b16 %v6307
      %v6784 = vunpack.c.h.b16 %v6307
      %v6785 = vunpack.c.l.b16 %v6308
      %v6786 = vunpack.c.h.b16 %v6308
      %v6787 = vunpack.c.l.b16 %v6309
      %v6788 = vunpack.c.h.b16 %v6309
      %v6789 = vunpack.c.l.b16 %v6310
      %v6790 = vunpack.c.h.b16 %v6310
      %v6791 = vunpack.c.l.b16 %v6311
      %v6792 = vunpack.c.h.b16 %v6311
      %v6793 = vunpack.c.l.b16 %v6312
      %v6794 = vunpack.c.h.b16 %v6312
      %v6795 = vunpack.c.l.b16 %v6313
      %v6796 = vunpack.c.h.b16 %v6313
      %v6797 = vunpack.c.l.b16 %v6314
      %v6798 = vunpack.c.h.b16 %v6314
      %v6799 = vunpack.c.l.b16 %v6315
      %v6800 = vunpack.c.h.b16 %v6315
      %v6801 = vunpack.c.l.b16 %v6316
      %v6802 = vunpack.c.h.b16 %v6316
      %v6803 = vunpack.c.l.b16 %v6317
      %v6804 = vunpack.c.h.b16 %v6317
      %v6805 = vunpack.c.l.b16 %v6318
      %v6806 = vunpack.c.h.b16 %v6318
      %v6807 = vunpack.c.l.b16 %v6319
      %v6808 = vunpack.c.h.b16 %v6319
      %v6809 = vunpack.c.l.b16 %v6320
      %v6810 = vunpack.c.h.b16 %v6320
      %v6811 = vunpack.c.l.b16 %v6321
      %v6812 = vunpack.c.h.b16 %v6321
      %v6813 = vunpack.c.l.b16 %v6322
      %v6814 = vunpack.c.h.b16 %v6322
      %v6815 = vunpack.c.l.b16 %v6323
      %v6816 = vunpack.c.h.b16 %v6323
      %v6817 = vunpack.c.l.b16 %v6324
      %v6818 = vunpack.c.h.b16 %v6324
      %v6819 = vunpack.c.l.b16 %v6325
      %v6820 = vunpack.c.h.b16 %v6325
      %v6821 = vunpack.c.l.b16 %v6326
      %v6822 = vunpack.c.h.b16 %v6326
      %v6823 = vunpack.c.l.b16 %v6327
      %v6824 = vunpack.c.h.b16 %v6327
      %v6825 = vunpack.c.l.b16 %v6328
      %v6826 = vunpack.c.h.b16 %v6328
      %v6827 = vunpack.c.l.b16 %v6329
      %v6828 = vunpack.c.h.b16 %v6329
      %v6829 = vunpack.c.l.b16 %v6330
      %v6830 = vunpack.c.h.b16 %v6330
      %v6831 = vunpack.c.l.b16 %v6331
      %v6832 = vunpack.c.h.b16 %v6331
      %v6833 = vunpack.c.l.b16 %v6332
      %v6834 = vunpack.c.h.b16 %v6332
      %v6835 = vunpack.c.l.b16 %v6333
      %v6836 = vunpack.c.h.b16 %v6333
      %v6837 = vunpack.c.l.b16 %v6334
      %v6838 = vunpack.c.h.b16 %v6334
      %v6839 = vunpack.c.l.b16 %v6335
      %v6840 = vunpack.c.h.b16 %v6335
      %v6841 = vunpack.c.l.b16 %v6336
      %v6842 = vunpack.c.h.b16 %v6336
      %v6843 = vunpack.c.l.b16 %v6337
      %v6844 = vunpack.c.h.b16 %v6337
      %v6845 = vunpack.c.l.b16 %v6338
      %v6846 = vunpack.c.h.b16 %v6338
      %v6847 = vunpack.c.l.b16 %v6339
      %v6848 = vunpack.c.h.b16 %v6339
      %v6849 = vunpack.c.l.b16 %v6340
      %v6850 = vunpack.c.h.b16 %v6340
      %v6851 = vunpack.c.l.b16 %v6341
      %v6852 = vunpack.c.h.b16 %v6341
      %v6853 = vunpack.c.l.b16 %v6342
      %v6854 = vunpack.c.h.b16 %v6342
      %v6855 = vunpack.c.l.b16 %v6343
      %v6856 = vunpack.c.h.b16 %v6343
      %v6857 = vunpack.c.l.b16 %v6344
      %v6858 = vunpack.c.h.b16 %v6344
      %v6859 = vunpack.c.l.b16 %v6345
      %v6860 = vunpack.c.h.b16 %v6345
      %v6861 = vunpack.c.l.b16 %v6346
      %v6862 = vunpack.c.h.b16 %v6346
      %v6863 = vunpack.c.l.b16 %v6347
      %v6864 = vunpack.c.h.b16 %v6347
      %v6865 = vunpack.c.l.b16 %v6348
      %v6866 = vunpack.c.h.b16 %v6348
      %v6867 = vunpack.c.l.b16 %v6349
      %v6868 = vunpack.c.h.b16 %v6349
      %v6869 = vunpack.c.l.b16 %v6350
      %v6870 = vunpack.c.h.b16 %v6350
      %v6871 = vunpack.c.l.b16 %v6351
      %v6872 = vunpack.c.h.b16 %v6351
      %v6873 = vunpack.c.l.b16 %v6352
      %v6874 = vunpack.c.h.b16 %v6352
      %v6875 = vunpack.c.l.b16 %v6353
      %v6876 = vunpack.c.h.b16 %v6353
      %v6877 = vunpack.c.l.b16 %v6354
      %v6878 = vunpack.c.h.b16 %v6354
      %v6879 = vunpack.c.l.b16 %v6355
      %v6880 = vunpack.c.h.b16 %v6355
      %v6881 = vunpack.c.l.b16 %v6356
      %v6882 = vunpack.c.h.b16 %v6356
      %v6883 = vunpack.c.l.b16 %v6357
      %v6884 = vunpack.c.h.b16 %v6357
      %v6885 = vunpack.c.l.b16 %v6358
      %v6886 = vunpack.c.h.b16 %v6358
      %v6887 = vunpack.c.l.b16 %v6359
      %v6888 = vunpack.c.h.b16 %v6359
      %v6889 = vunpack.c.l.b16 %v6360
      %v6890 = vunpack.c.h.b16 %v6360
      %v6891 = vunpack.c.l.b16 %v6361
      %v6892 = vunpack.c.h.b16 %v6361
      %v6893 = vunpack.c.l.b16 %v6362
      %v6894 = vunpack.c.h.b16 %v6362
      %v6895 = vunpack.c.l.b16 %v6363
      %v6896 = vunpack.c.h.b16 %v6363
      %v6897 = vunpack.c.l.b16 %v6364
      %v6898 = vunpack.c.h.b16 %v6364
      %v6899 = vunpack.c.l.b16 %v6365
      %v6900 = vunpack.c.h.b16 %v6365
      %v6901 = vunpack.c.l.b16 %v6366
      %v6902 = vunpack.c.h.b16 %v6366
      %v6903 = vunpack.c.l.b16 %v6367
      %v6904 = vunpack.c.h.b16 %v6367
      %v6905 = vunpack.c.l.b16 %v6368
      %v6906 = vunpack.c.h.b16 %v6368
      %v6907 = vunpack.c.l.b16 %v6369
      %v6908 = vunpack.c.h.b16 %v6369
      %v6909 = vunpack.c.l.b16 %v6370
      %v6910 = vunpack.c.h.b16 %v6370
      %v6911 = vunpack.c.l.b16 %v6371
      %v6912 = vunpack.c.h.b16 %v6371
      %v6913 = vunpack.c.l.b16 %v6372
      %v6914 = vunpack.c.h.b16 %v6372
      %v6915 = vunpack.c.l.b16 %v6373
      %v6916 = vunpack.c.h.b16 %v6373
      %v6917 = vunpack.c.l.b16 %v6374
      %v6918 = vunpack.c.h.b16 %v6374
      %v6919 = vunpack.c.l.b16 %v6375
      %v6920 = vunpack.c.h.b16 %v6375
      %v6921 = vunpack.c.l.b16 %v6376
      %v6922 = vunpack.c.h.b16 %v6376
      %v6923 = vunpack.c.l.b16 %v6377
      %v6924 = vunpack.c.h.b16 %v6377
      %v6925 = vunpack.c.l.b16 %v6378
      %v6926 = vunpack.c.h.b16 %v6378
      %v6927 = vunpack.c.l.b16 %v6379
      %v6928 = vunpack.c.h.b16 %v6379
      %v6929 = vunpack.c.l.b16 %v6380
      %v6930 = vunpack.c.h.b16 %v6380
      %v6931 = vunpack.c.l.b16 %v6381
      %v6932 = vunpack.c.h.b16 %v6381
      %v6933 = vunpack.c.l.b16 %v6382
      %v6934 = vunpack.c.h.b16 %v6382
      %v6935 = vunpack.c.l.b16 %v6383
      %v6936 = vunpack.c.h.b16 %v6383
      %v6937 = vunpack.c.l.b16 %v6384
      %v6938 = vunpack.c.h.b16 %v6384
      %v6939 = vunpack.c.l.b16 %v6385
      %v6940 = vunpack.c.h.b16 %v6385
      %v6941 = vunpack.c.l.b16 %v6386
      %v6942 = vunpack.c.h.b16 %v6386
      %v6943 = vunpack.c.l.b16 %v6387
      %v6944 = vunpack.c.h.b16 %v6387
      %v6945 = vunpack.c.l.b16 %v6388
      %v6946 = vunpack.c.h.b16 %v6388
      %v6947 = vunpack.c.l.b16 %v6389
      %v6948 = vunpack.c.h.b16 %v6389
      %v6949 = vunpack.c.l.b16 %v6390
      %v6950 = vunpack.c.h.b16 %v6390
      %v6951 = vunpack.c.l.b16 %v6391
      %v6952 = vunpack.c.h.b16 %v6391
      %v6953 = vunpack.c.l.b16 %v6392
      %v6954 = vunpack.c.h.b16 %v6392
      %v6955 = vunpack.c.l.b16 %v6393
      %v6956 = vunpack.c.h.b16 %v6393
      %v6957 = vunpack.c.l.b16 %v6394
      %v6958 = vunpack.c.h.b16 %v6394
      %v6959 = vunpack.c.l.b16 %v6395
      %v6960 = vunpack.c.h.b16 %v6395
      %v6961 = vunpack.c.l.b16 %v6396
      %v6962 = vunpack.c.h.b16 %v6396
      %v6963 = vunpack.c.l.b16 %v6397
      %v6964 = vunpack.c.h.b16 %v6397
      %v6965 = vunpack.c.l.b16 %v6398
      %v6966 = vunpack.c.h.b16 %v6398
      %v6967 = vunpack.c.l.b16 %v6399
      %v6968 = vunpack.c.h.b16 %v6399
      %v6969 = vunpack.c.l.b16 %v6400
      %v6970 = vunpack.c.h.b16 %v6400
      %v6971 = vunpack.c.l.b16 %v6401
      %v6972 = vunpack.c.h.b16 %v6401
      %v6973 = vunpack.c.l.b16 %v6402
      %v6974 = vunpack.c.h.b16 %v6402
      %v6975 = vunpack.c.l.b16 %v6403
      %v6976 = vunpack.c.h.b16 %v6403
      %v6977 = vunpack.c.l.b16 %v6404
      %v6978 = vunpack.c.h.b16 %v6404
      %v6979 = vunpack.c.l.b16 %v6405
      %v6980 = vunpack.c.h.b16 %v6405
      %v6981 = vunpack.c.l.b16 %v6406
      %v6982 = vunpack.c.h.b16 %v6406
      %v6983 = vunpack.c.l.b16 %v6407
      %v6984 = vunpack.c.h.b16 %v6407
      %v6985 = vunpack.c.l.b16 %v6408
      %v6986 = vunpack.c.h.b16 %v6408
      %v6987 = vunpack.c.l.b16 %v6409
      %v6988 = vunpack.c.h.b16 %v6409
      %v6989 = vunpack.c.l.b16 %v6410
      %v6990 = vunpack.c.h.b16 %v6410
      %v6991 = vunpack.c.l.b16 %v6411
      %v6992 = vunpack.c.h.b16 %v6411
      %v6993 = vunpack.c.l.b16 %v6412
      %v6994 = vunpack.c.h.b16 %v6412
      %v6995 = vunpack.c.l.b16 %v6413
      %v6996 = vunpack.c.h.b16 %v6413
      %v6997 = vunpack.c.l.b16 %v6414
      %v6998 = vunpack.c.h.b16 %v6414
      %v6999 = vunpack.c.l.b16 %v6415
      %v7000 = vunpack.c.h.b16 %v6415
      %v7001 = vpack.c.b16 %v6621, %v6617
      %v7002 = vpack.c.b16 %v6622, %v6618
      %v7003 = vpack.c.b16 %v6623, %v6619
      %v7004 = vpack.c.b16 %v6624, %v6620
      %v7005 = vpack.c.b16 %v6629, %v6625
      %v7006 = vpack.c.b16 %v6630, %v6626
      %v7007 = vpack.c.b16 %v6631, %v6627
      %v7008 = vpack.c.b16 %v6632, %v6628
      %v7009 = vpack.c.b16 %v6637, %v6633
      %v7010 = vpack.c.b16 %v6638, %v6634
      %v7011 = vpack.c.b16 %v6639, %v6635
      %v7012 = vpack.c.b16 %v6640, %v6636
      %v7013 = vpack.c.b16 %v6645, %v6641
      %v7014 = vpack.c.b16 %v6646, %v6642
      %v7015 = vpack.c.b16 %v6647, %v6643
      %v7016 = vpack.c.b16 %v6648, %v6644
      %v7017 = vpack.c.b16 %v6653, %v6649
      %v7018 = vpack.c.b16 %v6654, %v6650
      %v7019 = vpack.c.b16 %v6655, %v6651
      %v7020 = vpack.c.b16 %v6656, %v6652
      %v7021 = vpack.c.b16 %v6661, %v6657
      %v7022 = vpack.c.b16 %v6662, %v6658
      %v7023 = vpack.c.b16 %v6663, %v6659
      %v7024 = vpack.c.b16 %v6664, %v6660
      %v7025 = vpack.c.b16 %v6669, %v6665
      %v7026 = vpack.c.b16 %v6670, %v6666
      %v7027 = vpack.c.b16 %v6671, %v6667
      %v7028 = vpack.c.b16 %v6672, %v6668
      %v7029 = vpack.c.b16 %v6677, %v6673
      %v7030 = vpack.c.b16 %v6678, %v6674
      %v7031 = vpack.c.b16 %v6679, %v6675
      %v7032 = vpack.c.b16 %v6680, %v6676
      %v7033 = vpack.c.b16 %v6685, %v6681
      %v7034 = vpack.c.b16 %v6686, %v6682
      %v7035 = vpack.c.b16 %v6687, %v6683
      %v7036 = vpack.c.b16 %v6688, %v6684
      %v7037 = vpack.c.b16 %v6693, %v6689
      %v7038 = vpack.c.b16 %v6694, %v6690
      %v7039 = vpack.c.b16 %v6695, %v6691
      %v7040 = vpack.c.b16 %v6696, %v6692
      %v7041 = vpack.c.b16 %v6701, %v6697
      %v7042 = vpack.c.b16 %v6702, %v6698
      %v7043 = vpack.c.b16 %v6703, %v6699
      %v7044 = vpack.c.b16 %v6704, %v6700
      %v7045 = vpack.c.b16 %v6709, %v6705
      %v7046 = vpack.c.b16 %v6710, %v6706
      %v7047 = vpack.c.b16 %v6711, %v6707
      %v7048 = vpack.c.b16 %v6712, %v6708
      %v7049 = vpack.c.b16 %v6717, %v6713
      %v7050 = vpack.c.b16 %v6718, %v6714
      %v7051 = vpack.c.b16 %v6719, %v6715
      %v7052 = vpack.c.b16 %v6720, %v6716
      %v7053 = vpack.c.b16 %v6725, %v6721
      %v7054 = vpack.c.b16 %v6726, %v6722
      %v7055 = vpack.c.b16 %v6727, %v6723
      %v7056 = vpack.c.b16 %v6728, %v6724
      %v7057 = vpack.c.b16 %v6733, %v6729
      %v7058 = vpack.c.b16 %v6734, %v6730
      %v7059 = vpack.c.b16 %v6735, %v6731
      %v7060 = vpack.c.b16 %v6736, %v6732
      %v7061 = vpack.c.b16 %v6741, %v6737
      %v7062 = vpack.c.b16 %v6742, %v6738
      %v7063 = vpack.c.b16 %v6743, %v6739
      %v7064 = vpack.c.b16 %v6744, %v6740
      %v7065 = vpack.c.b16 %v6749, %v6745
      %v7066 = vpack.c.b16 %v6750, %v6746
      %v7067 = vpack.c.b16 %v6751, %v6747
      %v7068 = vpack.c.b16 %v6752, %v6748
      %v7069 = vpack.c.b16 %v6757, %v6753
      %v7070 = vpack.c.b16 %v6758, %v6754
      %v7071 = vpack.c.b16 %v6759, %v6755
      %v7072 = vpack.c.b16 %v6760, %v6756
      %v7073 = vpack.c.b16 %v6765, %v6761
      %v7074 = vpack.c.b16 %v6766, %v6762
      %v7075 = vpack.c.b16 %v6767, %v6763
      %v7076 = vpack.c.b16 %v6768, %v6764
      %v7077 = vpack.c.b16 %v6773, %v6769
      %v7078 = vpack.c.b16 %v6774, %v6770
      %v7079 = vpack.c.b16 %v6775, %v6771
      %v7080 = vpack.c.b16 %v6776, %v6772
      %v7081 = vpack.c.b16 %v6781, %v6777
      %v7082 = vpack.c.b16 %v6782, %v6778
      %v7083 = vpack.c.b16 %v6783, %v6779
      %v7084 = vpack.c.b16 %v6784, %v6780
      %v7085 = vpack.c.b16 %v6789, %v6785
      %v7086 = vpack.c.b16 %v6790, %v6786
      %v7087 = vpack.c.b16 %v6791, %v6787
      %v7088 = vpack.c.b16 %v6792, %v6788
      %v7089 = vpack.c.b16 %v6797, %v6793
      %v7090 = vpack.c.b16 %v6798, %v6794
      %v7091 = vpack.c.b16 %v6799, %v6795
      %v7092 = vpack.c.b16 %v6800, %v6796
      %v7093 = vpack.c.b16 %v6805, %v6801
      %v7094 = vpack.c.b16 %v6806, %v6802
      %v7095 = vpack.c.b16 %v6807, %v6803
      %v7096 = vpack.c.b16 %v6808, %v6804
      %v7097 = vpack.c.b16 %v6813, %v6809
      %v7098 = vpack.c.b16 %v6814, %v6810
      %v7099 = vpack.c.b16 %v6815, %v6811
      %v7100 = vpack.c.b16 %v6816, %v6812
      %v7101 = vpack.c.b16 %v6821, %v6817
      %v7102 = vpack.c.b16 %v6822, %v6818
      %v7103 = vpack.c.b16 %v6823, %v6819
      %v7104 = vpack.c.b16 %v6824, %v6820
      %v7105 = vpack.c.b16 %v6829, %v6825
      %v7106 = vpack.c.b16 %v6830, %v6826
      %v7107 = vpack.c.b16 %v6831, %v6827
      %v7108 = vpack.c.b16 %v6832, %v6828
      %v7109 = vpack.c.b16 %v6837, %v6833
      %v7110 = vpack.c.b16 %v6838, %v6834
      %v7111 = vpack.c.b16 %v6839, %v6835
      %v7112 = vpack.c.b16 %v6840, %v6836
      %v7113 = vpack.c.b16 %v6845, %v6841
      %v7114 = vpack.c.b16 %v6846, %v6842
      %v7115 = vpack.c.b16 %v6847, %v6843
      %v7116 = vpack.c.b16 %v6848, %v6844
      %v7117 = vpack.c.b16 %v6853, %v6849
      %v7118 = vpack.c.b16 %v6854, %v6850
      %v7119 = vpack.c.b16 %v6855, %v6851
      %v7120 = vpack.c.b16 %v6856, %v6852
      %v7121 = vpack.c.b16 %v6861, %v6857
      %v7122 = vpack.c.b16 %v6862, %v6858
      %v7123 = vpack.c.b16 %v6863, %v6859
      %v7124 = vpack.c.b16 %v6864, %v6860
      %v7125 = vpack.c.b16 %v6869, %v6865
      %v7126 = vpack.c.b16 %v6870, %v6866
      %v7127 = vpack.c.b16 %v6871, %v6867
      %v7128 = vpack.c.b16 %v6872, %v6868
      %v7129 = vpack.c.b16 %v6877, %v6873
      %v7130 = vpack.c.b16 %v6878, %v6874
      %v7131 = vpack.c.b16 %v6879, %v6875
      %v7132 = vpack.c.b16 %v6880, %v6876
      %v7133 = vpack.c.b16 %v6885, %v6881
      %v7134 = vpack.c.b16 %v6886, %v6882
      %v7135 = vpack.c.b16 %v6887, %v6883
      %v7136 = vpack.c.b16 %v6888, %v6884
      %v7137 = vpack.c.b16 %v6893, %v6889
      %v7138 = vpack.c.b16 %v6894, %v6890
      %v7139 = vpack.c.b16 %v6895, %v6891
      %v7140 = vpack.c.b16 %v6896, %v6892
      %v7141 = vpack.c.b16 %v6901, %v6897
      %v7142 = vpack.c.b16 %v6902, %v6898
      %v7143 = vpack.c.b16 %v6903, %v6899
      %v7144 = vpack.c.b16 %v6904, %v6900
      %v7145 = vpack.c.b16 %v6909, %v6905
      %v7146 = vpack.c.b16 %v6910, %v6906
      %v7147 = vpack.c.b16 %v6911, %v6907
      %v7148 = vpack.c.b16 %v6912, %v6908
      %v7149 = vpack.c.b16 %v6917, %v6913
      %v7150 = vpack.c.b16 %v6918, %v6914
      %v7151 = vpack.c.b16 %v6919, %v6915
      %v7152 = vpack.c.b16 %v6920, %v6916
      %v7153 = vpack.c.b16 %v6925, %v6921
      %v7154 = vpack.c.b16 %v6926, %v6922
      %v7155 = vpack.c.b16 %v6927, %v6923
      %v7156 = vpack.c.b16 %v6928, %v6924
      %v7157 = vpack.c.b16 %v6933, %v6929
      %v7158 = vpack.c.b16 %v6934, %v6930
      %v7159 = vpack.c.b16 %v6935, %v6931
      %v7160 = vpack.c.b16 %v6936, %v6932
      %v7161 = vpack.c.b16 %v6941, %v6937
      %v7162 = vpack.c.b16 %v6942, %v6938
      %v7163 = vpack.c.b16 %v6943, %v6939
      %v7164 = vpack.c.b16 %v6944, %v6940
      %v7165 = vpack.c.b16 %v6949, %v6945
      %v7166 = vpack.c.b16 %v6950, %v6946
      %v7167 = vpack.c.b16 %v6951, %v6947
      %v7168 = vpack.c.b16 %v6952, %v6948
      %v7169 = vpack.c.b16 %v6957, %v6953
      %v7170 = vpack.c.b16 %v6958, %v6954
      %v7171 = vpack.c.b16 %v6959, %v6955
      %v7172 = vpack.c.b16 %v6960, %v6956
      %v7173 = vpack.c.b16 %v6965, %v6961
      %v7174 = vpack.c.b16 %v6966, %v6962
      %v7175 = vpack.c.b16 %v6967, %v6963
      %v7176 = vpack.c.b16 %v6968, %v6964
      %v7177 = vpack.c.b16 %v6973, %v6969
      %v7178 = vpack.c.b16 %v6974, %v6970
      %v7179 = vpack.c.b16 %v6975, %v6971
      %v7180 = vpack.c.b16 %v6976, %v6972
      %v7181 = vpack.c.b16 %v6981, %v6977
      %v7182 = vpack.c.b16 %v6982, %v6978
      %v7183 = vpack.c.b16 %v6983, %v6979
      %v7184 = vpack.c.b16 %v6984, %v6980
      %v7185 = vpack.c.b16 %v6989, %v6985
      %v7186 = vpack.c.b16 %v6990, %v6986
      %v7187 = vpack.c.b16 %v6991, %v6987
      %v7188 = vpack.c.b16 %v6992, %v6988
      %v7189 = vpack.c.b16 %v6997, %v6993
      %v7190 = vpack.c.b16 %v6998, %v6994
      %v7191 = vpack.c.b16 %v6999, %v6995
      %v7192 = vpack.c.b16 %v7000, %v6996
      %7385 = vmatpush.bf16.msra.mxu0 %v7029
      %7386 = vmatpush.bf16.msra.mxu0 %v7025
      %7387 = vmatpush.bf16.msra.mxu0 %v7021
      %7388 = vmatpush.bf16.msra.mxu0 %v7017
      %7389 = vmatpush.bf16.msra.mxu0 %v7013
      %7390 = vmatpush.bf16.msra.mxu0 %v7009
      %7391 = vmatpush.bf16.msra.mxu0 %v7005
      %7392 = vmatpush.bf16.msra.mxu0 %v7001
      %7393 = vmatmul.bf16.gmra.mxu0 %v6218
      %v7394 = vpop.f32.mrf.mxu0
      %v7395 = vadd.f32 %v6417, %v7394
      %v7396 = vpop.f32.mrf.mxu0
      %7397 = vdwg.mxu0
      %7398 = vmatpush.bf16.msra.mxu0 %v7061
      %7399 = vmatpush.bf16.msra.mxu0 %v7057
      %7400 = vmatpush.bf16.msra.mxu0 %v7053
      %7401 = vmatpush.bf16.msra.mxu0 %v7049
      %7402 = vmatpush.bf16.msra.mxu0 %v7045
      %7403 = vmatpush.bf16.msra.mxu0 %v7041
      %7404 = vmatpush.bf16.msra.mxu0 %v7037
      %7405 = vmatpush.bf16.msra.mxu0 %v7033
      %7406 = vmatmul.bf16.gmra.mxu0 %v6219
      %v7407 = vpop.f32.mrf.mxu0
      %v7408 = vadd.f32 %v7395, %v7407
      %v7409 = vpop.f32.mrf.mxu0
      %7410 = vdwg.mxu0
      %7411 = vmatpush.bf16.msra.mxu0 %v7093
      %7412 = vmatpush.bf16.msra.mxu0 %v7089
      %7413 = vmatpush.bf16.msra.mxu0 %v7085
      %7414 = vmatpush.bf16.msra.mxu0 %v7081
      %7415 = vmatpush.bf16.msra.mxu0 %v7077
      %7416 = vmatpush.bf16.msra.mxu0 %v7073
      %7417 = vmatpush.bf16.msra.mxu0 %v7069
      %7418 = vmatpush.bf16.msra.mxu0 %v7065
      %7419 = vmatmul.bf16.gmra.mxu0 %v6220
      %v7420 = vpop.f32.mrf.mxu0
      %v7421 = vadd.f32 %v7408, %v7420
      %v7422 = vpop.f32.mrf.mxu0
      %7423 = vdwg.mxu0
      %7424 = vmatpush.bf16.msra.mxu0 %v7125
      %7425 = vmatpush.bf16.msra.mxu0 %v7121
      %7426 = vmatpush.bf16.msra.mxu0 %v7117
      %7427 = vmatpush.bf16.msra.mxu0 %v7113
      %7428 = vmatpush.bf16.msra.mxu0 %v7109
      %7429 = vmatpush.bf16.msra.mxu0 %v7105
      %7430 = vmatpush.bf16.msra.mxu0 %v7101
      %7431 = vmatpush.bf16.msra.mxu0 %v7097
      %7432 = vmatmul.bf16.gmra.mxu0 %v6221
      %v7433 = vpop.f32.mrf.mxu0
      %v7434 = vadd.f32 %v7421, %v7433
      %v7435 = vpop.f32.mrf.mxu0
      %7436 = vdwg.mxu0
      %7437 = vmatpush.bf16.msra.mxu0 %v7157
      %7438 = vmatpush.bf16.msra.mxu0 %v7153
      %7439 = vmatpush.bf16.msra.mxu0 %v7149
      %7440 = vmatpush.bf16.msra.mxu0 %v7145
      %7441 = vmatpush.bf16.msra.mxu0 %v7141
      %7442 = vmatpush.bf16.msra.mxu0 %v7137
      %7443 = vmatpush.bf16.msra.mxu0 %v7133
      %7444 = vmatpush.bf16.msra.mxu0 %v7129
      %7445 = vmatmul.bf16.gmra.mxu0 %v6222
      %v7446 = vpop.f32.mrf.mxu0
      %v7447 = vadd.f32 %v7434, %v7446
      %v7448 = vpop.f32.mrf.mxu0
      %7449 = vdwg.mxu0
      %7450 = vmatpush.bf16.msra.mxu0 %v7189
      %7451 = vmatpush.bf16.msra.mxu0 %v7185
      %7452 = vmatpush.bf16.msra.mxu0 %v7181
      %7453 = vmatpush.bf16.msra.mxu0 %v7177
      %7454 = vmatpush.bf16.msra.mxu0 %v7173
      %7455 = vmatpush.bf16.msra.mxu0 %v7169
      %7456 = vmatpush.bf16.msra.mxu0 %v7165
      %7457 = vmatpush.bf16.msra.mxu0 %v7161
      %7458 = vmatmul.bf16.gmra.mxu0 %v6223
      %v7459 = vpop.f32.mrf.mxu0
      %v7460 = vadd.f32 %v7447, %v7459
      %v7461 = vpop.f32.mrf.mxu0
      %7462 = vdwg.mxu0
      %7463 = vmatpush.bf16.msra.mxu0 %v7030
      %7464 = vmatpush.bf16.msra.mxu0 %v7026
      %7465 = vmatpush.bf16.msra.mxu0 %v7022
      %7466 = vmatpush.bf16.msra.mxu0 %v7018
      %7467 = vmatpush.bf16.msra.mxu0 %v7014
      %7468 = vmatpush.bf16.msra.mxu0 %v7010
      %7469 = vmatpush.bf16.msra.mxu0 %v7006
      %7470 = vmatpush.bf16.msra.mxu0 %v7002
      %7471 = vmatmul.bf16.gmra.mxu0 %v6218
      %v7472 = vpop.f32.mrf.mxu0
      %v7473 = vadd.f32 %v6418, %v7472
      %v7474 = vpop.f32.mrf.mxu0
      %7475 = vdwg.mxu0
      %7476 = vmatpush.bf16.msra.mxu0 %v7062
      %7477 = vmatpush.bf16.msra.mxu0 %v7058
      %7478 = vmatpush.bf16.msra.mxu0 %v7054
      %7479 = vmatpush.bf16.msra.mxu0 %v7050
      %7480 = vmatpush.bf16.msra.mxu0 %v7046
      %7481 = vmatpush.bf16.msra.mxu0 %v7042
      %7482 = vmatpush.bf16.msra.mxu0 %v7038
      %7483 = vmatpush.bf16.msra.mxu0 %v7034
      %7484 = vmatmul.bf16.gmra.mxu0 %v6219
      %v7485 = vpop.f32.mrf.mxu0
      %v7486 = vadd.f32 %v7473, %v7485
      %v7487 = vpop.f32.mrf.mxu0
      %7488 = vdwg.mxu0
      %7489 = vmatpush.bf16.msra.mxu0 %v7094
      %7490 = vmatpush.bf16.msra.mxu0 %v7090
      %7491 = vmatpush.bf16.msra.mxu0 %v7086
      %7492 = vmatpush.bf16.msra.mxu0 %v7082
      %7493 = vmatpush.bf16.msra.mxu0 %v7078
      %7494 = vmatpush.bf16.msra.mxu0 %v7074
      %7495 = vmatpush.bf16.msra.mxu0 %v7070
      %7496 = vmatpush.bf16.msra.mxu0 %v7066
      %7497 = vmatmul.bf16.gmra.mxu0 %v6220
      %v7498 = vpop.f32.mrf.mxu0
      %v7499 = vadd.f32 %v7486, %v7498
      %v7500 = vpop.f32.mrf.mxu0
      %7501 = vdwg.mxu0
      %7502 = vmatpush.bf16.msra.mxu0 %v7126
      %7503 = vmatpush.bf16.msra.mxu0 %v7122
      %7504 = vmatpush.bf16.msra.mxu0 %v7118
      %7505 = vmatpush.bf16.msra.mxu0 %v7114
      %7506 = vmatpush.bf16.msra.mxu0 %v7110
      %7507 = vmatpush.bf16.msra.mxu0 %v7106
      %7508 = vmatpush.bf16.msra.mxu0 %v7102
      %7509 = vmatpush.bf16.msra.mxu0 %v7098
      %7510 = vmatmul.bf16.gmra.mxu0 %v6221
      %v7511 = vpop.f32.mrf.mxu0
      %v7512 = vadd.f32 %v7499, %v7511
      %v7513 = vpop.f32.mrf.mxu0
      %7514 = vdwg.mxu0
      %7515 = vmatpush.bf16.msra.mxu0 %v7158
      %7516 = vmatpush.bf16.msra.mxu0 %v7154
      %7517 = vmatpush.bf16.msra.mxu0 %v7150
      %7518 = vmatpush.bf16.msra.mxu0 %v7146
      %7519 = vmatpush.bf16.msra.mxu0 %v7142
      %7520 = vmatpush.bf16.msra.mxu0 %v7138
      %7521 = vmatpush.bf16.msra.mxu0 %v7134
      %7522 = vmatpush.bf16.msra.mxu0 %v7130
      %7523 = vmatmul.bf16.gmra.mxu0 %v6222
      %v7524 = vpop.f32.mrf.mxu0
      %v7525 = vadd.f32 %v7512, %v7524
      %v7526 = vpop.f32.mrf.mxu0
      %7527 = vdwg.mxu0
      %7528 = vmatpush.bf16.msra.mxu0 %v7190
      %7529 = vmatpush.bf16.msra.mxu0 %v7186
      %7530 = vmatpush.bf16.msra.mxu0 %v7182
      %7531 = vmatpush.bf16.msra.mxu0 %v7178
      %7532 = vmatpush.bf16.msra.mxu0 %v7174
      %7533 = vmatpush.bf16.msra.mxu0 %v7170
      %7534 = vmatpush.bf16.msra.mxu0 %v7166
      %7535 = vmatpush.bf16.msra.mxu0 %v7162
      %7536 = vmatmul.bf16.gmra.mxu0 %v6223
      %v7537 = vpop.f32.mrf.mxu0
      %v7538 = vadd.f32 %v7525, %v7537
      %v7539 = vpop.f32.mrf.mxu0
      %7540 = vdwg.mxu0
      %7541 = vmatpush.bf16.msra.mxu0 %v7031
      %7542 = vmatpush.bf16.msra.mxu0 %v7027
      %7543 = vmatpush.bf16.msra.mxu0 %v7023
      %7544 = vmatpush.bf16.msra.mxu0 %v7019
      %7545 = vmatpush.bf16.msra.mxu0 %v7015
      %7546 = vmatpush.bf16.msra.mxu0 %v7011
      %7547 = vmatpush.bf16.msra.mxu0 %v7007
      %7548 = vmatpush.bf16.msra.mxu0 %v7003
      %7549 = vmatmul.bf16.gmra.mxu0 %v6218
      %v7550 = vpop.f32.mrf.mxu0
      %v7551 = vadd.f32 %v6419, %v7550
      %v7552 = vpop.f32.mrf.mxu0
      %7553 = vdwg.mxu0
      %7554 = vmatpush.bf16.msra.mxu0 %v7063
      %7555 = vmatpush.bf16.msra.mxu0 %v7059
      %7556 = vmatpush.bf16.msra.mxu0 %v7055
      %7557 = vmatpush.bf16.msra.mxu0 %v7051
      %7558 = vmatpush.bf16.msra.mxu0 %v7047
      %7559 = vmatpush.bf16.msra.mxu0 %v7043
      %7560 = vmatpush.bf16.msra.mxu0 %v7039
      %7561 = vmatpush.bf16.msra.mxu0 %v7035
      %7562 = vmatmul.bf16.gmra.mxu0 %v6219
      %v7563 = vpop.f32.mrf.mxu0
      %v7564 = vadd.f32 %v7551, %v7563
      %v7565 = vpop.f32.mrf.mxu0
      %7566 = vdwg.mxu0
      %7567 = vmatpush.bf16.msra.mxu0 %v7095
      %7568 = vmatpush.bf16.msra.mxu0 %v7091
      %7569 = vmatpush.bf16.msra.mxu0 %v7087
      %7570 = vmatpush.bf16.msra.mxu0 %v7083
      %7571 = vmatpush.bf16.msra.mxu0 %v7079
      %7572 = vmatpush.bf16.msra.mxu0 %v7075
      %7573 = vmatpush.bf16.msra.mxu0 %v7071
      %7574 = vmatpush.bf16.msra.mxu0 %v7067
      %7575 = vmatmul.bf16.gmra.mxu0 %v6220
      %v7576 = vpop.f32.mrf.mxu0
      %v7577 = vadd.f32 %v7564, %v7576
      %v7578 = vpop.f32.mrf.mxu0
      %7579 = vdwg.mxu0
      %7580 = vmatpush.bf16.msra.mxu0 %v7127
      %7581 = vmatpush.bf16.msra.mxu0 %v7123
      %7582 = vmatpush.bf16.msra.mxu0 %v7119
      %7583 = vmatpush.bf16.msra.mxu0 %v7115
      %7584 = vmatpush.bf16.msra.mxu0 %v7111
      %7585 = vmatpush.bf16.msra.mxu0 %v7107
      %7586 = vmatpush.bf16.msra.mxu0 %v7103
      %7587 = vmatpush.bf16.msra.mxu0 %v7099
      %7588 = vmatmul.bf16.gmra.mxu0 %v6221
      %v7589 = vpop.f32.mrf.mxu0
      %v7590 = vadd.f32 %v7577, %v7589
      %v7591 = vpop.f32.mrf.mxu0
      %7592 = vdwg.mxu0
      %7593 = vmatpush.bf16.msra.mxu0 %v7159
      %7594 = vmatpush.bf16.msra.mxu0 %v7155
      %7595 = vmatpush.bf16.msra.mxu0 %v7151
      %7596 = vmatpush.bf16.msra.mxu0 %v7147
      %7597 = vmatpush.bf16.msra.mxu0 %v7143
      %7598 = vmatpush.bf16.msra.mxu0 %v7139
      %7599 = vmatpush.bf16.msra.mxu0 %v7135
      %7600 = vmatpush.bf16.msra.mxu0 %v7131
      %7601 = vmatmul.bf16.gmra.mxu0 %v6222
      %v7602 = vpop.f32.mrf.mxu0
      %v7603 = vadd.f32 %v7590, %v7602
      %v7604 = vpop.f32.mrf.mxu0
      %7605 = vdwg.mxu0
      %7606 = vmatpush.bf16.msra.mxu0 %v7191
      %7607 = vmatpush.bf16.msra.mxu0 %v7187
      %7608 = vmatpush.bf16.msra.mxu0 %v7183
      %7609 = vmatpush.bf16.msra.mxu0 %v7179
      %7610 = vmatpush.bf16.msra.mxu0 %v7175
      %7611 = vmatpush.bf16.msra.mxu0 %v7171
      %7612 = vmatpush.bf16.msra.mxu0 %v7167
      %7613 = vmatpush.bf16.msra.mxu0 %v7163
      %7614 = vmatmul.bf16.gmra.mxu0 %v6223
      %v7615 = vpop.f32.mrf.mxu0
      %v7616 = vadd.f32 %v7603, %v7615
      %v7617 = vpop.f32.mrf.mxu0
      %7618 = vdwg.mxu0
      %7619 = vmatpush.bf16.msra.mxu0 %v7032
      %7620 = vmatpush.bf16.msra.mxu0 %v7028
      %7621 = vmatpush.bf16.msra.mxu0 %v7024
      %7622 = vmatpush.bf16.msra.mxu0 %v7020
      %7623 = vmatpush.bf16.msra.mxu0 %v7016
      %7624 = vmatpush.bf16.msra.mxu0 %v7012
      %7625 = vmatpush.bf16.msra.mxu0 %v7008
      %7626 = vmatpush.bf16.msra.mxu0 %v7004
      %7627 = vmatmul.bf16.gmra.mxu0 %v6218
      %v7628 = vpop.f32.mrf.mxu0
      %v7629 = vadd.f32 %v6420, %v7628
      %v7630 = vpop.f32.mrf.mxu0
      %7631 = vdwg.mxu0
      %7632 = vmatpush.bf16.msra.mxu0 %v7064
      %7633 = vmatpush.bf16.msra.mxu0 %v7060
      %7634 = vmatpush.bf16.msra.mxu0 %v7056
      %7635 = vmatpush.bf16.msra.mxu0 %v7052
      %7636 = vmatpush.bf16.msra.mxu0 %v7048
      %7637 = vmatpush.bf16.msra.mxu0 %v7044
      %7638 = vmatpush.bf16.msra.mxu0 %v7040
      %7639 = vmatpush.bf16.msra.mxu0 %v7036
      %7640 = vmatmul.bf16.gmra.mxu0 %v6219
      %v7641 = vpop.f32.mrf.mxu0
      %v7642 = vadd.f32 %v7629, %v7641
      %v7643 = vpop.f32.mrf.mxu0
      %7644 = vdwg.mxu0
      %7645 = vmatpush.bf16.msra.mxu0 %v7096
      %7646 = vmatpush.bf16.msra.mxu0 %v7092
      %7647 = vmatpush.bf16.msra.mxu0 %v7088
      %7648 = vmatpush.bf16.msra.mxu0 %v7084
      %7649 = vmatpush.bf16.msra.mxu0 %v7080
      %7650 = vmatpush.bf16.msra.mxu0 %v7076
      %7651 = vmatpush.bf16.msra.mxu0 %v7072
      %7652 = vmatpush.bf16.msra.mxu0 %v7068
      %7653 = vmatmul.bf16.gmra.mxu0 %v6220
      %v7654 = vpop.f32.mrf.mxu0
      %v7655 = vadd.f32 %v7642, %v7654
      %v7656 = vpop.f32.mrf.mxu0
      %7657 = vdwg.mxu0
      %7658 = vmatpush.bf16.msra.mxu0 %v7128
      %7659 = vmatpush.bf16.msra.mxu0 %v7124
      %7660 = vmatpush.bf16.msra.mxu0 %v7120
      %7661 = vmatpush.bf16.msra.mxu0 %v7116
      %7662 = vmatpush.bf16.msra.mxu0 %v7112
      %7663 = vmatpush.bf16.msra.mxu0 %v7108
      %7664 = vmatpush.bf16.msra.mxu0 %v7104
      %7665 = vmatpush.bf16.msra.mxu0 %v7100
      %7666 = vmatmul.bf16.gmra.mxu0 %v6221
      %v7667 = vpop.f32.mrf.mxu0
      %v7668 = vadd.f32 %v7655, %v7667
      %v7669 = vpop.f32.mrf.mxu0
      %7670 = vdwg.mxu0
      %7671 = vmatpush.bf16.msra.mxu0 %v7160
      %7672 = vmatpush.bf16.msra.mxu0 %v7156
      %7673 = vmatpush.bf16.msra.mxu0 %v7152
      %7674 = vmatpush.bf16.msra.mxu0 %v7148
      %7675 = vmatpush.bf16.msra.mxu0 %v7144
      %7676 = vmatpush.bf16.msra.mxu0 %v7140
      %7677 = vmatpush.bf16.msra.mxu0 %v7136
      %7678 = vmatpush.bf16.msra.mxu0 %v7132
      %7679 = vmatmul.bf16.gmra.mxu0 %v6222
      %v7680 = vpop.f32.mrf.mxu0
      %v7681 = vadd.f32 %v7668, %v7680
      %v7682 = vpop.f32.mrf.mxu0
      %7683 = vdwg.mxu0
      %7684 = vmatpush.bf16.msra.mxu0 %v7192
      %7685 = vmatpush.bf16.msra.mxu0 %v7188
      %7686 = vmatpush.bf16.msra.mxu0 %v7184
      %7687 = vmatpush.bf16.msra.mxu0 %v7180
      %7688 = vmatpush.bf16.msra.mxu0 %v7176
      %7689 = vmatpush.bf16.msra.mxu0 %v7172
      %7690 = vmatpush.bf16.msra.mxu0 %v7168
      %7691 = vmatpush.bf16.msra.mxu0 %v7164
      %7692 = vmatmul.bf16.gmra.mxu0 %v6223
      %v7693 = vpop.f32.mrf.mxu0
      %v7694 = vadd.f32 %v7681, %v7693
      %v7695 = vpop.f32.mrf.mxu0
      %7696 = vdwg.mxu0
      %v7697 = vpack.c.bf16 %v6131, %v6131
      %v7698 = vld [vmem:[#allocation9] sm:$0xff]
      %v7699 = vld [vmem:[#allocation9 + $0x8] sm:$0xff]
      %v7700 = vld [vmem:[#allocation9 + $0x10] sm:$0xff]
      %v7701 = vld [vmem:[#allocation9 + $0x18] sm:$0xff]
      %v7702 = vld [vmem:[#allocation9 + $0x20] sm:$0xff]
      %v7703 = vld [vmem:[#allocation9 + $0x28] sm:$0xff]
      %v7704 = vld [vmem:[#allocation9 + $0x30] sm:$0xff]
      %v7705 = vld [vmem:[#allocation9 + $0x38] sm:$0xff]
      %v7706 = vld [vmem:[#allocation9 + $0x40] sm:$0xff]
      %v7707 = vld [vmem:[#allocation9 + $0x48] sm:$0xff]
      %v7708 = vld [vmem:[#allocation9 + $0x50] sm:$0xff]
      %v7709 = vld [vmem:[#allocation9 + $0x58] sm:$0xff]
      %v7710 = vld [vmem:[#allocation9 + $0x60] sm:$0xff]
      %v7711 = vld [vmem:[#allocation9 + $0x68] sm:$0xff]
      %v7712 = vld [vmem:[#allocation9 + $0x70] sm:$0xff]
      %v7713 = vld [vmem:[#allocation9 + $0x78] sm:$0xff]
      %v7714 = vld [vmem:[#allocation9 + $0x80] sm:$0xff]
      %v7715 = vld [vmem:[#allocation9 + $0x88] sm:$0xff]
      %v7716 = vld [vmem:[#allocation9 + $0x90] sm:$0xff]
      %v7717 = vld [vmem:[#allocation9 + $0x98] sm:$0xff]
      %v7718 = vld [vmem:[#allocation9 + $0xa0] sm:$0xff]
      %v7719 = vld [vmem:[#allocation9 + $0xa8] sm:$0xff]
      %v7720 = vld [vmem:[#allocation9 + $0xb0] sm:$0xff]
      %v7721 = vld [vmem:[#allocation9 + $0xb8] sm:$0xff]
      %v7722 = vld [vmem:[#allocation9 + $0xc0] sm:$0xff]
      %v7723 = vld [vmem:[#allocation9 + $0xc8] sm:$0xff]
      %v7724 = vld [vmem:[#allocation9 + $0xd0] sm:$0xff]
      %v7725 = vld [vmem:[#allocation9 + $0xd8] sm:$0xff]
      %v7726 = vld [vmem:[#allocation9 + $0xe0] sm:$0xff]
      %v7727 = vld [vmem:[#allocation9 + $0xe8] sm:$0xff]
      %v7728 = vld [vmem:[#allocation9 + $0xf0] sm:$0xff]
      %v7729 = vld [vmem:[#allocation9 + $0xf8] sm:$0xff]
      %v7762 = vunpack.c.l.b16 %v7698
      %v7763 = vunpack.c.h.b16 %v7698
      %v7764 = vunpack.c.l.b16 %v7699
      %v7765 = vunpack.c.h.b16 %v7699
      %v7766 = vunpack.c.l.b16 %v7700
      %v7767 = vunpack.c.h.b16 %v7700
      %v7768 = vunpack.c.l.b16 %v7701
      %v7769 = vunpack.c.h.b16 %v7701
      %v7770 = vunpack.c.l.b16 %v7702
      %v7771 = vunpack.c.h.b16 %v7702
      %v7772 = vunpack.c.l.b16 %v7703
      %v7773 = vunpack.c.h.b16 %v7703
      %v7774 = vunpack.c.l.b16 %v7704
      %v7775 = vunpack.c.h.b16 %v7704
      %v7776 = vunpack.c.l.b16 %v7705
      %v7777 = vunpack.c.h.b16 %v7705
      %v7778 = vunpack.c.l.b16 %v7706
      %v7779 = vunpack.c.h.b16 %v7706
      %v7780 = vunpack.c.l.b16 %v7707
      %v7781 = vunpack.c.h.b16 %v7707
      %v7782 = vunpack.c.l.b16 %v7708
      %v7783 = vunpack.c.h.b16 %v7708
      %v7784 = vunpack.c.l.b16 %v7709
      %v7785 = vunpack.c.h.b16 %v7709
      %v7786 = vunpack.c.l.b16 %v7710
      %v7787 = vunpack.c.h.b16 %v7710
      %v7788 = vunpack.c.l.b16 %v7711
      %v7789 = vunpack.c.h.b16 %v7711
      %v7790 = vunpack.c.l.b16 %v7712
      %v7791 = vunpack.c.h.b16 %v7712
      %v7792 = vunpack.c.l.b16 %v7713
      %v7793 = vunpack.c.h.b16 %v7713
      %v7794 = vunpack.c.l.b16 %v7714
      %v7795 = vunpack.c.h.b16 %v7714
      %v7796 = vunpack.c.l.b16 %v7715
      %v7797 = vunpack.c.h.b16 %v7715
      %v7798 = vunpack.c.l.b16 %v7716
      %v7799 = vunpack.c.h.b16 %v7716
      %v7800 = vunpack.c.l.b16 %v7717
      %v7801 = vunpack.c.h.b16 %v7717
      %v7802 = vunpack.c.l.b16 %v7718
      %v7803 = vunpack.c.h.b16 %v7718
      %v7804 = vunpack.c.l.b16 %v7719
      %v7805 = vunpack.c.h.b16 %v7719
      %v7806 = vunpack.c.l.b16 %v7720
      %v7807 = vunpack.c.h.b16 %v7720
      %v7808 = vunpack.c.l.b16 %v7721
      %v7809 = vunpack.c.h.b16 %v7721
      %v7810 = vunpack.c.l.b16 %v7722
      %v7811 = vunpack.c.h.b16 %v7722
      %v7812 = vunpack.c.l.b16 %v7723
      %v7813 = vunpack.c.h.b16 %v7723
      %v7814 = vunpack.c.l.b16 %v7724
      %v7815 = vunpack.c.h.b16 %v7724
      %v7816 = vunpack.c.l.b16 %v7725
      %v7817 = vunpack.c.h.b16 %v7725
      %v7818 = vunpack.c.l.b16 %v7726
      %v7819 = vunpack.c.h.b16 %v7726
      %v7820 = vunpack.c.l.b16 %v7727
      %v7821 = vunpack.c.h.b16 %v7727
      %v7822 = vunpack.c.l.b16 %v7728
      %v7823 = vunpack.c.h.b16 %v7728
      %v7824 = vunpack.c.l.b16 %v7729
      %v7825 = vunpack.c.h.b16 %v7729
      %v7826 = vpack.c.b16 %v7766, %v7762
      %v7827 = vpack.c.b16 %v7767, %v7763
      %v7828 = vpack.c.b16 %v7768, %v7764
      %v7829 = vpack.c.b16 %v7769, %v7765
      %v7830 = vpack.c.b16 %v7774, %v7770
      %v7831 = vpack.c.b16 %v7775, %v7771
      %v7832 = vpack.c.b16 %v7776, %v7772
      %v7833 = vpack.c.b16 %v7777, %v7773
      %v7834 = vpack.c.b16 %v7782, %v7778
      %v7835 = vpack.c.b16 %v7783, %v7779
      %v7836 = vpack.c.b16 %v7784, %v7780
      %v7837 = vpack.c.b16 %v7785, %v7781
      %v7838 = vpack.c.b16 %v7790, %v7786
      %v7839 = vpack.c.b16 %v7791, %v7787
      %v7840 = vpack.c.b16 %v7792, %v7788
      %v7841 = vpack.c.b16 %v7793, %v7789
      %v7842 = vpack.c.b16 %v7798, %v7794
      %v7843 = vpack.c.b16 %v7799, %v7795
      %v7844 = vpack.c.b16 %v7800, %v7796
      %v7845 = vpack.c.b16 %v7801, %v7797
      %v7846 = vpack.c.b16 %v7806, %v7802
      %v7847 = vpack.c.b16 %v7807, %v7803
      %v7848 = vpack.c.b16 %v7808, %v7804
      %v7849 = vpack.c.b16 %v7809, %v7805
      %v7850 = vpack.c.b16 %v7814, %v7810
      %v7851 = vpack.c.b16 %v7815, %v7811
      %v7852 = vpack.c.b16 %v7816, %v7812
      %v7853 = vpack.c.b16 %v7817, %v7813
      %v7854 = vpack.c.b16 %v7822, %v7818
      %v7855 = vpack.c.b16 %v7823, %v7819
      %v7856 = vpack.c.b16 %v7824, %v7820
      %v7857 = vpack.c.b16 %v7825, %v7821
      %7890 = vmatpush.bf16.msra.mxu0 %v7854
      %7891 = vmatpush.bf16.msra.mxu0 %v7850
      %7892 = vmatpush.bf16.msra.mxu0 %v7846
      %7893 = vmatpush.bf16.msra.mxu0 %v7842
      %7894 = vmatpush.bf16.msra.mxu0 %v7838
      %7895 = vmatpush.bf16.msra.mxu0 %v7834
      %7896 = vmatpush.bf16.msra.mxu0 %v7830
      %7897 = vmatpush.bf16.msra.mxu0 %v7826
      %7898 = vmatmul.bf16.gmra.mxu0 %v7697
      %v7899 = vpop.f32.mrf.mxu0
      %v7900 = vadd.f32 0.0, %v7899
      %v7901 = vpop.f32.mrf.mxu0
      %7902 = vdwg.mxu0
      %7903 = vmatpush.bf16.msra.mxu0 %v7855
      %7904 = vmatpush.bf16.msra.mxu0 %v7851
      %7905 = vmatpush.bf16.msra.mxu0 %v7847
      %7906 = vmatpush.bf16.msra.mxu0 %v7843
      %7907 = vmatpush.bf16.msra.mxu0 %v7839
      %7908 = vmatpush.bf16.msra.mxu0 %v7835
      %7909 = vmatpush.bf16.msra.mxu0 %v7831
      %7910 = vmatpush.bf16.msra.mxu0 %v7827
      %7911 = vmatmul.bf16.gmra.mxu0 %v7697
      %v7912 = vpop.f32.mrf.mxu0
      %v7913 = vadd.f32 0.0, %v7912
      %v7914 = vpop.f32.mrf.mxu0
      %7915 = vdwg.mxu0
      %7916 = vmatpush.bf16.msra.mxu0 %v7856
      %7917 = vmatpush.bf16.msra.mxu0 %v7852
      %7918 = vmatpush.bf16.msra.mxu0 %v7848
      %7919 = vmatpush.bf16.msra.mxu0 %v7844
      %7920 = vmatpush.bf16.msra.mxu0 %v7840
      %7921 = vmatpush.bf16.msra.mxu0 %v7836
      %7922 = vmatpush.bf16.msra.mxu0 %v7832
      %7923 = vmatpush.bf16.msra.mxu0 %v7828
      %7924 = vmatmul.bf16.gmra.mxu0 %v7697
      %v7925 = vpop.f32.mrf.mxu0
      %v7926 = vadd.f32 0.0, %v7925
      %v7927 = vpop.f32.mrf.mxu0
      %7928 = vdwg.mxu0
      %7929 = vmatpush.bf16.msra.mxu0 %v7857
      %7930 = vmatpush.bf16.msra.mxu0 %v7853
      %7931 = vmatpush.bf16.msra.mxu0 %v7849
      %7932 = vmatpush.bf16.msra.mxu0 %v7845
      %7933 = vmatpush.bf16.msra.mxu0 %v7841
      %7934 = vmatpush.bf16.msra.mxu0 %v7837
      %7935 = vmatpush.bf16.msra.mxu0 %v7833
      %7936 = vmatpush.bf16.msra.mxu0 %v7829
      %7937 = vmatmul.bf16.gmra.mxu0 %v7697
      %v7938 = vpop.f32.mrf.mxu0
      %v7939 = vadd.f32 0.0, %v7938
      %v7940 = vpop.f32.mrf.mxu0
      %7941 = vdwg.mxu0
      %v7942 = vsub.f32 %v7460, %v7900
      %v7943 = vsub.f32 %v7538, %v7913
      %v7944 = vsub.f32 %v7616, %v7926
      %v7945 = vsub.f32 %v7694, %v7939
      %v7946 = vmul.f32 %v7942, %v7942
      %v7947 = vmul.f32 %v7943, %v7943
      %v7948 = vmul.f32 %v7944, %v7944
      %v7949 = vmul.f32 %v7945, %v7945
      %v7950 = vsel %vm6089, %v7946, 0.0
      %v7951 = vsel %vm6089, %v7947, 0.0
      %v7952 = vadd.f32 %v7950, %v7951
      %v7953 = vsel %vm6089, %v7948, 0.0
      %v7954 = vadd.f32 %v7952, %v7953
      %v7955 = vsel %vm6089, %v7949, 0.0
      %v7956 = vadd.f32 %v7954, %v7955
      %7957 = vadd.xlane.f32.xlu0 %v7956
      %v7958 = vpop.xlane.xlu0 %7957
      %v7959 = vrot.slane %v7958, 4
      %v7960 = vadd.f32 %v7958, %v7959
      %v7961 = vrot.slane %v7960, 2
      %v7962 = vadd.f32 %v7960, %v7961
      %v7963 = vrot.slane %v7962, 1
      %v7964 = vadd.f32 %v7962, %v7963
      %s7965 = vtos %v7964
      %s7966 = smul.f32 %s7965, 0.5
      %v7967 = vld [vmem:[#allocation11] sm:$0xff]
      %v7968 = vld [vmem:[#allocation11 + $0x8] sm:$0xff]
      %v7969 = vld [vmem:[#allocation11 + $0x10] sm:$0xff]
      %v7970 = vld [vmem:[#allocation11 + $0x18] sm:$0xff]
      %v7971 = vld [vmem:[#allocation11 + $0x20] sm:$0xff]
      %v7972 = vld [vmem:[#allocation11 + $0x28] sm:$0xff]
      %v7973 = vld [vmem:[#allocation11 + $0x30] sm:$0xff]
      %v7974 = vld [vmem:[#allocation11 + $0x38] sm:$0xff]
      %v7975 = vld [vmem:[#allocation11 + $0x40] sm:$0xff]
      %v7976 = vld [vmem:[#allocation11 + $0x48] sm:$0xff]
      %v7977 = vld [vmem:[#allocation11 + $0x50] sm:$0xff]
      %v7978 = vld [vmem:[#allocation11 + $0x58] sm:$0xff]
      %v7979 = vld [vmem:[#allocation11 + $0x60] sm:$0xff]
      %v7980 = vld [vmem:[#allocation11 + $0x68] sm:$0xff]
      %v7981 = vld [vmem:[#allocation11 + $0x70] sm:$0xff]
      %v7982 = vld [vmem:[#allocation11 + $0x78] sm:$0xff]
      %v7983 = vld [vmem:[#allocation11 + $0x80] sm:$0xff]
      %v7984 = vld [vmem:[#allocation11 + $0x88] sm:$0xff]
      %v7985 = vld [vmem:[#allocation11 + $0x90] sm:$0xff]
      %v7986 = vld [vmem:[#allocation11 + $0x98] sm:$0xff]
      %v7987 = vld [vmem:[#allocation11 + $0xa0] sm:$0xff]
      %v7988 = vld [vmem:[#allocation11 + $0xa8] sm:$0xff]
      %v7989 = vld [vmem:[#allocation11 + $0xb0] sm:$0xff]
      %v7990 = vld [vmem:[#allocation11 + $0xb8] sm:$0xff]
      %v7991 = vld [vmem:[#allocation11 + $0xc0] sm:$0xff]
      %v7992 = vld [vmem:[#allocation11 + $0xc8] sm:$0xff]
      %v7993 = vld [vmem:[#allocation11 + $0xd0] sm:$0xff]
      %v7994 = vld [vmem:[#allocation11 + $0xd8] sm:$0xff]
      %v7995 = vld [vmem:[#allocation11 + $0xe0] sm:$0xff]
      %v7996 = vld [vmem:[#allocation11 + $0xe8] sm:$0xff]
      %v7997 = vld [vmem:[#allocation11 + $0xf0] sm:$0xff]
      %v7998 = vld [vmem:[#allocation11 + $0xf8] sm:$0xff]
      %v8031 = vunpack.c.l.b16 %v7967
      %v8032 = vunpack.c.h.b16 %v7967
      %v8033 = vunpack.c.l.b16 %v7968
      %v8034 = vunpack.c.h.b16 %v7968
      %v8035 = vunpack.c.l.b16 %v7969
      %v8036 = vunpack.c.h.b16 %v7969
      %v8037 = vunpack.c.l.b16 %v7970
      %v8038 = vunpack.c.h.b16 %v7970
      %v8039 = vunpack.c.l.b16 %v7971
      %v8040 = vunpack.c.h.b16 %v7971
      %v8041 = vunpack.c.l.b16 %v7972
      %v8042 = vunpack.c.h.b16 %v7972
      %v8043 = vunpack.c.l.b16 %v7973
      %v8044 = vunpack.c.h.b16 %v7973
      %v8045 = vunpack.c.l.b16 %v7974
      %v8046 = vunpack.c.h.b16 %v7974
      %v8047 = vunpack.c.l.b16 %v7975
      %v8048 = vunpack.c.h.b16 %v7975
      %v8049 = vunpack.c.l.b16 %v7976
      %v8050 = vunpack.c.h.b16 %v7976
      %v8051 = vunpack.c.l.b16 %v7977
      %v8052 = vunpack.c.h.b16 %v7977
      %v8053 = vunpack.c.l.b16 %v7978
      %v8054 = vunpack.c.h.b16 %v7978
      %v8055 = vunpack.c.l.b16 %v7979
      %v8056 = vunpack.c.h.b16 %v7979
      %v8057 = vunpack.c.l.b16 %v7980
      %v8058 = vunpack.c.h.b16 %v7980
      %v8059 = vunpack.c.l.b16 %v7981
      %v8060 = vunpack.c.h.b16 %v7981
      %v8061 = vunpack.c.l.b16 %v7982
      %v8062 = vunpack.c.h.b16 %v7982
      %v8063 = vunpack.c.l.b16 %v7983
      %v8064 = vunpack.c.h.b16 %v7983
      %v8065 = vunpack.c.l.b16 %v7984
      %v8066 = vunpack.c.h.b16 %v7984
      %v8067 = vunpack.c.l.b16 %v7985
      %v8068 = vunpack.c.h.b16 %v7985
      %v8069 = vunpack.c.l.b16 %v7986
      %v8070 = vunpack.c.h.b16 %v7986
      %v8071 = vunpack.c.l.b16 %v7987
      %v8072 = vunpack.c.h.b16 %v7987
      %v8073 = vunpack.c.l.b16 %v7988
      %v8074 = vunpack.c.h.b16 %v7988
      %v8075 = vunpack.c.l.b16 %v7989
      %v8076 = vunpack.c.h.b16 %v7989
      %v8077 = vunpack.c.l.b16 %v7990
      %v8078 = vunpack.c.h.b16 %v7990
      %v8079 = vunpack.c.l.b16 %v7991
      %v8080 = vunpack.c.h.b16 %v7991
      %v8081 = vunpack.c.l.b16 %v7992
      %v8082 = vunpack.c.h.b16 %v7992
      %v8083 = vunpack.c.l.b16 %v7993
      %v8084 = vunpack.c.h.b16 %v7993
      %v8085 = vunpack.c.l.b16 %v7994
      %v8086 = vunpack.c.h.b16 %v7994
      %v8087 = vunpack.c.l.b16 %v7995
      %v8088 = vunpack.c.h.b16 %v7995
      %v8089 = vunpack.c.l.b16 %v7996
      %v8090 = vunpack.c.h.b16 %v7996
      %v8091 = vunpack.c.l.b16 %v7997
      %v8092 = vunpack.c.h.b16 %v7997
      %v8093 = vunpack.c.l.b16 %v7998
      %v8094 = vunpack.c.h.b16 %v7998
      %v8095 = vpack.c.b16 %v8035, %v8031
      %v8096 = vpack.c.b16 %v8036, %v8032
      %v8097 = vpack.c.b16 %v8037, %v8033
      %v8098 = vpack.c.b16 %v8038, %v8034
      %v8099 = vpack.c.b16 %v8043, %v8039
      %v8100 = vpack.c.b16 %v8044, %v8040
      %v8101 = vpack.c.b16 %v8045, %v8041
      %v8102 = vpack.c.b16 %v8046, %v8042
      %v8103 = vpack.c.b16 %v8051, %v8047
      %v8104 = vpack.c.b16 %v8052, %v8048
      %v8105 = vpack.c.b16 %v8053, %v8049
      %v8106 = vpack.c.b16 %v8054, %v8050
      %v8107 = vpack.c.b16 %v8059, %v8055
      %v8108 = vpack.c.b16 %v8060, %v8056
      %v8109 = vpack.c.b16 %v8061, %v8057
      %v8110 = vpack.c.b16 %v8062, %v8058
      %v8111 = vpack.c.b16 %v8067, %v8063
      %v8112 = vpack.c.b16 %v8068, %v8064
      %v8113 = vpack.c.b16 %v8069, %v8065
      %v8114 = vpack.c.b16 %v8070, %v8066
      %v8115 = vpack.c.b16 %v8075, %v8071
      %v8116 = vpack.c.b16 %v8076, %v8072
      %v8117 = vpack.c.b16 %v8077, %v8073
      %v8118 = vpack.c.b16 %v8078, %v8074
      %v8119 = vpack.c.b16 %v8083, %v8079
      %v8120 = vpack.c.b16 %v8084, %v8080
      %v8121 = vpack.c.b16 %v8085, %v8081
      %v8122 = vpack.c.b16 %v8086, %v8082
      %v8123 = vpack.c.b16 %v8091, %v8087
      %v8124 = vpack.c.b16 %v8092, %v8088
      %v8125 = vpack.c.b16 %v8093, %v8089
      %v8126 = vpack.c.b16 %v8094, %v8090
      %8159 = vmatpush.bf16.msra.mxu0 %v8123
      %8160 = vmatpush.bf16.msra.mxu0 %v8119
      %8161 = vmatpush.bf16.msra.mxu0 %v8115
      %8162 = vmatpush.bf16.msra.mxu0 %v8111
      %8163 = vmatpush.bf16.msra.mxu0 %v8107
      %8164 = vmatpush.bf16.msra.mxu0 %v8103
      %8165 = vmatpush.bf16.msra.mxu0 %v8099
      %8166 = vmatpush.bf16.msra.mxu0 %v8095
      %8167 = vmatmul.bf16.gmra.mxu0 %v7697
      %v8168 = vpop.f32.mrf.mxu0
      %v8169 = vadd.f32 0.0, %v8168
      %v8170 = vpop.f32.mrf.mxu0
      %8171 = vdwg.mxu0
      %8172 = vmatpush.bf16.msra.mxu0 %v8124
      %8173 = vmatpush.bf16.msra.mxu0 %v8120
      %8174 = vmatpush.bf16.msra.mxu0 %v8116
      %8175 = vmatpush.bf16.msra.mxu0 %v8112
      %8176 = vmatpush.bf16.msra.mxu0 %v8108
      %8177 = vmatpush.bf16.msra.mxu0 %v8104
      %8178 = vmatpush.bf16.msra.mxu0 %v8100
      %8179 = vmatpush.bf16.msra.mxu0 %v8096
      %8180 = vmatmul.bf16.gmra.mxu0 %v7697
      %v8181 = vpop.f32.mrf.mxu0
      %v8182 = vadd.f32 0.0, %v8181
      %v8183 = vpop.f32.mrf.mxu0
      %8184 = vdwg.mxu0
      %8185 = vmatpush.bf16.msra.mxu0 %v8125
      %8186 = vmatpush.bf16.msra.mxu0 %v8121
      %8187 = vmatpush.bf16.msra.mxu0 %v8117
      %8188 = vmatpush.bf16.msra.mxu0 %v8113
      %8189 = vmatpush.bf16.msra.mxu0 %v8109
      %8190 = vmatpush.bf16.msra.mxu0 %v8105
      %8191 = vmatpush.bf16.msra.mxu0 %v8101
      %8192 = vmatpush.bf16.msra.mxu0 %v8097
      %8193 = vmatmul.bf16.gmra.mxu0 %v7697
      %v8194 = vpop.f32.mrf.mxu0
      %v8195 = vadd.f32 0.0, %v8194
      %v8196 = vpop.f32.mrf.mxu0
      %8197 = vdwg.mxu0
      %8198 = vmatpush.bf16.msra.mxu0 %v8126
      %8199 = vmatpush.bf16.msra.mxu0 %v8122
      %8200 = vmatpush.bf16.msra.mxu0 %v8118
      %8201 = vmatpush.bf16.msra.mxu0 %v8114
      %8202 = vmatpush.bf16.msra.mxu0 %v8110
      %8203 = vmatpush.bf16.msra.mxu0 %v8106
      %8204 = vmatpush.bf16.msra.mxu0 %v8102
      %8205 = vmatpush.bf16.msra.mxu0 %v8098
      %8206 = vmatmul.bf16.gmra.mxu0 %v7697
      %v8207 = vpop.f32.mrf.mxu0
      %v8208 = vadd.f32 0.0, %v8207
      %v8209 = vpop.f32.mrf.mxu0
      %8210 = vdwg.mxu0
      %v8213 = vrot.slane %v6120, 4
      %v8214 = vrot.slane %v6121, 4
      %v8215 = vrot.slane %v6122, 4
      %v8216 = vsel %vm6089, %v8213, %v8214
      %v8217 = vsel %vm6089, %v8214, %v8215
      %v8224 = vrot.slane %v8182, 4
      %v8225 = vrot.slane %v8208, 4
      %v8226 = vsel %vm6089, %v8169, %v8224
      %v8227 = vsel %vm6089, %v8195, %v8225
      %v8230 = vsub.f32 %v8216, %v8226
      %v8231 = vsub.f32 %v8217, %v8227
      %v8232 = vmul.f32 %v8230, %v8230
      %v8233 = vmul.f32 %v8231, %v8231
      %8236 = vst [vmem:[#allocation1] ss:$2 sm:$0xff] %v8232
      %s8237 = scalar_lea.vmem [#allocation1], 16
      %8238 = vst [vmem:[%s8237] ss:$2 sm:$0xff] %v8233
      %v8239 = vld.sshfl [vmem:[#allocation1] sm:$0xff pattern:$0x75316420]
      %v8240 = vld.sshfl [vmem:[#allocation1 + $0x8] sm:$0xff pattern:$0x75316420]
      %v8241 = vld.sshfl [vmem:[#allocation1 + $0x10] sm:$0xff pattern:$0x75316420]
      %v8242 = vld.sshfl [vmem:[#allocation1 + $0x18] sm:$0xff pattern:$0x75316420]
      %v8247 = vsel %vm6089, %v8239, 0.0
      %v8248 = vsel %vm6089, %v8240, 0.0
      %v8249 = vadd.f32 %v8247, %v8248
      %v8250 = vsel %vm6089, %v8241, 0.0
      %v8251 = vadd.f32 %v8249, %v8250
      %v8252 = vsel %vm6089, %v8242, 0.0
      %v8253 = vadd.f32 %v8251, %v8252
      %8254 = vadd.xlane.f32.xlu0 %v8253
      %v8255 = vpop.xlane.xlu0 %8254
      %v8256 = vrot.slane %v8255, 4
      %v8257 = vadd.f32 %v8255, %v8256
      %v8258 = vrot.slane %v8257, 2
      %v8259 = vadd.f32 %v8257, %v8258
      %v8260 = vrot.slane %v8259, 1
      %v8261 = vadd.f32 %v8259, %v8260
      %s8262 = vtos %v8261
      %s8263 = smul.f32 %s8262, 0.5
      %v8264 = vld [vmem:[#allocation6 + $0x10] sm:$0xf]
      %v8265 = vld [vmem:[#allocation6 + $0x14] sm:$0xf]
      %v8266 = vld [vmem:[#allocation6 + $0x21] sm:$0x1]
      %v8268 = vperm.slane %v8264, 0
      %v8269 = vperm.slane %v8264, 1
      %v8270 = vperm.slane %v8264, 2
      %v8271 = vperm.slane %v8264, 3
      %v8276 = vmul.f32 %v7460, %v8268
      %v8277 = vmul.f32 %v7538, %v8269
      %v8278 = vmul.f32 %v7616, %v8270
      %v8279 = vmul.f32 %v7694, %v8271
      %v8280 = vsel %vm6089, %v8276, 0.0
      %v8281 = vsel %vm6089, %v8277, 0.0
      %v8282 = vadd.f32 %v8280, %v8281
      %v8283 = vsel %vm6089, %v8278, 0.0
      %v8284 = vadd.f32 %v8282, %v8283
      %v8285 = vsel %vm6089, %v8279, 0.0
      %v8286 = vadd.f32 %v8284, %v8285
      %8287 = vadd.xlane.f32.xlu0 %v8286
      %v8288 = vpop.xlane.xlu0 %8287
      %v8290 = vperm.slane %v8265, 0
      %v8291 = vperm.slane %v8265, 1
      %v8292 = vperm.slane %v8265, 2
      %v8293 = vperm.slane %v8265, 3
      %v8294 = vrot.slane %v8291, 4
      %v8295 = vrot.slane %v8293, 4
      %v8296 = vsel %vm6089, %v8290, %v8294
      %v8297 = vsel %vm6089, %v8292, %v8295
      %v8300 = vmul.f32 %v8216, %v8296
      %v8301 = vmul.f32 %v8217, %v8297
      %8304 = vst [vmem:[#allocation1] ss:$2 sm:$0xff] %v8300
      %s8305 = scalar_lea.vmem [#allocation1], 16
      %8306 = vst [vmem:[%s8305] ss:$2 sm:$0xff] %v8301
      %v8307 = vld.sshfl [vmem:[#allocation1] sm:$0xff pattern:$0x75316420]
      %v8308 = vld.sshfl [vmem:[#allocation1 + $0x8] sm:$0xff pattern:$0x75316420]
      %v8309 = vld.sshfl [vmem:[#allocation1 + $0x10] sm:$0xff pattern:$0x75316420]
      %v8310 = vld.sshfl [vmem:[#allocation1 + $0x18] sm:$0xff pattern:$0x75316420]
      %v8315 = vsel %vm6089, %v8307, 0.0
      %v8316 = vsel %vm6089, %v8308, 0.0
      %v8317 = vadd.f32 %v8315, %v8316
      %v8318 = vsel %vm6089, %v8309, 0.0
      %v8319 = vadd.f32 %v8317, %v8318
      %v8320 = vsel %vm6089, %v8310, 0.0
      %v8321 = vadd.f32 %v8319, %v8320
      %8322 = vadd.xlane.f32.xlu0 %v8321
      %v8323 = vpop.xlane.xlu0 %8322
      %v8324 = vadd.f32 %v8288, %v8323
      %v8326 = vperm.slane %v8266, 0
      %v8328 = vadd.f32 %v8324, %v8326
      %v8329 = vsub.f32 0.0, %v8328
      %v8330 = vmul.f32 %v8329, 1.442695
      %v8331 = vpow.pop %v8330
      %v8332 = vadd.f32 %v8331, 1.0
      %v8333 = vrcp.pop %v8332
      %v8334 = vmul.f32 %v8332, %v8333
      %v8335 = vsub.f32 1.0, %v8334
      %v8336 = vmul.f32 %v8333, %v8335
      %v8337 = vadd.f32 %v8333, %v8336
      %vm8338 = vweird.f32 %v8332
      %vm8339 = vweird.f32 %v8333
      %vm8340 = vmor %vm8338, %vm8339
      %v8341 = vsel %vm8340, %v8333, %v8337
      %v8342 = vand.u32 2147483647, %v8332
      %vm8343 = vcmp.eq.f32.partialorder %v8342, 8.507059e+37
      %v8344 = vand.u32 %v8332, 2147483648
      %v8345 = vor.u32 1.1754944e-38, %v8344
      %v8346 = vsel %vm8343, %v8345, %v8341
      %v8347 = vmul.f32 1.0, %v8346
      %8349 = vset.pattern.permute.xlu0 0
      %8350 = vperm.xlu0 %8349, %v8347
      %v8351 = vpop.permute.xlu0 %8350
      %v8353 = vmul.f32 %v8351, %v7460
      %v8354 = vmul.f32 %v8351, %v7538
      %v8355 = vmul.f32 %v8351, %v7616
      %v8356 = vmul.f32 %v8351, %v7694
      %v8357 = vsub.f32 1.0, %v8347
      %8359 = vset.pattern.permute.xlu0 0
      %8360 = vperm.xlu0 %8359, %v8357
      %v8361 = vpop.permute.xlu0 %8360
      %8363 = vst [vmem:[#allocation1] ss:$2 sm:$0xff] %v6120
      %s8364 = scalar_lea.vmem [#allocation1], 16
      %8365 = vst [vmem:[%s8364] ss:$2 sm:$0xff] %v6121
      %s8366 = scalar_lea.vmem [#allocation1], 32
      %8367 = vst [vmem:[%s8366] ss:$2 sm:$0xff] %v6122
      %v8368 = vld.sshfl [vmem:[#allocation1 + $0x8] sm:$0xff pattern:$0x75316420]
      %v8369 = vld.sshfl [vmem:[#allocation1 + $0x10] sm:$0xff pattern:$0x75316420]
      %v8370 = vld.sshfl [vmem:[#allocation1 + $0x18] sm:$0xff pattern:$0x75316420]
      %v8371 = vld.sshfl [vmem:[#allocation1 + $0x20] sm:$0xff pattern:$0x75316420]
      %v8376 = vmul.f32 %v8361, %v8368
      %v8377 = vmul.f32 %v8361, %v8369
      %v8378 = vmul.f32 %v8361, %v8370
      %v8379 = vmul.f32 %v8361, %v8371
      %v8380 = vadd.f32 %v8353, %v8376
      %v8381 = vadd.f32 %v8354, %v8377
      %v8382 = vadd.f32 %v8355, %v8378
      %v8383 = vadd.f32 %v8356, %v8379
      %v8384 = vsel %vm6089, %v8380, 0.0
      %v8385 = vrot.slane %v8384, 4
      %v8386 = vadd.f32 %v8384, %v8385
      %v8387 = vrot.slane %v8386, 2
      %v8388 = vadd.f32 %v8386, %v8387
      %v8389 = vrot.slane %v8388, 1
      %v8390 = vadd.f32 %v8388, %v8389
      %v8391 = vsel %vm6089, %v8381, 0.0
      %v8392 = vrot.slane %v8391, 4
      %v8393 = vadd.f32 %v8391, %v8392
      %v8394 = vrot.slane %v8393, 2
      %v8395 = vadd.f32 %v8393, %v8394
      %v8396 = vrot.slane %v8395, 1
      %v8397 = vadd.f32 %v8395, %v8396
      %v8398 = vsel %vm6089, %v8382, 0.0
      %v8399 = vrot.slane %v8398, 4
      %v8400 = vadd.f32 %v8398, %v8399
      %v8401 = vrot.slane %v8400, 2
      %v8402 = vadd.f32 %v8400, %v8401
      %v8403 = vrot.slane %v8402, 1
      %v8404 = vadd.f32 %v8402, %v8403
      %v8405 = vsel %vm6089, %v8383, 0.0
      %v8406 = vrot.slane %v8405, 4
      %v8407 = vadd.f32 %v8405, %v8406
      %v8408 = vrot.slane %v8407, 2
      %v8409 = vadd.f32 %v8407, %v8408
      %v8410 = vrot.slane %v8409, 1
      %v8411 = vadd.f32 %v8409, %v8410
      %v8412 = vrcp.pop 4.0
      %v8413 = vmul.f32 4.0, %v8412
      %v8414 = vsub.f32 1.0, %v8413
      %v8415 = vmul.f32 %v8412, %v8414
      %v8416 = vadd.f32 %v8412, %v8415
      %vm8417 = vweird.f32 %v8412
      %v8418 = vsel %vm8417, %v8412, %v8416
      %v8419 = vmul.f32 %v8390, %v8418
      %v8420 = vmul.f32 %v8397, %v8418
      %v8421 = vmul.f32 %v8404, %v8418
      %v8422 = vmul.f32 %v8411, %v8418
      %v8423 = vsub.f32 %v8380, %v8419
      %v8424 = vsub.f32 %v8381, %v8420
      %v8425 = vsub.f32 %v8382, %v8421
      %v8426 = vsub.f32 %v8383, %v8422
      %v8427 = vmul.f32 %v8423, %v8423
      %v8428 = vmul.f32 %v8424, %v8424
      %v8429 = vmul.f32 %v8425, %v8425
      %v8430 = vmul.f32 %v8426, %v8426
      %v8431 = vsel %vm6089, %v8427, 0.0
      %v8432 = vrot.slane %v8431, 4
      %v8433 = vadd.f32 %v8431, %v8432
      %v8434 = vrot.slane %v8433, 2
      %v8435 = vadd.f32 %v8433, %v8434
      %v8436 = vrot.slane %v8435, 1
      %v8437 = vadd.f32 %v8435, %v8436
      %v8438 = vsel %vm6089, %v8428, 0.0
      %v8439 = vrot.slane %v8438, 4
      %v8440 = vadd.f32 %v8438, %v8439
      %v8441 = vrot.slane %v8440, 2
      %v8442 = vadd.f32 %v8440, %v8441
      %v8443 = vrot.slane %v8442, 1
      %v8444 = vadd.f32 %v8442, %v8443
      %v8445 = vsel %vm6089, %v8429, 0.0
      %v8446 = vrot.slane %v8445, 4
      %v8447 = vadd.f32 %v8445, %v8446
      %v8448 = vrot.slane %v8447, 2
      %v8449 = vadd.f32 %v8447, %v8448
      %v8450 = vrot.slane %v8449, 1
      %v8451 = vadd.f32 %v8449, %v8450
      %v8452 = vsel %vm6089, %v8430, 0.0
      %v8453 = vrot.slane %v8452, 4
      %v8454 = vadd.f32 %v8452, %v8453
      %v8455 = vrot.slane %v8454, 2
      %v8456 = vadd.f32 %v8454, %v8455
      %v8457 = vrot.slane %v8456, 1
      %v8458 = vadd.f32 %v8456, %v8457
      %v8459 = vmul.f32 %v8437, %v8418
      %v8460 = vmul.f32 %v8444, %v8418
      %v8461 = vmul.f32 %v8451, %v8418
      %v8462 = vmul.f32 %v8458, %v8418
      %v8463 = vld [vmem:[#allocation6 + $0x18] sm:$0xf]
      %v8464 = vld [vmem:[#allocation6 + $0x1c] sm:$0xf]
      %v8465 = vadd.f32 %v8459, 1e-05
      %v8466 = vadd.f32 %v8460, 1e-05
      %v8467 = vadd.f32 %v8461, 1e-05
      %v8468 = vadd.f32 %v8462, 1e-05
      %v8469 = vrsqrt.pop %v8465
      %v8470 = vmul.f32 %v8469, %v8465
      %v8471 = vmul.f32 %v8470, %v8469
      %v8472 = vmul.f32 0.5, %v8471
      %v8473 = vsub.f32 1.5, %v8472
      %v8474 = vmul.f32 %v8469, %v8473
      %vm8475 = vweird.f32 %v8465
      %vm8476 = vweird.f32 %v8469
      %vm8477 = vmor %vm8475, %vm8476
      %v8478 = vsel %vm8477, %v8469, %v8474
      %v8479 = vrsqrt.pop %v8466
      %v8480 = vmul.f32 %v8479, %v8466
      %v8481 = vmul.f32 %v8480, %v8479
      %v8482 = vmul.f32 0.5, %v8481
      %v8483 = vsub.f32 1.5, %v8482
      %v8484 = vmul.f32 %v8479, %v8483
      %vm8485 = vweird.f32 %v8466
      %vm8486 = vweird.f32 %v8479
      %vm8487 = vmor %vm8485, %vm8486
      %v8488 = vsel %vm8487, %v8479, %v8484
      %v8489 = vrsqrt.pop %v8467
      %v8490 = vmul.f32 %v8489, %v8467
      %v8491 = vmul.f32 %v8490, %v8489
      %v8492 = vmul.f32 0.5, %v8491
      %v8493 = vsub.f32 1.5, %v8492
      %v8494 = vmul.f32 %v8489, %v8493
      %vm8495 = vweird.f32 %v8467
      %vm8496 = vweird.f32 %v8489
      %vm8497 = vmor %vm8495, %vm8496
      %v8498 = vsel %vm8497, %v8489, %v8494
      %v8499 = vrsqrt.pop %v8468
      %v8500 = vmul.f32 %v8499, %v8468
      %v8501 = vmul.f32 %v8500, %v8499
      %v8502 = vmul.f32 0.5, %v8501
      %v8503 = vsub.f32 1.5, %v8502
      %v8504 = vmul.f32 %v8499, %v8503
      %vm8505 = vweird.f32 %v8468
      %vm8506 = vweird.f32 %v8499
      %vm8507 = vmor %vm8505, %vm8506
      %v8508 = vsel %vm8507, %v8499, %v8504
      %v8509 = vmul.f32 %v8423, %v8478
      %v8510 = vmul.f32 %v8424, %v8488
      %v8511 = vmul.f32 %v8425, %v8498
      %v8512 = vmul.f32 %v8426, %v8508
      %v8514 = vperm.slane %v8463, 0
      %v8515 = vperm.slane %v8463, 1
      %v8516 = vperm.slane %v8463, 2
      %v8517 = vperm.slane %v8463, 3
      %v8522 = vmul.f32 %v8509, %v8514
      %v8523 = vmul.f32 %v8510, %v8515
      %v8524 = vmul.f32 %v8511, %v8516
      %v8525 = vmul.f32 %v8512, %v8517
      %v8527 = vperm.slane %v8464, 0
      %v8528 = vperm.slane %v8464, 1
      %v8529 = vperm.slane %v8464, 2
      %v8530 = vperm.slane %v8464, 3
      %v8535 = vadd.f32 %v8522, %v8527
      %v8536 = vadd.f32 %v8523, %v8528
      %v8537 = vadd.f32 %v8524, %v8529
      %v8538 = vadd.f32 %v8525, %v8530
      %v8539 = vmax.f32 %v8535, 0.0
      %v8540 = vmax.f32 %v8536, 0.0
      %v8541 = vmax.f32 %v8537, 0.0
      %v8542 = vmax.f32 %v8538, 0.0
      %v8543 = vld [vmem:[#allocation6 + $0x20] sm:$0x1]
      %v8544 = vpack.c.bf16 %v8539, %v8539
      %v8545 = vpack.c.bf16 %v8540, %v8540
      %v8546 = vpack.c.bf16 %v8541, %v8541
      %v8547 = vpack.c.bf16 %v8542, %v8542
      %v8548 = vld [vmem:[#allocation12] sm:$0xf]
      %v8549 = vld [vmem:[#allocation12 + $0x4] sm:$0xf]
      %v8550 = vld [vmem:[#allocation12 + $0x8] sm:$0xf]
      %v8551 = vld [vmem:[#allocation12 + $0xc] sm:$0xf]
      %v8552 = vld [vmem:[#allocation12 + $0x10] sm:$0xf]
      %v8553 = vld [vmem:[#allocation12 + $0x14] sm:$0xf]
      %v8554 = vld [vmem:[#allocation12 + $0x18] sm:$0xf]
      %v8555 = vld [vmem:[#allocation12 + $0x1c] sm:$0xf]
      %v8556 = vld [vmem:[#allocation12 + $0x20] sm:$0xf]
      %v8557 = vld [vmem:[#allocation12 + $0x24] sm:$0xf]
      %v8558 = vld [vmem:[#allocation12 + $0x28] sm:$0xf]
      %v8559 = vld [vmem:[#allocation12 + $0x2c] sm:$0xf]
      %v8560 = vld [vmem:[#allocation12 + $0x30] sm:$0xf]
      %v8561 = vld [vmem:[#allocation12 + $0x34] sm:$0xf]
      %v8562 = vld [vmem:[#allocation12 + $0x38] sm:$0xf]
      %v8563 = vld [vmem:[#allocation12 + $0x3c] sm:$0xf]
      %v8564 = vld [vmem:[#allocation12 + $0x40] sm:$0xf]
      %v8565 = vld [vmem:[#allocation12 + $0x44] sm:$0xf]
      %v8566 = vld [vmem:[#allocation12 + $0x48] sm:$0xf]
      %v8567 = vld [vmem:[#allocation12 + $0x4c] sm:$0xf]
      %v8568 = vld [vmem:[#allocation12 + $0x50] sm:$0xf]
      %v8569 = vld [vmem:[#allocation12 + $0x54] sm:$0xf]
      %v8570 = vld [vmem:[#allocation12 + $0x58] sm:$0xf]
      %v8571 = vld [vmem:[#allocation12 + $0x5c] sm:$0xf]
      %v8572 = vld [vmem:[#allocation12 + $0x60] sm:$0xf]
      %v8573 = vld [vmem:[#allocation12 + $0x64] sm:$0xf]
      %v8574 = vld [vmem:[#allocation12 + $0x68] sm:$0xf]
      %v8575 = vld [vmem:[#allocation12 + $0x6c] sm:$0xf]
      %v8576 = vld [vmem:[#allocation12 + $0x70] sm:$0xf]
      %v8577 = vld [vmem:[#allocation12 + $0x74] sm:$0xf]
      %v8578 = vld [vmem:[#allocation12 + $0x78] sm:$0xf]
      %v8579 = vld [vmem:[#allocation12 + $0x7c] sm:$0xf]
      %v8580 = vld [vmem:[#allocation12 + $0x80] sm:$0xf]
      %v8581 = vld [vmem:[#allocation12 + $0x84] sm:$0xf]
      %v8582 = vld [vmem:[#allocation12 + $0x88] sm:$0xf]
      %v8583 = vld [vmem:[#allocation12 + $0x8c] sm:$0xf]
      %v8584 = vld [vmem:[#allocation12 + $0x90] sm:$0xf]
      %v8585 = vld [vmem:[#allocation12 + $0x94] sm:$0xf]
      %v8586 = vld [vmem:[#allocation12 + $0x98] sm:$0xf]
      %v8587 = vld [vmem:[#allocation12 + $0x9c] sm:$0xf]
      %v8588 = vld [vmem:[#allocation12 + $0xa0] sm:$0xf]
      %v8589 = vld [vmem:[#allocation12 + $0xa4] sm:$0xf]
      %v8590 = vld [vmem:[#allocation12 + $0xa8] sm:$0xf]
      %v8591 = vld [vmem:[#allocation12 + $0xac] sm:$0xf]
      %v8592 = vld [vmem:[#allocation12 + $0xb0] sm:$0xf]
      %v8593 = vld [vmem:[#allocation12 + $0xb4] sm:$0xf]
      %v8594 = vld [vmem:[#allocation12 + $0xb8] sm:$0xf]
      %v8595 = vld [vmem:[#allocation12 + $0xbc] sm:$0xf]
      %v8596 = vld [vmem:[#allocation12 + $0xc0] sm:$0xf]
      %v8597 = vld [vmem:[#allocation12 + $0xc4] sm:$0xf]
      %v8598 = vld [vmem:[#allocation12 + $0xc8] sm:$0xf]
      %v8599 = vld [vmem:[#allocation12 + $0xcc] sm:$0xf]
      %v8600 = vld [vmem:[#allocation12 + $0xd0] sm:$0xf]
      %v8601 = vld [vmem:[#allocation12 + $0xd4] sm:$0xf]
      %v8602 = vld [vmem:[#allocation12 + $0xd8] sm:$0xf]
      %v8603 = vld [vmem:[#allocation12 + $0xdc] sm:$0xf]
      %v8604 = vld [vmem:[#allocation12 + $0xe0] sm:$0xf]
      %v8605 = vld [vmem:[#allocation12 + $0xe4] sm:$0xf]
      %v8606 = vld [vmem:[#allocation12 + $0xe8] sm:$0xf]
      %v8607 = vld [vmem:[#allocation12 + $0xec] sm:$0xf]
      %v8608 = vld [vmem:[#allocation12 + $0xf0] sm:$0xf]
      %v8609 = vld [vmem:[#allocation12 + $0xf4] sm:$0xf]
      %v8610 = vld [vmem:[#allocation12 + $0xf8] sm:$0xf]
      %v8611 = vld [vmem:[#allocation12 + $0xfc] sm:$0xf]
      %v8613 = vperm.slane %v8543, 0
      %v8679 = vunpack.c.l.b16 %v8548
      %v8680 = vunpack.c.l.b16 %v8549
      %v8681 = vunpack.c.l.b16 %v8550
      %v8682 = vunpack.c.l.b16 %v8551
      %v8683 = vunpack.c.l.b16 %v8552
      %v8684 = vunpack.c.l.b16 %v8553
      %v8685 = vunpack.c.l.b16 %v8554
      %v8686 = vunpack.c.l.b16 %v8555
      %v8687 = vunpack.c.l.b16 %v8556
      %v8688 = vunpack.c.l.b16 %v8557
      %v8689 = vunpack.c.l.b16 %v8558
      %v8690 = vunpack.c.l.b16 %v8559
      %v8691 = vunpack.c.l.b16 %v8560
      %v8692 = vunpack.c.l.b16 %v8561
      %v8693 = vunpack.c.l.b16 %v8562
      %v8694 = vunpack.c.l.b16 %v8563
      %v8695 = vunpack.c.l.b16 %v8564
      %v8696 = vunpack.c.l.b16 %v8565
      %v8697 = vunpack.c.l.b16 %v8566
      %v8698 = vunpack.c.l.b16 %v8567
      %v8699 = vunpack.c.l.b16 %v8568
      %v8700 = vunpack.c.l.b16 %v8569
      %v8701 = vunpack.c.l.b16 %v8570
      %v8702 = vunpack.c.l.b16 %v8571
      %v8703 = vunpack.c.l.b16 %v8572
      %v8704 = vunpack.c.l.b16 %v8573
      %v8705 = vunpack.c.l.b16 %v8574
      %v8706 = vunpack.c.l.b16 %v8575
      %v8707 = vunpack.c.l.b16 %v8576
      %v8708 = vunpack.c.l.b16 %v8577
      %v8709 = vunpack.c.l.b16 %v8578
      %v8710 = vunpack.c.l.b16 %v8579
      %v8711 = vunpack.c.l.b16 %v8580
      %v8712 = vunpack.c.l.b16 %v8581
      %v8713 = vunpack.c.l.b16 %v8582
      %v8714 = vunpack.c.l.b16 %v8583
      %v8715 = vunpack.c.l.b16 %v8584
      %v8716 = vunpack.c.l.b16 %v8585
      %v8717 = vunpack.c.l.b16 %v8586
      %v8718 = vunpack.c.l.b16 %v8587
      %v8719 = vunpack.c.l.b16 %v8588
      %v8720 = vunpack.c.l.b16 %v8589
      %v8721 = vunpack.c.l.b16 %v8590
      %v8722 = vunpack.c.l.b16 %v8591
      %v8723 = vunpack.c.l.b16 %v8592
      %v8724 = vunpack.c.l.b16 %v8593
      %v8725 = vunpack.c.l.b16 %v8594
      %v8726 = vunpack.c.l.b16 %v8595
      %v8727 = vunpack.c.l.b16 %v8596
      %v8728 = vunpack.c.l.b16 %v8597
      %v8729 = vunpack.c.l.b16 %v8598
      %v8730 = vunpack.c.l.b16 %v8599
      %v8731 = vunpack.c.l.b16 %v8600
      %v8732 = vunpack.c.l.b16 %v8601
      %v8733 = vunpack.c.l.b16 %v8602
      %v8734 = vunpack.c.l.b16 %v8603
      %v8735 = vunpack.c.l.b16 %v8604
      %v8736 = vunpack.c.l.b16 %v8605
      %v8737 = vunpack.c.l.b16 %v8606
      %v8738 = vunpack.c.l.b16 %v8607
      %v8739 = vunpack.c.l.b16 %v8608
      %v8740 = vunpack.c.l.b16 %v8609
      %v8741 = vunpack.c.l.b16 %v8610
      %v8742 = vunpack.c.l.b16 %v8611
      %v8743 = vpack.c.b16 %v8680, %v8679
      %v8744 = vpack.c.b16 %v8682, %v8681
      %v8745 = vpack.c.b16 %v8684, %v8683
      %v8746 = vpack.c.b16 %v8686, %v8685
      %v8747 = vpack.c.b16 %v8688, %v8687
      %v8748 = vpack.c.b16 %v8690, %v8689
      %v8749 = vpack.c.b16 %v8692, %v8691
      %v8750 = vpack.c.b16 %v8694, %v8693
      %v8751 = vpack.c.b16 %v8696, %v8695
      %v8752 = vpack.c.b16 %v8698, %v8697
      %v8753 = vpack.c.b16 %v8700, %v8699
      %v8754 = vpack.c.b16 %v8702, %v8701
      %v8755 = vpack.c.b16 %v8704, %v8703
      %v8756 = vpack.c.b16 %v8706, %v8705
      %v8757 = vpack.c.b16 %v8708, %v8707
      %v8758 = vpack.c.b16 %v8710, %v8709
      %v8759 = vpack.c.b16 %v8712, %v8711
      %v8760 = vpack.c.b16 %v8714, %v8713
      %v8761 = vpack.c.b16 %v8716, %v8715
      %v8762 = vpack.c.b16 %v8718, %v8717
      %v8763 = vpack.c.b16 %v8720, %v8719
      %v8764 = vpack.c.b16 %v8722, %v8721
      %v8765 = vpack.c.b16 %v8724, %v8723
      %v8766 = vpack.c.b16 %v8726, %v8725
      %v8767 = vpack.c.b16 %v8728, %v8727
      %v8768 = vpack.c.b16 %v8730, %v8729
      %v8769 = vpack.c.b16 %v8732, %v8731
      %v8770 = vpack.c.b16 %v8734, %v8733
      %v8771 = vpack.c.b16 %v8736, %v8735
      %v8772 = vpack.c.b16 %v8738, %v8737
      %v8773 = vpack.c.b16 %v8740, %v8739
      %v8774 = vpack.c.b16 %v8742, %v8741
      %8807 = vmatpush.bf16.msra.mxu0 %v8750
      %8808 = vmatpush.bf16.msra.mxu0 %v8749
      %8809 = vmatpush.bf16.msra.mxu0 %v8748
      %8810 = vmatpush.bf16.msra.mxu0 %v8747
      %8811 = vmatpush.bf16.msra.mxu0 %v8746
      %8812 = vmatpush.bf16.msra.mxu0 %v8745
      %8813 = vmatpush.bf16.msra.mxu0 %v8744
      %8814 = vmatpush.bf16.msra.mxu0 %v8743
      %8815 = vmatmul.bf16.gmra.mxu0 %v8544
      %v8816 = vpop.f32.mrf.mxu0
      %v8817 = vadd.f32 %v8613, %v8816
      %v8818 = vpop.f32.mrf.mxu0
      %8819 = vdwg.mxu0
      %8820 = vmatpush.bf16.msra.mxu0 %v8758
      %8821 = vmatpush.bf16.msra.mxu0 %v8757
      %8822 = vmatpush.bf16.msra.mxu0 %v8756
      %8823 = vmatpush.bf16.msra.mxu0 %v8755
      %8824 = vmatpush.bf16.msra.mxu0 %v8754
      %8825 = vmatpush.bf16.msra.mxu0 %v8753
      %8826 = vmatpush.bf16.msra.mxu0 %v8752
      %8827 = vmatpush.bf16.msra.mxu0 %v8751
      %8828 = vmatmul.bf16.gmra.mxu0 %v8545
      %v8829 = vpop.f32.mrf.mxu0
      %v8830 = vadd.f32 %v8817, %v8829
      %v8831 = vpop.f32.mrf.mxu0
      %8832 = vdwg.mxu0
      %8833 = vmatpush.bf16.msra.mxu0 %v8766
      %8834 = vmatpush.bf16.msra.mxu0 %v8765
      %8835 = vmatpush.bf16.msra.mxu0 %v8764
      %8836 = vmatpush.bf16.msra.mxu0 %v8763
      %8837 = vmatpush.bf16.msra.mxu0 %v8762
      %8838 = vmatpush.bf16.msra.mxu0 %v8761
      %8839 = vmatpush.bf16.msra.mxu0 %v8760
      %8840 = vmatpush.bf16.msra.mxu0 %v8759
      %8841 = vmatmul.bf16.gmra.mxu0 %v8546
      %v8842 = vpop.f32.mrf.mxu0
      %v8843 = vadd.f32 %v8830, %v8842
      %v8844 = vpop.f32.mrf.mxu0
      %8845 = vdwg.mxu0
      %8846 = vmatpush.bf16.msra.mxu0 %v8774
      %8847 = vmatpush.bf16.msra.mxu0 %v8773
      %8848 = vmatpush.bf16.msra.mxu0 %v8772
      %8849 = vmatpush.bf16.msra.mxu0 %v8771
      %8850 = vmatpush.bf16.msra.mxu0 %v8770
      %8851 = vmatpush.bf16.msra.mxu0 %v8769
      %8852 = vmatpush.bf16.msra.mxu0 %v8768
      %8853 = vmatpush.bf16.msra.mxu0 %v8767
      %8854 = vmatmul.bf16.gmra.mxu0 %v8547
      %v8855 = vpop.f32.mrf.mxu0
      %v8856 = vadd.f32 %v8843, %v8855
      %v8857 = vpop.f32.mrf.mxu0
      %8858 = vdwg.mxu0
      %8859 = vst [vmem:[#allocation14] sm:$0xf] %v8856
      %v8860 = vsel %vm6132, %v8856, -1e+30
      %v8861 = vsel %vm6089, %v8860, -inf
      %8862 = vmax.xlane.f32.xlu0 %v8861
      %v8863 = vpop.xlane.xlu0 %8862
      %v8864 = vsub.f32 %v8860, %v8863
      %v8865 = vmul.f32 %v8864, 1.442695
      %v8866 = vpow.pop %v8865
      %v8867 = vsel %vm6089, %v8866, 0.0
      %8868 = vadd.xlane.f32.xlu0 %v8867
      %v8869 = vpop.xlane.xlu0 %8868
      %v8870 = vlog2.pop %v8869
      %v8871 = vmul.f32 %v8870, 0.6931472
      %v8872 = vadd.f32 %v8863, %v8871
      %v8873 = vmul.f32 %v6131, %v8856
      %v8874 = vsel %vm6089, %v8873, 0.0
      %8875 = vadd.xlane.f32.xlu0 %v8874
      %v8876 = vpop.xlane.xlu0 %8875
      %v8877 = vsub.f32 %v8872, %v8876
      %v8878 = vsel %vm6151, %v8877, 0.0
      %8879 = vadd.xlane.f32.xlu0 %v8878
      %v8880 = vpop.xlane.xlu0 %8879
      %v8881 = vrot.slane %v8880, 4
      %v8882 = vadd.f32 %v8880, %v8881
      %v8883 = vrot.slane %v8882, 2
      %v8884 = vadd.f32 %v8882, %v8883
      %v8885 = vrot.slane %v8884, 1
      %v8886 = vadd.f32 %v8884, %v8885
      %s8887 = vtos %v8886
      %s8888 = sadd.f32 %s6161, %s6196
      %s8889 = sadd.f32 %s8888, %s8887
      %s8890 = sadd.f32 %s7966, %s8263
      %s8891 = smul.f32 %s8890, 0.005
      %s8892 = sadd.f32 %s8889, %s8891
      %v8893 = vstv %s8892
      %8894 = vst [vmem:[#allocation15] sm:$0x1] %v8893
    $region65: #{ctnet_forward.1} parent=1 // pred_fallthru
      _
    // Predicated region
    $region66: #{ctnet_forward.1} parent=1 // pred_check
      _
    $region67: #{ctnet_forward.1} parent=1 // pred_check_branch
      %8896 = sbr.rel (0) target = $region69
    $region68: #{ctnet_forward.1} parent=1 // pred_region
      %8898 = vsyncadd [#allocation5], 0
      %s8900 = sshll.u32 [#allocation14], 4
      %s8901 = int_to_ptr.vmem [resolvable:$true] %s8900
      %s8902 = sshll.u32 %s8, 4
      %s8903 = int_to_ptr.hbm [resolvable:$true] %s8902
      %8905 = dma.vmem_to_hbm [thread:$0]  %s8901, 64, %s8903, [#allocation5]
    $region69: #{ctnet_forward.1} parent=1 // pred_fallthru
      _
    // Predicated region
    $region70: #{ctnet_forward.1} parent=1 // pred_check
      _
    $region71: #{ctnet_forward.1} parent=1 // pred_check_branch
      %8907 = sbr.rel (0) target = $region73
    $region72: #{ctnet_forward.1} parent=1 // pred_region
      %8909 = vsyncadd [#allocation16], 0
      %s8911 = sshll.u32 [#allocation15], 4
      %s8912 = int_to_ptr.vmem [resolvable:$true] %s8911
      %s8913 = sshll.u32 %s9, 4
      %s8914 = int_to_ptr.hbm [resolvable:$true] %s8913
      %8916 = dma.vmem_to_hbm [thread:$0]  %s8912, 16, %s8914, [#allocation16]
    $region73: #{ctnet_forward.1} parent=1 // pred_fallthru
      _
    // Predicated region
    $region74: #{ctnet_forward.1} parent=1 // pred_check
      _
    $region75: #{ctnet_forward.1} parent=1 // pred_check_branch
      %8918 = sbr.rel (0) target = $region77
    $region76: #{ctnet_forward.1} parent=1 // pred_region
      %8920 = dma.done [#allocation5], 64
    $region77: #{ctnet_forward.1} parent=1 // pred_fallthru
      _
    // Predicated region
    $region78: #{ctnet_forward.1} parent=1 // pred_check
      _
    $region79: #{ctnet_forward.1} parent=1 // pred_check_branch
      %8922 = sbr.rel (0) target = $region81
    $region80: #{ctnet_forward.1} parent=1 // pred_region
      %8924 = dma.done [#allocation16], 16
    $region81: #{ctnet_forward.1} parent=1 // pred_fallthru
      _
    %8925 = vsyncpa [#allocation4], 1
    %8926 = vsyncpa [#allocation7], 1
    %8927 = vsyncpa [#allocation10], 1
    %8928 = vsyncpa [#allocation13], 1
    %8929 = vsyncpa [#allocation5], 1
    %8930 = vsyncpa [#allocation16], 1

</llo_original>
